<compile_context>
chip_gen: v5e
topology: v5e:2x2
jax: 0.10.0
libtpu: 0.0.40
codegen_flags: <defaults>
</compile_context>

<pallas_src>
import functools

import numpy as np

import jax
import jax.numpy as jnp
from jax import lax
from jax.experimental import pallas as pl
from jax.experimental.pallas import tpu as pltpu


# -----------------------------------------------------------------------------
# Pallas kernel: one branch matmul + one projection matmul per image, bias+ReLU
# epilogues, H-reduction and the final Linear.
# -----------------------------------------------------------------------------
def aspp_kernel(xc_ref, wb_ref, wj_ref, bbr_ref, bpn_ref, wl_ref, bl_ref,
                out_ref, *, H, W, C_out, R):
    # xc_ref block: (1, W*H, Kp) bf16, flattened W-major (rows [w*H : w*H+H] share w).
    x = xc_ref[0]                                            # (W*H, Kp) bf16

    # ---- all conv branches in ONE matmul: (W*H, Kp) @ (Kp, (R+1)*C_out) ----
    z = jnp.dot(x, wb_ref[...], preferred_element_type=jnp.float32)
    z = jnp.maximum(z + bbr_ref[...], 0.0)                   # single (1, 384) broadcast

    # branch sum — slices at 128-lane-aligned boundaries are free.
    bsum = z[:, 0:C_out]
    for b in range(1, R + 1):
        bsum = bsum + z[:, b * C_out:(b + 1) * C_out]        # (W*H, C_out)

    # ---- projection: 1x1 conv + BN + ReLU.  BN scale and 1/num_branches folded
    #      into wj; the pooling branch and BN bias are folded into bpn (per image);
    #      Dropout(0.95) is identity in eval. ----
    pj = jnp.dot(bsum.astype(jnp.bfloat16), wj_ref[...],
                 preferred_element_type=jnp.float32)
    pj = jnp.maximum(pj + bpn_ref[0], 0.0)                   # (W*H, C_out)

    # ---- H-reduction: each H-group is exactly one (8,128) sublane tile ----
    m = jnp.sum(pj.reshape(W, H, C_out), axis=1)             # (W, C_out); 1/H is in wl

    # ---- l0: Linear(W -> 192), already in the permuted (192, C_out) layout ----
    # Tiny f32 dot; kept at HIGHEST to preserve numerics (negligible cost).
    out = jnp.dot(wl_ref[...], m,
                  precision=lax.Precision.HIGHEST,
                  preferred_element_type=jnp.float32) + bl_ref[...]
    out_ref[0] = out                                         # (192, C_out)


# -----------------------------------------------------------------------------
# Wrapper (glue): layout transforms, im2col, weight folding, pooling branch,
# pallas_call.
# -----------------------------------------------------------------------------
def aspp_pallas(x_nchw, params, rates):
    N, C_in, H, W = x_nchw.shape
    C_out = params["w1"].shape[0]
    R = len(rates)
    nb = R + 2                            # branches: 1x1, each rate, pooling
    K = C_in * (1 + 9 * R)                # im2col depth: center + 9 taps per rate
    Kp = max(128, ((K + 127) // 128) * 128)   # lane-dense contraction depth
    WH = W * H
    sc, bi = params["scale"], params["bias"]

    # NCHW -> NHWC, im2col (center channels + 9 zero-padded shifted taps per rate),
    # flatten W-major so the kernel's H-reduction is sublane-tile aligned, pad K->Kp.
    x = jnp.transpose(x_nchw, (0, 2, 3, 1))                          # (N, H, W, C_in)
    cols = [x]
    for r in rates:
        xp = jnp.pad(x, ((0, 0), (r, r), (r, r), (0, 0)))
        for ky in range(3):
            for kx in range(3):
                cols.append(xp[:, ky * r:ky * r + H, kx * r:kx * r + W, :])
    xc = jnp.concatenate(cols, axis=-1)                              # (N, H, W, K)
    xc = jnp.transpose(xc, (0, 2, 1, 3)).reshape(N, WH, K)           # W-major flatten
    xc = jnp.pad(xc, ((0, 0), (0, 0), (0, Kp - K))).astype(jnp.bfloat16)

    # Branch conv weights, BN scale folded, concatenated along the output dim so a
    # single (WH, Kp) @ (Kp, (R+1)*C_out) matmul covers every conv branch.
    wb = jnp.zeros((Kp, (R + 1) * C_out), jnp.float32)
    wb = wb.at[0:C_in, 0:C_out].set(params["w1"][:, :, 0, 0].T * sc[0][None, :])
    for ri in range(R):
        wri = jnp.transpose(params["wr"][ri], (2, 3, 1, 0)).reshape(9 * C_in, C_out)
        wb = wb.at[C_in + 9 * C_in * ri:C_in + 9 * C_in * (ri + 1),
                   (ri + 1) * C_out:(ri + 2) * C_out].set(wri * sc[1 + ri][None, :])
    wb = wb.astype(jnp.bfloat16)                                     # (Kp, (R+1)*C_out)

    # Concatenated branch BN biases (one (1, (R+1)*C_out) broadcast in-kernel).
    bbr = jnp.concatenate([bi[b] for b in range(R + 1)], axis=0).reshape(
        1, (R + 1) * C_out).astype(jnp.float32)

    # project weight: BN scale and 1/nb (branch mean) folded in.
    wj_scaled = params["wj"][:, :, 0, 0].T * sc[R + 2][None, :]      # (C_out, C_out) f32
    wj = (wj_scaled / float(nb)).astype(jnp.bfloat16)

    # ---- ASPPPooling branch, computed in f32 from the original input (cheap:
    #      only C_in channels), then folded into a per-image projection bias.
    #      (bilinear resize from 1x1 is an exact broadcast.) ----
    pooled = jnp.mean(x_nchw, axis=(2, 3))                           # (N, C_in) f32
    zp = pooled @ (params["wp"][:, :, 0, 0].T * sc[R + 1][None, :]) + bi[R + 1][None, :]
    zp = jnp.maximum(zp, 0.0)                                        # (N, C_out)
    bpn = (bi[R + 2][None, :] + (zp @ wj_scaled) / float(nb)).astype(jnp.float32)
    bpn = bpn.reshape(N, 1, C_out)

    # final Linear: 1/H (H-mean) folded in; kept f32.
    wl = (params["wl"] / float(H)).astype(jnp.float32)               # (192, W)
    bl = params["bl"].reshape(192, 1).astype(jnp.float32)

    kernel = functools.partial(aspp_kernel, H=H, W=W, C_out=C_out, R=R)

    return pl.pallas_call(
        kernel,
        out_shape=jax.ShapeDtypeStruct((N, 192, C_out), jnp.float32),
        grid_spec=pltpu.PrefetchScalarGridSpec(
            num_scalar_prefetch=0,
            # Parallel over images: with N=2 this feeds both TensorCores on v7x;
            # on single-TC v5e/v6e it is two cheap serial steps.
            grid=(N,),
            in_specs=[
                pl.BlockSpec((1, WH, Kp), lambda n: (n, 0, 0)),
                pl.BlockSpec((Kp, (R + 1) * C_out), lambda n: (0, 0)),
                pl.BlockSpec((C_out, C_out), lambda n: (0, 0)),
                pl.BlockSpec((1, (R + 1) * C_out), lambda n: (0, 0)),
                pl.BlockSpec((1, 1, C_out), lambda n: (n, 0, 0)),
                pl.BlockSpec((192, W), lambda n: (0, 0)),
                pl.BlockSpec((192, 1), lambda n: (0, 0)),
            ],
            out_specs=pl.BlockSpec((1, 192, C_out), lambda n: (n, 0, 0)),
        ),
        compiler_params=pltpu.CompilerParams(dimension_semantics=("parallel",)),
    )(xc, wb, wj, bbr, bpn, wl, bl)


# -----------------------------------------------------------------------------
# Pure-JAX reference (independent implementation via lax.conv) for validation.
# -----------------------------------------------------------------------------
def aspp_reference(x, params, rates):
    R = len(rates)
    dn = ("NCHW", "OIHW", "NCHW")
    sc, bi = params["scale"], params["bias"]

    def bn_relu(y, i):
        return jnp.maximum(y * sc[i][None, :, None, None] + bi[i][None, :, None, None], 0.0)

    branches = []
    y = lax.conv_general_dilated(x, params["w1"], (1, 1), "VALID",
                                 dimension_numbers=dn, precision="highest")
    branches.append(bn_relu(y, 0))
    for i, r in enumerate(rates):
        y = lax.conv_general_dilated(x, params["wr"][i], (1, 1), [(r, r), (r, r)],
                                     rhs_dilation=(r, r), dimension_numbers=dn,
                                     precision="highest")
        branches.append(bn_relu(y, 1 + i))
    pm = jnp.mean(x, axis=(2, 3), keepdims=True)
    y = lax.conv_general_dilated(pm, params["wp"], (1, 1), "VALID",
                                 dimension_numbers=dn, precision="highest")
    y = bn_relu(y, R + 1)
    C_out = params["w1"].shape[0]
    branches.append(jnp.broadcast_to(y, (x.shape[0], C_out, x.shape[2], x.shape[3])))

    res = jnp.mean(jnp.stack(branches, axis=-1), axis=-1)
    y = lax.conv_general_dilated(res, params["wj"], (1, 1), "VALID",
                                 dimension_numbers=dn, precision="highest")
    res = bn_relu(y, R + 2)                                   # Dropout(0.95) -> identity (eval)
    m = jnp.mean(res, axis=2)                                 # (N, C, W)
    out = jnp.einsum("ncw,ow->nco", m, params["wl"], precision="highest") \
        + params["bl"][None, None, :]
    return jnp.transpose(out, (0, 2, 1))                      # (N, 192, C)


def make_params(key, C_in, C_out, rates):
    R = len(rates)
    ks = jax.random.split(key, 10)
    w1 = jax.random.normal(ks[0], (C_out, C_in, 1, 1), jnp.float32) * 0.1
    wr = jax.random.normal(ks[1], (R, C_out, C_in, 3, 3), jnp.float32) * 0.1
    wp = jax.random.normal(ks[2], (C_out, C_in, 1, 1), jnp.float32) * 0.1
    wj = jax.random.normal(ks[3], (C_out, C_out, 1, 1), jnp.float32) * 0.05
    wl = jax.random.normal(ks[4], (192, 193), jnp.float32) * 0.05
    bl = jax.random.normal(ks[5], (192,), jnp.float32) * 0.1
    nbn = R + 3  # BN sets: 1x1 branch, each rate branch, pooling branch, project
    gamma = jax.random.uniform(ks[6], (nbn, C_out), jnp.float32, 0.5, 1.5)
    beta = jax.random.normal(ks[7], (nbn, C_out), jnp.float32) * 0.1
    rmean = jax.random.normal(ks[8], (nbn, C_out), jnp.float32) * 0.1
    rvar = jax.random.uniform(ks[9], (nbn, C_out), jnp.float32, 0.5, 1.5)
    scale = gamma / jnp.sqrt(rvar + 1e-5)
    bias = beta - rmean * scale
    return dict(w1=w1, wr=wr, wp=wp, wj=wj, wl=wl, bl=bl, scale=scale, bias=bias)


if __name__ == "__main__":
    # Small shapes consistent with the module: l0 = Linear(193, 192) forces W = 193.
    N, C_in, H, W = 2, 4, 8, 193
    C_out = 128
    rates = (1, 2)

    key = jax.random.PRNGKey(0)
    kx, kp = jax.random.split(key)
    params = make_params(kp, C_in, C_out, rates)
    x = jax.random.normal(kx, (N, C_in, H, W), jnp.float32)   # NCHW like PyTorch

    out = aspp_pallas(x, params, rates)
    out = jax.block_until_ready(out)
    assert out.shape == (N, 192, C_out)

    ref = aspp_reference(x, params, rates)
    # bf16 MXU inputs (f32 accumulation) vs. an f32/"highest" reference -> 2e-2 tolerance.
    np.testing.assert_allclose(np.asarray(out), np.asarray(ref), rtol=2e-2, atol=2e-2)

    print("KERNEL_OK")
</pallas_src>

<mosaic_0001>
module attributes {stable_mosaic.version = 11 : i64} {
  func.func @aspp_kernel(%arg0: i32, %arg1: memref<1x1544x128xbf16, #tpu.memory_space<vmem>>, %arg2: memref<128x384xbf16, #tpu.memory_space<vmem>>, %arg3: memref<128x128xbf16, #tpu.memory_space<vmem>>, %arg4: memref<1x384xf32, #tpu.memory_space<vmem>>, %arg5: memref<1x1x128xf32, #tpu.memory_space<vmem>>, %arg6: memref<192x193xf32, #tpu.memory_space<vmem>>, %arg7: memref<192x1xf32, #tpu.memory_space<vmem>>, %arg8: memref<1x192x128xf32, #tpu.memory_space<vmem>>) attributes {dimension_semantics = [#tpu.dimension_semantics<parallel>], iteration_bounds = array<i64: 2>, scalar_prefetch = 0 : i64, scratch_operands = 0 : i64, tpu.core_type = #tpu.core_type<tc>, window_params = [{transform_indices = @transform_0, window_bounds = array<i64: 1, 1544, 128>}, {pipeline_mode = #tpu.pipeline_mode<synchronous>, transform_indices = @transform_1, window_bounds = array<i64: 128, 384>}, {pipeline_mode = #tpu.pipeline_mode<synchronous>, transform_indices = @transform_2, window_bounds = array<i64: 128, 128>}, {pipeline_mode = #tpu.pipeline_mode<synchronous>, transform_indices = @transform_3, window_bounds = array<i64: 1, 384>}, {transform_indices = @transform_4, window_bounds = array<i64: 1, 1, 128>}, {pipeline_mode = #tpu.pipeline_mode<synchronous>, transform_indices = @transform_5, window_bounds = array<i64: 192, 193>}, {pipeline_mode = #tpu.pipeline_mode<synchronous>, transform_indices = @transform_6, window_bounds = array<i64: 192, 1>}, {transform_indices = @transform_7, window_bounds = array<i64: 1, 192, 128>}]} {
    %c0 = arith.constant 0 : index
    %c0_0 = arith.constant 0 : index
    %c0_1 = arith.constant 0 : index
    %0 = vector.load %arg1[%c0, %c0_0, %c0_1] : memref<1x1544x128xbf16, #tpu.memory_space<vmem>>, vector<1x1544x128xbf16>
    %1 = vector.shape_cast %0 : vector<1x1544x128xbf16> to vector<1544x128xbf16>
    %c0_2 = arith.constant 0 : index
    %c0_3 = arith.constant 0 : index
    %2 = vector.load %arg2[%c0_2, %c0_3] : memref<128x384xbf16, #tpu.memory_space<vmem>>, vector<128x384xbf16>
    %cst = arith.constant dense<0.000000e+00> : vector<1544x384xf32>
    %3 = tpu.matmul %1, %2, %cst {dimension_numbers = #tpu.dot_dimension_numbers<[1], [0], [0], [1], [0, 0, 1, 1], [], []>} : vector<1544x128xbf16>, vector<128x384xbf16>, vector<1544x384xf32> -> vector<1544x384xf32>
    %c0_4 = arith.constant 0 : index
    %c0_5 = arith.constant 0 : index
    %4 = vector.load %arg4[%c0_4, %c0_5] : memref<1x384xf32, #tpu.memory_space<vmem>>, vector<1x384xf32>
    %5 = vector.broadcast %4 : vector<1x384xf32> to vector<1544x384xf32>
    %6 = arith.addf %3, %5 : vector<1544x384xf32>
    %cst_6 = arith.constant 0.000000e+00 : f32
    %7 = vector.broadcast %cst_6 : f32 to vector<1544x384xf32>
    %8 = arith.maximumf %6, %7 : vector<1544x384xf32>
    %9 = vector.extract_strided_slice %8 {offsets = [0, 0], sizes = [1544, 128], strides = [1, 1]} : vector<1544x384xf32> to vector<1544x128xf32>
    %10 = vector.extract_strided_slice %8 {offsets = [0, 128], sizes = [1544, 128], strides = [1, 1]} : vector<1544x384xf32> to vector<1544x128xf32>
    %11 = arith.addf %9, %10 : vector<1544x128xf32>
    %12 = vector.extract_strided_slice %8 {offsets = [0, 256], sizes = [1544, 128], strides = [1, 1]} : vector<1544x384xf32> to vector<1544x128xf32>
    %13 = arith.addf %11, %12 : vector<1544x128xf32>
    %14 = arith.truncf %13 : vector<1544x128xf32> to vector<1544x128xbf16>
    %c0_7 = arith.constant 0 : index
    %c0_8 = arith.constant 0 : index
    %15 = vector.load %arg3[%c0_7, %c0_8] : memref<128x128xbf16, #tpu.memory_space<vmem>>, vector<128x128xbf16>
    %cst_9 = arith.constant dense<0.000000e+00> : vector<1544x128xf32>
    %16 = tpu.matmul %14, %15, %cst_9 {dimension_numbers = #tpu.dot_dimension_numbers<[1], [0], [0], [1], [0, 0, 1, 1], [], []>} : vector<1544x128xbf16>, vector<128x128xbf16>, vector<1544x128xf32> -> vector<1544x128xf32>
    %c0_10 = arith.constant 0 : index
    %c0_11 = arith.constant 0 : index
    %c0_12 = arith.constant 0 : index
    %17 = vector.load %arg5[%c0_10, %c0_11, %c0_12] : memref<1x1x128xf32, #tpu.memory_space<vmem>>, vector<1x1x128xf32>
    %18 = vector.shape_cast %17 : vector<1x1x128xf32> to vector<1x128xf32>
    %19 = vector.broadcast %18 : vector<1x128xf32> to vector<1544x128xf32>
    %20 = arith.addf %16, %19 : vector<1544x128xf32>
    %cst_13 = arith.constant 0.000000e+00 : f32
    %21 = vector.broadcast %cst_13 : f32 to vector<1544x128xf32>
    %22 = arith.maximumf %20, %21 : vector<1544x128xf32>
    %23 = vector.shape_cast %22 : vector<1544x128xf32> to vector<193x8x128xf32>
    %cst_14 = arith.constant dense<0.000000e+00> : vector<193x128xf32>
    %24 = vector.multi_reduction <add>, %23, %cst_14 [1] : vector<193x8x128xf32> to vector<193x128xf32>
    %c0_15 = arith.constant 0 : index
    %c0_16 = arith.constant 0 : index
    %25 = vector.load %arg6[%c0_15, %c0_16] : memref<192x193xf32, #tpu.memory_space<vmem>>, vector<192x193xf32>
    %cst_17 = arith.constant dense<0.000000e+00> : vector<192x128xf32>
    %26 = tpu.matmul %25, %24, %cst_17 {dimension_numbers = #tpu.dot_dimension_numbers<[1], [0], [0], [1], [0, 0, 1, 1], [], []>, precision = #tpu.contract_precision<fp32>} : vector<192x193xf32>, vector<193x128xf32>, vector<192x128xf32> -> vector<192x128xf32>
    %c0_18 = arith.constant 0 : index
    %c0_19 = arith.constant 0 : index
    %27 = vector.load %arg7[%c0_18, %c0_19] : memref<192x1xf32, #tpu.memory_space<vmem>>, vector<192x1xf32>
    %28 = vector.broadcast %27 : vector<192x1xf32> to vector<192x128xf32>
    %29 = arith.addf %26, %28 : vector<192x128xf32>
    %c0_20 = arith.constant 0 : index
    %c0_21 = arith.constant 0 : index
    %c0_22 = arith.constant 0 : index
    %30 = vector.load %arg8[%c0_20, %c0_21, %c0_22] : memref<1x192x128xf32, #tpu.memory_space<vmem>>, vector<1x192x128xf32>
    %31 = vector.shape_cast %30 : vector<1x192x128xf32> to vector<192x128xf32>
    %32 = vector.shape_cast %29 : vector<192x128xf32> to vector<1x192x128xf32>
    tpu.vector_store %arg8[%c0_20, %c0_21, %c0_22], %32 {strides = array<i32>} : memref<1x192x128xf32, #tpu.memory_space<vmem>>, vector<1x192x128xf32>,
    return
  }
  func.func @transform_0(%arg0: i32) -> (i32, i32, i32) {
    %c0_i32 = arith.constant 0 : i32
    %c0_i32_0 = arith.constant 0 : i32
    %c0_i32_1 = arith.constant 0 : i32
    return %arg0, %c0_i32, %c0_i32_0 : i32, i32, i32
  }
  func.func @transform_1(%arg0: i32) -> (i32, i32) {
    %c0_i32 = arith.constant 0 : i32
    %c0_i32_0 = arith.constant 0 : i32
    %c0_i32_1 = arith.constant 0 : i32
    return %c0_i32, %c0_i32_0 : i32, i32
  }
  func.func @transform_2(%arg0: i32) -> (i32, i32) {
    %c0_i32 = arith.constant 0 : i32
    %c0_i32_0 = arith.constant 0 : i32
    %c0_i32_1 = arith.constant 0 : i32
    return %c0_i32, %c0_i32_0 : i32, i32
  }
  func.func @transform_3(%arg0: i32) -> (i32, i32) {
    %c0_i32 = arith.constant 0 : i32
    %c0_i32_0 = arith.constant 0 : i32
    %c0_i32_1 = arith.constant 0 : i32
    return %c0_i32, %c0_i32_0 : i32, i32
  }
  func.func @transform_4(%arg0: i32) -> (i32, i32, i32) {
    %c0_i32 = arith.constant 0 : i32
    %c0_i32_0 = arith.constant 0 : i32
    %c0_i32_1 = arith.constant 0 : i32
    return %arg0, %c0_i32, %c0_i32_0 : i32, i32, i32
  }
  func.func @transform_5(%arg0: i32) -> (i32, i32) {
    %c0_i32 = arith.constant 0 : i32
    %c0_i32_0 = arith.constant 0 : i32
    %c0_i32_1 = arith.constant 0 : i32
    return %c0_i32, %c0_i32_0 : i32, i32
  }
  func.func @transform_6(%arg0: i32) -> (i32, i32) {
    %c0_i32 = arith.constant 0 : i32
    %c0_i32_0 = arith.constant 0 : i32
    %c0_i32_1 = arith.constant 0 : i32
    return %c0_i32, %c0_i32_0 : i32, i32
  }
  func.func @transform_7(%arg0: i32) -> (i32, i32, i32) {
    %c0_i32 = arith.constant 0 : i32
    %c0_i32_0 = arith.constant 0 : i32
    %c0_i32_1 = arith.constant 0 : i32
    return %arg0, %c0_i32, %c0_i32_0 : i32, i32, i32
  }
}

</mosaic_0001>

<llo_original>
// kernel: tpu_custom_call.1
$region0: #{tpu_custom_call.1}
  #allocation0 [shape = 'u32[]', space=smem, size = 0x4, offset = 0x4, fixed_abs, tag = 'smem constant byte address 0x4 - core index']
  #allocation1 [shape = 'u32[72,128]{1,0:T(1,128)}', space=vmem, size = 0x9000, scoped, tag = 'internal scratch']
  %s0 = inlined_call_operand.hbm [shape: bf16[2,1544,128], index: 0, kind: input, shape index: {}]
  %s1 = inlined_call_operand.vmem [shape: bf16[128,384], index: 1, kind: input, shape index: {}]
  %s2 = inlined_call_operand.hbm [shape: bf16[128,128], index: 2, kind: input, shape index: {}]
  %s3 = inlined_call_operand.vmem [shape: f32[1,384], index: 3, kind: input, shape index: {}]
  %s4 = inlined_call_operand.hbm [shape: f32[2,1,128], index: 4, kind: input, shape index: {}]
  %s5 = inlined_call_operand.hbm [shape: f32[192,193], index: 5, kind: input, shape index: {}]
  %s6 = inlined_call_operand.vmem [shape: f32[192,1], index: 6, kind: input, shape index: {}]
  %s7 = inlined_call_operand.hbm [shape: f32[2,192,128], index: 7, kind: output, shape index: {}]
  %s8 = sld [smem:[#allocation0]]
  $region77: #{tpu_custom_call.1} parent=0
    _
  %s10 = ssub.s32 1, %s8
  %s11 = scalar_select 0, %s10, %s8
  $region1: #{tpu_custom_call.1} parent=0
    #allocation2 [shape = 'u8[790528]{0}', space=vmem, size = 0xc1000, scoped, tag = 'input window, operand 0']
    #allocation3 [shape = 's32[2]{0}', space=sflag, size = 0x8, scoped, tag = 'scoped memory for tpu_custom_call.1']
    #allocation4 [shape = 's32[2]{0}', space=sflag, size = 0x8, scoped, tag = 'scoped memory for tpu_custom_call.1']
    #allocation5 [shape = 'u8[32768]{0}', space=vmem, size = 0x8000, scoped, tag = 'input window, operand 2, single buffered']
    #allocation6 [shape = 's32[1]{0}', space=sflag, size = 0x4, scoped, tag = 'scoped memory for tpu_custom_call.1']
    #allocation7 [shape = 'u8[1024]{0}', space=vmem, size = 0x400, scoped, tag = 'input window, operand 4']
    #allocation8 [shape = 'u8[196608]{0}', space=vmem, size = 0x30000, scoped, tag = 'input window, operand 5, single buffered']
    #allocation9 [shape = 'u8[196608]{0}', space=vmem, size = 0x30000, scoped, tag = 'output window, operand 0']
    %12 = vsyncpa [#allocation3], 0
    %s13 = scalar_lea.sflag [#allocation3], 1
    %14 = vsyncpa %s13, 0
    %15 = vsyncpa [#allocation6], 0
    %16 = vsyncpa [#allocation4], 0
    %s17 = scalar_lea.sflag [#allocation4], 1
    %18 = vsyncpa %s17, 0
    loop: start=0, step=1, limit=4
    $region2: #{tpu_custom_call.1} parent=1 // loop_pre_header
      _
    $region3: #{tpu_custom_call.1} parent=1 // loop_header
      %s20 = sphi 0, %s24
      %p21 = scmp.ge.s32.totalorder %s20, 4
      %s30 = sphi 0, %s32
      %s33 = sphi 0, %s30
      %s34 = sphi 0, %s33
      %s50 = sphi 0, %s34
      %s54 = sphi 0, %s54
      %s56 = sphi 0, %s54
      %s57 = sphi 0, %s56
      %s71 = sphi 0, %s57
      %s75 = sphi 0, %s75
      %s77 = sphi 0, %s75
      %s78 = sphi 0, %s77
      %s92 = sphi 0, %s78
      %s96 = sphi 0, %s96
      %s98 = sphi 0, %s96
      %s99 = sphi 0, %s98
      %s113 = sphi 0, %s99
      %s119 = sphi 0, %s121
      %s122 = sphi 0, %s119
      %s123 = sphi 0, %s122
      %s139 = sphi 0, %s123
      %s143 = sphi 0, %s143
      %s145 = sphi 0, %s143
      %s146 = sphi 0, %s145
      %s160 = sphi 0, %s146
      %s164 = sphi 0, %s164
      %s166 = sphi 0, %s164
      %s167 = sphi 0, %s166
      %s181 = sphi 0, %s167
      %s187 = sphi 0, %s189
      %s190 = sphi 0, %s187
      %s191 = sphi 0, %s190
      %s207 = sphi 0, %s191
    $region4: #{tpu_custom_call.1} parent=1 // loop_header_branch
      %23 = sbr.rel (%p21) target = $region8
    $region5: #{tpu_custom_call.1} parent=1 // loop_body
      %s25 = ssub.s32 %s20, 1
      %s26 = ssub.s32 %s20, 2
      %s27 = sadd.s32 %s20, 1
      %s28 = ssub.s32 %s20, %s27
      %p29 = scmp.eq.s32.totalorder %s28, 0
      %s31 = sadd.s32 %s30, 1
      %s32 = scalar_select %p29, %s30, %s31
      %p35 = pneg %p29
      %p36 = scmp.eq.s32.totalorder %s20, 1
      %p37 = por %p35, %p36
      %p38 = scmp.ne.s32.totalorder %s30, %s33
      %p39 = scmp.eq.s32.totalorder %s20, 0
      %p40 = por %p38, %p39
      %p41 = scmp.ne.s32.totalorder %s30, %s33
      %p42 = scmp.eq.s32.totalorder %s25, 1
      %p43 = por %p41, %p42
      %p44 = scmp.ne.s32.totalorder %s33, %s34
      %p45 = scmp.eq.s32.totalorder %s25, 0
      %p46 = por %p44, %p45
      %p47 = scmp.ne.s32.totalorder %s33, %s34
      %p48 = scmp.eq.s32.totalorder %s26, 1
      %p49 = por %p47, %p48
      %p51 = scmp.ne.s32.totalorder %s34, %s50
      %p52 = scmp.eq.s32.totalorder %s26, 0
      %p53 = por %p51, %p52
      %s55 = sadd.s32 %s54, 1
      %p58 = scmp.eq.s32.totalorder %s20, 1
      %p59 = scmp.ne.s32.totalorder %s54, %s56
      %p60 = scmp.eq.s32.totalorder %s20, 0
      %p61 = por %p59, %p60
      %p62 = scmp.ne.s32.totalorder %s54, %s56
      %p63 = scmp.eq.s32.totalorder %s25, 1
      %p64 = por %p62, %p63
      %p65 = scmp.ne.s32.totalorder %s56, %s57
      %p66 = scmp.eq.s32.totalorder %s25, 0
      %p67 = por %p65, %p66
      %p68 = scmp.ne.s32.totalorder %s56, %s57
      %p69 = scmp.eq.s32.totalorder %s26, 1
      %p70 = por %p68, %p69
      %p72 = scmp.ne.s32.totalorder %s57, %s71
      %p73 = scmp.eq.s32.totalorder %s26, 0
      %p74 = por %p72, %p73
      %s76 = sadd.s32 %s75, 1
      %p79 = scmp.eq.s32.totalorder %s20, 1
      %p80 = scmp.ne.s32.totalorder %s75, %s77
      %p81 = scmp.eq.s32.totalorder %s20, 0
      %p82 = por %p80, %p81
      %p83 = scmp.ne.s32.totalorder %s75, %s77
      %p84 = scmp.eq.s32.totalorder %s25, 1
      %p85 = por %p83, %p84
      %p86 = scmp.ne.s32.totalorder %s77, %s78
      %p87 = scmp.eq.s32.totalorder %s25, 0
      %p88 = por %p86, %p87
      %p89 = scmp.ne.s32.totalorder %s77, %s78
      %p90 = scmp.eq.s32.totalorder %s26, 1
      %p91 = por %p89, %p90
      %p93 = scmp.ne.s32.totalorder %s78, %s92
      %p94 = scmp.eq.s32.totalorder %s26, 0
      %p95 = por %p93, %p94
      %s97 = sadd.s32 %s96, 1
      %p100 = scmp.eq.s32.totalorder %s20, 1
      %p101 = scmp.ne.s32.totalorder %s96, %s98
      %p102 = scmp.eq.s32.totalorder %s20, 0
      %p103 = por %p101, %p102
      %p104 = scmp.ne.s32.totalorder %s96, %s98
      %p105 = scmp.eq.s32.totalorder %s25, 1
      %p106 = por %p104, %p105
      %p107 = scmp.ne.s32.totalorder %s98, %s99
      %p108 = scmp.eq.s32.totalorder %s25, 0
      %p109 = por %p107, %p108
      %p110 = scmp.ne.s32.totalorder %s98, %s99
      %p111 = scmp.eq.s32.totalorder %s26, 1
      %p112 = por %p110, %p111
      %p114 = scmp.ne.s32.totalorder %s99, %s113
      %p115 = scmp.eq.s32.totalorder %s26, 0
      %p116 = por %p114, %p115
      %s117 = ssub.s32 %s20, %s27
      %p118 = scmp.eq.s32.totalorder %s117, 0
      %s120 = sadd.s32 %s119, 1
      %s121 = scalar_select %p118, %s119, %s120
      %p124 = pneg %p118
      %p125 = scmp.eq.s32.totalorder %s20, 1
      %p126 = por %p124, %p125
      %p127 = scmp.ne.s32.totalorder %s119, %s122
      %p128 = scmp.eq.s32.totalorder %s20, 0
      %p129 = por %p127, %p128
      %p130 = scmp.ne.s32.totalorder %s119, %s122
      %p131 = scmp.eq.s32.totalorder %s25, 1
      %p132 = por %p130, %p131
      %p133 = scmp.ne.s32.totalorder %s122, %s123
      %p134 = scmp.eq.s32.totalorder %s25, 0
      %p135 = por %p133, %p134
      %p136 = scmp.ne.s32.totalorder %s122, %s123
      %p137 = scmp.eq.s32.totalorder %s26, 1
      %p138 = por %p136, %p137
      %p140 = scmp.ne.s32.totalorder %s123, %s139
      %p141 = scmp.eq.s32.totalorder %s26, 0
      %p142 = por %p140, %p141
      %s144 = sadd.s32 %s143, 1
      %p147 = scmp.eq.s32.totalorder %s20, 1
      %p148 = scmp.ne.s32.totalorder %s143, %s145
      %p149 = scmp.eq.s32.totalorder %s20, 0
      %p150 = por %p148, %p149
      %p151 = scmp.ne.s32.totalorder %s143, %s145
      %p152 = scmp.eq.s32.totalorder %s25, 1
      %p153 = por %p151, %p152
      %p154 = scmp.ne.s32.totalorder %s145, %s146
      %p155 = scmp.eq.s32.totalorder %s25, 0
      %p156 = por %p154, %p155
      %p157 = scmp.ne.s32.totalorder %s145, %s146
      %p158 = scmp.eq.s32.totalorder %s26, 1
      %p159 = por %p157, %p158
      %p161 = scmp.ne.s32.totalorder %s146, %s160
      %p162 = scmp.eq.s32.totalorder %s26, 0
      %p163 = por %p161, %p162
      %s165 = sadd.s32 %s164, 1
      %p168 = scmp.eq.s32.totalorder %s20, 1
      %p169 = scmp.ne.s32.totalorder %s164, %s166
      %p170 = scmp.eq.s32.totalorder %s20, 0
      %p171 = por %p169, %p170
      %p172 = scmp.ne.s32.totalorder %s164, %s166
      %p173 = scmp.eq.s32.totalorder %s25, 1
      %p174 = por %p172, %p173
      %p175 = scmp.ne.s32.totalorder %s166, %s167
      %p176 = scmp.eq.s32.totalorder %s25, 0
      %p177 = por %p175, %p176
      %p178 = scmp.ne.s32.totalorder %s166, %s167
      %p179 = scmp.eq.s32.totalorder %s26, 1
      %p180 = por %p178, %p179
      %p182 = scmp.ne.s32.totalorder %s167, %s181
      %p183 = scmp.eq.s32.totalorder %s26, 0
      %p184 = por %p182, %p183
      %s185 = ssub.s32 %s20, %s27
      %p186 = scmp.eq.s32.totalorder %s185, 0
      %s188 = sadd.s32 %s187, 1
      %s189 = scalar_select %p186, %s187, %s188
      %p192 = pneg %p186
      %p193 = scmp.eq.s32.totalorder %s20, 1
      %p194 = por %p192, %p193
      %p195 = scmp.ne.s32.totalorder %s187, %s190
      %p196 = scmp.eq.s32.totalorder %s20, 0
      %p197 = por %p195, %p196
      %p198 = scmp.ne.s32.totalorder %s187, %s190
      %p199 = scmp.eq.s32.totalorder %s25, 1
      %p200 = por %p198, %p199
      %p201 = scmp.ne.s32.totalorder %s190, %s191
      %p202 = scmp.eq.s32.totalorder %s25, 0
      %p203 = por %p201, %p202
      %p204 = scmp.ne.s32.totalorder %s190, %s191
      %p205 = scmp.eq.s32.totalorder %s26, 1
      %p206 = por %p204, %p205
      %p208 = scmp.ne.s32.totalorder %s191, %s207
      %p209 = scmp.eq.s32.totalorder %s26, 0
      %p210 = por %p208, %p209
      %p211 = scmp.le.s32.totalorder 1, %s20
      %p212 = scmp.lt.s32.totalorder %s20, 3
      %p213 = pnand %p211, %p212
      %p214 = pneg %p213
      // Predicated region
      $region9: #{tpu_custom_call.1} parent=5 // pred_check
        _
      $region10: #{tpu_custom_call.1} parent=5 // pred_check_branch
        %216 = sbr.rel (%p213) target = $region12
      $region11: #{tpu_custom_call.1} parent=5 // pred_region
        %s217 = ssub.s32 %s20, 1
        // Predicated region
        $region13: #{tpu_custom_call.1} parent=11 // pred_check
          %p218 = pneg %p67
        $region14: #{tpu_custom_call.1} parent=11 // pred_check_branch
          %220 = sbr.rel (%p218) target = $region16
        $region15: #{tpu_custom_call.1} parent=11 // pred_region
          _
        $region16: #{tpu_custom_call.1} parent=11 // pred_fallthru
          _
        // Predicated region
        $region17: #{tpu_custom_call.1} parent=11 // pred_check
          %p221 = pneg %p88
        $region18: #{tpu_custom_call.1} parent=11 // pred_check_branch
          %223 = sbr.rel (%p221) target = $region20
        $region19: #{tpu_custom_call.1} parent=11 // pred_region
          %225 = vsyncadd [#allocation6], 0
          %s226 = sshll.u32 %s2, 4
          %s227 = int_to_ptr.hbm [resolvable:$true] %s226
          %s228 = sshll.u32 [#allocation5], 4
          %s229 = int_to_ptr.vmem [resolvable:$true] %s228
          %234 = dma.hbm_to_vmem [thread:$0]  %s227, 1024, %s229, [#allocation6], 64, 64, 4
        $region20: #{tpu_custom_call.1} parent=11 // pred_fallthru
          _
        // Predicated region
        $region21: #{tpu_custom_call.1} parent=11 // pred_check
          %p235 = pneg %p109
        $region22: #{tpu_custom_call.1} parent=11 // pred_check_branch
          %237 = sbr.rel (%p235) target = $region24
        $region23: #{tpu_custom_call.1} parent=11 // pred_region
          _
        $region24: #{tpu_custom_call.1} parent=11 // pred_fallthru
          _
        // Predicated region
        $region25: #{tpu_custom_call.1} parent=11 // pred_check
          %p238 = pneg %p156
        $region26: #{tpu_custom_call.1} parent=11 // pred_check_branch
          %240 = sbr.rel (%p238) target = $region28
        $region27: #{tpu_custom_call.1} parent=11 // pred_region
          %242 = vsyncadd [#allocation6], 0
          %s243 = sshll.u32 %s5, 4
          %s244 = int_to_ptr.hbm [resolvable:$true] %s243
          %s245 = sshll.u32 [#allocation8], 4
          %s246 = int_to_ptr.vmem [resolvable:$true] %s245
          %251 = dma.hbm_to_vmem [thread:$0]  %s244, 6144, %s246, [#allocation6], 256, 256, 16
        $region28: #{tpu_custom_call.1} parent=11 // pred_fallthru
          _
        // Predicated region
        $region29: #{tpu_custom_call.1} parent=11 // pred_check
          %p252 = pneg %p177
        $region30: #{tpu_custom_call.1} parent=11 // pred_check_branch
          %254 = sbr.rel (%p252) target = $region32
        $region31: #{tpu_custom_call.1} parent=11 // pred_region
          _
        $region32: #{tpu_custom_call.1} parent=11 // pred_fallthru
          _
      $region12: #{tpu_custom_call.1} parent=5 // pred_fallthru
        _
      %p255 = scmp.lt.s32.totalorder %s20, 2
      // Predicated region
      $region33: #{tpu_custom_call.1} parent=5 // pred_check
        %p256 = pneg %p255
      $region34: #{tpu_custom_call.1} parent=5 // pred_check_branch
        %258 = sbr.rel (%p256) target = $region36
      $region35: #{tpu_custom_call.1} parent=5 // pred_region
        // Predicated region
        $region37: #{tpu_custom_call.1} parent=35 // pred_check
          %p259 = pneg %p40
        $region38: #{tpu_custom_call.1} parent=35 // pred_check_branch
          %261 = sbr.rel (%p259) target = $region40
        $region39: #{tpu_custom_call.1} parent=35 // pred_region
          %s262 = sand.u32 %s20, 1
          %s263 = scalar_lea.sflag [#allocation3], %s262
          %s264 = sand.u32 %s30, 1
          %s265 = smul.addr %s264, 772
          %s266 = scalar_lea.vmem [#allocation2], %s265
          %268 = vsyncadd %s263, 0
          %s269 = smul.addr %s20, 193
          %s270 = smul.addr %s269, 4
          %s271 = scalar_lea.hbm %s0, %s270
          %s272 = sshll.u32 %s271, 4
          %s273 = int_to_ptr.hbm [resolvable:$true] %s272
          %s274 = sshll.u32 %s266, 4
          %s275 = int_to_ptr.vmem [resolvable:$true] %s274
          %280 = dma.hbm_to_vmem [thread:$0]  %s273, 12352, %s275, %s263, 64, 64, 4
        $region40: #{tpu_custom_call.1} parent=35 // pred_fallthru
          _
        // Predicated region
        $region41: #{tpu_custom_call.1} parent=35 // pred_check
          %p281 = pneg %p129
        $region42: #{tpu_custom_call.1} parent=35 // pred_check_branch
          %283 = sbr.rel (%p281) target = $region44
        $region43: #{tpu_custom_call.1} parent=35 // pred_region
          %s284 = sand.u32 %s20, 1
          %s285 = scalar_lea.sflag [#allocation3], %s284
          %s286 = sand.u32 %s119, 1
          %s287 = scalar_lea.vmem [#allocation7], %s286
          %289 = vsyncadd %s285, 0
          %s290 = scalar_lea.hbm %s4, %s20
          %s292 = sshll.u32 %s290, 4
          %s293 = int_to_ptr.hbm [resolvable:$true] %s292
          %s294 = sshll.u32 %s287, 4
          %s295 = int_to_ptr.vmem [resolvable:$true] %s294
          %297 = dma.hbm_to_vmem [thread:$0]  %s293, 16, %s295, %s285
        $region44: #{tpu_custom_call.1} parent=35 // pred_fallthru
          _
      $region36: #{tpu_custom_call.1} parent=5 // pred_fallthru
        _
      %p298 = scmp.le.s32.totalorder 1, %s20
      %p299 = scmp.lt.s32.totalorder %s20, 3
      %p300 = pnand %p298, %p299
      %p301 = pneg %p300
      // Predicated region
      $region45: #{tpu_custom_call.1} parent=5 // pred_check
        _
      $region46: #{tpu_custom_call.1} parent=5 // pred_check_branch
        %303 = sbr.rel (%p300) target = $region48
      $region47: #{tpu_custom_call.1} parent=5 // pred_region
        %s304 = ssub.s32 %s20, 1
        %s305 = sand.u32 %s25, 1
        %s306 = scalar_lea.sflag [#allocation3], %s305
        %s307 = sand.u32 %s33, 1
        %s308 = smul.addr %s307, 772
        %s309 = scalar_lea.vmem [#allocation2], %s308
        // Predicated region
        $region49: #{tpu_custom_call.1} parent=47 // pred_check
          %p310 = pneg %p46
        $region50: #{tpu_custom_call.1} parent=47 // pred_check_branch
          %312 = sbr.rel (%p310) target = $region52
        $region51: #{tpu_custom_call.1} parent=47 // pred_region
          %314 = dma.done %s306, 12352
        $region52: #{tpu_custom_call.1} parent=47 // pred_fallthru
          _
        // Predicated region
        $region53: #{tpu_custom_call.1} parent=47 // pred_check
          %p315 = pneg %p88
        $region54: #{tpu_custom_call.1} parent=47 // pred_check_branch
          %317 = sbr.rel (%p315) target = $region56
        $region55: #{tpu_custom_call.1} parent=47 // pred_region
          %319 = dma.done [#allocation6], 1024
        $region56: #{tpu_custom_call.1} parent=47 // pred_fallthru
          _
        %s320 = sand.u32 %s25, 1
        %s321 = scalar_lea.sflag [#allocation3], %s320
        %s322 = sand.u32 %s122, 1
        %s323 = scalar_lea.vmem [#allocation7], %s322
        // Predicated region
        $region57: #{tpu_custom_call.1} parent=47 // pred_check
          %p324 = pneg %p135
        $region58: #{tpu_custom_call.1} parent=47 // pred_check_branch
          %326 = sbr.rel (%p324) target = $region60
        $region59: #{tpu_custom_call.1} parent=47 // pred_region
          %328 = dma.done %s321, 16
        $region60: #{tpu_custom_call.1} parent=47 // pred_fallthru
          _
        // Predicated region
        $region61: #{tpu_custom_call.1} parent=47 // pred_check
          %p329 = pneg %p156
        $region62: #{tpu_custom_call.1} parent=47 // pred_check_branch
          %331 = sbr.rel (%p329) target = $region64
        $region63: #{tpu_custom_call.1} parent=47 // pred_region
          %333 = dma.done [#allocation6], 6144
        $region64: #{tpu_custom_call.1} parent=47 // pred_fallthru
          _
        %s334 = sand.u32 %s25, 1
        %s335 = scalar_lea.sflag [#allocation3], %s334
        %s336 = sand.u32 %s33, 1
        %s337 = smul.addr %s336, 772
        %s338 = scalar_lea.vmem [#allocation2], %s337
        %p339 = pneg %p46
        %p340 = pneg %p43
        %p341 = pneg %p67
        %p342 = pneg %p64
        %p343 = pneg %p88
        %p344 = pneg %p85
        %p345 = pneg %p109
        %p346 = pneg %p106
        %s347 = sand.u32 %s25, 1
        %s348 = scalar_lea.sflag [#allocation3], %s347
        %s349 = sand.u32 %s122, 1
        %s350 = scalar_lea.vmem [#allocation7], %s349
        %p351 = pneg %p135
        %p352 = pneg %p132
        %p353 = pneg %p156
        %p354 = pneg %p153
        %p355 = pneg %p177
        %p356 = pneg %p174
        %p357 = pneg %p203
        %p358 = pneg %p200
        %s359 = sand.u32 %s190, 1
        %s360 = scalar_lea.sflag [#allocation4], %s359
        %s361 = sand.u32 %s190, 1
        %s362 = smul.addr %s361, 192
        %s363 = scalar_lea.vmem [#allocation9], %s362
        %v364 = vld [vmem:[%s309] sm:$0xf]
        %v365 = vld [vmem:[%s309 + $0x4] sm:$0xf]
        %v366 = vld [vmem:[%s309 + $0x8] sm:$0xf]
        %v367 = vld [vmem:[%s309 + $0xc] sm:$0xf]
        %v368 = vld [vmem:[%s309 + $0x10] sm:$0xf]
        %v369 = vld [vmem:[%s309 + $0x14] sm:$0xf]
        %v370 = vld [vmem:[%s309 + $0x18] sm:$0xf]
        %v371 = vld [vmem:[%s309 + $0x1c] sm:$0xf]
        %v372 = vld [vmem:[%s309 + $0x20] sm:$0xf]
        %v373 = vld [vmem:[%s309 + $0x24] sm:$0xf]
        %v374 = vld [vmem:[%s309 + $0x28] sm:$0xf]
        %v375 = vld [vmem:[%s309 + $0x2c] sm:$0xf]
        %v376 = vld [vmem:[%s309 + $0x30] sm:$0xf]
        %v377 = vld [vmem:[%s309 + $0x34] sm:$0xf]
        %v378 = vld [vmem:[%s309 + $0x38] sm:$0xf]
        %v379 = vld [vmem:[%s309 + $0x3c] sm:$0xf]
        %v380 = vld [vmem:[%s309 + $0x40] sm:$0xf]
        %v381 = vld [vmem:[%s309 + $0x44] sm:$0xf]
        %v382 = vld [vmem:[%s309 + $0x48] sm:$0xf]
        %v383 = vld [vmem:[%s309 + $0x4c] sm:$0xf]
        %v384 = vld [vmem:[%s309 + $0x50] sm:$0xf]
        %v385 = vld [vmem:[%s309 + $0x54] sm:$0xf]
        %v386 = vld [vmem:[%s309 + $0x58] sm:$0xf]
        %v387 = vld [vmem:[%s309 + $0x5c] sm:$0xf]
        %v388 = vld [vmem:[%s309 + $0x60] sm:$0xf]
        %v389 = vld [vmem:[%s309 + $0x64] sm:$0xf]
        %v390 = vld [vmem:[%s309 + $0x68] sm:$0xf]
        %v391 = vld [vmem:[%s309 + $0x6c] sm:$0xf]
        %v392 = vld [vmem:[%s309 + $0x70] sm:$0xf]
        %v393 = vld [vmem:[%s309 + $0x74] sm:$0xf]
        %v394 = vld [vmem:[%s309 + $0x78] sm:$0xf]
        %v395 = vld [vmem:[%s309 + $0x7c] sm:$0xf]
        %v396 = vld [vmem:[%s309 + $0x80] sm:$0xf]
        %v397 = vld [vmem:[%s309 + $0x84] sm:$0xf]
        %v398 = vld [vmem:[%s309 + $0x88] sm:$0xf]
        %v399 = vld [vmem:[%s309 + $0x8c] sm:$0xf]
        %v400 = vld [vmem:[%s309 + $0x90] sm:$0xf]
        %v401 = vld [vmem:[%s309 + $0x94] sm:$0xf]
        %v402 = vld [vmem:[%s309 + $0x98] sm:$0xf]
        %v403 = vld [vmem:[%s309 + $0x9c] sm:$0xf]
        %v404 = vld [vmem:[%s309 + $0xa0] sm:$0xf]
        %v405 = vld [vmem:[%s309 + $0xa4] sm:$0xf]
        %v406 = vld [vmem:[%s309 + $0xa8] sm:$0xf]
        %v407 = vld [vmem:[%s309 + $0xac] sm:$0xf]
        %v408 = vld [vmem:[%s309 + $0xb0] sm:$0xf]
        %v409 = vld [vmem:[%s309 + $0xb4] sm:$0xf]
        %v410 = vld [vmem:[%s309 + $0xb8] sm:$0xf]
        %v411 = vld [vmem:[%s309 + $0xbc] sm:$0xf]
        %v412 = vld [vmem:[%s309 + $0xc0] sm:$0xf]
        %v413 = vld [vmem:[%s309 + $0xc4] sm:$0xf]
        %v414 = vld [vmem:[%s309 + $0xc8] sm:$0xf]
        %v415 = vld [vmem:[%s309 + $0xcc] sm:$0xf]
        %v416 = vld [vmem:[%s309 + $0xd0] sm:$0xf]
        %v417 = vld [vmem:[%s309 + $0xd4] sm:$0xf]
        %v418 = vld [vmem:[%s309 + $0xd8] sm:$0xf]
        %v419 = vld [vmem:[%s309 + $0xdc] sm:$0xf]
        %v420 = vld [vmem:[%s309 + $0xe0] sm:$0xf]
        %v421 = vld [vmem:[%s309 + $0xe4] sm:$0xf]
        %v422 = vld [vmem:[%s309 + $0xe8] sm:$0xf]
        %v423 = vld [vmem:[%s309 + $0xec] sm:$0xf]
        %v424 = vld [vmem:[%s309 + $0xf0] sm:$0xf]
        %v425 = vld [vmem:[%s309 + $0xf4] sm:$0xf]
        %v426 = vld [vmem:[%s309 + $0xf8] sm:$0xf]
        %v427 = vld [vmem:[%s309 + $0xfc] sm:$0xf]
        %v428 = vld [vmem:[%s309 + $0x100] sm:$0xf]
        %v429 = vld [vmem:[%s309 + $0x104] sm:$0xf]
        %v430 = vld [vmem:[%s309 + $0x108] sm:$0xf]
        %v431 = vld [vmem:[%s309 + $0x10c] sm:$0xf]
        %v432 = vld [vmem:[%s309 + $0x110] sm:$0xf]
        %v433 = vld [vmem:[%s309 + $0x114] sm:$0xf]
        %v434 = vld [vmem:[%s309 + $0x118] sm:$0xf]
        %v435 = vld [vmem:[%s309 + $0x11c] sm:$0xf]
        %v436 = vld [vmem:[%s309 + $0x120] sm:$0xf]
        %v437 = vld [vmem:[%s309 + $0x124] sm:$0xf]
        %v438 = vld [vmem:[%s309 + $0x128] sm:$0xf]
        %v439 = vld [vmem:[%s309 + $0x12c] sm:$0xf]
        %v440 = vld [vmem:[%s309 + $0x130] sm:$0xf]
        %v441 = vld [vmem:[%s309 + $0x134] sm:$0xf]
        %v442 = vld [vmem:[%s309 + $0x138] sm:$0xf]
        %v443 = vld [vmem:[%s309 + $0x13c] sm:$0xf]
        %v444 = vld [vmem:[%s309 + $0x140] sm:$0xf]
        %v445 = vld [vmem:[%s309 + $0x144] sm:$0xf]
        %v446 = vld [vmem:[%s309 + $0x148] sm:$0xf]
        %v447 = vld [vmem:[%s309 + $0x14c] sm:$0xf]
        %v448 = vld [vmem:[%s309 + $0x150] sm:$0xf]
        %v449 = vld [vmem:[%s309 + $0x154] sm:$0xf]
        %v450 = vld [vmem:[%s309 + $0x158] sm:$0xf]
        %v451 = vld [vmem:[%s309 + $0x15c] sm:$0xf]
        %v452 = vld [vmem:[%s309 + $0x160] sm:$0xf]
        %v453 = vld [vmem:[%s309 + $0x164] sm:$0xf]
        %v454 = vld [vmem:[%s309 + $0x168] sm:$0xf]
        %v455 = vld [vmem:[%s309 + $0x16c] sm:$0xf]
        %v456 = vld [vmem:[%s309 + $0x170] sm:$0xf]
        %v457 = vld [vmem:[%s309 + $0x174] sm:$0xf]
        %v458 = vld [vmem:[%s309 + $0x178] sm:$0xf]
        %v459 = vld [vmem:[%s309 + $0x17c] sm:$0xf]
        %v460 = vld [vmem:[%s309 + $0x180] sm:$0xf]
        %v461 = vld [vmem:[%s309 + $0x184] sm:$0xf]
        %v462 = vld [vmem:[%s309 + $0x188] sm:$0xf]
        %v463 = vld [vmem:[%s309 + $0x18c] sm:$0xf]
        %v464 = vld [vmem:[%s309 + $0x190] sm:$0xf]
        %v465 = vld [vmem:[%s309 + $0x194] sm:$0xf]
        %v466 = vld [vmem:[%s309 + $0x198] sm:$0xf]
        %v467 = vld [vmem:[%s309 + $0x19c] sm:$0xf]
        %v468 = vld [vmem:[%s309 + $0x1a0] sm:$0xf]
        %v469 = vld [vmem:[%s309 + $0x1a4] sm:$0xf]
        %v470 = vld [vmem:[%s309 + $0x1a8] sm:$0xf]
        %v471 = vld [vmem:[%s309 + $0x1ac] sm:$0xf]
        %v472 = vld [vmem:[%s309 + $0x1b0] sm:$0xf]
        %v473 = vld [vmem:[%s309 + $0x1b4] sm:$0xf]
        %v474 = vld [vmem:[%s309 + $0x1b8] sm:$0xf]
        %v475 = vld [vmem:[%s309 + $0x1bc] sm:$0xf]
        %v476 = vld [vmem:[%s309 + $0x1c0] sm:$0xf]
        %v477 = vld [vmem:[%s309 + $0x1c4] sm:$0xf]
        %v478 = vld [vmem:[%s309 + $0x1c8] sm:$0xf]
        %v479 = vld [vmem:[%s309 + $0x1cc] sm:$0xf]
        %v480 = vld [vmem:[%s309 + $0x1d0] sm:$0xf]
        %v481 = vld [vmem:[%s309 + $0x1d4] sm:$0xf]
        %v482 = vld [vmem:[%s309 + $0x1d8] sm:$0xf]
        %v483 = vld [vmem:[%s309 + $0x1dc] sm:$0xf]
        %v484 = vld [vmem:[%s309 + $0x1e0] sm:$0xf]
        %v485 = vld [vmem:[%s309 + $0x1e4] sm:$0xf]
        %v486 = vld [vmem:[%s309 + $0x1e8] sm:$0xf]
        %v487 = vld [vmem:[%s309 + $0x1ec] sm:$0xf]
        %v488 = vld [vmem:[%s309 + $0x1f0] sm:$0xf]
        %v489 = vld [vmem:[%s309 + $0x1f4] sm:$0xf]
        %v490 = vld [vmem:[%s309 + $0x1f8] sm:$0xf]
        %v491 = vld [vmem:[%s309 + $0x1fc] sm:$0xf]
        %v492 = vld [vmem:[%s309 + $0x200] sm:$0xf]
        %v493 = vld [vmem:[%s309 + $0x204] sm:$0xf]
        %v494 = vld [vmem:[%s309 + $0x208] sm:$0xf]
        %v495 = vld [vmem:[%s309 + $0x20c] sm:$0xf]
        %v496 = vld [vmem:[%s309 + $0x210] sm:$0xf]
        %v497 = vld [vmem:[%s309 + $0x214] sm:$0xf]
        %v498 = vld [vmem:[%s309 + $0x218] sm:$0xf]
        %v499 = vld [vmem:[%s309 + $0x21c] sm:$0xf]
        %v500 = vld [vmem:[%s309 + $0x220] sm:$0xf]
        %v501 = vld [vmem:[%s309 + $0x224] sm:$0xf]
        %v502 = vld [vmem:[%s309 + $0x228] sm:$0xf]
        %v503 = vld [vmem:[%s309 + $0x22c] sm:$0xf]
        %v504 = vld [vmem:[%s309 + $0x230] sm:$0xf]
        %v505 = vld [vmem:[%s309 + $0x234] sm:$0xf]
        %v506 = vld [vmem:[%s309 + $0x238] sm:$0xf]
        %v507 = vld [vmem:[%s309 + $0x23c] sm:$0xf]
        %v508 = vld [vmem:[%s309 + $0x240] sm:$0xf]
        %v509 = vld [vmem:[%s309 + $0x244] sm:$0xf]
        %v510 = vld [vmem:[%s309 + $0x248] sm:$0xf]
        %v511 = vld [vmem:[%s309 + $0x24c] sm:$0xf]
        %v512 = vld [vmem:[%s309 + $0x250] sm:$0xf]
        %v513 = vld [vmem:[%s309 + $0x254] sm:$0xf]
        %v514 = vld [vmem:[%s309 + $0x258] sm:$0xf]
        %v515 = vld [vmem:[%s309 + $0x25c] sm:$0xf]
        %v516 = vld [vmem:[%s309 + $0x260] sm:$0xf]
        %v517 = vld [vmem:[%s309 + $0x264] sm:$0xf]
        %v518 = vld [vmem:[%s309 + $0x268] sm:$0xf]
        %v519 = vld [vmem:[%s309 + $0x26c] sm:$0xf]
        %v520 = vld [vmem:[%s309 + $0x270] sm:$0xf]
        %v521 = vld [vmem:[%s309 + $0x274] sm:$0xf]
        %v522 = vld [vmem:[%s309 + $0x278] sm:$0xf]
        %v523 = vld [vmem:[%s309 + $0x27c] sm:$0xf]
        %v524 = vld [vmem:[%s309 + $0x280] sm:$0xf]
        %v525 = vld [vmem:[%s309 + $0x284] sm:$0xf]
        %v526 = vld [vmem:[%s309 + $0x288] sm:$0xf]
        %v527 = vld [vmem:[%s309 + $0x28c] sm:$0xf]
        %v528 = vld [vmem:[%s309 + $0x290] sm:$0xf]
        %v529 = vld [vmem:[%s309 + $0x294] sm:$0xf]
        %v530 = vld [vmem:[%s309 + $0x298] sm:$0xf]
        %v531 = vld [vmem:[%s309 + $0x29c] sm:$0xf]
        %v532 = vld [vmem:[%s309 + $0x2a0] sm:$0xf]
        %v533 = vld [vmem:[%s309 + $0x2a4] sm:$0xf]
        %v534 = vld [vmem:[%s309 + $0x2a8] sm:$0xf]
        %v535 = vld [vmem:[%s309 + $0x2ac] sm:$0xf]
        %v536 = vld [vmem:[%s309 + $0x2b0] sm:$0xf]
        %v537 = vld [vmem:[%s309 + $0x2b4] sm:$0xf]
        %v538 = vld [vmem:[%s309 + $0x2b8] sm:$0xf]
        %v539 = vld [vmem:[%s309 + $0x2bc] sm:$0xf]
        %v540 = vld [vmem:[%s309 + $0x2c0] sm:$0xf]
        %v541 = vld [vmem:[%s309 + $0x2c4] sm:$0xf]
        %v542 = vld [vmem:[%s309 + $0x2c8] sm:$0xf]
        %v543 = vld [vmem:[%s309 + $0x2cc] sm:$0xf]
        %v544 = vld [vmem:[%s309 + $0x2d0] sm:$0xf]
        %v545 = vld [vmem:[%s309 + $0x2d4] sm:$0xf]
        %v546 = vld [vmem:[%s309 + $0x2d8] sm:$0xf]
        %v547 = vld [vmem:[%s309 + $0x2dc] sm:$0xf]
        %v548 = vld [vmem:[%s309 + $0x2e0] sm:$0xf]
        %v549 = vld [vmem:[%s309 + $0x2e4] sm:$0xf]
        %v550 = vld [vmem:[%s309 + $0x2e8] sm:$0xf]
        %v551 = vld [vmem:[%s309 + $0x2ec] sm:$0xf]
        %v552 = vld [vmem:[%s309 + $0x2f0] sm:$0xf]
        %v553 = vld [vmem:[%s309 + $0x2f4] sm:$0xf]
        %v554 = vld [vmem:[%s309 + $0x2f8] sm:$0xf]
        %v555 = vld [vmem:[%s309 + $0x2fc] sm:$0xf]
        %v556 = vld [vmem:[%s309 + $0x300] sm:$0xf]
        %v557 = vld [vmem:[%s1] sm:$0xff]
        %v558 = vld [vmem:[%s1 + $0x8] sm:$0xf]
        %v559 = vld [vmem:[%s1 + $0xc] sm:$0xff]
        %v560 = vld [vmem:[%s1 + $0x14] sm:$0xf]
        %v561 = vld [vmem:[%s1 + $0x18] sm:$0xff]
        %v562 = vld [vmem:[%s1 + $0x20] sm:$0xf]
        %v563 = vld [vmem:[%s1 + $0x24] sm:$0xff]
        %v564 = vld [vmem:[%s1 + $0x2c] sm:$0xf]
        %v565 = vld [vmem:[%s1 + $0x30] sm:$0xff]
        %v566 = vld [vmem:[%s1 + $0x38] sm:$0xf]
        %v567 = vld [vmem:[%s1 + $0x3c] sm:$0xff]
        %v568 = vld [vmem:[%s1 + $0x44] sm:$0xf]
        %v569 = vld [vmem:[%s1 + $0x48] sm:$0xff]
        %v570 = vld [vmem:[%s1 + $0x50] sm:$0xf]
        %v571 = vld [vmem:[%s1 + $0x54] sm:$0xff]
        %v572 = vld [vmem:[%s1 + $0x5c] sm:$0xf]
        %v573 = vld [vmem:[%s1 + $0x60] sm:$0xff]
        %v574 = vld [vmem:[%s1 + $0x68] sm:$0xf]
        %v575 = vld [vmem:[%s1 + $0x6c] sm:$0xff]
        %v576 = vld [vmem:[%s1 + $0x74] sm:$0xf]
        %v577 = vld [vmem:[%s1 + $0x78] sm:$0xff]
        %v578 = vld [vmem:[%s1 + $0x80] sm:$0xf]
        %v579 = vld [vmem:[%s1 + $0x84] sm:$0xff]
        %v580 = vld [vmem:[%s1 + $0x8c] sm:$0xf]
        %v581 = vld [vmem:[%s1 + $0x90] sm:$0xff]
        %v582 = vld [vmem:[%s1 + $0x98] sm:$0xf]
        %v583 = vld [vmem:[%s1 + $0x9c] sm:$0xff]
        %v584 = vld [vmem:[%s1 + $0xa4] sm:$0xf]
        %v585 = vld [vmem:[%s1 + $0xa8] sm:$0xff]
        %v586 = vld [vmem:[%s1 + $0xb0] sm:$0xf]
        %v587 = vld [vmem:[%s1 + $0xb4] sm:$0xff]
        %v588 = vld [vmem:[%s1 + $0xbc] sm:$0xf]
        %v589 = vld [vmem:[%s3] sm:$0x7]
        %v591 = vperm.slane %v589, 0
        %v592 = vperm.slane %v589, 1
        %v593 = vperm.slane %v589, 2
        %v790 = vunpack.c.l.b16 %v364
        %v791 = vunpack.c.l.b16 %v365
        %v792 = vunpack.c.l.b16 %v366
        %v793 = vunpack.c.l.b16 %v367
        %v794 = vunpack.c.l.b16 %v368
        %v795 = vunpack.c.l.b16 %v369
        %v796 = vunpack.c.l.b16 %v370
        %v797 = vunpack.c.l.b16 %v371
        %v798 = vunpack.c.l.b16 %v372
        %v799 = vunpack.c.l.b16 %v373
        %v800 = vunpack.c.l.b16 %v374
        %v801 = vunpack.c.l.b16 %v375
        %v802 = vunpack.c.l.b16 %v376
        %v803 = vunpack.c.l.b16 %v377
        %v804 = vunpack.c.l.b16 %v378
        %v805 = vunpack.c.l.b16 %v379
        %v806 = vunpack.c.l.b16 %v380
        %v807 = vunpack.c.l.b16 %v381
        %v808 = vunpack.c.l.b16 %v382
        %v809 = vunpack.c.l.b16 %v383
        %v810 = vunpack.c.l.b16 %v384
        %v811 = vunpack.c.l.b16 %v385
        %v812 = vunpack.c.l.b16 %v386
        %v813 = vunpack.c.l.b16 %v387
        %v814 = vunpack.c.l.b16 %v388
        %v815 = vunpack.c.l.b16 %v389
        %v816 = vunpack.c.l.b16 %v390
        %v817 = vunpack.c.l.b16 %v391
        %v818 = vunpack.c.l.b16 %v392
        %v819 = vunpack.c.l.b16 %v393
        %v820 = vunpack.c.l.b16 %v394
        %v821 = vunpack.c.l.b16 %v395
        %v822 = vunpack.c.l.b16 %v396
        %v823 = vunpack.c.l.b16 %v397
        %v824 = vunpack.c.l.b16 %v398
        %v825 = vunpack.c.l.b16 %v399
        %v826 = vunpack.c.l.b16 %v400
        %v827 = vunpack.c.l.b16 %v401
        %v828 = vunpack.c.l.b16 %v402
        %v829 = vunpack.c.l.b16 %v403
        %v830 = vunpack.c.l.b16 %v404
        %v831 = vunpack.c.l.b16 %v405
        %v832 = vunpack.c.l.b16 %v406
        %v833 = vunpack.c.l.b16 %v407
        %v834 = vunpack.c.l.b16 %v408
        %v835 = vunpack.c.l.b16 %v409
        %v836 = vunpack.c.l.b16 %v410
        %v837 = vunpack.c.l.b16 %v411
        %v838 = vunpack.c.l.b16 %v412
        %v839 = vunpack.c.l.b16 %v413
        %v840 = vunpack.c.l.b16 %v414
        %v841 = vunpack.c.l.b16 %v415
        %v842 = vunpack.c.l.b16 %v416
        %v843 = vunpack.c.l.b16 %v417
        %v844 = vunpack.c.l.b16 %v418
        %v845 = vunpack.c.l.b16 %v419
        %v846 = vunpack.c.l.b16 %v420
        %v847 = vunpack.c.l.b16 %v421
        %v848 = vunpack.c.l.b16 %v422
        %v849 = vunpack.c.l.b16 %v423
        %v850 = vunpack.c.l.b16 %v424
        %v851 = vunpack.c.l.b16 %v425
        %v852 = vunpack.c.l.b16 %v426
        %v853 = vunpack.c.l.b16 %v427
        %v854 = vunpack.c.l.b16 %v428
        %v855 = vunpack.c.l.b16 %v429
        %v856 = vunpack.c.l.b16 %v430
        %v857 = vunpack.c.l.b16 %v431
        %v858 = vunpack.c.l.b16 %v432
        %v859 = vunpack.c.l.b16 %v433
        %v860 = vunpack.c.l.b16 %v434
        %v861 = vunpack.c.l.b16 %v435
        %v862 = vunpack.c.l.b16 %v436
        %v863 = vunpack.c.l.b16 %v437
        %v864 = vunpack.c.l.b16 %v438
        %v865 = vunpack.c.l.b16 %v439
        %v866 = vunpack.c.l.b16 %v440
        %v867 = vunpack.c.l.b16 %v441
        %v868 = vunpack.c.l.b16 %v442
        %v869 = vunpack.c.l.b16 %v443
        %v870 = vunpack.c.l.b16 %v444
        %v871 = vunpack.c.l.b16 %v445
        %v872 = vunpack.c.l.b16 %v446
        %v873 = vunpack.c.l.b16 %v447
        %v874 = vunpack.c.l.b16 %v448
        %v875 = vunpack.c.l.b16 %v449
        %v876 = vunpack.c.l.b16 %v450
        %v877 = vunpack.c.l.b16 %v451
        %v878 = vunpack.c.l.b16 %v452
        %v879 = vunpack.c.l.b16 %v453
        %v880 = vunpack.c.l.b16 %v454
        %v881 = vunpack.c.l.b16 %v455
        %v882 = vunpack.c.l.b16 %v456
        %v883 = vunpack.c.l.b16 %v457
        %v884 = vunpack.c.l.b16 %v458
        %v885 = vunpack.c.l.b16 %v459
        %v886 = vunpack.c.l.b16 %v460
        %v887 = vunpack.c.l.b16 %v461
        %v888 = vunpack.c.l.b16 %v462
        %v889 = vunpack.c.l.b16 %v463
        %v890 = vunpack.c.l.b16 %v464
        %v891 = vunpack.c.l.b16 %v465
        %v892 = vunpack.c.l.b16 %v466
        %v893 = vunpack.c.l.b16 %v467
        %v894 = vunpack.c.l.b16 %v468
        %v895 = vunpack.c.l.b16 %v469
        %v896 = vunpack.c.l.b16 %v470
        %v897 = vunpack.c.l.b16 %v471
        %v898 = vunpack.c.l.b16 %v472
        %v899 = vunpack.c.l.b16 %v473
        %v900 = vunpack.c.l.b16 %v474
        %v901 = vunpack.c.l.b16 %v475
        %v902 = vunpack.c.l.b16 %v476
        %v903 = vunpack.c.l.b16 %v477
        %v904 = vunpack.c.l.b16 %v478
        %v905 = vunpack.c.l.b16 %v479
        %v906 = vunpack.c.l.b16 %v480
        %v907 = vunpack.c.l.b16 %v481
        %v908 = vunpack.c.l.b16 %v482
        %v909 = vunpack.c.l.b16 %v483
        %v910 = vunpack.c.l.b16 %v484
        %v911 = vunpack.c.l.b16 %v485
        %v912 = vunpack.c.l.b16 %v486
        %v913 = vunpack.c.l.b16 %v487
        %v914 = vunpack.c.l.b16 %v488
        %v915 = vunpack.c.l.b16 %v489
        %v916 = vunpack.c.l.b16 %v490
        %v917 = vunpack.c.l.b16 %v491
        %v918 = vunpack.c.l.b16 %v492
        %v919 = vunpack.c.l.b16 %v493
        %v920 = vunpack.c.l.b16 %v494
        %v921 = vunpack.c.l.b16 %v495
        %v922 = vunpack.c.l.b16 %v496
        %v923 = vunpack.c.l.b16 %v497
        %v924 = vunpack.c.l.b16 %v498
        %v925 = vunpack.c.l.b16 %v499
        %v926 = vunpack.c.l.b16 %v500
        %v927 = vunpack.c.l.b16 %v501
        %v928 = vunpack.c.l.b16 %v502
        %v929 = vunpack.c.l.b16 %v503
        %v930 = vunpack.c.l.b16 %v504
        %v931 = vunpack.c.l.b16 %v505
        %v932 = vunpack.c.l.b16 %v506
        %v933 = vunpack.c.l.b16 %v507
        %v934 = vunpack.c.l.b16 %v508
        %v935 = vunpack.c.l.b16 %v509
        %v936 = vunpack.c.l.b16 %v510
        %v937 = vunpack.c.l.b16 %v511
        %v938 = vunpack.c.l.b16 %v512
        %v939 = vunpack.c.l.b16 %v513
        %v940 = vunpack.c.l.b16 %v514
        %v941 = vunpack.c.l.b16 %v515
        %v942 = vunpack.c.l.b16 %v516
        %v943 = vunpack.c.l.b16 %v517
        %v944 = vunpack.c.l.b16 %v518
        %v945 = vunpack.c.l.b16 %v519
        %v946 = vunpack.c.l.b16 %v520
        %v947 = vunpack.c.l.b16 %v521
        %v948 = vunpack.c.l.b16 %v522
        %v949 = vunpack.c.l.b16 %v523
        %v950 = vunpack.c.l.b16 %v524
        %v951 = vunpack.c.l.b16 %v525
        %v952 = vunpack.c.l.b16 %v526
        %v953 = vunpack.c.l.b16 %v527
        %v954 = vunpack.c.l.b16 %v528
        %v955 = vunpack.c.l.b16 %v529
        %v956 = vunpack.c.l.b16 %v530
        %v957 = vunpack.c.l.b16 %v531
        %v958 = vunpack.c.l.b16 %v532
        %v959 = vunpack.c.l.b16 %v533
        %v960 = vunpack.c.l.b16 %v534
        %v961 = vunpack.c.l.b16 %v535
        %v962 = vunpack.c.l.b16 %v536
        %v963 = vunpack.c.l.b16 %v537
        %v964 = vunpack.c.l.b16 %v538
        %v965 = vunpack.c.l.b16 %v539
        %v966 = vunpack.c.l.b16 %v540
        %v967 = vunpack.c.l.b16 %v541
        %v968 = vunpack.c.l.b16 %v542
        %v969 = vunpack.c.l.b16 %v543
        %v970 = vunpack.c.l.b16 %v544
        %v971 = vunpack.c.l.b16 %v545
        %v972 = vunpack.c.l.b16 %v546
        %v973 = vunpack.c.l.b16 %v547
        %v974 = vunpack.c.l.b16 %v548
        %v975 = vunpack.c.l.b16 %v549
        %v976 = vunpack.c.l.b16 %v550
        %v977 = vunpack.c.l.b16 %v551
        %v978 = vunpack.c.l.b16 %v552
        %v979 = vunpack.c.l.b16 %v553
        %v980 = vunpack.c.l.b16 %v554
        %v981 = vunpack.c.l.b16 %v555
        %v982 = vunpack.c.l.b16 %v556
        %v983 = vpack.c.b16 %v791, %v790
        %v984 = vpack.c.b16 %v793, %v792
        %v985 = vpack.c.b16 %v795, %v794
        %v986 = vpack.c.b16 %v797, %v796
        %v987 = vpack.c.b16 %v799, %v798
        %v988 = vpack.c.b16 %v801, %v800
        %v989 = vpack.c.b16 %v803, %v802
        %v990 = vpack.c.b16 %v805, %v804
        %v991 = vpack.c.b16 %v807, %v806
        %v992 = vpack.c.b16 %v809, %v808
        %v993 = vpack.c.b16 %v811, %v810
        %v994 = vpack.c.b16 %v813, %v812
        %v995 = vpack.c.b16 %v815, %v814
        %v996 = vpack.c.b16 %v817, %v816
        %v997 = vpack.c.b16 %v819, %v818
        %v998 = vpack.c.b16 %v821, %v820
        %v999 = vpack.c.b16 %v823, %v822
        %v1000 = vpack.c.b16 %v825, %v824
        %v1001 = vpack.c.b16 %v827, %v826
        %v1002 = vpack.c.b16 %v829, %v828
        %v1003 = vpack.c.b16 %v831, %v830
        %v1004 = vpack.c.b16 %v833, %v832
        %v1005 = vpack.c.b16 %v835, %v834
        %v1006 = vpack.c.b16 %v837, %v836
        %v1007 = vpack.c.b16 %v839, %v838
        %v1008 = vpack.c.b16 %v841, %v840
        %v1009 = vpack.c.b16 %v843, %v842
        %v1010 = vpack.c.b16 %v845, %v844
        %v1011 = vpack.c.b16 %v847, %v846
        %v1012 = vpack.c.b16 %v849, %v848
        %v1013 = vpack.c.b16 %v851, %v850
        %v1014 = vpack.c.b16 %v853, %v852
        %v1015 = vpack.c.b16 %v855, %v854
        %v1016 = vpack.c.b16 %v857, %v856
        %v1017 = vpack.c.b16 %v859, %v858
        %v1018 = vpack.c.b16 %v861, %v860
        %v1019 = vpack.c.b16 %v863, %v862
        %v1020 = vpack.c.b16 %v865, %v864
        %v1021 = vpack.c.b16 %v867, %v866
        %v1022 = vpack.c.b16 %v869, %v868
        %v1023 = vpack.c.b16 %v871, %v870
        %v1024 = vpack.c.b16 %v873, %v872
        %v1025 = vpack.c.b16 %v875, %v874
        %v1026 = vpack.c.b16 %v877, %v876
        %v1027 = vpack.c.b16 %v879, %v878
        %v1028 = vpack.c.b16 %v881, %v880
        %v1029 = vpack.c.b16 %v883, %v882
        %v1030 = vpack.c.b16 %v885, %v884
        %v1031 = vpack.c.b16 %v887, %v886
        %v1032 = vpack.c.b16 %v889, %v888
        %v1033 = vpack.c.b16 %v891, %v890
        %v1034 = vpack.c.b16 %v893, %v892
        %v1035 = vpack.c.b16 %v895, %v894
        %v1036 = vpack.c.b16 %v897, %v896
        %v1037 = vpack.c.b16 %v899, %v898
        %v1038 = vpack.c.b16 %v901, %v900
        %v1039 = vpack.c.b16 %v903, %v902
        %v1040 = vpack.c.b16 %v905, %v904
        %v1041 = vpack.c.b16 %v907, %v906
        %v1042 = vpack.c.b16 %v909, %v908
        %v1043 = vpack.c.b16 %v911, %v910
        %v1044 = vpack.c.b16 %v913, %v912
        %v1045 = vpack.c.b16 %v915, %v914
        %v1046 = vpack.c.b16 %v917, %v916
        %v1047 = vpack.c.b16 %v919, %v918
        %v1048 = vpack.c.b16 %v921, %v920
        %v1049 = vpack.c.b16 %v923, %v922
        %v1050 = vpack.c.b16 %v925, %v924
        %v1051 = vpack.c.b16 %v927, %v926
        %v1052 = vpack.c.b16 %v929, %v928
        %v1053 = vpack.c.b16 %v931, %v930
        %v1054 = vpack.c.b16 %v933, %v932
        %v1055 = vpack.c.b16 %v935, %v934
        %v1056 = vpack.c.b16 %v937, %v936
        %v1057 = vpack.c.b16 %v939, %v938
        %v1058 = vpack.c.b16 %v941, %v940
        %v1059 = vpack.c.b16 %v943, %v942
        %v1060 = vpack.c.b16 %v945, %v944
        %v1061 = vpack.c.b16 %v947, %v946
        %v1062 = vpack.c.b16 %v949, %v948
        %v1063 = vpack.c.b16 %v951, %v950
        %v1064 = vpack.c.b16 %v953, %v952
        %v1065 = vpack.c.b16 %v955, %v954
        %v1066 = vpack.c.b16 %v957, %v956
        %v1067 = vpack.c.b16 %v959, %v958
        %v1068 = vpack.c.b16 %v961, %v960
        %v1069 = vpack.c.b16 %v963, %v962
        %v1070 = vpack.c.b16 %v965, %v964
        %v1071 = vpack.c.b16 %v967, %v966
        %v1072 = vpack.c.b16 %v969, %v968
        %v1073 = vpack.c.b16 %v971, %v970
        %v1074 = vpack.c.b16 %v973, %v972
        %v1075 = vpack.c.b16 %v975, %v974
        %v1076 = vpack.c.b16 %v977, %v976
        %v1077 = vpack.c.b16 %v979, %v978
        %v1078 = vpack.c.b16 %v981, %v980
        %v1079 = vpack.c.b16 %v982, %v982
        %v1209 = vunpack.c.l.b16 %v557
        %v1210 = vunpack.c.h.b16 %v557
        %v1211 = vunpack.c.l.b16 %v558
        %v1212 = vunpack.c.l.b16 %v559
        %v1213 = vunpack.c.h.b16 %v559
        %v1214 = vunpack.c.l.b16 %v560
        %v1215 = vunpack.c.l.b16 %v561
        %v1216 = vunpack.c.h.b16 %v561
        %v1217 = vunpack.c.l.b16 %v562
        %v1218 = vunpack.c.l.b16 %v563
        %v1219 = vunpack.c.h.b16 %v563
        %v1220 = vunpack.c.l.b16 %v564
        %v1221 = vunpack.c.l.b16 %v565
        %v1222 = vunpack.c.h.b16 %v565
        %v1223 = vunpack.c.l.b16 %v566
        %v1224 = vunpack.c.l.b16 %v567
        %v1225 = vunpack.c.h.b16 %v567
        %v1226 = vunpack.c.l.b16 %v568
        %v1227 = vunpack.c.l.b16 %v569
        %v1228 = vunpack.c.h.b16 %v569
        %v1229 = vunpack.c.l.b16 %v570
        %v1230 = vunpack.c.l.b16 %v571
        %v1231 = vunpack.c.h.b16 %v571
        %v1232 = vunpack.c.l.b16 %v572
        %v1233 = vunpack.c.l.b16 %v573
        %v1234 = vunpack.c.h.b16 %v573
        %v1235 = vunpack.c.l.b16 %v574
        %v1236 = vunpack.c.l.b16 %v575
        %v1237 = vunpack.c.h.b16 %v575
        %v1238 = vunpack.c.l.b16 %v576
        %v1239 = vunpack.c.l.b16 %v577
        %v1240 = vunpack.c.h.b16 %v577
        %v1241 = vunpack.c.l.b16 %v578
        %v1242 = vunpack.c.l.b16 %v579
        %v1243 = vunpack.c.h.b16 %v579
        %v1244 = vunpack.c.l.b16 %v580
        %v1245 = vunpack.c.l.b16 %v581
        %v1246 = vunpack.c.h.b16 %v581
        %v1247 = vunpack.c.l.b16 %v582
        %v1248 = vunpack.c.l.b16 %v583
        %v1249 = vunpack.c.h.b16 %v583
        %v1250 = vunpack.c.l.b16 %v584
        %v1251 = vunpack.c.l.b16 %v585
        %v1252 = vunpack.c.h.b16 %v585
        %v1253 = vunpack.c.l.b16 %v586
        %v1254 = vunpack.c.l.b16 %v587
        %v1255 = vunpack.c.h.b16 %v587
        %v1256 = vunpack.c.l.b16 %v588
        %v1257 = vpack.c.b16 %v1212, %v1209
        %v1258 = vpack.c.b16 %v1213, %v1210
        %v1259 = vpack.c.b16 %v1214, %v1211
        %v1260 = vpack.c.b16 %v1218, %v1215
        %v1261 = vpack.c.b16 %v1219, %v1216
        %v1262 = vpack.c.b16 %v1220, %v1217
        %v1263 = vpack.c.b16 %v1224, %v1221
        %v1264 = vpack.c.b16 %v1225, %v1222
        %v1265 = vpack.c.b16 %v1226, %v1223
        %v1266 = vpack.c.b16 %v1230, %v1227
        %v1267 = vpack.c.b16 %v1231, %v1228
        %v1268 = vpack.c.b16 %v1232, %v1229
        %v1269 = vpack.c.b16 %v1236, %v1233
        %v1270 = vpack.c.b16 %v1237, %v1234
        %v1271 = vpack.c.b16 %v1238, %v1235
        %v1272 = vpack.c.b16 %v1242, %v1239
        %v1273 = vpack.c.b16 %v1243, %v1240
        %v1274 = vpack.c.b16 %v1244, %v1241
        %v1275 = vpack.c.b16 %v1248, %v1245
        %v1276 = vpack.c.b16 %v1249, %v1246
        %v1277 = vpack.c.b16 %v1250, %v1247
        %v1278 = vpack.c.b16 %v1254, %v1251
        %v1279 = vpack.c.b16 %v1255, %v1252
        %v1280 = vpack.c.b16 %v1256, %v1253
        %1305 = vmatpush.bf16.msra.mxu0 %v1278
        %1306 = vmatpush.bf16.msra.mxu0 %v1275
        %1307 = vmatpush.bf16.msra.mxu0 %v1272
        %1308 = vmatpush.bf16.msra.mxu0 %v1269
        %1309 = vmatpush.bf16.msra.mxu0 %v1266
        %1310 = vmatpush.bf16.msra.mxu0 %v1263
        %1311 = vmatpush.bf16.msra.mxu0 %v1260
        %1312 = vmatpush.bf16.msra.mxu0 %v1257
        %1313 = vmatmul.bf16.gmra.mxu0 %v983
        %v1314 = vpop.f32.mrf.mxu0
        %v1315 = vadd.f32 %v591, %v1314
        %v1316 = vpop.f32.mrf.mxu0
        %v1317 = vadd.f32 %v591, %v1316
        %1318 = vmatmul.bf16.gmra.mxu0 %v984
        %v1319 = vpop.f32.mrf.mxu0
        %v1320 = vadd.f32 %v591, %v1319
        %v1321 = vpop.f32.mrf.mxu0
        %v1322 = vadd.f32 %v591, %v1321
        %1323 = vmatmul.bf16.gmra.mxu0 %v985
        %v1324 = vpop.f32.mrf.mxu0
        %v1325 = vadd.f32 %v591, %v1324
        %v1326 = vpop.f32.mrf.mxu0
        %v1327 = vadd.f32 %v591, %v1326
        %1328 = vmatmul.bf16.gmra.mxu0 %v986
        %v1329 = vpop.f32.mrf.mxu0
        %v1330 = vadd.f32 %v591, %v1329
        %v1331 = vpop.f32.mrf.mxu0
        %v1332 = vadd.f32 %v591, %v1331
        %1333 = vmatmul.bf16.gmra.mxu0 %v987
        %v1334 = vpop.f32.mrf.mxu0
        %v1335 = vadd.f32 %v591, %v1334
        %v1336 = vpop.f32.mrf.mxu0
        %v1337 = vadd.f32 %v591, %v1336
        %1338 = vmatmul.bf16.gmra.mxu0 %v988
        %v1339 = vpop.f32.mrf.mxu0
        %v1340 = vadd.f32 %v591, %v1339
        %v1341 = vpop.f32.mrf.mxu0
        %v1342 = vadd.f32 %v591, %v1341
        %1343 = vmatmul.bf16.gmra.mxu0 %v989
        %v1344 = vpop.f32.mrf.mxu0
        %v1345 = vadd.f32 %v591, %v1344
        %v1346 = vpop.f32.mrf.mxu0
        %v1347 = vadd.f32 %v591, %v1346
        %1348 = vmatmul.bf16.gmra.mxu0 %v990
        %v1349 = vpop.f32.mrf.mxu0
        %v1350 = vadd.f32 %v591, %v1349
        %v1351 = vpop.f32.mrf.mxu0
        %v1352 = vadd.f32 %v591, %v1351
        %1353 = vmatmul.bf16.gmra.mxu0 %v991
        %v1354 = vpop.f32.mrf.mxu0
        %v1355 = vadd.f32 %v591, %v1354
        %v1356 = vpop.f32.mrf.mxu0
        %v1357 = vadd.f32 %v591, %v1356
        %1358 = vmatmul.bf16.gmra.mxu0 %v992
        %v1359 = vpop.f32.mrf.mxu0
        %v1360 = vadd.f32 %v591, %v1359
        %v1361 = vpop.f32.mrf.mxu0
        %v1362 = vadd.f32 %v591, %v1361
        %1363 = vmatmul.bf16.gmra.mxu0 %v993
        %v1364 = vpop.f32.mrf.mxu0
        %v1365 = vadd.f32 %v591, %v1364
        %v1366 = vpop.f32.mrf.mxu0
        %v1367 = vadd.f32 %v591, %v1366
        %1368 = vmatmul.bf16.gmra.mxu0 %v994
        %v1369 = vpop.f32.mrf.mxu0
        %v1370 = vadd.f32 %v591, %v1369
        %v1371 = vpop.f32.mrf.mxu0
        %v1372 = vadd.f32 %v591, %v1371
        %1373 = vmatmul.bf16.gmra.mxu0 %v995
        %v1374 = vpop.f32.mrf.mxu0
        %v1375 = vadd.f32 %v591, %v1374
        %v1376 = vpop.f32.mrf.mxu0
        %v1377 = vadd.f32 %v591, %v1376
        %1378 = vmatmul.bf16.gmra.mxu0 %v996
        %v1379 = vpop.f32.mrf.mxu0
        %v1380 = vadd.f32 %v591, %v1379
        %v1381 = vpop.f32.mrf.mxu0
        %v1382 = vadd.f32 %v591, %v1381
        %1383 = vmatmul.bf16.gmra.mxu0 %v997
        %v1384 = vpop.f32.mrf.mxu0
        %v1385 = vadd.f32 %v591, %v1384
        %v1386 = vpop.f32.mrf.mxu0
        %v1387 = vadd.f32 %v591, %v1386
        %1388 = vmatmul.bf16.gmra.mxu0 %v998
        %v1389 = vpop.f32.mrf.mxu0
        %v1390 = vadd.f32 %v591, %v1389
        %v1391 = vpop.f32.mrf.mxu0
        %v1392 = vadd.f32 %v591, %v1391
        %1393 = vmatmul.bf16.gmra.mxu0 %v999
        %v1394 = vpop.f32.mrf.mxu0
        %v1395 = vadd.f32 %v591, %v1394
        %v1396 = vpop.f32.mrf.mxu0
        %v1397 = vadd.f32 %v591, %v1396
        %1398 = vmatmul.bf16.gmra.mxu0 %v1000
        %v1399 = vpop.f32.mrf.mxu0
        %v1400 = vadd.f32 %v591, %v1399
        %v1401 = vpop.f32.mrf.mxu0
        %v1402 = vadd.f32 %v591, %v1401
        %1403 = vmatmul.bf16.gmra.mxu0 %v1001
        %v1404 = vpop.f32.mrf.mxu0
        %v1405 = vadd.f32 %v591, %v1404
        %v1406 = vpop.f32.mrf.mxu0
        %v1407 = vadd.f32 %v591, %v1406
        %1408 = vmatmul.bf16.gmra.mxu0 %v1002
        %v1409 = vpop.f32.mrf.mxu0
        %v1410 = vadd.f32 %v591, %v1409
        %v1411 = vpop.f32.mrf.mxu0
        %v1412 = vadd.f32 %v591, %v1411
        %1413 = vmatmul.bf16.gmra.mxu0 %v1003
        %v1414 = vpop.f32.mrf.mxu0
        %v1415 = vadd.f32 %v591, %v1414
        %v1416 = vpop.f32.mrf.mxu0
        %v1417 = vadd.f32 %v591, %v1416
        %1418 = vmatmul.bf16.gmra.mxu0 %v1004
        %v1419 = vpop.f32.mrf.mxu0
        %v1420 = vadd.f32 %v591, %v1419
        %v1421 = vpop.f32.mrf.mxu0
        %v1422 = vadd.f32 %v591, %v1421
        %1423 = vmatmul.bf16.gmra.mxu0 %v1005
        %v1424 = vpop.f32.mrf.mxu0
        %v1425 = vadd.f32 %v591, %v1424
        %v1426 = vpop.f32.mrf.mxu0
        %v1427 = vadd.f32 %v591, %v1426
        %1428 = vmatmul.bf16.gmra.mxu0 %v1006
        %v1429 = vpop.f32.mrf.mxu0
        %v1430 = vadd.f32 %v591, %v1429
        %v1431 = vpop.f32.mrf.mxu0
        %v1432 = vadd.f32 %v591, %v1431
        %1433 = vmatmul.bf16.gmra.mxu0 %v1007
        %v1434 = vpop.f32.mrf.mxu0
        %v1435 = vadd.f32 %v591, %v1434
        %v1436 = vpop.f32.mrf.mxu0
        %v1437 = vadd.f32 %v591, %v1436
        %1438 = vmatmul.bf16.gmra.mxu0 %v1008
        %v1439 = vpop.f32.mrf.mxu0
        %v1440 = vadd.f32 %v591, %v1439
        %v1441 = vpop.f32.mrf.mxu0
        %v1442 = vadd.f32 %v591, %v1441
        %1443 = vmatmul.bf16.gmra.mxu0 %v1009
        %v1444 = vpop.f32.mrf.mxu0
        %v1445 = vadd.f32 %v591, %v1444
        %v1446 = vpop.f32.mrf.mxu0
        %v1447 = vadd.f32 %v591, %v1446
        %1448 = vmatmul.bf16.gmra.mxu0 %v1010
        %v1449 = vpop.f32.mrf.mxu0
        %v1450 = vadd.f32 %v591, %v1449
        %v1451 = vpop.f32.mrf.mxu0
        %v1452 = vadd.f32 %v591, %v1451
        %1453 = vmatmul.bf16.gmra.mxu0 %v1011
        %v1454 = vpop.f32.mrf.mxu0
        %v1455 = vadd.f32 %v591, %v1454
        %v1456 = vpop.f32.mrf.mxu0
        %v1457 = vadd.f32 %v591, %v1456
        %1458 = vmatmul.bf16.gmra.mxu0 %v1012
        %v1459 = vpop.f32.mrf.mxu0
        %v1460 = vadd.f32 %v591, %v1459
        %v1461 = vpop.f32.mrf.mxu0
        %v1462 = vadd.f32 %v591, %v1461
        %1463 = vmatmul.bf16.gmra.mxu0 %v1013
        %v1464 = vpop.f32.mrf.mxu0
        %v1465 = vadd.f32 %v591, %v1464
        %v1466 = vpop.f32.mrf.mxu0
        %v1467 = vadd.f32 %v591, %v1466
        %1468 = vmatmul.bf16.gmra.mxu0 %v1014
        %v1469 = vpop.f32.mrf.mxu0
        %v1470 = vadd.f32 %v591, %v1469
        %v1471 = vpop.f32.mrf.mxu0
        %v1472 = vadd.f32 %v591, %v1471
        %1473 = vmatmul.bf16.gmra.mxu0 %v1015
        %v1474 = vpop.f32.mrf.mxu0
        %v1475 = vadd.f32 %v591, %v1474
        %v1476 = vpop.f32.mrf.mxu0
        %v1477 = vadd.f32 %v591, %v1476
        %1478 = vmatmul.bf16.gmra.mxu0 %v1016
        %v1479 = vpop.f32.mrf.mxu0
        %v1480 = vadd.f32 %v591, %v1479
        %v1481 = vpop.f32.mrf.mxu0
        %v1482 = vadd.f32 %v591, %v1481
        %1483 = vmatmul.bf16.gmra.mxu0 %v1017
        %v1484 = vpop.f32.mrf.mxu0
        %v1485 = vadd.f32 %v591, %v1484
        %v1486 = vpop.f32.mrf.mxu0
        %v1487 = vadd.f32 %v591, %v1486
        %1488 = vmatmul.bf16.gmra.mxu0 %v1018
        %v1489 = vpop.f32.mrf.mxu0
        %v1490 = vadd.f32 %v591, %v1489
        %v1491 = vpop.f32.mrf.mxu0
        %v1492 = vadd.f32 %v591, %v1491
        %1493 = vmatmul.bf16.gmra.mxu0 %v1019
        %v1494 = vpop.f32.mrf.mxu0
        %v1495 = vadd.f32 %v591, %v1494
        %v1496 = vpop.f32.mrf.mxu0
        %v1497 = vadd.f32 %v591, %v1496
        %1498 = vmatmul.bf16.gmra.mxu0 %v1020
        %v1499 = vpop.f32.mrf.mxu0
        %v1500 = vadd.f32 %v591, %v1499
        %v1501 = vpop.f32.mrf.mxu0
        %v1502 = vadd.f32 %v591, %v1501
        %1503 = vmatmul.bf16.gmra.mxu0 %v1021
        %v1504 = vpop.f32.mrf.mxu0
        %v1505 = vadd.f32 %v591, %v1504
        %v1506 = vpop.f32.mrf.mxu0
        %v1507 = vadd.f32 %v591, %v1506
        %1508 = vmatmul.bf16.gmra.mxu0 %v1022
        %v1509 = vpop.f32.mrf.mxu0
        %v1510 = vadd.f32 %v591, %v1509
        %v1511 = vpop.f32.mrf.mxu0
        %v1512 = vadd.f32 %v591, %v1511
        %1513 = vmatmul.bf16.gmra.mxu0 %v1023
        %v1514 = vpop.f32.mrf.mxu0
        %v1515 = vadd.f32 %v591, %v1514
        %v1516 = vpop.f32.mrf.mxu0
        %v1517 = vadd.f32 %v591, %v1516
        %1518 = vmatmul.bf16.gmra.mxu0 %v1024
        %v1519 = vpop.f32.mrf.mxu0
        %v1520 = vadd.f32 %v591, %v1519
        %v1521 = vpop.f32.mrf.mxu0
        %v1522 = vadd.f32 %v591, %v1521
        %1523 = vmatmul.bf16.gmra.mxu0 %v1025
        %v1524 = vpop.f32.mrf.mxu0
        %v1525 = vadd.f32 %v591, %v1524
        %v1526 = vpop.f32.mrf.mxu0
        %v1527 = vadd.f32 %v591, %v1526
        %1528 = vmatmul.bf16.gmra.mxu0 %v1026
        %v1529 = vpop.f32.mrf.mxu0
        %v1530 = vadd.f32 %v591, %v1529
        %v1531 = vpop.f32.mrf.mxu0
        %v1532 = vadd.f32 %v591, %v1531
        %1533 = vmatmul.bf16.gmra.mxu0 %v1027
        %v1534 = vpop.f32.mrf.mxu0
        %v1535 = vadd.f32 %v591, %v1534
        %v1536 = vpop.f32.mrf.mxu0
        %v1537 = vadd.f32 %v591, %v1536
        %1538 = vmatmul.bf16.gmra.mxu0 %v1028
        %v1539 = vpop.f32.mrf.mxu0
        %v1540 = vadd.f32 %v591, %v1539
        %v1541 = vpop.f32.mrf.mxu0
        %v1542 = vadd.f32 %v591, %v1541
        %1543 = vmatmul.bf16.gmra.mxu0 %v1029
        %v1544 = vpop.f32.mrf.mxu0
        %v1545 = vadd.f32 %v591, %v1544
        %v1546 = vpop.f32.mrf.mxu0
        %v1547 = vadd.f32 %v591, %v1546
        %1548 = vmatmul.bf16.gmra.mxu0 %v1030
        %v1549 = vpop.f32.mrf.mxu0
        %v1550 = vadd.f32 %v591, %v1549
        %v1551 = vpop.f32.mrf.mxu0
        %v1552 = vadd.f32 %v591, %v1551
        %1553 = vmatmul.bf16.gmra.mxu0 %v1031
        %v1554 = vpop.f32.mrf.mxu0
        %v1555 = vadd.f32 %v591, %v1554
        %v1556 = vpop.f32.mrf.mxu0
        %v1557 = vadd.f32 %v591, %v1556
        %1558 = vmatmul.bf16.gmra.mxu0 %v1032
        %v1559 = vpop.f32.mrf.mxu0
        %v1560 = vadd.f32 %v591, %v1559
        %v1561 = vpop.f32.mrf.mxu0
        %v1562 = vadd.f32 %v591, %v1561
        %1563 = vmatmul.bf16.gmra.mxu0 %v1033
        %v1564 = vpop.f32.mrf.mxu0
        %v1565 = vadd.f32 %v591, %v1564
        %v1566 = vpop.f32.mrf.mxu0
        %v1567 = vadd.f32 %v591, %v1566
        %1568 = vmatmul.bf16.gmra.mxu0 %v1034
        %v1569 = vpop.f32.mrf.mxu0
        %v1570 = vadd.f32 %v591, %v1569
        %v1571 = vpop.f32.mrf.mxu0
        %v1572 = vadd.f32 %v591, %v1571
        %1573 = vmatmul.bf16.gmra.mxu0 %v1035
        %v1574 = vpop.f32.mrf.mxu0
        %v1575 = vadd.f32 %v591, %v1574
        %v1576 = vpop.f32.mrf.mxu0
        %v1577 = vadd.f32 %v591, %v1576
        %1578 = vmatmul.bf16.gmra.mxu0 %v1036
        %v1579 = vpop.f32.mrf.mxu0
        %v1580 = vadd.f32 %v591, %v1579
        %v1581 = vpop.f32.mrf.mxu0
        %v1582 = vadd.f32 %v591, %v1581
        %1583 = vmatmul.bf16.gmra.mxu0 %v1037
        %v1584 = vpop.f32.mrf.mxu0
        %v1585 = vadd.f32 %v591, %v1584
        %v1586 = vpop.f32.mrf.mxu0
        %v1587 = vadd.f32 %v591, %v1586
        %1588 = vmatmul.bf16.gmra.mxu0 %v1038
        %v1589 = vpop.f32.mrf.mxu0
        %v1590 = vadd.f32 %v591, %v1589
        %v1591 = vpop.f32.mrf.mxu0
        %v1592 = vadd.f32 %v591, %v1591
        %1593 = vmatmul.bf16.gmra.mxu0 %v1039
        %v1594 = vpop.f32.mrf.mxu0
        %v1595 = vadd.f32 %v591, %v1594
        %v1596 = vpop.f32.mrf.mxu0
        %v1597 = vadd.f32 %v591, %v1596
        %1598 = vmatmul.bf16.gmra.mxu0 %v1040
        %v1599 = vpop.f32.mrf.mxu0
        %v1600 = vadd.f32 %v591, %v1599
        %v1601 = vpop.f32.mrf.mxu0
        %v1602 = vadd.f32 %v591, %v1601
        %1603 = vmatmul.bf16.gmra.mxu0 %v1041
        %v1604 = vpop.f32.mrf.mxu0
        %v1605 = vadd.f32 %v591, %v1604
        %v1606 = vpop.f32.mrf.mxu0
        %v1607 = vadd.f32 %v591, %v1606
        %1608 = vmatmul.bf16.gmra.mxu0 %v1042
        %v1609 = vpop.f32.mrf.mxu0
        %v1610 = vadd.f32 %v591, %v1609
        %v1611 = vpop.f32.mrf.mxu0
        %v1612 = vadd.f32 %v591, %v1611
        %1613 = vmatmul.bf16.gmra.mxu0 %v1043
        %v1614 = vpop.f32.mrf.mxu0
        %v1615 = vadd.f32 %v591, %v1614
        %v1616 = vpop.f32.mrf.mxu0
        %v1617 = vadd.f32 %v591, %v1616
        %1618 = vmatmul.bf16.gmra.mxu0 %v1044
        %v1619 = vpop.f32.mrf.mxu0
        %v1620 = vadd.f32 %v591, %v1619
        %v1621 = vpop.f32.mrf.mxu0
        %v1622 = vadd.f32 %v591, %v1621
        %1623 = vmatmul.bf16.gmra.mxu0 %v1045
        %v1624 = vpop.f32.mrf.mxu0
        %v1625 = vadd.f32 %v591, %v1624
        %v1626 = vpop.f32.mrf.mxu0
        %v1627 = vadd.f32 %v591, %v1626
        %1628 = vmatmul.bf16.gmra.mxu0 %v1046
        %v1629 = vpop.f32.mrf.mxu0
        %v1630 = vadd.f32 %v591, %v1629
        %v1631 = vpop.f32.mrf.mxu0
        %v1632 = vadd.f32 %v591, %v1631
        %1633 = vmatmul.bf16.gmra.mxu0 %v1047
        %v1634 = vpop.f32.mrf.mxu0
        %v1635 = vadd.f32 %v591, %v1634
        %v1636 = vpop.f32.mrf.mxu0
        %v1637 = vadd.f32 %v591, %v1636
        %1638 = vmatmul.bf16.gmra.mxu0 %v1048
        %v1639 = vpop.f32.mrf.mxu0
        %v1640 = vadd.f32 %v591, %v1639
        %v1641 = vpop.f32.mrf.mxu0
        %v1642 = vadd.f32 %v591, %v1641
        %1643 = vmatmul.bf16.gmra.mxu0 %v1049
        %v1644 = vpop.f32.mrf.mxu0
        %v1645 = vadd.f32 %v591, %v1644
        %v1646 = vpop.f32.mrf.mxu0
        %v1647 = vadd.f32 %v591, %v1646
        %1648 = vmatmul.bf16.gmra.mxu0 %v1050
        %v1649 = vpop.f32.mrf.mxu0
        %v1650 = vadd.f32 %v591, %v1649
        %v1651 = vpop.f32.mrf.mxu0
        %v1652 = vadd.f32 %v591, %v1651
        %1653 = vmatmul.bf16.gmra.mxu0 %v1051
        %v1654 = vpop.f32.mrf.mxu0
        %v1655 = vadd.f32 %v591, %v1654
        %v1656 = vpop.f32.mrf.mxu0
        %v1657 = vadd.f32 %v591, %v1656
        %1658 = vmatmul.bf16.gmra.mxu0 %v1052
        %v1659 = vpop.f32.mrf.mxu0
        %v1660 = vadd.f32 %v591, %v1659
        %v1661 = vpop.f32.mrf.mxu0
        %v1662 = vadd.f32 %v591, %v1661
        %1663 = vmatmul.bf16.gmra.mxu0 %v1053
        %v1664 = vpop.f32.mrf.mxu0
        %v1665 = vadd.f32 %v591, %v1664
        %v1666 = vpop.f32.mrf.mxu0
        %v1667 = vadd.f32 %v591, %v1666
        %1668 = vmatmul.bf16.gmra.mxu0 %v1054
        %v1669 = vpop.f32.mrf.mxu0
        %v1670 = vadd.f32 %v591, %v1669
        %v1671 = vpop.f32.mrf.mxu0
        %v1672 = vadd.f32 %v591, %v1671
        %1673 = vmatmul.bf16.gmra.mxu0 %v1055
        %v1674 = vpop.f32.mrf.mxu0
        %v1675 = vadd.f32 %v591, %v1674
        %v1676 = vpop.f32.mrf.mxu0
        %v1677 = vadd.f32 %v591, %v1676
        %1678 = vmatmul.bf16.gmra.mxu0 %v1056
        %v1679 = vpop.f32.mrf.mxu0
        %v1680 = vadd.f32 %v591, %v1679
        %v1681 = vpop.f32.mrf.mxu0
        %v1682 = vadd.f32 %v591, %v1681
        %1683 = vmatmul.bf16.gmra.mxu0 %v1057
        %v1684 = vpop.f32.mrf.mxu0
        %v1685 = vadd.f32 %v591, %v1684
        %v1686 = vpop.f32.mrf.mxu0
        %v1687 = vadd.f32 %v591, %v1686
        %1688 = vmatmul.bf16.gmra.mxu0 %v1058
        %v1689 = vpop.f32.mrf.mxu0
        %v1690 = vadd.f32 %v591, %v1689
        %v1691 = vpop.f32.mrf.mxu0
        %v1692 = vadd.f32 %v591, %v1691
        %1693 = vmatmul.bf16.gmra.mxu0 %v1059
        %v1694 = vpop.f32.mrf.mxu0
        %v1695 = vadd.f32 %v591, %v1694
        %v1696 = vpop.f32.mrf.mxu0
        %v1697 = vadd.f32 %v591, %v1696
        %1698 = vmatmul.bf16.gmra.mxu0 %v1060
        %v1699 = vpop.f32.mrf.mxu0
        %v1700 = vadd.f32 %v591, %v1699
        %v1701 = vpop.f32.mrf.mxu0
        %v1702 = vadd.f32 %v591, %v1701
        %1703 = vmatmul.bf16.gmra.mxu0 %v1061
        %v1704 = vpop.f32.mrf.mxu0
        %v1705 = vadd.f32 %v591, %v1704
        %v1706 = vpop.f32.mrf.mxu0
        %v1707 = vadd.f32 %v591, %v1706
        %1708 = vmatmul.bf16.gmra.mxu0 %v1062
        %v1709 = vpop.f32.mrf.mxu0
        %v1710 = vadd.f32 %v591, %v1709
        %v1711 = vpop.f32.mrf.mxu0
        %v1712 = vadd.f32 %v591, %v1711
        %1713 = vmatmul.bf16.gmra.mxu0 %v1063
        %v1714 = vpop.f32.mrf.mxu0
        %v1715 = vadd.f32 %v591, %v1714
        %v1716 = vpop.f32.mrf.mxu0
        %v1717 = vadd.f32 %v591, %v1716
        %1718 = vmatmul.bf16.gmra.mxu0 %v1064
        %v1719 = vpop.f32.mrf.mxu0
        %v1720 = vadd.f32 %v591, %v1719
        %v1721 = vpop.f32.mrf.mxu0
        %v1722 = vadd.f32 %v591, %v1721
        %1723 = vmatmul.bf16.gmra.mxu0 %v1065
        %v1724 = vpop.f32.mrf.mxu0
        %v1725 = vadd.f32 %v591, %v1724
        %v1726 = vpop.f32.mrf.mxu0
        %v1727 = vadd.f32 %v591, %v1726
        %1728 = vmatmul.bf16.gmra.mxu0 %v1066
        %v1729 = vpop.f32.mrf.mxu0
        %v1730 = vadd.f32 %v591, %v1729
        %v1731 = vpop.f32.mrf.mxu0
        %v1732 = vadd.f32 %v591, %v1731
        %1733 = vmatmul.bf16.gmra.mxu0 %v1067
        %v1734 = vpop.f32.mrf.mxu0
        %v1735 = vadd.f32 %v591, %v1734
        %v1736 = vpop.f32.mrf.mxu0
        %v1737 = vadd.f32 %v591, %v1736
        %1738 = vmatmul.bf16.gmra.mxu0 %v1068
        %v1739 = vpop.f32.mrf.mxu0
        %v1740 = vadd.f32 %v591, %v1739
        %v1741 = vpop.f32.mrf.mxu0
        %v1742 = vadd.f32 %v591, %v1741
        %1743 = vmatmul.bf16.gmra.mxu0 %v1069
        %v1744 = vpop.f32.mrf.mxu0
        %v1745 = vadd.f32 %v591, %v1744
        %v1746 = vpop.f32.mrf.mxu0
        %v1747 = vadd.f32 %v591, %v1746
        %1748 = vmatmul.bf16.gmra.mxu0 %v1070
        %v1749 = vpop.f32.mrf.mxu0
        %v1750 = vadd.f32 %v591, %v1749
        %v1751 = vpop.f32.mrf.mxu0
        %v1752 = vadd.f32 %v591, %v1751
        %1753 = vmatmul.bf16.gmra.mxu0 %v1071
        %v1754 = vpop.f32.mrf.mxu0
        %v1755 = vadd.f32 %v591, %v1754
        %v1756 = vpop.f32.mrf.mxu0
        %v1757 = vadd.f32 %v591, %v1756
        %1758 = vmatmul.bf16.gmra.mxu0 %v1072
        %v1759 = vpop.f32.mrf.mxu0
        %v1760 = vadd.f32 %v591, %v1759
        %v1761 = vpop.f32.mrf.mxu0
        %v1762 = vadd.f32 %v591, %v1761
        %1763 = vmatmul.bf16.gmra.mxu0 %v1073
        %v1764 = vpop.f32.mrf.mxu0
        %v1765 = vadd.f32 %v591, %v1764
        %v1766 = vpop.f32.mrf.mxu0
        %v1767 = vadd.f32 %v591, %v1766
        %1768 = vmatmul.bf16.gmra.mxu0 %v1074
        %v1769 = vpop.f32.mrf.mxu0
        %v1770 = vadd.f32 %v591, %v1769
        %v1771 = vpop.f32.mrf.mxu0
        %v1772 = vadd.f32 %v591, %v1771
        %1773 = vmatmul.bf16.gmra.mxu0 %v1075
        %v1774 = vpop.f32.mrf.mxu0
        %v1775 = vadd.f32 %v591, %v1774
        %v1776 = vpop.f32.mrf.mxu0
        %v1777 = vadd.f32 %v591, %v1776
        %1778 = vmatmul.bf16.gmra.mxu0 %v1076
        %v1779 = vpop.f32.mrf.mxu0
        %v1780 = vadd.f32 %v591, %v1779
        %v1781 = vpop.f32.mrf.mxu0
        %v1782 = vadd.f32 %v591, %v1781
        %1783 = vmatmul.bf16.gmra.mxu0 %v1077
        %v1784 = vpop.f32.mrf.mxu0
        %v1785 = vadd.f32 %v591, %v1784
        %v1786 = vpop.f32.mrf.mxu0
        %v1787 = vadd.f32 %v591, %v1786
        %1788 = vmatmul.bf16.gmra.mxu0 %v1078
        %v1789 = vpop.f32.mrf.mxu0
        %v1790 = vadd.f32 %v591, %v1789
        %v1791 = vpop.f32.mrf.mxu0
        %v1792 = vadd.f32 %v591, %v1791
        %1793 = vmatmul.bf16.gmra.mxu0 %v1079
        %v1794 = vpop.f32.mrf.mxu0
        %v1795 = vadd.f32 %v591, %v1794
        %v1796 = vpop.f32.mrf.mxu0
        %1797 = vdwg.mxu0
        %1798 = vmatpush.bf16.msra.mxu0 %v1279
        %1799 = vmatpush.bf16.msra.mxu0 %v1276
        %1800 = vmatpush.bf16.msra.mxu0 %v1273
        %1801 = vmatpush.bf16.msra.mxu0 %v1270
        %1802 = vmatpush.bf16.msra.mxu0 %v1267
        %1803 = vmatpush.bf16.msra.mxu0 %v1264
        %1804 = vmatpush.bf16.msra.mxu0 %v1261
        %1805 = vmatpush.bf16.msra.mxu0 %v1258
        %1806 = vmatmul.bf16.gmra.mxu0 %v983
        %v1807 = vpop.f32.mrf.mxu0
        %v1808 = vadd.f32 %v592, %v1807
        %v1809 = vpop.f32.mrf.mxu0
        %v1810 = vadd.f32 %v592, %v1809
        %1811 = vmatmul.bf16.gmra.mxu0 %v984
        %v1812 = vpop.f32.mrf.mxu0
        %v1813 = vadd.f32 %v592, %v1812
        %v1814 = vpop.f32.mrf.mxu0
        %v1815 = vadd.f32 %v592, %v1814
        %1816 = vmatmul.bf16.gmra.mxu0 %v985
        %v1817 = vpop.f32.mrf.mxu0
        %v1818 = vadd.f32 %v592, %v1817
        %v1819 = vpop.f32.mrf.mxu0
        %v1820 = vadd.f32 %v592, %v1819
        %1821 = vmatmul.bf16.gmra.mxu0 %v986
        %v1822 = vpop.f32.mrf.mxu0
        %v1823 = vadd.f32 %v592, %v1822
        %v1824 = vpop.f32.mrf.mxu0
        %v1825 = vadd.f32 %v592, %v1824
        %1826 = vmatmul.bf16.gmra.mxu0 %v987
        %v1827 = vpop.f32.mrf.mxu0
        %v1828 = vadd.f32 %v592, %v1827
        %v1829 = vpop.f32.mrf.mxu0
        %v1830 = vadd.f32 %v592, %v1829
        %1831 = vmatmul.bf16.gmra.mxu0 %v988
        %v1832 = vpop.f32.mrf.mxu0
        %v1833 = vadd.f32 %v592, %v1832
        %v1834 = vpop.f32.mrf.mxu0
        %v1835 = vadd.f32 %v592, %v1834
        %1836 = vmatmul.bf16.gmra.mxu0 %v989
        %v1837 = vpop.f32.mrf.mxu0
        %v1838 = vadd.f32 %v592, %v1837
        %v1839 = vpop.f32.mrf.mxu0
        %v1840 = vadd.f32 %v592, %v1839
        %1841 = vmatmul.bf16.gmra.mxu0 %v990
        %v1842 = vpop.f32.mrf.mxu0
        %v1843 = vadd.f32 %v592, %v1842
        %v1844 = vpop.f32.mrf.mxu0
        %v1845 = vadd.f32 %v592, %v1844
        %1846 = vmatmul.bf16.gmra.mxu0 %v991
        %v1847 = vpop.f32.mrf.mxu0
        %v1848 = vadd.f32 %v592, %v1847
        %v1849 = vpop.f32.mrf.mxu0
        %v1850 = vadd.f32 %v592, %v1849
        %1851 = vmatmul.bf16.gmra.mxu0 %v992
        %v1852 = vpop.f32.mrf.mxu0
        %v1853 = vadd.f32 %v592, %v1852
        %v1854 = vpop.f32.mrf.mxu0
        %v1855 = vadd.f32 %v592, %v1854
        %1856 = vmatmul.bf16.gmra.mxu0 %v993
        %v1857 = vpop.f32.mrf.mxu0
        %v1858 = vadd.f32 %v592, %v1857
        %v1859 = vpop.f32.mrf.mxu0
        %v1860 = vadd.f32 %v592, %v1859
        %1861 = vmatmul.bf16.gmra.mxu0 %v994
        %v1862 = vpop.f32.mrf.mxu0
        %v1863 = vadd.f32 %v592, %v1862
        %v1864 = vpop.f32.mrf.mxu0
        %v1865 = vadd.f32 %v592, %v1864
        %1866 = vmatmul.bf16.gmra.mxu0 %v995
        %v1867 = vpop.f32.mrf.mxu0
        %v1868 = vadd.f32 %v592, %v1867
        %v1869 = vpop.f32.mrf.mxu0
        %v1870 = vadd.f32 %v592, %v1869
        %1871 = vmatmul.bf16.gmra.mxu0 %v996
        %v1872 = vpop.f32.mrf.mxu0
        %v1873 = vadd.f32 %v592, %v1872
        %v1874 = vpop.f32.mrf.mxu0
        %v1875 = vadd.f32 %v592, %v1874
        %1876 = vmatmul.bf16.gmra.mxu0 %v997
        %v1877 = vpop.f32.mrf.mxu0
        %v1878 = vadd.f32 %v592, %v1877
        %v1879 = vpop.f32.mrf.mxu0
        %v1880 = vadd.f32 %v592, %v1879
        %1881 = vmatmul.bf16.gmra.mxu0 %v998
        %v1882 = vpop.f32.mrf.mxu0
        %v1883 = vadd.f32 %v592, %v1882
        %v1884 = vpop.f32.mrf.mxu0
        %v1885 = vadd.f32 %v592, %v1884
        %1886 = vmatmul.bf16.gmra.mxu0 %v999
        %v1887 = vpop.f32.mrf.mxu0
        %v1888 = vadd.f32 %v592, %v1887
        %v1889 = vpop.f32.mrf.mxu0
        %v1890 = vadd.f32 %v592, %v1889
        %1891 = vmatmul.bf16.gmra.mxu0 %v1000
        %v1892 = vpop.f32.mrf.mxu0
        %v1893 = vadd.f32 %v592, %v1892
        %v1894 = vpop.f32.mrf.mxu0
        %v1895 = vadd.f32 %v592, %v1894
        %1896 = vmatmul.bf16.gmra.mxu0 %v1001
        %v1897 = vpop.f32.mrf.mxu0
        %v1898 = vadd.f32 %v592, %v1897
        %v1899 = vpop.f32.mrf.mxu0
        %v1900 = vadd.f32 %v592, %v1899
        %1901 = vmatmul.bf16.gmra.mxu0 %v1002
        %v1902 = vpop.f32.mrf.mxu0
        %v1903 = vadd.f32 %v592, %v1902
        %v1904 = vpop.f32.mrf.mxu0
        %v1905 = vadd.f32 %v592, %v1904
        %1906 = vmatmul.bf16.gmra.mxu0 %v1003
        %v1907 = vpop.f32.mrf.mxu0
        %v1908 = vadd.f32 %v592, %v1907
        %v1909 = vpop.f32.mrf.mxu0
        %v1910 = vadd.f32 %v592, %v1909
        %1911 = vmatmul.bf16.gmra.mxu0 %v1004
        %v1912 = vpop.f32.mrf.mxu0
        %v1913 = vadd.f32 %v592, %v1912
        %v1914 = vpop.f32.mrf.mxu0
        %v1915 = vadd.f32 %v592, %v1914
        %1916 = vmatmul.bf16.gmra.mxu0 %v1005
        %v1917 = vpop.f32.mrf.mxu0
        %v1918 = vadd.f32 %v592, %v1917
        %v1919 = vpop.f32.mrf.mxu0
        %v1920 = vadd.f32 %v592, %v1919
        %1921 = vmatmul.bf16.gmra.mxu0 %v1006
        %v1922 = vpop.f32.mrf.mxu0
        %v1923 = vadd.f32 %v592, %v1922
        %v1924 = vpop.f32.mrf.mxu0
        %v1925 = vadd.f32 %v592, %v1924
        %1926 = vmatmul.bf16.gmra.mxu0 %v1007
        %v1927 = vpop.f32.mrf.mxu0
        %v1928 = vadd.f32 %v592, %v1927
        %v1929 = vpop.f32.mrf.mxu0
        %v1930 = vadd.f32 %v592, %v1929
        %1931 = vmatmul.bf16.gmra.mxu0 %v1008
        %v1932 = vpop.f32.mrf.mxu0
        %v1933 = vadd.f32 %v592, %v1932
        %v1934 = vpop.f32.mrf.mxu0
        %v1935 = vadd.f32 %v592, %v1934
        %1936 = vmatmul.bf16.gmra.mxu0 %v1009
        %v1937 = vpop.f32.mrf.mxu0
        %v1938 = vadd.f32 %v592, %v1937
        %v1939 = vpop.f32.mrf.mxu0
        %v1940 = vadd.f32 %v592, %v1939
        %1941 = vmatmul.bf16.gmra.mxu0 %v1010
        %v1942 = vpop.f32.mrf.mxu0
        %v1943 = vadd.f32 %v592, %v1942
        %v1944 = vpop.f32.mrf.mxu0
        %v1945 = vadd.f32 %v592, %v1944
        %1946 = vmatmul.bf16.gmra.mxu0 %v1011
        %v1947 = vpop.f32.mrf.mxu0
        %v1948 = vadd.f32 %v592, %v1947
        %v1949 = vpop.f32.mrf.mxu0
        %v1950 = vadd.f32 %v592, %v1949
        %1951 = vmatmul.bf16.gmra.mxu0 %v1012
        %v1952 = vpop.f32.mrf.mxu0
        %v1953 = vadd.f32 %v592, %v1952
        %v1954 = vpop.f32.mrf.mxu0
        %v1955 = vadd.f32 %v592, %v1954
        %1956 = vmatmul.bf16.gmra.mxu0 %v1013
        %v1957 = vpop.f32.mrf.mxu0
        %v1958 = vadd.f32 %v592, %v1957
        %v1959 = vpop.f32.mrf.mxu0
        %v1960 = vadd.f32 %v592, %v1959
        %1961 = vmatmul.bf16.gmra.mxu0 %v1014
        %v1962 = vpop.f32.mrf.mxu0
        %v1963 = vadd.f32 %v592, %v1962
        %v1964 = vpop.f32.mrf.mxu0
        %v1965 = vadd.f32 %v592, %v1964
        %1966 = vmatmul.bf16.gmra.mxu0 %v1015
        %v1967 = vpop.f32.mrf.mxu0
        %v1968 = vadd.f32 %v592, %v1967
        %v1969 = vpop.f32.mrf.mxu0
        %v1970 = vadd.f32 %v592, %v1969
        %1971 = vmatmul.bf16.gmra.mxu0 %v1016
        %v1972 = vpop.f32.mrf.mxu0
        %v1973 = vadd.f32 %v592, %v1972
        %v1974 = vpop.f32.mrf.mxu0
        %v1975 = vadd.f32 %v592, %v1974
        %1976 = vmatmul.bf16.gmra.mxu0 %v1017
        %v1977 = vpop.f32.mrf.mxu0
        %v1978 = vadd.f32 %v592, %v1977
        %v1979 = vpop.f32.mrf.mxu0
        %v1980 = vadd.f32 %v592, %v1979
        %1981 = vmatmul.bf16.gmra.mxu0 %v1018
        %v1982 = vpop.f32.mrf.mxu0
        %v1983 = vadd.f32 %v592, %v1982
        %v1984 = vpop.f32.mrf.mxu0
        %v1985 = vadd.f32 %v592, %v1984
        %1986 = vmatmul.bf16.gmra.mxu0 %v1019
        %v1987 = vpop.f32.mrf.mxu0
        %v1988 = vadd.f32 %v592, %v1987
        %v1989 = vpop.f32.mrf.mxu0
        %v1990 = vadd.f32 %v592, %v1989
        %1991 = vmatmul.bf16.gmra.mxu0 %v1020
        %v1992 = vpop.f32.mrf.mxu0
        %v1993 = vadd.f32 %v592, %v1992
        %v1994 = vpop.f32.mrf.mxu0
        %v1995 = vadd.f32 %v592, %v1994
        %1996 = vmatmul.bf16.gmra.mxu0 %v1021
        %v1997 = vpop.f32.mrf.mxu0
        %v1998 = vadd.f32 %v592, %v1997
        %v1999 = vpop.f32.mrf.mxu0
        %v2000 = vadd.f32 %v592, %v1999
        %2001 = vmatmul.bf16.gmra.mxu0 %v1022
        %v2002 = vpop.f32.mrf.mxu0
        %v2003 = vadd.f32 %v592, %v2002
        %v2004 = vpop.f32.mrf.mxu0
        %v2005 = vadd.f32 %v592, %v2004
        %2006 = vmatmul.bf16.gmra.mxu0 %v1023
        %v2007 = vpop.f32.mrf.mxu0
        %v2008 = vadd.f32 %v592, %v2007
        %v2009 = vpop.f32.mrf.mxu0
        %v2010 = vadd.f32 %v592, %v2009
        %2011 = vmatmul.bf16.gmra.mxu0 %v1024
        %v2012 = vpop.f32.mrf.mxu0
        %v2013 = vadd.f32 %v592, %v2012
        %v2014 = vpop.f32.mrf.mxu0
        %v2015 = vadd.f32 %v592, %v2014
        %2016 = vmatmul.bf16.gmra.mxu0 %v1025
        %v2017 = vpop.f32.mrf.mxu0
        %v2018 = vadd.f32 %v592, %v2017
        %v2019 = vpop.f32.mrf.mxu0
        %v2020 = vadd.f32 %v592, %v2019
        %2021 = vmatmul.bf16.gmra.mxu0 %v1026
        %v2022 = vpop.f32.mrf.mxu0
        %v2023 = vadd.f32 %v592, %v2022
        %v2024 = vpop.f32.mrf.mxu0
        %v2025 = vadd.f32 %v592, %v2024
        %2026 = vmatmul.bf16.gmra.mxu0 %v1027
        %v2027 = vpop.f32.mrf.mxu0
        %v2028 = vadd.f32 %v592, %v2027
        %v2029 = vpop.f32.mrf.mxu0
        %v2030 = vadd.f32 %v592, %v2029
        %2031 = vmatmul.bf16.gmra.mxu0 %v1028
        %v2032 = vpop.f32.mrf.mxu0
        %v2033 = vadd.f32 %v592, %v2032
        %v2034 = vpop.f32.mrf.mxu0
        %v2035 = vadd.f32 %v592, %v2034
        %2036 = vmatmul.bf16.gmra.mxu0 %v1029
        %v2037 = vpop.f32.mrf.mxu0
        %v2038 = vadd.f32 %v592, %v2037
        %v2039 = vpop.f32.mrf.mxu0
        %v2040 = vadd.f32 %v592, %v2039
        %2041 = vmatmul.bf16.gmra.mxu0 %v1030
        %v2042 = vpop.f32.mrf.mxu0
        %v2043 = vadd.f32 %v592, %v2042
        %v2044 = vpop.f32.mrf.mxu0
        %v2045 = vadd.f32 %v592, %v2044
        %2046 = vmatmul.bf16.gmra.mxu0 %v1031
        %v2047 = vpop.f32.mrf.mxu0
        %v2048 = vadd.f32 %v592, %v2047
        %v2049 = vpop.f32.mrf.mxu0
        %v2050 = vadd.f32 %v592, %v2049
        %2051 = vmatmul.bf16.gmra.mxu0 %v1032
        %v2052 = vpop.f32.mrf.mxu0
        %v2053 = vadd.f32 %v592, %v2052
        %v2054 = vpop.f32.mrf.mxu0
        %v2055 = vadd.f32 %v592, %v2054
        %2056 = vmatmul.bf16.gmra.mxu0 %v1033
        %v2057 = vpop.f32.mrf.mxu0
        %v2058 = vadd.f32 %v592, %v2057
        %v2059 = vpop.f32.mrf.mxu0
        %v2060 = vadd.f32 %v592, %v2059
        %2061 = vmatmul.bf16.gmra.mxu0 %v1034
        %v2062 = vpop.f32.mrf.mxu0
        %v2063 = vadd.f32 %v592, %v2062
        %v2064 = vpop.f32.mrf.mxu0
        %v2065 = vadd.f32 %v592, %v2064
        %2066 = vmatmul.bf16.gmra.mxu0 %v1035
        %v2067 = vpop.f32.mrf.mxu0
        %v2068 = vadd.f32 %v592, %v2067
        %v2069 = vpop.f32.mrf.mxu0
        %v2070 = vadd.f32 %v592, %v2069
        %2071 = vmatmul.bf16.gmra.mxu0 %v1036
        %v2072 = vpop.f32.mrf.mxu0
        %v2073 = vadd.f32 %v592, %v2072
        %v2074 = vpop.f32.mrf.mxu0
        %v2075 = vadd.f32 %v592, %v2074
        %2076 = vmatmul.bf16.gmra.mxu0 %v1037
        %v2077 = vpop.f32.mrf.mxu0
        %v2078 = vadd.f32 %v592, %v2077
        %v2079 = vpop.f32.mrf.mxu0
        %v2080 = vadd.f32 %v592, %v2079
        %2081 = vmatmul.bf16.gmra.mxu0 %v1038
        %v2082 = vpop.f32.mrf.mxu0
        %v2083 = vadd.f32 %v592, %v2082
        %v2084 = vpop.f32.mrf.mxu0
        %v2085 = vadd.f32 %v592, %v2084
        %2086 = vmatmul.bf16.gmra.mxu0 %v1039
        %v2087 = vpop.f32.mrf.mxu0
        %v2088 = vadd.f32 %v592, %v2087
        %v2089 = vpop.f32.mrf.mxu0
        %v2090 = vadd.f32 %v592, %v2089
        %2091 = vmatmul.bf16.gmra.mxu0 %v1040
        %v2092 = vpop.f32.mrf.mxu0
        %v2093 = vadd.f32 %v592, %v2092
        %v2094 = vpop.f32.mrf.mxu0
        %v2095 = vadd.f32 %v592, %v2094
        %2096 = vmatmul.bf16.gmra.mxu0 %v1041
        %v2097 = vpop.f32.mrf.mxu0
        %v2098 = vadd.f32 %v592, %v2097
        %v2099 = vpop.f32.mrf.mxu0
        %v2100 = vadd.f32 %v592, %v2099
        %2101 = vmatmul.bf16.gmra.mxu0 %v1042
        %v2102 = vpop.f32.mrf.mxu0
        %v2103 = vadd.f32 %v592, %v2102
        %v2104 = vpop.f32.mrf.mxu0
        %v2105 = vadd.f32 %v592, %v2104
        %2106 = vmatmul.bf16.gmra.mxu0 %v1043
        %v2107 = vpop.f32.mrf.mxu0
        %v2108 = vadd.f32 %v592, %v2107
        %v2109 = vpop.f32.mrf.mxu0
        %v2110 = vadd.f32 %v592, %v2109
        %2111 = vmatmul.bf16.gmra.mxu0 %v1044
        %v2112 = vpop.f32.mrf.mxu0
        %v2113 = vadd.f32 %v592, %v2112
        %v2114 = vpop.f32.mrf.mxu0
        %v2115 = vadd.f32 %v592, %v2114
        %2116 = vmatmul.bf16.gmra.mxu0 %v1045
        %v2117 = vpop.f32.mrf.mxu0
        %v2118 = vadd.f32 %v592, %v2117
        %v2119 = vpop.f32.mrf.mxu0
        %v2120 = vadd.f32 %v592, %v2119
        %2121 = vmatmul.bf16.gmra.mxu0 %v1046
        %v2122 = vpop.f32.mrf.mxu0
        %v2123 = vadd.f32 %v592, %v2122
        %v2124 = vpop.f32.mrf.mxu0
        %v2125 = vadd.f32 %v592, %v2124
        %2126 = vmatmul.bf16.gmra.mxu0 %v1047
        %v2127 = vpop.f32.mrf.mxu0
        %v2128 = vadd.f32 %v592, %v2127
        %v2129 = vpop.f32.mrf.mxu0
        %v2130 = vadd.f32 %v592, %v2129
        %2131 = vmatmul.bf16.gmra.mxu0 %v1048
        %v2132 = vpop.f32.mrf.mxu0
        %v2133 = vadd.f32 %v592, %v2132
        %v2134 = vpop.f32.mrf.mxu0
        %v2135 = vadd.f32 %v592, %v2134
        %2136 = vmatmul.bf16.gmra.mxu0 %v1049
        %v2137 = vpop.f32.mrf.mxu0
        %v2138 = vadd.f32 %v592, %v2137
        %v2139 = vpop.f32.mrf.mxu0
        %v2140 = vadd.f32 %v592, %v2139
        %2141 = vmatmul.bf16.gmra.mxu0 %v1050
        %v2142 = vpop.f32.mrf.mxu0
        %v2143 = vadd.f32 %v592, %v2142
        %v2144 = vpop.f32.mrf.mxu0
        %v2145 = vadd.f32 %v592, %v2144
        %2146 = vmatmul.bf16.gmra.mxu0 %v1051
        %v2147 = vpop.f32.mrf.mxu0
        %v2148 = vadd.f32 %v592, %v2147
        %v2149 = vpop.f32.mrf.mxu0
        %v2150 = vadd.f32 %v592, %v2149
        %2151 = vmatmul.bf16.gmra.mxu0 %v1052
        %v2152 = vpop.f32.mrf.mxu0
        %v2153 = vadd.f32 %v592, %v2152
        %v2154 = vpop.f32.mrf.mxu0
        %v2155 = vadd.f32 %v592, %v2154
        %2156 = vmatmul.bf16.gmra.mxu0 %v1053
        %v2157 = vpop.f32.mrf.mxu0
        %v2158 = vadd.f32 %v592, %v2157
        %v2159 = vpop.f32.mrf.mxu0
        %v2160 = vadd.f32 %v592, %v2159
        %2161 = vmatmul.bf16.gmra.mxu0 %v1054
        %v2162 = vpop.f32.mrf.mxu0
        %v2163 = vadd.f32 %v592, %v2162
        %v2164 = vpop.f32.mrf.mxu0
        %v2165 = vadd.f32 %v592, %v2164
        %2166 = vmatmul.bf16.gmra.mxu0 %v1055
        %v2167 = vpop.f32.mrf.mxu0
        %v2168 = vadd.f32 %v592, %v2167
        %v2169 = vpop.f32.mrf.mxu0
        %v2170 = vadd.f32 %v592, %v2169
        %2171 = vmatmul.bf16.gmra.mxu0 %v1056
        %v2172 = vpop.f32.mrf.mxu0
        %v2173 = vadd.f32 %v592, %v2172
        %v2174 = vpop.f32.mrf.mxu0
        %v2175 = vadd.f32 %v592, %v2174
        %2176 = vmatmul.bf16.gmra.mxu0 %v1057
        %v2177 = vpop.f32.mrf.mxu0
        %v2178 = vadd.f32 %v592, %v2177
        %v2179 = vpop.f32.mrf.mxu0
        %v2180 = vadd.f32 %v592, %v2179
        %2181 = vmatmul.bf16.gmra.mxu0 %v1058
        %v2182 = vpop.f32.mrf.mxu0
        %v2183 = vadd.f32 %v592, %v2182
        %v2184 = vpop.f32.mrf.mxu0
        %v2185 = vadd.f32 %v592, %v2184
        %2186 = vmatmul.bf16.gmra.mxu0 %v1059
        %v2187 = vpop.f32.mrf.mxu0
        %v2188 = vadd.f32 %v592, %v2187
        %v2189 = vpop.f32.mrf.mxu0
        %v2190 = vadd.f32 %v592, %v2189
        %2191 = vmatmul.bf16.gmra.mxu0 %v1060
        %v2192 = vpop.f32.mrf.mxu0
        %v2193 = vadd.f32 %v592, %v2192
        %v2194 = vpop.f32.mrf.mxu0
        %v2195 = vadd.f32 %v592, %v2194
        %2196 = vmatmul.bf16.gmra.mxu0 %v1061
        %v2197 = vpop.f32.mrf.mxu0
        %v2198 = vadd.f32 %v592, %v2197
        %v2199 = vpop.f32.mrf.mxu0
        %v2200 = vadd.f32 %v592, %v2199
        %2201 = vmatmul.bf16.gmra.mxu0 %v1062
        %v2202 = vpop.f32.mrf.mxu0
        %v2203 = vadd.f32 %v592, %v2202
        %v2204 = vpop.f32.mrf.mxu0
        %v2205 = vadd.f32 %v592, %v2204
        %2206 = vmatmul.bf16.gmra.mxu0 %v1063
        %v2207 = vpop.f32.mrf.mxu0
        %v2208 = vadd.f32 %v592, %v2207
        %v2209 = vpop.f32.mrf.mxu0
        %v2210 = vadd.f32 %v592, %v2209
        %2211 = vmatmul.bf16.gmra.mxu0 %v1064
        %v2212 = vpop.f32.mrf.mxu0
        %v2213 = vadd.f32 %v592, %v2212
        %v2214 = vpop.f32.mrf.mxu0
        %v2215 = vadd.f32 %v592, %v2214
        %2216 = vmatmul.bf16.gmra.mxu0 %v1065
        %v2217 = vpop.f32.mrf.mxu0
        %v2218 = vadd.f32 %v592, %v2217
        %v2219 = vpop.f32.mrf.mxu0
        %v2220 = vadd.f32 %v592, %v2219
        %2221 = vmatmul.bf16.gmra.mxu0 %v1066
        %v2222 = vpop.f32.mrf.mxu0
        %v2223 = vadd.f32 %v592, %v2222
        %v2224 = vpop.f32.mrf.mxu0
        %v2225 = vadd.f32 %v592, %v2224
        %2226 = vmatmul.bf16.gmra.mxu0 %v1067
        %v2227 = vpop.f32.mrf.mxu0
        %v2228 = vadd.f32 %v592, %v2227
        %v2229 = vpop.f32.mrf.mxu0
        %v2230 = vadd.f32 %v592, %v2229
        %2231 = vmatmul.bf16.gmra.mxu0 %v1068
        %v2232 = vpop.f32.mrf.mxu0
        %v2233 = vadd.f32 %v592, %v2232
        %v2234 = vpop.f32.mrf.mxu0
        %v2235 = vadd.f32 %v592, %v2234
        %2236 = vmatmul.bf16.gmra.mxu0 %v1069
        %v2237 = vpop.f32.mrf.mxu0
        %v2238 = vadd.f32 %v592, %v2237
        %v2239 = vpop.f32.mrf.mxu0
        %v2240 = vadd.f32 %v592, %v2239
        %2241 = vmatmul.bf16.gmra.mxu0 %v1070
        %v2242 = vpop.f32.mrf.mxu0
        %v2243 = vadd.f32 %v592, %v2242
        %v2244 = vpop.f32.mrf.mxu0
        %v2245 = vadd.f32 %v592, %v2244
        %2246 = vmatmul.bf16.gmra.mxu0 %v1071
        %v2247 = vpop.f32.mrf.mxu0
        %v2248 = vadd.f32 %v592, %v2247
        %v2249 = vpop.f32.mrf.mxu0
        %v2250 = vadd.f32 %v592, %v2249
        %2251 = vmatmul.bf16.gmra.mxu0 %v1072
        %v2252 = vpop.f32.mrf.mxu0
        %v2253 = vadd.f32 %v592, %v2252
        %v2254 = vpop.f32.mrf.mxu0
        %v2255 = vadd.f32 %v592, %v2254
        %2256 = vmatmul.bf16.gmra.mxu0 %v1073
        %v2257 = vpop.f32.mrf.mxu0
        %v2258 = vadd.f32 %v592, %v2257
        %v2259 = vpop.f32.mrf.mxu0
        %v2260 = vadd.f32 %v592, %v2259
        %2261 = vmatmul.bf16.gmra.mxu0 %v1074
        %v2262 = vpop.f32.mrf.mxu0
        %v2263 = vadd.f32 %v592, %v2262
        %v2264 = vpop.f32.mrf.mxu0
        %v2265 = vadd.f32 %v592, %v2264
        %2266 = vmatmul.bf16.gmra.mxu0 %v1075
        %v2267 = vpop.f32.mrf.mxu0
        %v2268 = vadd.f32 %v592, %v2267
        %v2269 = vpop.f32.mrf.mxu0
        %v2270 = vadd.f32 %v592, %v2269
        %2271 = vmatmul.bf16.gmra.mxu0 %v1076
        %v2272 = vpop.f32.mrf.mxu0
        %v2273 = vadd.f32 %v592, %v2272
        %v2274 = vpop.f32.mrf.mxu0
        %v2275 = vadd.f32 %v592, %v2274
        %2276 = vmatmul.bf16.gmra.mxu0 %v1077
        %v2277 = vpop.f32.mrf.mxu0
        %v2278 = vadd.f32 %v592, %v2277
        %v2279 = vpop.f32.mrf.mxu0
        %v2280 = vadd.f32 %v592, %v2279
        %2281 = vmatmul.bf16.gmra.mxu0 %v1078
        %v2282 = vpop.f32.mrf.mxu0
        %v2283 = vadd.f32 %v592, %v2282
        %v2284 = vpop.f32.mrf.mxu0
        %v2285 = vadd.f32 %v592, %v2284
        %2286 = vmatmul.bf16.gmra.mxu0 %v1079
        %v2287 = vpop.f32.mrf.mxu0
        %v2288 = vadd.f32 %v592, %v2287
        %v2289 = vpop.f32.mrf.mxu0
        %2290 = vdwg.mxu0
        %2291 = vmatpush.bf16.msra.mxu0 %v1280
        %2292 = vmatpush.bf16.msra.mxu0 %v1277
        %2293 = vmatpush.bf16.msra.mxu0 %v1274
        %2294 = vmatpush.bf16.msra.mxu0 %v1271
        %2295 = vmatpush.bf16.msra.mxu0 %v1268
        %2296 = vmatpush.bf16.msra.mxu0 %v1265
        %2297 = vmatpush.bf16.msra.mxu0 %v1262
        %2298 = vmatpush.bf16.msra.mxu0 %v1259
        %2299 = vmatmul.bf16.gmra.mxu0 %v983
        %v2300 = vpop.f32.mrf.mxu0
        %v2301 = vadd.f32 %v593, %v2300
        %v2302 = vpop.f32.mrf.mxu0
        %v2303 = vadd.f32 %v593, %v2302
        %2304 = vmatmul.bf16.gmra.mxu0 %v984
        %v2305 = vpop.f32.mrf.mxu0
        %v2306 = vadd.f32 %v593, %v2305
        %v2307 = vpop.f32.mrf.mxu0
        %v2308 = vadd.f32 %v593, %v2307
        %2309 = vmatmul.bf16.gmra.mxu0 %v985
        %v2310 = vpop.f32.mrf.mxu0
        %v2311 = vadd.f32 %v593, %v2310
        %v2312 = vpop.f32.mrf.mxu0
        %v2313 = vadd.f32 %v593, %v2312
        %2314 = vmatmul.bf16.gmra.mxu0 %v986
        %v2315 = vpop.f32.mrf.mxu0
        %v2316 = vadd.f32 %v593, %v2315
        %v2317 = vpop.f32.mrf.mxu0
        %v2318 = vadd.f32 %v593, %v2317
        %2319 = vmatmul.bf16.gmra.mxu0 %v987
        %v2320 = vpop.f32.mrf.mxu0
        %v2321 = vadd.f32 %v593, %v2320
        %v2322 = vpop.f32.mrf.mxu0
        %v2323 = vadd.f32 %v593, %v2322
        %2324 = vmatmul.bf16.gmra.mxu0 %v988
        %v2325 = vpop.f32.mrf.mxu0
        %v2326 = vadd.f32 %v593, %v2325
        %v2327 = vpop.f32.mrf.mxu0
        %v2328 = vadd.f32 %v593, %v2327
        %2329 = vmatmul.bf16.gmra.mxu0 %v989
        %v2330 = vpop.f32.mrf.mxu0
        %v2331 = vadd.f32 %v593, %v2330
        %v2332 = vpop.f32.mrf.mxu0
        %v2333 = vadd.f32 %v593, %v2332
        %2334 = vmatmul.bf16.gmra.mxu0 %v990
        %v2335 = vpop.f32.mrf.mxu0
        %v2336 = vadd.f32 %v593, %v2335
        %v2337 = vpop.f32.mrf.mxu0
        %v2338 = vadd.f32 %v593, %v2337
        %2339 = vmatmul.bf16.gmra.mxu0 %v991
        %v2340 = vpop.f32.mrf.mxu0
        %v2341 = vadd.f32 %v593, %v2340
        %v2342 = vpop.f32.mrf.mxu0
        %v2343 = vadd.f32 %v593, %v2342
        %2344 = vmatmul.bf16.gmra.mxu0 %v992
        %v2345 = vpop.f32.mrf.mxu0
        %v2346 = vadd.f32 %v593, %v2345
        %v2347 = vpop.f32.mrf.mxu0
        %v2348 = vadd.f32 %v593, %v2347
        %2349 = vmatmul.bf16.gmra.mxu0 %v993
        %v2350 = vpop.f32.mrf.mxu0
        %v2351 = vadd.f32 %v593, %v2350
        %v2352 = vpop.f32.mrf.mxu0
        %v2353 = vadd.f32 %v593, %v2352
        %2354 = vmatmul.bf16.gmra.mxu0 %v994
        %v2355 = vpop.f32.mrf.mxu0
        %v2356 = vadd.f32 %v593, %v2355
        %v2357 = vpop.f32.mrf.mxu0
        %v2358 = vadd.f32 %v593, %v2357
        %2359 = vmatmul.bf16.gmra.mxu0 %v995
        %v2360 = vpop.f32.mrf.mxu0
        %v2361 = vadd.f32 %v593, %v2360
        %v2362 = vpop.f32.mrf.mxu0
        %v2363 = vadd.f32 %v593, %v2362
        %2364 = vmatmul.bf16.gmra.mxu0 %v996
        %v2365 = vpop.f32.mrf.mxu0
        %v2366 = vadd.f32 %v593, %v2365
        %v2367 = vpop.f32.mrf.mxu0
        %v2368 = vadd.f32 %v593, %v2367
        %2369 = vmatmul.bf16.gmra.mxu0 %v997
        %v2370 = vpop.f32.mrf.mxu0
        %v2371 = vadd.f32 %v593, %v2370
        %v2372 = vpop.f32.mrf.mxu0
        %v2373 = vadd.f32 %v593, %v2372
        %2374 = vmatmul.bf16.gmra.mxu0 %v998
        %v2375 = vpop.f32.mrf.mxu0
        %v2376 = vadd.f32 %v593, %v2375
        %v2377 = vpop.f32.mrf.mxu0
        %v2378 = vadd.f32 %v593, %v2377
        %2379 = vmatmul.bf16.gmra.mxu0 %v999
        %v2380 = vpop.f32.mrf.mxu0
        %v2381 = vadd.f32 %v593, %v2380
        %v2382 = vpop.f32.mrf.mxu0
        %v2383 = vadd.f32 %v593, %v2382
        %2384 = vmatmul.bf16.gmra.mxu0 %v1000
        %v2385 = vpop.f32.mrf.mxu0
        %v2386 = vadd.f32 %v593, %v2385
        %v2387 = vpop.f32.mrf.mxu0
        %v2388 = vadd.f32 %v593, %v2387
        %2389 = vmatmul.bf16.gmra.mxu0 %v1001
        %v2390 = vpop.f32.mrf.mxu0
        %v2391 = vadd.f32 %v593, %v2390
        %v2392 = vpop.f32.mrf.mxu0
        %v2393 = vadd.f32 %v593, %v2392
        %2394 = vmatmul.bf16.gmra.mxu0 %v1002
        %v2395 = vpop.f32.mrf.mxu0
        %v2396 = vadd.f32 %v593, %v2395
        %v2397 = vpop.f32.mrf.mxu0
        %v2398 = vadd.f32 %v593, %v2397
        %2399 = vmatmul.bf16.gmra.mxu0 %v1003
        %v2400 = vpop.f32.mrf.mxu0
        %v2401 = vadd.f32 %v593, %v2400
        %v2402 = vpop.f32.mrf.mxu0
        %v2403 = vadd.f32 %v593, %v2402
        %2404 = vmatmul.bf16.gmra.mxu0 %v1004
        %v2405 = vpop.f32.mrf.mxu0
        %v2406 = vadd.f32 %v593, %v2405
        %v2407 = vpop.f32.mrf.mxu0
        %v2408 = vadd.f32 %v593, %v2407
        %2409 = vmatmul.bf16.gmra.mxu0 %v1005
        %v2410 = vpop.f32.mrf.mxu0
        %v2411 = vadd.f32 %v593, %v2410
        %v2412 = vpop.f32.mrf.mxu0
        %v2413 = vadd.f32 %v593, %v2412
        %2414 = vmatmul.bf16.gmra.mxu0 %v1006
        %v2415 = vpop.f32.mrf.mxu0
        %v2416 = vadd.f32 %v593, %v2415
        %v2417 = vpop.f32.mrf.mxu0
        %v2418 = vadd.f32 %v593, %v2417
        %2419 = vmatmul.bf16.gmra.mxu0 %v1007
        %v2420 = vpop.f32.mrf.mxu0
        %v2421 = vadd.f32 %v593, %v2420
        %v2422 = vpop.f32.mrf.mxu0
        %v2423 = vadd.f32 %v593, %v2422
        %2424 = vmatmul.bf16.gmra.mxu0 %v1008
        %v2425 = vpop.f32.mrf.mxu0
        %v2426 = vadd.f32 %v593, %v2425
        %v2427 = vpop.f32.mrf.mxu0
        %v2428 = vadd.f32 %v593, %v2427
        %2429 = vmatmul.bf16.gmra.mxu0 %v1009
        %v2430 = vpop.f32.mrf.mxu0
        %v2431 = vadd.f32 %v593, %v2430
        %v2432 = vpop.f32.mrf.mxu0
        %v2433 = vadd.f32 %v593, %v2432
        %2434 = vmatmul.bf16.gmra.mxu0 %v1010
        %v2435 = vpop.f32.mrf.mxu0
        %v2436 = vadd.f32 %v593, %v2435
        %v2437 = vpop.f32.mrf.mxu0
        %v2438 = vadd.f32 %v593, %v2437
        %2439 = vmatmul.bf16.gmra.mxu0 %v1011
        %v2440 = vpop.f32.mrf.mxu0
        %v2441 = vadd.f32 %v593, %v2440
        %v2442 = vpop.f32.mrf.mxu0
        %v2443 = vadd.f32 %v593, %v2442
        %2444 = vmatmul.bf16.gmra.mxu0 %v1012
        %v2445 = vpop.f32.mrf.mxu0
        %v2446 = vadd.f32 %v593, %v2445
        %v2447 = vpop.f32.mrf.mxu0
        %v2448 = vadd.f32 %v593, %v2447
        %2449 = vmatmul.bf16.gmra.mxu0 %v1013
        %v2450 = vpop.f32.mrf.mxu0
        %v2451 = vadd.f32 %v593, %v2450
        %v2452 = vpop.f32.mrf.mxu0
        %v2453 = vadd.f32 %v593, %v2452
        %2454 = vmatmul.bf16.gmra.mxu0 %v1014
        %v2455 = vpop.f32.mrf.mxu0
        %v2456 = vadd.f32 %v593, %v2455
        %v2457 = vpop.f32.mrf.mxu0
        %v2458 = vadd.f32 %v593, %v2457
        %2459 = vmatmul.bf16.gmra.mxu0 %v1015
        %v2460 = vpop.f32.mrf.mxu0
        %v2461 = vadd.f32 %v593, %v2460
        %v2462 = vpop.f32.mrf.mxu0
        %v2463 = vadd.f32 %v593, %v2462
        %2464 = vmatmul.bf16.gmra.mxu0 %v1016
        %v2465 = vpop.f32.mrf.mxu0
        %v2466 = vadd.f32 %v593, %v2465
        %v2467 = vpop.f32.mrf.mxu0
        %v2468 = vadd.f32 %v593, %v2467
        %2469 = vmatmul.bf16.gmra.mxu0 %v1017
        %v2470 = vpop.f32.mrf.mxu0
        %v2471 = vadd.f32 %v593, %v2470
        %v2472 = vpop.f32.mrf.mxu0
        %v2473 = vadd.f32 %v593, %v2472
        %2474 = vmatmul.bf16.gmra.mxu0 %v1018
        %v2475 = vpop.f32.mrf.mxu0
        %v2476 = vadd.f32 %v593, %v2475
        %v2477 = vpop.f32.mrf.mxu0
        %v2478 = vadd.f32 %v593, %v2477
        %2479 = vmatmul.bf16.gmra.mxu0 %v1019
        %v2480 = vpop.f32.mrf.mxu0
        %v2481 = vadd.f32 %v593, %v2480
        %v2482 = vpop.f32.mrf.mxu0
        %v2483 = vadd.f32 %v593, %v2482
        %2484 = vmatmul.bf16.gmra.mxu0 %v1020
        %v2485 = vpop.f32.mrf.mxu0
        %v2486 = vadd.f32 %v593, %v2485
        %v2487 = vpop.f32.mrf.mxu0
        %v2488 = vadd.f32 %v593, %v2487
        %2489 = vmatmul.bf16.gmra.mxu0 %v1021
        %v2490 = vpop.f32.mrf.mxu0
        %v2491 = vadd.f32 %v593, %v2490
        %v2492 = vpop.f32.mrf.mxu0
        %v2493 = vadd.f32 %v593, %v2492
        %2494 = vmatmul.bf16.gmra.mxu0 %v1022
        %v2495 = vpop.f32.mrf.mxu0
        %v2496 = vadd.f32 %v593, %v2495
        %v2497 = vpop.f32.mrf.mxu0
        %v2498 = vadd.f32 %v593, %v2497
        %2499 = vmatmul.bf16.gmra.mxu0 %v1023
        %v2500 = vpop.f32.mrf.mxu0
        %v2501 = vadd.f32 %v593, %v2500
        %v2502 = vpop.f32.mrf.mxu0
        %v2503 = vadd.f32 %v593, %v2502
        %2504 = vmatmul.bf16.gmra.mxu0 %v1024
        %v2505 = vpop.f32.mrf.mxu0
        %v2506 = vadd.f32 %v593, %v2505
        %v2507 = vpop.f32.mrf.mxu0
        %v2508 = vadd.f32 %v593, %v2507
        %2509 = vmatmul.bf16.gmra.mxu0 %v1025
        %v2510 = vpop.f32.mrf.mxu0
        %v2511 = vadd.f32 %v593, %v2510
        %v2512 = vpop.f32.mrf.mxu0
        %v2513 = vadd.f32 %v593, %v2512
        %2514 = vmatmul.bf16.gmra.mxu0 %v1026
        %v2515 = vpop.f32.mrf.mxu0
        %v2516 = vadd.f32 %v593, %v2515
        %v2517 = vpop.f32.mrf.mxu0
        %v2518 = vadd.f32 %v593, %v2517
        %2519 = vmatmul.bf16.gmra.mxu0 %v1027
        %v2520 = vpop.f32.mrf.mxu0
        %v2521 = vadd.f32 %v593, %v2520
        %v2522 = vpop.f32.mrf.mxu0
        %v2523 = vadd.f32 %v593, %v2522
        %2524 = vmatmul.bf16.gmra.mxu0 %v1028
        %v2525 = vpop.f32.mrf.mxu0
        %v2526 = vadd.f32 %v593, %v2525
        %v2527 = vpop.f32.mrf.mxu0
        %v2528 = vadd.f32 %v593, %v2527
        %2529 = vmatmul.bf16.gmra.mxu0 %v1029
        %v2530 = vpop.f32.mrf.mxu0
        %v2531 = vadd.f32 %v593, %v2530
        %v2532 = vpop.f32.mrf.mxu0
        %v2533 = vadd.f32 %v593, %v2532
        %2534 = vmatmul.bf16.gmra.mxu0 %v1030
        %v2535 = vpop.f32.mrf.mxu0
        %v2536 = vadd.f32 %v593, %v2535
        %v2537 = vpop.f32.mrf.mxu0
        %v2538 = vadd.f32 %v593, %v2537
        %2539 = vmatmul.bf16.gmra.mxu0 %v1031
        %v2540 = vpop.f32.mrf.mxu0
        %v2541 = vadd.f32 %v593, %v2540
        %v2542 = vpop.f32.mrf.mxu0
        %v2543 = vadd.f32 %v593, %v2542
        %2544 = vmatmul.bf16.gmra.mxu0 %v1032
        %v2545 = vpop.f32.mrf.mxu0
        %v2546 = vadd.f32 %v593, %v2545
        %v2547 = vpop.f32.mrf.mxu0
        %v2548 = vadd.f32 %v593, %v2547
        %2549 = vmatmul.bf16.gmra.mxu0 %v1033
        %v2550 = vpop.f32.mrf.mxu0
        %v2551 = vadd.f32 %v593, %v2550
        %v2552 = vpop.f32.mrf.mxu0
        %v2553 = vadd.f32 %v593, %v2552
        %2554 = vmatmul.bf16.gmra.mxu0 %v1034
        %v2555 = vpop.f32.mrf.mxu0
        %v2556 = vadd.f32 %v593, %v2555
        %v2557 = vpop.f32.mrf.mxu0
        %v2558 = vadd.f32 %v593, %v2557
        %2559 = vmatmul.bf16.gmra.mxu0 %v1035
        %v2560 = vpop.f32.mrf.mxu0
        %v2561 = vadd.f32 %v593, %v2560
        %v2562 = vpop.f32.mrf.mxu0
        %v2563 = vadd.f32 %v593, %v2562
        %2564 = vmatmul.bf16.gmra.mxu0 %v1036
        %v2565 = vpop.f32.mrf.mxu0
        %v2566 = vadd.f32 %v593, %v2565
        %v2567 = vpop.f32.mrf.mxu0
        %v2568 = vadd.f32 %v593, %v2567
        %2569 = vmatmul.bf16.gmra.mxu0 %v1037
        %v2570 = vpop.f32.mrf.mxu0
        %v2571 = vadd.f32 %v593, %v2570
        %v2572 = vpop.f32.mrf.mxu0
        %v2573 = vadd.f32 %v593, %v2572
        %2574 = vmatmul.bf16.gmra.mxu0 %v1038
        %v2575 = vpop.f32.mrf.mxu0
        %v2576 = vadd.f32 %v593, %v2575
        %v2577 = vpop.f32.mrf.mxu0
        %v2578 = vadd.f32 %v593, %v2577
        %2579 = vmatmul.bf16.gmra.mxu0 %v1039
        %v2580 = vpop.f32.mrf.mxu0
        %v2581 = vadd.f32 %v593, %v2580
        %v2582 = vpop.f32.mrf.mxu0
        %v2583 = vadd.f32 %v593, %v2582
        %2584 = vmatmul.bf16.gmra.mxu0 %v1040
        %v2585 = vpop.f32.mrf.mxu0
        %v2586 = vadd.f32 %v593, %v2585
        %v2587 = vpop.f32.mrf.mxu0
        %v2588 = vadd.f32 %v593, %v2587
        %2589 = vmatmul.bf16.gmra.mxu0 %v1041
        %v2590 = vpop.f32.mrf.mxu0
        %v2591 = vadd.f32 %v593, %v2590
        %v2592 = vpop.f32.mrf.mxu0
        %v2593 = vadd.f32 %v593, %v2592
        %2594 = vmatmul.bf16.gmra.mxu0 %v1042
        %v2595 = vpop.f32.mrf.mxu0
        %v2596 = vadd.f32 %v593, %v2595
        %v2597 = vpop.f32.mrf.mxu0
        %v2598 = vadd.f32 %v593, %v2597
        %2599 = vmatmul.bf16.gmra.mxu0 %v1043
        %v2600 = vpop.f32.mrf.mxu0
        %v2601 = vadd.f32 %v593, %v2600
        %v2602 = vpop.f32.mrf.mxu0
        %v2603 = vadd.f32 %v593, %v2602
        %2604 = vmatmul.bf16.gmra.mxu0 %v1044
        %v2605 = vpop.f32.mrf.mxu0
        %v2606 = vadd.f32 %v593, %v2605
        %v2607 = vpop.f32.mrf.mxu0
        %v2608 = vadd.f32 %v593, %v2607
        %2609 = vmatmul.bf16.gmra.mxu0 %v1045
        %v2610 = vpop.f32.mrf.mxu0
        %v2611 = vadd.f32 %v593, %v2610
        %v2612 = vpop.f32.mrf.mxu0
        %v2613 = vadd.f32 %v593, %v2612
        %2614 = vmatmul.bf16.gmra.mxu0 %v1046
        %v2615 = vpop.f32.mrf.mxu0
        %v2616 = vadd.f32 %v593, %v2615
        %v2617 = vpop.f32.mrf.mxu0
        %v2618 = vadd.f32 %v593, %v2617
        %2619 = vmatmul.bf16.gmra.mxu0 %v1047
        %v2620 = vpop.f32.mrf.mxu0
        %v2621 = vadd.f32 %v593, %v2620
        %v2622 = vpop.f32.mrf.mxu0
        %v2623 = vadd.f32 %v593, %v2622
        %2624 = vmatmul.bf16.gmra.mxu0 %v1048
        %v2625 = vpop.f32.mrf.mxu0
        %v2626 = vadd.f32 %v593, %v2625
        %v2627 = vpop.f32.mrf.mxu0
        %v2628 = vadd.f32 %v593, %v2627
        %2629 = vmatmul.bf16.gmra.mxu0 %v1049
        %v2630 = vpop.f32.mrf.mxu0
        %v2631 = vadd.f32 %v593, %v2630
        %v2632 = vpop.f32.mrf.mxu0
        %v2633 = vadd.f32 %v593, %v2632
        %2634 = vmatmul.bf16.gmra.mxu0 %v1050
        %v2635 = vpop.f32.mrf.mxu0
        %v2636 = vadd.f32 %v593, %v2635
        %v2637 = vpop.f32.mrf.mxu0
        %v2638 = vadd.f32 %v593, %v2637
        %2639 = vmatmul.bf16.gmra.mxu0 %v1051
        %v2640 = vpop.f32.mrf.mxu0
        %v2641 = vadd.f32 %v593, %v2640
        %v2642 = vpop.f32.mrf.mxu0
        %v2643 = vadd.f32 %v593, %v2642
        %2644 = vmatmul.bf16.gmra.mxu0 %v1052
        %v2645 = vpop.f32.mrf.mxu0
        %v2646 = vadd.f32 %v593, %v2645
        %v2647 = vpop.f32.mrf.mxu0
        %v2648 = vadd.f32 %v593, %v2647
        %2649 = vmatmul.bf16.gmra.mxu0 %v1053
        %v2650 = vpop.f32.mrf.mxu0
        %v2651 = vadd.f32 %v593, %v2650
        %v2652 = vpop.f32.mrf.mxu0
        %v2653 = vadd.f32 %v593, %v2652
        %2654 = vmatmul.bf16.gmra.mxu0 %v1054
        %v2655 = vpop.f32.mrf.mxu0
        %v2656 = vadd.f32 %v593, %v2655
        %v2657 = vpop.f32.mrf.mxu0
        %v2658 = vadd.f32 %v593, %v2657
        %2659 = vmatmul.bf16.gmra.mxu0 %v1055
        %v2660 = vpop.f32.mrf.mxu0
        %v2661 = vadd.f32 %v593, %v2660
        %v2662 = vpop.f32.mrf.mxu0
        %v2663 = vadd.f32 %v593, %v2662
        %2664 = vmatmul.bf16.gmra.mxu0 %v1056
        %v2665 = vpop.f32.mrf.mxu0
        %v2666 = vadd.f32 %v593, %v2665
        %v2667 = vpop.f32.mrf.mxu0
        %v2668 = vadd.f32 %v593, %v2667
        %2669 = vmatmul.bf16.gmra.mxu0 %v1057
        %v2670 = vpop.f32.mrf.mxu0
        %v2671 = vadd.f32 %v593, %v2670
        %v2672 = vpop.f32.mrf.mxu0
        %v2673 = vadd.f32 %v593, %v2672
        %2674 = vmatmul.bf16.gmra.mxu0 %v1058
        %v2675 = vpop.f32.mrf.mxu0
        %v2676 = vadd.f32 %v593, %v2675
        %v2677 = vpop.f32.mrf.mxu0
        %v2678 = vadd.f32 %v593, %v2677
        %2679 = vmatmul.bf16.gmra.mxu0 %v1059
        %v2680 = vpop.f32.mrf.mxu0
        %v2681 = vadd.f32 %v593, %v2680
        %v2682 = vpop.f32.mrf.mxu0
        %v2683 = vadd.f32 %v593, %v2682
        %2684 = vmatmul.bf16.gmra.mxu0 %v1060
        %v2685 = vpop.f32.mrf.mxu0
        %v2686 = vadd.f32 %v593, %v2685
        %v2687 = vpop.f32.mrf.mxu0
        %v2688 = vadd.f32 %v593, %v2687
        %2689 = vmatmul.bf16.gmra.mxu0 %v1061
        %v2690 = vpop.f32.mrf.mxu0
        %v2691 = vadd.f32 %v593, %v2690
        %v2692 = vpop.f32.mrf.mxu0
        %v2693 = vadd.f32 %v593, %v2692
        %2694 = vmatmul.bf16.gmra.mxu0 %v1062
        %v2695 = vpop.f32.mrf.mxu0
        %v2696 = vadd.f32 %v593, %v2695
        %v2697 = vpop.f32.mrf.mxu0
        %v2698 = vadd.f32 %v593, %v2697
        %2699 = vmatmul.bf16.gmra.mxu0 %v1063
        %v2700 = vpop.f32.mrf.mxu0
        %v2701 = vadd.f32 %v593, %v2700
        %v2702 = vpop.f32.mrf.mxu0
        %v2703 = vadd.f32 %v593, %v2702
        %2704 = vmatmul.bf16.gmra.mxu0 %v1064
        %v2705 = vpop.f32.mrf.mxu0
        %v2706 = vadd.f32 %v593, %v2705
        %v2707 = vpop.f32.mrf.mxu0
        %v2708 = vadd.f32 %v593, %v2707
        %2709 = vmatmul.bf16.gmra.mxu0 %v1065
        %v2710 = vpop.f32.mrf.mxu0
        %v2711 = vadd.f32 %v593, %v2710
        %v2712 = vpop.f32.mrf.mxu0
        %v2713 = vadd.f32 %v593, %v2712
        %2714 = vmatmul.bf16.gmra.mxu0 %v1066
        %v2715 = vpop.f32.mrf.mxu0
        %v2716 = vadd.f32 %v593, %v2715
        %v2717 = vpop.f32.mrf.mxu0
        %v2718 = vadd.f32 %v593, %v2717
        %2719 = vmatmul.bf16.gmra.mxu0 %v1067
        %v2720 = vpop.f32.mrf.mxu0
        %v2721 = vadd.f32 %v593, %v2720
        %v2722 = vpop.f32.mrf.mxu0
        %v2723 = vadd.f32 %v593, %v2722
        %2724 = vmatmul.bf16.gmra.mxu0 %v1068
        %v2725 = vpop.f32.mrf.mxu0
        %v2726 = vadd.f32 %v593, %v2725
        %v2727 = vpop.f32.mrf.mxu0
        %v2728 = vadd.f32 %v593, %v2727
        %2729 = vmatmul.bf16.gmra.mxu0 %v1069
        %v2730 = vpop.f32.mrf.mxu0
        %v2731 = vadd.f32 %v593, %v2730
        %v2732 = vpop.f32.mrf.mxu0
        %v2733 = vadd.f32 %v593, %v2732
        %2734 = vmatmul.bf16.gmra.mxu0 %v1070
        %v2735 = vpop.f32.mrf.mxu0
        %v2736 = vadd.f32 %v593, %v2735
        %v2737 = vpop.f32.mrf.mxu0
        %v2738 = vadd.f32 %v593, %v2737
        %2739 = vmatmul.bf16.gmra.mxu0 %v1071
        %v2740 = vpop.f32.mrf.mxu0
        %v2741 = vadd.f32 %v593, %v2740
        %v2742 = vpop.f32.mrf.mxu0
        %v2743 = vadd.f32 %v593, %v2742
        %2744 = vmatmul.bf16.gmra.mxu0 %v1072
        %v2745 = vpop.f32.mrf.mxu0
        %v2746 = vadd.f32 %v593, %v2745
        %v2747 = vpop.f32.mrf.mxu0
        %v2748 = vadd.f32 %v593, %v2747
        %2749 = vmatmul.bf16.gmra.mxu0 %v1073
        %v2750 = vpop.f32.mrf.mxu0
        %v2751 = vadd.f32 %v593, %v2750
        %v2752 = vpop.f32.mrf.mxu0
        %v2753 = vadd.f32 %v593, %v2752
        %2754 = vmatmul.bf16.gmra.mxu0 %v1074
        %v2755 = vpop.f32.mrf.mxu0
        %v2756 = vadd.f32 %v593, %v2755
        %v2757 = vpop.f32.mrf.mxu0
        %v2758 = vadd.f32 %v593, %v2757
        %2759 = vmatmul.bf16.gmra.mxu0 %v1075
        %v2760 = vpop.f32.mrf.mxu0
        %v2761 = vadd.f32 %v593, %v2760
        %v2762 = vpop.f32.mrf.mxu0
        %v2763 = vadd.f32 %v593, %v2762
        %2764 = vmatmul.bf16.gmra.mxu0 %v1076
        %v2765 = vpop.f32.mrf.mxu0
        %v2766 = vadd.f32 %v593, %v2765
        %v2767 = vpop.f32.mrf.mxu0
        %v2768 = vadd.f32 %v593, %v2767
        %2769 = vmatmul.bf16.gmra.mxu0 %v1077
        %v2770 = vpop.f32.mrf.mxu0
        %v2771 = vadd.f32 %v593, %v2770
        %v2772 = vpop.f32.mrf.mxu0
        %v2773 = vadd.f32 %v593, %v2772
        %2774 = vmatmul.bf16.gmra.mxu0 %v1078
        %v2775 = vpop.f32.mrf.mxu0
        %v2776 = vadd.f32 %v593, %v2775
        %v2777 = vpop.f32.mrf.mxu0
        %v2778 = vadd.f32 %v593, %v2777
        %2779 = vmatmul.bf16.gmra.mxu0 %v1079
        %v2780 = vpop.f32.mrf.mxu0
        %v2781 = vadd.f32 %v593, %v2780
        %v2782 = vpop.f32.mrf.mxu0
        %2783 = vdwg.mxu0
        %v2784 = vmax.f32 %v1315, 0.0
        %v2785 = vmax.f32 %v1808, 0.0
        %v2786 = vmax.f32 %v2301, 0.0
        %v2787 = vmax.f32 %v1317, 0.0
        %v2788 = vmax.f32 %v1810, 0.0
        %v2789 = vmax.f32 %v2303, 0.0
        %v2790 = vmax.f32 %v1320, 0.0
        %v2791 = vmax.f32 %v1813, 0.0
        %v2792 = vmax.f32 %v2306, 0.0
        %v2793 = vmax.f32 %v1322, 0.0
        %v2794 = vmax.f32 %v1815, 0.0
        %v2795 = vmax.f32 %v2308, 0.0
        %v2796 = vmax.f32 %v1325, 0.0
        %v2797 = vmax.f32 %v1818, 0.0
        %v2798 = vmax.f32 %v2311, 0.0
        %v2799 = vmax.f32 %v1327, 0.0
        %v2800 = vmax.f32 %v1820, 0.0
        %v2801 = vmax.f32 %v2313, 0.0
        %v2802 = vmax.f32 %v1330, 0.0
        %v2803 = vmax.f32 %v1823, 0.0
        %v2804 = vmax.f32 %v2316, 0.0
        %v2805 = vmax.f32 %v1332, 0.0
        %v2806 = vmax.f32 %v1825, 0.0
        %v2807 = vmax.f32 %v2318, 0.0
        %v2808 = vmax.f32 %v1335, 0.0
        %v2809 = vmax.f32 %v1828, 0.0
        %v2810 = vmax.f32 %v2321, 0.0
        %v2811 = vmax.f32 %v1337, 0.0
        %v2812 = vmax.f32 %v1830, 0.0
        %v2813 = vmax.f32 %v2323, 0.0
        %v2814 = vmax.f32 %v1340, 0.0
        %v2815 = vmax.f32 %v1833, 0.0
        %v2816 = vmax.f32 %v2326, 0.0
        %v2817 = vmax.f32 %v1342, 0.0
        %v2818 = vmax.f32 %v1835, 0.0
        %v2819 = vmax.f32 %v2328, 0.0
        %v2820 = vmax.f32 %v1345, 0.0
        %v2821 = vmax.f32 %v1838, 0.0
        %v2822 = vmax.f32 %v2331, 0.0
        %v2823 = vmax.f32 %v1347, 0.0
        %v2824 = vmax.f32 %v1840, 0.0
        %v2825 = vmax.f32 %v2333, 0.0
        %v2826 = vmax.f32 %v1350, 0.0
        %v2827 = vmax.f32 %v1843, 0.0
        %v2828 = vmax.f32 %v2336, 0.0
        %v2829 = vmax.f32 %v1352, 0.0
        %v2830 = vmax.f32 %v1845, 0.0
        %v2831 = vmax.f32 %v2338, 0.0
        %v2832 = vmax.f32 %v1355, 0.0
        %v2833 = vmax.f32 %v1848, 0.0
        %v2834 = vmax.f32 %v2341, 0.0
        %v2835 = vmax.f32 %v1357, 0.0
        %v2836 = vmax.f32 %v1850, 0.0
        %v2837 = vmax.f32 %v2343, 0.0
        %v2838 = vmax.f32 %v1360, 0.0
        %v2839 = vmax.f32 %v1853, 0.0
        %v2840 = vmax.f32 %v2346, 0.0
        %v2841 = vmax.f32 %v1362, 0.0
        %v2842 = vmax.f32 %v1855, 0.0
        %v2843 = vmax.f32 %v2348, 0.0
        %v2844 = vmax.f32 %v1365, 0.0
        %v2845 = vmax.f32 %v1858, 0.0
        %v2846 = vmax.f32 %v2351, 0.0
        %v2847 = vmax.f32 %v1367, 0.0
        %v2848 = vmax.f32 %v1860, 0.0
        %v2849 = vmax.f32 %v2353, 0.0
        %v2850 = vmax.f32 %v1370, 0.0
        %v2851 = vmax.f32 %v1863, 0.0
        %v2852 = vmax.f32 %v2356, 0.0
        %v2853 = vmax.f32 %v1372, 0.0
        %v2854 = vmax.f32 %v1865, 0.0
        %v2855 = vmax.f32 %v2358, 0.0
        %v2856 = vmax.f32 %v1375, 0.0
        %v2857 = vmax.f32 %v1868, 0.0
        %v2858 = vmax.f32 %v2361, 0.0
        %v2859 = vmax.f32 %v1377, 0.0
        %v2860 = vmax.f32 %v1870, 0.0
        %v2861 = vmax.f32 %v2363, 0.0
        %v2862 = vmax.f32 %v1380, 0.0
        %v2863 = vmax.f32 %v1873, 0.0
        %v2864 = vmax.f32 %v2366, 0.0
        %v2865 = vmax.f32 %v1382, 0.0
        %v2866 = vmax.f32 %v1875, 0.0
        %v2867 = vmax.f32 %v2368, 0.0
        %v2868 = vmax.f32 %v1385, 0.0
        %v2869 = vmax.f32 %v1878, 0.0
        %v2870 = vmax.f32 %v2371, 0.0
        %v2871 = vmax.f32 %v1387, 0.0
        %v2872 = vmax.f32 %v1880, 0.0
        %v2873 = vmax.f32 %v2373, 0.0
        %v2874 = vmax.f32 %v1390, 0.0
        %v2875 = vmax.f32 %v1883, 0.0
        %v2876 = vmax.f32 %v2376, 0.0
        %v2877 = vmax.f32 %v1392, 0.0
        %v2878 = vmax.f32 %v1885, 0.0
        %v2879 = vmax.f32 %v2378, 0.0
        %v2880 = vmax.f32 %v1395, 0.0
        %v2881 = vmax.f32 %v1888, 0.0
        %v2882 = vmax.f32 %v2381, 0.0
        %v2883 = vmax.f32 %v1397, 0.0
        %v2884 = vmax.f32 %v1890, 0.0
        %v2885 = vmax.f32 %v2383, 0.0
        %v2886 = vmax.f32 %v1400, 0.0
        %v2887 = vmax.f32 %v1893, 0.0
        %v2888 = vmax.f32 %v2386, 0.0
        %v2889 = vmax.f32 %v1402, 0.0
        %v2890 = vmax.f32 %v1895, 0.0
        %v2891 = vmax.f32 %v2388, 0.0
        %v2892 = vmax.f32 %v1405, 0.0
        %v2893 = vmax.f32 %v1898, 0.0
        %v2894 = vmax.f32 %v2391, 0.0
        %v2895 = vmax.f32 %v1407, 0.0
        %v2896 = vmax.f32 %v1900, 0.0
        %v2897 = vmax.f32 %v2393, 0.0
        %v2898 = vmax.f32 %v1410, 0.0
        %v2899 = vmax.f32 %v1903, 0.0
        %v2900 = vmax.f32 %v2396, 0.0
        %v2901 = vmax.f32 %v1412, 0.0
        %v2902 = vmax.f32 %v1905, 0.0
        %v2903 = vmax.f32 %v2398, 0.0
        %v2904 = vmax.f32 %v1415, 0.0
        %v2905 = vmax.f32 %v1908, 0.0
        %v2906 = vmax.f32 %v2401, 0.0
        %v2907 = vmax.f32 %v1417, 0.0
        %v2908 = vmax.f32 %v1910, 0.0
        %v2909 = vmax.f32 %v2403, 0.0
        %v2910 = vmax.f32 %v1420, 0.0
        %v2911 = vmax.f32 %v1913, 0.0
        %v2912 = vmax.f32 %v2406, 0.0
        %v2913 = vmax.f32 %v1422, 0.0
        %v2914 = vmax.f32 %v1915, 0.0
        %v2915 = vmax.f32 %v2408, 0.0
        %v2916 = vmax.f32 %v1425, 0.0
        %v2917 = vmax.f32 %v1918, 0.0
        %v2918 = vmax.f32 %v2411, 0.0
        %v2919 = vmax.f32 %v1427, 0.0
        %v2920 = vmax.f32 %v1920, 0.0
        %v2921 = vmax.f32 %v2413, 0.0
        %v2922 = vmax.f32 %v1430, 0.0
        %v2923 = vmax.f32 %v1923, 0.0
        %v2924 = vmax.f32 %v2416, 0.0
        %v2925 = vmax.f32 %v1432, 0.0
        %v2926 = vmax.f32 %v1925, 0.0
        %v2927 = vmax.f32 %v2418, 0.0
        %v2928 = vmax.f32 %v1435, 0.0
        %v2929 = vmax.f32 %v1928, 0.0
        %v2930 = vmax.f32 %v2421, 0.0
        %v2931 = vmax.f32 %v1437, 0.0
        %v2932 = vmax.f32 %v1930, 0.0
        %v2933 = vmax.f32 %v2423, 0.0
        %v2934 = vmax.f32 %v1440, 0.0
        %v2935 = vmax.f32 %v1933, 0.0
        %v2936 = vmax.f32 %v2426, 0.0
        %v2937 = vmax.f32 %v1442, 0.0
        %v2938 = vmax.f32 %v1935, 0.0
        %v2939 = vmax.f32 %v2428, 0.0
        %v2940 = vmax.f32 %v1445, 0.0
        %v2941 = vmax.f32 %v1938, 0.0
        %v2942 = vmax.f32 %v2431, 0.0
        %v2943 = vmax.f32 %v1447, 0.0
        %v2944 = vmax.f32 %v1940, 0.0
        %v2945 = vmax.f32 %v2433, 0.0
        %v2946 = vmax.f32 %v1450, 0.0
        %v2947 = vmax.f32 %v1943, 0.0
        %v2948 = vmax.f32 %v2436, 0.0
        %v2949 = vmax.f32 %v1452, 0.0
        %v2950 = vmax.f32 %v1945, 0.0
        %v2951 = vmax.f32 %v2438, 0.0
        %v2952 = vmax.f32 %v1455, 0.0
        %v2953 = vmax.f32 %v1948, 0.0
        %v2954 = vmax.f32 %v2441, 0.0
        %v2955 = vmax.f32 %v1457, 0.0
        %v2956 = vmax.f32 %v1950, 0.0
        %v2957 = vmax.f32 %v2443, 0.0
        %v2958 = vmax.f32 %v1460, 0.0
        %v2959 = vmax.f32 %v1953, 0.0
        %v2960 = vmax.f32 %v2446, 0.0
        %v2961 = vmax.f32 %v1462, 0.0
        %v2962 = vmax.f32 %v1955, 0.0
        %v2963 = vmax.f32 %v2448, 0.0
        %v2964 = vmax.f32 %v1465, 0.0
        %v2965 = vmax.f32 %v1958, 0.0
        %v2966 = vmax.f32 %v2451, 0.0
        %v2967 = vmax.f32 %v1467, 0.0
        %v2968 = vmax.f32 %v1960, 0.0
        %v2969 = vmax.f32 %v2453, 0.0
        %v2970 = vmax.f32 %v1470, 0.0
        %v2971 = vmax.f32 %v1963, 0.0
        %v2972 = vmax.f32 %v2456, 0.0
        %v2973 = vmax.f32 %v1472, 0.0
        %v2974 = vmax.f32 %v1965, 0.0
        %v2975 = vmax.f32 %v2458, 0.0
        %v2976 = vmax.f32 %v1475, 0.0
        %v2977 = vmax.f32 %v1968, 0.0
        %v2978 = vmax.f32 %v2461, 0.0
        %v2979 = vmax.f32 %v1477, 0.0
        %v2980 = vmax.f32 %v1970, 0.0
        %v2981 = vmax.f32 %v2463, 0.0
        %v2982 = vmax.f32 %v1480, 0.0
        %v2983 = vmax.f32 %v1973, 0.0
        %v2984 = vmax.f32 %v2466, 0.0
        %v2985 = vmax.f32 %v1482, 0.0
        %v2986 = vmax.f32 %v1975, 0.0
        %v2987 = vmax.f32 %v2468, 0.0
        %v2988 = vmax.f32 %v1485, 0.0
        %v2989 = vmax.f32 %v1978, 0.0
        %v2990 = vmax.f32 %v2471, 0.0
        %v2991 = vmax.f32 %v1487, 0.0
        %v2992 = vmax.f32 %v1980, 0.0
        %v2993 = vmax.f32 %v2473, 0.0
        %v2994 = vmax.f32 %v1490, 0.0
        %v2995 = vmax.f32 %v1983, 0.0
        %v2996 = vmax.f32 %v2476, 0.0
        %v2997 = vmax.f32 %v1492, 0.0
        %v2998 = vmax.f32 %v1985, 0.0
        %v2999 = vmax.f32 %v2478, 0.0
        %v3000 = vmax.f32 %v1495, 0.0
        %v3001 = vmax.f32 %v1988, 0.0
        %v3002 = vmax.f32 %v2481, 0.0
        %v3003 = vmax.f32 %v1497, 0.0
        %v3004 = vmax.f32 %v1990, 0.0
        %v3005 = vmax.f32 %v2483, 0.0
        %v3006 = vmax.f32 %v1500, 0.0
        %v3007 = vmax.f32 %v1993, 0.0
        %v3008 = vmax.f32 %v2486, 0.0
        %v3009 = vmax.f32 %v1502, 0.0
        %v3010 = vmax.f32 %v1995, 0.0
        %v3011 = vmax.f32 %v2488, 0.0
        %v3012 = vmax.f32 %v1505, 0.0
        %v3013 = vmax.f32 %v1998, 0.0
        %v3014 = vmax.f32 %v2491, 0.0
        %v3015 = vmax.f32 %v1507, 0.0
        %v3016 = vmax.f32 %v2000, 0.0
        %v3017 = vmax.f32 %v2493, 0.0
        %v3018 = vmax.f32 %v1510, 0.0
        %v3019 = vmax.f32 %v2003, 0.0
        %v3020 = vmax.f32 %v2496, 0.0
        %v3021 = vmax.f32 %v1512, 0.0
        %v3022 = vmax.f32 %v2005, 0.0
        %v3023 = vmax.f32 %v2498, 0.0
        %v3024 = vmax.f32 %v1515, 0.0
        %v3025 = vmax.f32 %v2008, 0.0
        %v3026 = vmax.f32 %v2501, 0.0
        %v3027 = vmax.f32 %v1517, 0.0
        %v3028 = vmax.f32 %v2010, 0.0
        %v3029 = vmax.f32 %v2503, 0.0
        %v3030 = vmax.f32 %v1520, 0.0
        %v3031 = vmax.f32 %v2013, 0.0
        %v3032 = vmax.f32 %v2506, 0.0
        %v3033 = vmax.f32 %v1522, 0.0
        %v3034 = vmax.f32 %v2015, 0.0
        %v3035 = vmax.f32 %v2508, 0.0
        %v3036 = vmax.f32 %v1525, 0.0
        %v3037 = vmax.f32 %v2018, 0.0
        %v3038 = vmax.f32 %v2511, 0.0
        %v3039 = vmax.f32 %v1527, 0.0
        %v3040 = vmax.f32 %v2020, 0.0
        %v3041 = vmax.f32 %v2513, 0.0
        %v3042 = vmax.f32 %v1530, 0.0
        %v3043 = vmax.f32 %v2023, 0.0
        %v3044 = vmax.f32 %v2516, 0.0
        %v3045 = vmax.f32 %v1532, 0.0
        %v3046 = vmax.f32 %v2025, 0.0
        %v3047 = vmax.f32 %v2518, 0.0
        %v3048 = vmax.f32 %v1535, 0.0
        %v3049 = vmax.f32 %v2028, 0.0
        %v3050 = vmax.f32 %v2521, 0.0
        %v3051 = vmax.f32 %v1537, 0.0
        %v3052 = vmax.f32 %v2030, 0.0
        %v3053 = vmax.f32 %v2523, 0.0
        %v3054 = vmax.f32 %v1540, 0.0
        %v3055 = vmax.f32 %v2033, 0.0
        %v3056 = vmax.f32 %v2526, 0.0
        %v3057 = vmax.f32 %v1542, 0.0
        %v3058 = vmax.f32 %v2035, 0.0
        %v3059 = vmax.f32 %v2528, 0.0
        %v3060 = vmax.f32 %v1545, 0.0
        %v3061 = vmax.f32 %v2038, 0.0
        %v3062 = vmax.f32 %v2531, 0.0
        %v3063 = vmax.f32 %v1547, 0.0
        %v3064 = vmax.f32 %v2040, 0.0
        %v3065 = vmax.f32 %v2533, 0.0
        %v3066 = vmax.f32 %v1550, 0.0
        %v3067 = vmax.f32 %v2043, 0.0
        %v3068 = vmax.f32 %v2536, 0.0
        %v3069 = vmax.f32 %v1552, 0.0
        %v3070 = vmax.f32 %v2045, 0.0
        %v3071 = vmax.f32 %v2538, 0.0
        %v3072 = vmax.f32 %v1555, 0.0
        %v3073 = vmax.f32 %v2048, 0.0
        %v3074 = vmax.f32 %v2541, 0.0
        %v3075 = vmax.f32 %v1557, 0.0
        %v3076 = vmax.f32 %v2050, 0.0
        %v3077 = vmax.f32 %v2543, 0.0
        %v3078 = vmax.f32 %v1560, 0.0
        %v3079 = vmax.f32 %v2053, 0.0
        %v3080 = vmax.f32 %v2546, 0.0
        %v3081 = vmax.f32 %v1562, 0.0
        %v3082 = vmax.f32 %v2055, 0.0
        %v3083 = vmax.f32 %v2548, 0.0
        %v3084 = vmax.f32 %v1565, 0.0
        %v3085 = vmax.f32 %v2058, 0.0
        %v3086 = vmax.f32 %v2551, 0.0
        %v3087 = vmax.f32 %v1567, 0.0
        %v3088 = vmax.f32 %v2060, 0.0
        %v3089 = vmax.f32 %v2553, 0.0
        %v3090 = vmax.f32 %v1570, 0.0
        %v3091 = vmax.f32 %v2063, 0.0
        %v3092 = vmax.f32 %v2556, 0.0
        %v3093 = vmax.f32 %v1572, 0.0
        %v3094 = vmax.f32 %v2065, 0.0
        %v3095 = vmax.f32 %v2558, 0.0
        %v3096 = vmax.f32 %v1575, 0.0
        %v3097 = vmax.f32 %v2068, 0.0
        %v3098 = vmax.f32 %v2561, 0.0
        %v3099 = vmax.f32 %v1577, 0.0
        %v3100 = vmax.f32 %v2070, 0.0
        %v3101 = vmax.f32 %v2563, 0.0
        %v3102 = vmax.f32 %v1580, 0.0
        %v3103 = vmax.f32 %v2073, 0.0
        %v3104 = vmax.f32 %v2566, 0.0
        %v3105 = vmax.f32 %v1582, 0.0
        %v3106 = vmax.f32 %v2075, 0.0
        %v3107 = vmax.f32 %v2568, 0.0
        %v3108 = vmax.f32 %v1585, 0.0
        %v3109 = vmax.f32 %v2078, 0.0
        %v3110 = vmax.f32 %v2571, 0.0
        %v3111 = vmax.f32 %v1587, 0.0
        %v3112 = vmax.f32 %v2080, 0.0
        %v3113 = vmax.f32 %v2573, 0.0
        %v3114 = vmax.f32 %v1590, 0.0
        %v3115 = vmax.f32 %v2083, 0.0
        %v3116 = vmax.f32 %v2576, 0.0
        %v3117 = vmax.f32 %v1592, 0.0
        %v3118 = vmax.f32 %v2085, 0.0
        %v3119 = vmax.f32 %v2578, 0.0
        %v3120 = vmax.f32 %v1595, 0.0
        %v3121 = vmax.f32 %v2088, 0.0
        %v3122 = vmax.f32 %v2581, 0.0
        %v3123 = vmax.f32 %v1597, 0.0
        %v3124 = vmax.f32 %v2090, 0.0
        %v3125 = vmax.f32 %v2583, 0.0
        %v3126 = vmax.f32 %v1600, 0.0
        %v3127 = vmax.f32 %v2093, 0.0
        %v3128 = vmax.f32 %v2586, 0.0
        %v3129 = vmax.f32 %v1602, 0.0
        %v3130 = vmax.f32 %v2095, 0.0
        %v3131 = vmax.f32 %v2588, 0.0
        %v3132 = vmax.f32 %v1605, 0.0
        %v3133 = vmax.f32 %v2098, 0.0
        %v3134 = vmax.f32 %v2591, 0.0
        %v3135 = vmax.f32 %v1607, 0.0
        %v3136 = vmax.f32 %v2100, 0.0
        %v3137 = vmax.f32 %v2593, 0.0
        %v3138 = vmax.f32 %v1610, 0.0
        %v3139 = vmax.f32 %v2103, 0.0
        %v3140 = vmax.f32 %v2596, 0.0
        %v3141 = vmax.f32 %v1612, 0.0
        %v3142 = vmax.f32 %v2105, 0.0
        %v3143 = vmax.f32 %v2598, 0.0
        %v3144 = vmax.f32 %v1615, 0.0
        %v3145 = vmax.f32 %v2108, 0.0
        %v3146 = vmax.f32 %v2601, 0.0
        %v3147 = vmax.f32 %v1617, 0.0
        %v3148 = vmax.f32 %v2110, 0.0
        %v3149 = vmax.f32 %v2603, 0.0
        %v3150 = vmax.f32 %v1620, 0.0
        %v3151 = vmax.f32 %v2113, 0.0
        %v3152 = vmax.f32 %v2606, 0.0
        %v3153 = vmax.f32 %v1622, 0.0
        %v3154 = vmax.f32 %v2115, 0.0
        %v3155 = vmax.f32 %v2608, 0.0
        %v3156 = vmax.f32 %v1625, 0.0
        %v3157 = vmax.f32 %v2118, 0.0
        %v3158 = vmax.f32 %v2611, 0.0
        %v3159 = vmax.f32 %v1627, 0.0
        %v3160 = vmax.f32 %v2120, 0.0
        %v3161 = vmax.f32 %v2613, 0.0
        %v3162 = vmax.f32 %v1630, 0.0
        %v3163 = vmax.f32 %v2123, 0.0
        %v3164 = vmax.f32 %v2616, 0.0
        %v3165 = vmax.f32 %v1632, 0.0
        %v3166 = vmax.f32 %v2125, 0.0
        %v3167 = vmax.f32 %v2618, 0.0
        %v3168 = vmax.f32 %v1635, 0.0
        %v3169 = vmax.f32 %v2128, 0.0
        %v3170 = vmax.f32 %v2621, 0.0
        %v3171 = vmax.f32 %v1637, 0.0
        %v3172 = vmax.f32 %v2130, 0.0
        %v3173 = vmax.f32 %v2623, 0.0
        %v3174 = vmax.f32 %v1640, 0.0
        %v3175 = vmax.f32 %v2133, 0.0
        %v3176 = vmax.f32 %v2626, 0.0
        %v3177 = vmax.f32 %v1642, 0.0
        %v3178 = vmax.f32 %v2135, 0.0
        %v3179 = vmax.f32 %v2628, 0.0
        %v3180 = vmax.f32 %v1645, 0.0
        %v3181 = vmax.f32 %v2138, 0.0
        %v3182 = vmax.f32 %v2631, 0.0
        %v3183 = vmax.f32 %v1647, 0.0
        %v3184 = vmax.f32 %v2140, 0.0
        %v3185 = vmax.f32 %v2633, 0.0
        %v3186 = vmax.f32 %v1650, 0.0
        %v3187 = vmax.f32 %v2143, 0.0
        %v3188 = vmax.f32 %v2636, 0.0
        %v3189 = vmax.f32 %v1652, 0.0
        %v3190 = vmax.f32 %v2145, 0.0
        %v3191 = vmax.f32 %v2638, 0.0
        %v3192 = vmax.f32 %v1655, 0.0
        %v3193 = vmax.f32 %v2148, 0.0
        %v3194 = vmax.f32 %v2641, 0.0
        %v3195 = vmax.f32 %v1657, 0.0
        %v3196 = vmax.f32 %v2150, 0.0
        %v3197 = vmax.f32 %v2643, 0.0
        %v3198 = vmax.f32 %v1660, 0.0
        %v3199 = vmax.f32 %v2153, 0.0
        %v3200 = vmax.f32 %v2646, 0.0
        %v3201 = vmax.f32 %v1662, 0.0
        %v3202 = vmax.f32 %v2155, 0.0
        %v3203 = vmax.f32 %v2648, 0.0
        %v3204 = vmax.f32 %v1665, 0.0
        %v3205 = vmax.f32 %v2158, 0.0
        %v3206 = vmax.f32 %v2651, 0.0
        %v3207 = vmax.f32 %v1667, 0.0
        %v3208 = vmax.f32 %v2160, 0.0
        %v3209 = vmax.f32 %v2653, 0.0
        %v3210 = vmax.f32 %v1670, 0.0
        %v3211 = vmax.f32 %v2163, 0.0
        %v3212 = vmax.f32 %v2656, 0.0
        %v3213 = vmax.f32 %v1672, 0.0
        %v3214 = vmax.f32 %v2165, 0.0
        %v3215 = vmax.f32 %v2658, 0.0
        %v3216 = vmax.f32 %v1675, 0.0
        %v3217 = vmax.f32 %v2168, 0.0
        %v3218 = vmax.f32 %v2661, 0.0
        %v3219 = vmax.f32 %v1677, 0.0
        %v3220 = vmax.f32 %v2170, 0.0
        %v3221 = vmax.f32 %v2663, 0.0
        %v3222 = vmax.f32 %v1680, 0.0
        %v3223 = vmax.f32 %v2173, 0.0
        %v3224 = vmax.f32 %v2666, 0.0
        %v3225 = vmax.f32 %v1682, 0.0
        %v3226 = vmax.f32 %v2175, 0.0
        %v3227 = vmax.f32 %v2668, 0.0
        %v3228 = vmax.f32 %v1685, 0.0
        %v3229 = vmax.f32 %v2178, 0.0
        %v3230 = vmax.f32 %v2671, 0.0
        %v3231 = vmax.f32 %v1687, 0.0
        %v3232 = vmax.f32 %v2180, 0.0
        %v3233 = vmax.f32 %v2673, 0.0
        %v3234 = vmax.f32 %v1690, 0.0
        %v3235 = vmax.f32 %v2183, 0.0
        %v3236 = vmax.f32 %v2676, 0.0
        %v3237 = vmax.f32 %v1692, 0.0
        %v3238 = vmax.f32 %v2185, 0.0
        %v3239 = vmax.f32 %v2678, 0.0
        %v3240 = vmax.f32 %v1695, 0.0
        %v3241 = vmax.f32 %v2188, 0.0
        %v3242 = vmax.f32 %v2681, 0.0
        %v3243 = vmax.f32 %v1697, 0.0
        %v3244 = vmax.f32 %v2190, 0.0
        %v3245 = vmax.f32 %v2683, 0.0
        %v3246 = vmax.f32 %v1700, 0.0
        %v3247 = vmax.f32 %v2193, 0.0
        %v3248 = vmax.f32 %v2686, 0.0
        %v3249 = vmax.f32 %v1702, 0.0
        %v3250 = vmax.f32 %v2195, 0.0
        %v3251 = vmax.f32 %v2688, 0.0
        %v3252 = vmax.f32 %v1705, 0.0
        %v3253 = vmax.f32 %v2198, 0.0
        %v3254 = vmax.f32 %v2691, 0.0
        %v3255 = vmax.f32 %v1707, 0.0
        %v3256 = vmax.f32 %v2200, 0.0
        %v3257 = vmax.f32 %v2693, 0.0
        %v3258 = vmax.f32 %v1710, 0.0
        %v3259 = vmax.f32 %v2203, 0.0
        %v3260 = vmax.f32 %v2696, 0.0
        %v3261 = vmax.f32 %v1712, 0.0
        %v3262 = vmax.f32 %v2205, 0.0
        %v3263 = vmax.f32 %v2698, 0.0
        %v3264 = vmax.f32 %v1715, 0.0
        %v3265 = vmax.f32 %v2208, 0.0
        %v3266 = vmax.f32 %v2701, 0.0
        %v3267 = vmax.f32 %v1717, 0.0
        %v3268 = vmax.f32 %v2210, 0.0
        %v3269 = vmax.f32 %v2703, 0.0
        %v3270 = vmax.f32 %v1720, 0.0
        %v3271 = vmax.f32 %v2213, 0.0
        %v3272 = vmax.f32 %v2706, 0.0
        %v3273 = vmax.f32 %v1722, 0.0
        %v3274 = vmax.f32 %v2215, 0.0
        %v3275 = vmax.f32 %v2708, 0.0
        %v3276 = vmax.f32 %v1725, 0.0
        %v3277 = vmax.f32 %v2218, 0.0
        %v3278 = vmax.f32 %v2711, 0.0
        %v3279 = vmax.f32 %v1727, 0.0
        %v3280 = vmax.f32 %v2220, 0.0
        %v3281 = vmax.f32 %v2713, 0.0
        %v3282 = vmax.f32 %v1730, 0.0
        %v3283 = vmax.f32 %v2223, 0.0
        %v3284 = vmax.f32 %v2716, 0.0
        %v3285 = vmax.f32 %v1732, 0.0
        %v3286 = vmax.f32 %v2225, 0.0
        %v3287 = vmax.f32 %v2718, 0.0
        %v3288 = vmax.f32 %v1735, 0.0
        %v3289 = vmax.f32 %v2228, 0.0
        %v3290 = vmax.f32 %v2721, 0.0
        %v3291 = vmax.f32 %v1737, 0.0
        %v3292 = vmax.f32 %v2230, 0.0
        %v3293 = vmax.f32 %v2723, 0.0
        %v3294 = vmax.f32 %v1740, 0.0
        %v3295 = vmax.f32 %v2233, 0.0
        %v3296 = vmax.f32 %v2726, 0.0
        %v3297 = vmax.f32 %v1742, 0.0
        %v3298 = vmax.f32 %v2235, 0.0
        %v3299 = vmax.f32 %v2728, 0.0
        %v3300 = vmax.f32 %v1745, 0.0
        %v3301 = vmax.f32 %v2238, 0.0
        %v3302 = vmax.f32 %v2731, 0.0
        %v3303 = vmax.f32 %v1747, 0.0
        %v3304 = vmax.f32 %v2240, 0.0
        %v3305 = vmax.f32 %v2733, 0.0
        %v3306 = vmax.f32 %v1750, 0.0
        %v3307 = vmax.f32 %v2243, 0.0
        %v3308 = vmax.f32 %v2736, 0.0
        %v3309 = vmax.f32 %v1752, 0.0
        %v3310 = vmax.f32 %v2245, 0.0
        %v3311 = vmax.f32 %v2738, 0.0
        %v3312 = vmax.f32 %v1755, 0.0
        %v3313 = vmax.f32 %v2248, 0.0
        %v3314 = vmax.f32 %v2741, 0.0
        %v3315 = vmax.f32 %v1757, 0.0
        %v3316 = vmax.f32 %v2250, 0.0
        %v3317 = vmax.f32 %v2743, 0.0
        %v3318 = vmax.f32 %v1760, 0.0
        %v3319 = vmax.f32 %v2253, 0.0
        %v3320 = vmax.f32 %v2746, 0.0
        %v3321 = vmax.f32 %v1762, 0.0
        %v3322 = vmax.f32 %v2255, 0.0
        %v3323 = vmax.f32 %v2748, 0.0
        %v3324 = vmax.f32 %v1765, 0.0
        %v3325 = vmax.f32 %v2258, 0.0
        %v3326 = vmax.f32 %v2751, 0.0
        %v3327 = vmax.f32 %v1767, 0.0
        %v3328 = vmax.f32 %v2260, 0.0
        %v3329 = vmax.f32 %v2753, 0.0
        %v3330 = vmax.f32 %v1770, 0.0
        %v3331 = vmax.f32 %v2263, 0.0
        %v3332 = vmax.f32 %v2756, 0.0
        %v3333 = vmax.f32 %v1772, 0.0
        %v3334 = vmax.f32 %v2265, 0.0
        %v3335 = vmax.f32 %v2758, 0.0
        %v3336 = vmax.f32 %v1775, 0.0
        %v3337 = vmax.f32 %v2268, 0.0
        %v3338 = vmax.f32 %v2761, 0.0
        %v3339 = vmax.f32 %v1777, 0.0
        %v3340 = vmax.f32 %v2270, 0.0
        %v3341 = vmax.f32 %v2763, 0.0
        %v3342 = vmax.f32 %v1780, 0.0
        %v3343 = vmax.f32 %v2273, 0.0
        %v3344 = vmax.f32 %v2766, 0.0
        %v3345 = vmax.f32 %v1782, 0.0
        %v3346 = vmax.f32 %v2275, 0.0
        %v3347 = vmax.f32 %v2768, 0.0
        %v3348 = vmax.f32 %v1785, 0.0
        %v3349 = vmax.f32 %v2278, 0.0
        %v3350 = vmax.f32 %v2771, 0.0
        %v3351 = vmax.f32 %v1787, 0.0
        %v3352 = vmax.f32 %v2280, 0.0
        %v3353 = vmax.f32 %v2773, 0.0
        %v3354 = vmax.f32 %v1790, 0.0
        %v3355 = vmax.f32 %v2283, 0.0
        %v3356 = vmax.f32 %v2776, 0.0
        %v3357 = vmax.f32 %v1792, 0.0
        %v3358 = vmax.f32 %v2285, 0.0
        %v3359 = vmax.f32 %v2778, 0.0
        %v3360 = vmax.f32 %v1795, 0.0
        %v3361 = vmax.f32 %v2288, 0.0
        %v3362 = vmax.f32 %v2781, 0.0
        %v3363 = vadd.f32 %v2784, %v2785
        %v3364 = vadd.f32 %v2787, %v2788
        %v3365 = vadd.f32 %v2790, %v2791
        %v3366 = vadd.f32 %v2793, %v2794
        %v3367 = vadd.f32 %v2796, %v2797
        %v3368 = vadd.f32 %v2799, %v2800
        %v3369 = vadd.f32 %v2802, %v2803
        %v3370 = vadd.f32 %v2805, %v2806
        %v3371 = vadd.f32 %v2808, %v2809
        %v3372 = vadd.f32 %v2811, %v2812
        %v3373 = vadd.f32 %v2814, %v2815
        %v3374 = vadd.f32 %v2817, %v2818
        %v3375 = vadd.f32 %v2820, %v2821
        %v3376 = vadd.f32 %v2823, %v2824
        %v3377 = vadd.f32 %v2826, %v2827
        %v3378 = vadd.f32 %v2829, %v2830
        %v3379 = vadd.f32 %v2832, %v2833
        %v3380 = vadd.f32 %v2835, %v2836
        %v3381 = vadd.f32 %v2838, %v2839
        %v3382 = vadd.f32 %v2841, %v2842
        %v3383 = vadd.f32 %v2844, %v2845
        %v3384 = vadd.f32 %v2847, %v2848
        %v3385 = vadd.f32 %v2850, %v2851
        %v3386 = vadd.f32 %v2853, %v2854
        %v3387 = vadd.f32 %v2856, %v2857
        %v3388 = vadd.f32 %v2859, %v2860
        %v3389 = vadd.f32 %v2862, %v2863
        %v3390 = vadd.f32 %v2865, %v2866
        %v3391 = vadd.f32 %v2868, %v2869
        %v3392 = vadd.f32 %v2871, %v2872
        %v3393 = vadd.f32 %v2874, %v2875
        %v3394 = vadd.f32 %v2877, %v2878
        %v3395 = vadd.f32 %v2880, %v2881
        %v3396 = vadd.f32 %v2883, %v2884
        %v3397 = vadd.f32 %v2886, %v2887
        %v3398 = vadd.f32 %v2889, %v2890
        %v3399 = vadd.f32 %v2892, %v2893
        %v3400 = vadd.f32 %v2895, %v2896
        %v3401 = vadd.f32 %v2898, %v2899
        %v3402 = vadd.f32 %v2901, %v2902
        %v3403 = vadd.f32 %v2904, %v2905
        %v3404 = vadd.f32 %v2907, %v2908
        %v3405 = vadd.f32 %v2910, %v2911
        %v3406 = vadd.f32 %v2913, %v2914
        %v3407 = vadd.f32 %v2916, %v2917
        %v3408 = vadd.f32 %v2919, %v2920
        %v3409 = vadd.f32 %v2922, %v2923
        %v3410 = vadd.f32 %v2925, %v2926
        %v3411 = vadd.f32 %v2928, %v2929
        %v3412 = vadd.f32 %v2931, %v2932
        %v3413 = vadd.f32 %v2934, %v2935
        %v3414 = vadd.f32 %v2937, %v2938
        %v3415 = vadd.f32 %v2940, %v2941
        %v3416 = vadd.f32 %v2943, %v2944
        %v3417 = vadd.f32 %v2946, %v2947
        %v3418 = vadd.f32 %v2949, %v2950
        %v3419 = vadd.f32 %v2952, %v2953
        %v3420 = vadd.f32 %v2955, %v2956
        %v3421 = vadd.f32 %v2958, %v2959
        %v3422 = vadd.f32 %v2961, %v2962
        %v3423 = vadd.f32 %v2964, %v2965
        %v3424 = vadd.f32 %v2967, %v2968
        %v3425 = vadd.f32 %v2970, %v2971
        %v3426 = vadd.f32 %v2973, %v2974
        %v3427 = vadd.f32 %v2976, %v2977
        %v3428 = vadd.f32 %v2979, %v2980
        %v3429 = vadd.f32 %v2982, %v2983
        %v3430 = vadd.f32 %v2985, %v2986
        %v3431 = vadd.f32 %v2988, %v2989
        %v3432 = vadd.f32 %v2991, %v2992
        %v3433 = vadd.f32 %v2994, %v2995
        %v3434 = vadd.f32 %v2997, %v2998
        %v3435 = vadd.f32 %v3000, %v3001
        %v3436 = vadd.f32 %v3003, %v3004
        %v3437 = vadd.f32 %v3006, %v3007
        %v3438 = vadd.f32 %v3009, %v3010
        %v3439 = vadd.f32 %v3012, %v3013
        %v3440 = vadd.f32 %v3015, %v3016
        %v3441 = vadd.f32 %v3018, %v3019
        %v3442 = vadd.f32 %v3021, %v3022
        %v3443 = vadd.f32 %v3024, %v3025
        %v3444 = vadd.f32 %v3027, %v3028
        %v3445 = vadd.f32 %v3030, %v3031
        %v3446 = vadd.f32 %v3033, %v3034
        %v3447 = vadd.f32 %v3036, %v3037
        %v3448 = vadd.f32 %v3039, %v3040
        %v3449 = vadd.f32 %v3042, %v3043
        %v3450 = vadd.f32 %v3045, %v3046
        %v3451 = vadd.f32 %v3048, %v3049
        %v3452 = vadd.f32 %v3051, %v3052
        %v3453 = vadd.f32 %v3054, %v3055
        %v3454 = vadd.f32 %v3057, %v3058
        %v3455 = vadd.f32 %v3060, %v3061
        %v3456 = vadd.f32 %v3063, %v3064
        %v3457 = vadd.f32 %v3066, %v3067
        %v3458 = vadd.f32 %v3069, %v3070
        %v3459 = vadd.f32 %v3072, %v3073
        %v3460 = vadd.f32 %v3075, %v3076
        %v3461 = vadd.f32 %v3078, %v3079
        %v3462 = vadd.f32 %v3081, %v3082
        %v3463 = vadd.f32 %v3084, %v3085
        %v3464 = vadd.f32 %v3087, %v3088
        %v3465 = vadd.f32 %v3090, %v3091
        %v3466 = vadd.f32 %v3093, %v3094
        %v3467 = vadd.f32 %v3096, %v3097
        %v3468 = vadd.f32 %v3099, %v3100
        %v3469 = vadd.f32 %v3102, %v3103
        %v3470 = vadd.f32 %v3105, %v3106
        %v3471 = vadd.f32 %v3108, %v3109
        %v3472 = vadd.f32 %v3111, %v3112
        %v3473 = vadd.f32 %v3114, %v3115
        %v3474 = vadd.f32 %v3117, %v3118
        %v3475 = vadd.f32 %v3120, %v3121
        %v3476 = vadd.f32 %v3123, %v3124
        %v3477 = vadd.f32 %v3126, %v3127
        %v3478 = vadd.f32 %v3129, %v3130
        %v3479 = vadd.f32 %v3132, %v3133
        %v3480 = vadd.f32 %v3135, %v3136
        %v3481 = vadd.f32 %v3138, %v3139
        %v3482 = vadd.f32 %v3141, %v3142
        %v3483 = vadd.f32 %v3144, %v3145
        %v3484 = vadd.f32 %v3147, %v3148
        %v3485 = vadd.f32 %v3150, %v3151
        %v3486 = vadd.f32 %v3153, %v3154
        %v3487 = vadd.f32 %v3156, %v3157
        %v3488 = vadd.f32 %v3159, %v3160
        %v3489 = vadd.f32 %v3162, %v3163
        %v3490 = vadd.f32 %v3165, %v3166
        %v3491 = vadd.f32 %v3168, %v3169
        %v3492 = vadd.f32 %v3171, %v3172
        %v3493 = vadd.f32 %v3174, %v3175
        %v3494 = vadd.f32 %v3177, %v3178
        %v3495 = vadd.f32 %v3180, %v3181
        %v3496 = vadd.f32 %v3183, %v3184
        %v3497 = vadd.f32 %v3186, %v3187
        %v3498 = vadd.f32 %v3189, %v3190
        %v3499 = vadd.f32 %v3192, %v3193
        %v3500 = vadd.f32 %v3195, %v3196
        %v3501 = vadd.f32 %v3198, %v3199
        %v3502 = vadd.f32 %v3201, %v3202
        %v3503 = vadd.f32 %v3204, %v3205
        %v3504 = vadd.f32 %v3207, %v3208
        %v3505 = vadd.f32 %v3210, %v3211
        %v3506 = vadd.f32 %v3213, %v3214
        %v3507 = vadd.f32 %v3216, %v3217
        %v3508 = vadd.f32 %v3219, %v3220
        %v3509 = vadd.f32 %v3222, %v3223
        %v3510 = vadd.f32 %v3225, %v3226
        %v3511 = vadd.f32 %v3228, %v3229
        %v3512 = vadd.f32 %v3231, %v3232
        %v3513 = vadd.f32 %v3234, %v3235
        %v3514 = vadd.f32 %v3237, %v3238
        %v3515 = vadd.f32 %v3240, %v3241
        %v3516 = vadd.f32 %v3243, %v3244
        %v3517 = vadd.f32 %v3246, %v3247
        %v3518 = vadd.f32 %v3249, %v3250
        %v3519 = vadd.f32 %v3252, %v3253
        %v3520 = vadd.f32 %v3255, %v3256
        %v3521 = vadd.f32 %v3258, %v3259
        %v3522 = vadd.f32 %v3261, %v3262
        %v3523 = vadd.f32 %v3264, %v3265
        %v3524 = vadd.f32 %v3267, %v3268
        %v3525 = vadd.f32 %v3270, %v3271
        %v3526 = vadd.f32 %v3273, %v3274
        %v3527 = vadd.f32 %v3276, %v3277
        %v3528 = vadd.f32 %v3279, %v3280
        %v3529 = vadd.f32 %v3282, %v3283
        %v3530 = vadd.f32 %v3285, %v3286
        %v3531 = vadd.f32 %v3288, %v3289
        %v3532 = vadd.f32 %v3291, %v3292
        %v3533 = vadd.f32 %v3294, %v3295
        %v3534 = vadd.f32 %v3297, %v3298
        %v3535 = vadd.f32 %v3300, %v3301
        %v3536 = vadd.f32 %v3303, %v3304
        %v3537 = vadd.f32 %v3306, %v3307
        %v3538 = vadd.f32 %v3309, %v3310
        %v3539 = vadd.f32 %v3312, %v3313
        %v3540 = vadd.f32 %v3315, %v3316
        %v3541 = vadd.f32 %v3318, %v3319
        %v3542 = vadd.f32 %v3321, %v3322
        %v3543 = vadd.f32 %v3324, %v3325
        %v3544 = vadd.f32 %v3327, %v3328
        %v3545 = vadd.f32 %v3330, %v3331
        %v3546 = vadd.f32 %v3333, %v3334
        %v3547 = vadd.f32 %v3336, %v3337
        %v3548 = vadd.f32 %v3339, %v3340
        %v3549 = vadd.f32 %v3342, %v3343
        %v3550 = vadd.f32 %v3345, %v3346
        %v3551 = vadd.f32 %v3348, %v3349
        %v3552 = vadd.f32 %v3351, %v3352
        %v3553 = vadd.f32 %v3354, %v3355
        %v3554 = vadd.f32 %v3357, %v3358
        %v3555 = vadd.f32 %v3360, %v3361
        %v3556 = vadd.f32 %v3363, %v2786
        %v3557 = vadd.f32 %v3364, %v2789
        %v3558 = vadd.f32 %v3365, %v2792
        %v3559 = vadd.f32 %v3366, %v2795
        %v3560 = vadd.f32 %v3367, %v2798
        %v3561 = vadd.f32 %v3368, %v2801
        %v3562 = vadd.f32 %v3369, %v2804
        %v3563 = vadd.f32 %v3370, %v2807
        %v3564 = vadd.f32 %v3371, %v2810
        %v3565 = vadd.f32 %v3372, %v2813
        %v3566 = vadd.f32 %v3373, %v2816
        %v3567 = vadd.f32 %v3374, %v2819
        %v3568 = vadd.f32 %v3375, %v2822
        %v3569 = vadd.f32 %v3376, %v2825
        %v3570 = vadd.f32 %v3377, %v2828
        %v3571 = vadd.f32 %v3378, %v2831
        %v3572 = vadd.f32 %v3379, %v2834
        %v3573 = vadd.f32 %v3380, %v2837
        %v3574 = vadd.f32 %v3381, %v2840
        %v3575 = vadd.f32 %v3382, %v2843
        %v3576 = vadd.f32 %v3383, %v2846
        %v3577 = vadd.f32 %v3384, %v2849
        %v3578 = vadd.f32 %v3385, %v2852
        %v3579 = vadd.f32 %v3386, %v2855
        %v3580 = vadd.f32 %v3387, %v2858
        %v3581 = vadd.f32 %v3388, %v2861
        %v3582 = vadd.f32 %v3389, %v2864
        %v3583 = vadd.f32 %v3390, %v2867
        %v3584 = vadd.f32 %v3391, %v2870
        %v3585 = vadd.f32 %v3392, %v2873
        %v3586 = vadd.f32 %v3393, %v2876
        %v3587 = vadd.f32 %v3394, %v2879
        %v3588 = vadd.f32 %v3395, %v2882
        %v3589 = vadd.f32 %v3396, %v2885
        %v3590 = vadd.f32 %v3397, %v2888
        %v3591 = vadd.f32 %v3398, %v2891
        %v3592 = vadd.f32 %v3399, %v2894
        %v3593 = vadd.f32 %v3400, %v2897
        %v3594 = vadd.f32 %v3401, %v2900
        %v3595 = vadd.f32 %v3402, %v2903
        %v3596 = vadd.f32 %v3403, %v2906
        %v3597 = vadd.f32 %v3404, %v2909
        %v3598 = vadd.f32 %v3405, %v2912
        %v3599 = vadd.f32 %v3406, %v2915
        %v3600 = vadd.f32 %v3407, %v2918
        %v3601 = vadd.f32 %v3408, %v2921
        %v3602 = vadd.f32 %v3409, %v2924
        %v3603 = vadd.f32 %v3410, %v2927
        %v3604 = vadd.f32 %v3411, %v2930
        %v3605 = vadd.f32 %v3412, %v2933
        %v3606 = vadd.f32 %v3413, %v2936
        %v3607 = vadd.f32 %v3414, %v2939
        %v3608 = vadd.f32 %v3415, %v2942
        %v3609 = vadd.f32 %v3416, %v2945
        %v3610 = vadd.f32 %v3417, %v2948
        %v3611 = vadd.f32 %v3418, %v2951
        %v3612 = vadd.f32 %v3419, %v2954
        %v3613 = vadd.f32 %v3420, %v2957
        %v3614 = vadd.f32 %v3421, %v2960
        %v3615 = vadd.f32 %v3422, %v2963
        %v3616 = vadd.f32 %v3423, %v2966
        %v3617 = vadd.f32 %v3424, %v2969
        %v3618 = vadd.f32 %v3425, %v2972
        %v3619 = vadd.f32 %v3426, %v2975
        %v3620 = vadd.f32 %v3427, %v2978
        %v3621 = vadd.f32 %v3428, %v2981
        %v3622 = vadd.f32 %v3429, %v2984
        %v3623 = vadd.f32 %v3430, %v2987
        %v3624 = vadd.f32 %v3431, %v2990
        %v3625 = vadd.f32 %v3432, %v2993
        %v3626 = vadd.f32 %v3433, %v2996
        %v3627 = vadd.f32 %v3434, %v2999
        %v3628 = vadd.f32 %v3435, %v3002
        %v3629 = vadd.f32 %v3436, %v3005
        %v3630 = vadd.f32 %v3437, %v3008
        %v3631 = vadd.f32 %v3438, %v3011
        %v3632 = vadd.f32 %v3439, %v3014
        %v3633 = vadd.f32 %v3440, %v3017
        %v3634 = vadd.f32 %v3441, %v3020
        %v3635 = vadd.f32 %v3442, %v3023
        %v3636 = vadd.f32 %v3443, %v3026
        %v3637 = vadd.f32 %v3444, %v3029
        %v3638 = vadd.f32 %v3445, %v3032
        %v3639 = vadd.f32 %v3446, %v3035
        %v3640 = vadd.f32 %v3447, %v3038
        %v3641 = vadd.f32 %v3448, %v3041
        %v3642 = vadd.f32 %v3449, %v3044
        %v3643 = vadd.f32 %v3450, %v3047
        %v3644 = vadd.f32 %v3451, %v3050
        %v3645 = vadd.f32 %v3452, %v3053
        %v3646 = vadd.f32 %v3453, %v3056
        %v3647 = vadd.f32 %v3454, %v3059
        %v3648 = vadd.f32 %v3455, %v3062
        %v3649 = vadd.f32 %v3456, %v3065
        %v3650 = vadd.f32 %v3457, %v3068
        %v3651 = vadd.f32 %v3458, %v3071
        %v3652 = vadd.f32 %v3459, %v3074
        %v3653 = vadd.f32 %v3460, %v3077
        %v3654 = vadd.f32 %v3461, %v3080
        %v3655 = vadd.f32 %v3462, %v3083
        %v3656 = vadd.f32 %v3463, %v3086
        %v3657 = vadd.f32 %v3464, %v3089
        %v3658 = vadd.f32 %v3465, %v3092
        %v3659 = vadd.f32 %v3466, %v3095
        %v3660 = vadd.f32 %v3467, %v3098
        %v3661 = vadd.f32 %v3468, %v3101
        %v3662 = vadd.f32 %v3469, %v3104
        %v3663 = vadd.f32 %v3470, %v3107
        %v3664 = vadd.f32 %v3471, %v3110
        %v3665 = vadd.f32 %v3472, %v3113
        %v3666 = vadd.f32 %v3473, %v3116
        %v3667 = vadd.f32 %v3474, %v3119
        %v3668 = vadd.f32 %v3475, %v3122
        %v3669 = vadd.f32 %v3476, %v3125
        %v3670 = vadd.f32 %v3477, %v3128
        %v3671 = vadd.f32 %v3478, %v3131
        %v3672 = vadd.f32 %v3479, %v3134
        %v3673 = vadd.f32 %v3480, %v3137
        %v3674 = vadd.f32 %v3481, %v3140
        %v3675 = vadd.f32 %v3482, %v3143
        %v3676 = vadd.f32 %v3483, %v3146
        %v3677 = vadd.f32 %v3484, %v3149
        %v3678 = vadd.f32 %v3485, %v3152
        %v3679 = vadd.f32 %v3486, %v3155
        %v3680 = vadd.f32 %v3487, %v3158
        %v3681 = vadd.f32 %v3488, %v3161
        %v3682 = vadd.f32 %v3489, %v3164
        %v3683 = vadd.f32 %v3490, %v3167
        %v3684 = vadd.f32 %v3491, %v3170
        %v3685 = vadd.f32 %v3492, %v3173
        %v3686 = vadd.f32 %v3493, %v3176
        %v3687 = vadd.f32 %v3494, %v3179
        %v3688 = vadd.f32 %v3495, %v3182
        %v3689 = vadd.f32 %v3496, %v3185
        %v3690 = vadd.f32 %v3497, %v3188
        %v3691 = vadd.f32 %v3498, %v3191
        %v3692 = vadd.f32 %v3499, %v3194
        %v3693 = vadd.f32 %v3500, %v3197
        %v3694 = vadd.f32 %v3501, %v3200
        %v3695 = vadd.f32 %v3502, %v3203
        %v3696 = vadd.f32 %v3503, %v3206
        %v3697 = vadd.f32 %v3504, %v3209
        %v3698 = vadd.f32 %v3505, %v3212
        %v3699 = vadd.f32 %v3506, %v3215
        %v3700 = vadd.f32 %v3507, %v3218
        %v3701 = vadd.f32 %v3508, %v3221
        %v3702 = vadd.f32 %v3509, %v3224
        %v3703 = vadd.f32 %v3510, %v3227
        %v3704 = vadd.f32 %v3511, %v3230
        %v3705 = vadd.f32 %v3512, %v3233
        %v3706 = vadd.f32 %v3513, %v3236
        %v3707 = vadd.f32 %v3514, %v3239
        %v3708 = vadd.f32 %v3515, %v3242
        %v3709 = vadd.f32 %v3516, %v3245
        %v3710 = vadd.f32 %v3517, %v3248
        %v3711 = vadd.f32 %v3518, %v3251
        %v3712 = vadd.f32 %v3519, %v3254
        %v3713 = vadd.f32 %v3520, %v3257
        %v3714 = vadd.f32 %v3521, %v3260
        %v3715 = vadd.f32 %v3522, %v3263
        %v3716 = vadd.f32 %v3523, %v3266
        %v3717 = vadd.f32 %v3524, %v3269
        %v3718 = vadd.f32 %v3525, %v3272
        %v3719 = vadd.f32 %v3526, %v3275
        %v3720 = vadd.f32 %v3527, %v3278
        %v3721 = vadd.f32 %v3528, %v3281
        %v3722 = vadd.f32 %v3529, %v3284
        %v3723 = vadd.f32 %v3530, %v3287
        %v3724 = vadd.f32 %v3531, %v3290
        %v3725 = vadd.f32 %v3532, %v3293
        %v3726 = vadd.f32 %v3533, %v3296
        %v3727 = vadd.f32 %v3534, %v3299
        %v3728 = vadd.f32 %v3535, %v3302
        %v3729 = vadd.f32 %v3536, %v3305
        %v3730 = vadd.f32 %v3537, %v3308
        %v3731 = vadd.f32 %v3538, %v3311
        %v3732 = vadd.f32 %v3539, %v3314
        %v3733 = vadd.f32 %v3540, %v3317
        %v3734 = vadd.f32 %v3541, %v3320
        %v3735 = vadd.f32 %v3542, %v3323
        %v3736 = vadd.f32 %v3543, %v3326
        %v3737 = vadd.f32 %v3544, %v3329
        %v3738 = vadd.f32 %v3545, %v3332
        %v3739 = vadd.f32 %v3546, %v3335
        %v3740 = vadd.f32 %v3547, %v3338
        %v3741 = vadd.f32 %v3548, %v3341
        %v3742 = vadd.f32 %v3549, %v3344
        %v3743 = vadd.f32 %v3550, %v3347
        %v3744 = vadd.f32 %v3551, %v3350
        %v3745 = vadd.f32 %v3552, %v3353
        %v3746 = vadd.f32 %v3553, %v3356
        %v3747 = vadd.f32 %v3554, %v3359
        %v3748 = vadd.f32 %v3555, %v3362
        %v3749 = vpack.c.bf16 %v3557, %v3556
        %v3750 = vpack.c.bf16 %v3559, %v3558
        %v3751 = vpack.c.bf16 %v3561, %v3560
        %v3752 = vpack.c.bf16 %v3563, %v3562
        %v3753 = vpack.c.bf16 %v3565, %v3564
        %v3754 = vpack.c.bf16 %v3567, %v3566
        %v3755 = vpack.c.bf16 %v3569, %v3568
        %v3756 = vpack.c.bf16 %v3571, %v3570
        %v3757 = vpack.c.bf16 %v3573, %v3572
        %v3758 = vpack.c.bf16 %v3575, %v3574
        %v3759 = vpack.c.bf16 %v3577, %v3576
        %v3760 = vpack.c.bf16 %v3579, %v3578
        %v3761 = vpack.c.bf16 %v3581, %v3580
        %v3762 = vpack.c.bf16 %v3583, %v3582
        %v3763 = vpack.c.bf16 %v3585, %v3584
        %v3764 = vpack.c.bf16 %v3587, %v3586
        %v3765 = vpack.c.bf16 %v3589, %v3588
        %v3766 = vpack.c.bf16 %v3591, %v3590
        %v3767 = vpack.c.bf16 %v3593, %v3592
        %v3768 = vpack.c.bf16 %v3595, %v3594
        %v3769 = vpack.c.bf16 %v3597, %v3596
        %v3770 = vpack.c.bf16 %v3599, %v3598
        %v3771 = vpack.c.bf16 %v3601, %v3600
        %v3772 = vpack.c.bf16 %v3603, %v3602
        %v3773 = vpack.c.bf16 %v3605, %v3604
        %v3774 = vpack.c.bf16 %v3607, %v3606
        %v3775 = vpack.c.bf16 %v3609, %v3608
        %v3776 = vpack.c.bf16 %v3611, %v3610
        %v3777 = vpack.c.bf16 %v3613, %v3612
        %v3778 = vpack.c.bf16 %v3615, %v3614
        %v3779 = vpack.c.bf16 %v3617, %v3616
        %v3780 = vpack.c.bf16 %v3619, %v3618
        %v3781 = vpack.c.bf16 %v3621, %v3620
        %v3782 = vpack.c.bf16 %v3623, %v3622
        %v3783 = vpack.c.bf16 %v3625, %v3624
        %v3784 = vpack.c.bf16 %v3627, %v3626
        %v3785 = vpack.c.bf16 %v3629, %v3628
        %v3786 = vpack.c.bf16 %v3631, %v3630
        %v3787 = vpack.c.bf16 %v3633, %v3632
        %v3788 = vpack.c.bf16 %v3635, %v3634
        %v3789 = vpack.c.bf16 %v3637, %v3636
        %v3790 = vpack.c.bf16 %v3639, %v3638
        %v3791 = vpack.c.bf16 %v3641, %v3640
        %v3792 = vpack.c.bf16 %v3643, %v3642
        %v3793 = vpack.c.bf16 %v3645, %v3644
        %v3794 = vpack.c.bf16 %v3647, %v3646
        %v3795 = vpack.c.bf16 %v3649, %v3648
        %v3796 = vpack.c.bf16 %v3651, %v3650
        %v3797 = vpack.c.bf16 %v3653, %v3652
        %v3798 = vpack.c.bf16 %v3655, %v3654
        %v3799 = vpack.c.bf16 %v3657, %v3656
        %v3800 = vpack.c.bf16 %v3659, %v3658
        %v3801 = vpack.c.bf16 %v3661, %v3660
        %v3802 = vpack.c.bf16 %v3663, %v3662
        %v3803 = vpack.c.bf16 %v3665, %v3664
        %v3804 = vpack.c.bf16 %v3667, %v3666
        %v3805 = vpack.c.bf16 %v3669, %v3668
        %v3806 = vpack.c.bf16 %v3671, %v3670
        %v3807 = vpack.c.bf16 %v3673, %v3672
        %v3808 = vpack.c.bf16 %v3675, %v3674
        %v3809 = vpack.c.bf16 %v3677, %v3676
        %v3810 = vpack.c.bf16 %v3679, %v3678
        %v3811 = vpack.c.bf16 %v3681, %v3680
        %v3812 = vpack.c.bf16 %v3683, %v3682
        %v3813 = vpack.c.bf16 %v3685, %v3684
        %v3814 = vpack.c.bf16 %v3687, %v3686
        %v3815 = vpack.c.bf16 %v3689, %v3688
        %v3816 = vpack.c.bf16 %v3691, %v3690
        %v3817 = vpack.c.bf16 %v3693, %v3692
        %v3818 = vpack.c.bf16 %v3695, %v3694
        %v3819 = vpack.c.bf16 %v3697, %v3696
        %v3820 = vpack.c.bf16 %v3699, %v3698
        %v3821 = vpack.c.bf16 %v3701, %v3700
        %v3822 = vpack.c.bf16 %v3703, %v3702
        %v3823 = vpack.c.bf16 %v3705, %v3704
        %v3824 = vpack.c.bf16 %v3707, %v3706
        %v3825 = vpack.c.bf16 %v3709, %v3708
        %v3826 = vpack.c.bf16 %v3711, %v3710
        %v3827 = vpack.c.bf16 %v3713, %v3712
        %v3828 = vpack.c.bf16 %v3715, %v3714
        %v3829 = vpack.c.bf16 %v3717, %v3716
        %v3830 = vpack.c.bf16 %v3719, %v3718
        %v3831 = vpack.c.bf16 %v3721, %v3720
        %v3832 = vpack.c.bf16 %v3723, %v3722
        %v3833 = vpack.c.bf16 %v3725, %v3724
        %v3834 = vpack.c.bf16 %v3727, %v3726
        %v3835 = vpack.c.bf16 %v3729, %v3728
        %v3836 = vpack.c.bf16 %v3731, %v3730
        %v3837 = vpack.c.bf16 %v3733, %v3732
        %v3838 = vpack.c.bf16 %v3735, %v3734
        %v3839 = vpack.c.bf16 %v3737, %v3736
        %v3840 = vpack.c.bf16 %v3739, %v3738
        %v3841 = vpack.c.bf16 %v3741, %v3740
        %v3842 = vpack.c.bf16 %v3743, %v3742
        %v3843 = vpack.c.bf16 %v3745, %v3744
        %v3844 = vpack.c.bf16 %v3747, %v3746
        %v3845 = vpack.c.bf16 %v3748, %v3748
        %v3846 = vld [vmem:[#allocation5] sm:$0xf]
        %v3847 = vld [vmem:[#allocation5 + $0x4] sm:$0xf]
        %v3848 = vld [vmem:[#allocation5 + $0x8] sm:$0xf]
        %v3849 = vld [vmem:[#allocation5 + $0xc] sm:$0xf]
        %v3850 = vld [vmem:[#allocation5 + $0x10] sm:$0xf]
        %v3851 = vld [vmem:[#allocation5 + $0x14] sm:$0xf]
        %v3852 = vld [vmem:[#allocation5 + $0x18] sm:$0xf]
        %v3853 = vld [vmem:[#allocation5 + $0x1c] sm:$0xf]
        %v3854 = vld [vmem:[#allocation5 + $0x20] sm:$0xf]
        %v3855 = vld [vmem:[#allocation5 + $0x24] sm:$0xf]
        %v3856 = vld [vmem:[#allocation5 + $0x28] sm:$0xf]
        %v3857 = vld [vmem:[#allocation5 + $0x2c] sm:$0xf]
        %v3858 = vld [vmem:[#allocation5 + $0x30] sm:$0xf]
        %v3859 = vld [vmem:[#allocation5 + $0x34] sm:$0xf]
        %v3860 = vld [vmem:[#allocation5 + $0x38] sm:$0xf]
        %v3861 = vld [vmem:[#allocation5 + $0x3c] sm:$0xf]
        %v3862 = vld [vmem:[%s323] sm:$0x1]
        %v3864 = vperm.slane %v3862, 0
        %v3882 = vunpack.c.l.b16 %v3846
        %v3883 = vunpack.c.l.b16 %v3847
        %v3884 = vunpack.c.l.b16 %v3848
        %v3885 = vunpack.c.l.b16 %v3849
        %v3886 = vunpack.c.l.b16 %v3850
        %v3887 = vunpack.c.l.b16 %v3851
        %v3888 = vunpack.c.l.b16 %v3852
        %v3889 = vunpack.c.l.b16 %v3853
        %v3890 = vunpack.c.l.b16 %v3854
        %v3891 = vunpack.c.l.b16 %v3855
        %v3892 = vunpack.c.l.b16 %v3856
        %v3893 = vunpack.c.l.b16 %v3857
        %v3894 = vunpack.c.l.b16 %v3858
        %v3895 = vunpack.c.l.b16 %v3859
        %v3896 = vunpack.c.l.b16 %v3860
        %v3897 = vunpack.c.l.b16 %v3861
        %v3898 = vpack.c.b16 %v3883, %v3882
        %v3899 = vpack.c.b16 %v3885, %v3884
        %v3900 = vpack.c.b16 %v3887, %v3886
        %v3901 = vpack.c.b16 %v3889, %v3888
        %v3902 = vpack.c.b16 %v3891, %v3890
        %v3903 = vpack.c.b16 %v3893, %v3892
        %v3904 = vpack.c.b16 %v3895, %v3894
        %v3905 = vpack.c.b16 %v3897, %v3896
        %3914 = vmatpush.bf16.msra.mxu0 %v3905
        %3915 = vmatpush.bf16.msra.mxu0 %v3904
        %3916 = vmatpush.bf16.msra.mxu0 %v3903
        %3917 = vmatpush.bf16.msra.mxu0 %v3902
        %3918 = vmatpush.bf16.msra.mxu0 %v3901
        %3919 = vmatpush.bf16.msra.mxu0 %v3900
        %3920 = vmatpush.bf16.msra.mxu0 %v3899
        %3921 = vmatpush.bf16.msra.mxu0 %v3898
        %3922 = vmatmul.bf16.gmra.mxu0 %v3749
        %v3923 = vpop.f32.mrf.mxu0
        %v3924 = vadd.f32 %v3864, %v3923
        %v3925 = vpop.f32.mrf.mxu0
        %v3926 = vadd.f32 %v3864, %v3925
        %3927 = vmatmul.bf16.gmra.mxu0 %v3750
        %v3928 = vpop.f32.mrf.mxu0
        %v3929 = vadd.f32 %v3864, %v3928
        %v3930 = vpop.f32.mrf.mxu0
        %v3931 = vadd.f32 %v3864, %v3930
        %3932 = vmatmul.bf16.gmra.mxu0 %v3751
        %v3933 = vpop.f32.mrf.mxu0
        %v3934 = vadd.f32 %v3864, %v3933
        %v3935 = vpop.f32.mrf.mxu0
        %v3936 = vadd.f32 %v3864, %v3935
        %3937 = vmatmul.bf16.gmra.mxu0 %v3752
        %v3938 = vpop.f32.mrf.mxu0
        %v3939 = vadd.f32 %v3864, %v3938
        %v3940 = vpop.f32.mrf.mxu0
        %v3941 = vadd.f32 %v3864, %v3940
        %3942 = vmatmul.bf16.gmra.mxu0 %v3753
        %v3943 = vpop.f32.mrf.mxu0
        %v3944 = vadd.f32 %v3864, %v3943
        %v3945 = vpop.f32.mrf.mxu0
        %v3946 = vadd.f32 %v3864, %v3945
        %3947 = vmatmul.bf16.gmra.mxu0 %v3754
        %v3948 = vpop.f32.mrf.mxu0
        %v3949 = vadd.f32 %v3864, %v3948
        %v3950 = vpop.f32.mrf.mxu0
        %v3951 = vadd.f32 %v3864, %v3950
        %3952 = vmatmul.bf16.gmra.mxu0 %v3755
        %v3953 = vpop.f32.mrf.mxu0
        %v3954 = vadd.f32 %v3864, %v3953
        %v3955 = vpop.f32.mrf.mxu0
        %v3956 = vadd.f32 %v3864, %v3955
        %3957 = vmatmul.bf16.gmra.mxu0 %v3756
        %v3958 = vpop.f32.mrf.mxu0
        %v3959 = vadd.f32 %v3864, %v3958
        %v3960 = vpop.f32.mrf.mxu0
        %v3961 = vadd.f32 %v3864, %v3960
        %3962 = vmatmul.bf16.gmra.mxu0 %v3757
        %v3963 = vpop.f32.mrf.mxu0
        %v3964 = vadd.f32 %v3864, %v3963
        %v3965 = vpop.f32.mrf.mxu0
        %v3966 = vadd.f32 %v3864, %v3965
        %3967 = vmatmul.bf16.gmra.mxu0 %v3758
        %v3968 = vpop.f32.mrf.mxu0
        %v3969 = vadd.f32 %v3864, %v3968
        %v3970 = vpop.f32.mrf.mxu0
        %v3971 = vadd.f32 %v3864, %v3970
        %3972 = vmatmul.bf16.gmra.mxu0 %v3759
        %v3973 = vpop.f32.mrf.mxu0
        %v3974 = vadd.f32 %v3864, %v3973
        %v3975 = vpop.f32.mrf.mxu0
        %v3976 = vadd.f32 %v3864, %v3975
        %3977 = vmatmul.bf16.gmra.mxu0 %v3760
        %v3978 = vpop.f32.mrf.mxu0
        %v3979 = vadd.f32 %v3864, %v3978
        %v3980 = vpop.f32.mrf.mxu0
        %v3981 = vadd.f32 %v3864, %v3980
        %3982 = vmatmul.bf16.gmra.mxu0 %v3761
        %v3983 = vpop.f32.mrf.mxu0
        %v3984 = vadd.f32 %v3864, %v3983
        %v3985 = vpop.f32.mrf.mxu0
        %v3986 = vadd.f32 %v3864, %v3985
        %3987 = vmatmul.bf16.gmra.mxu0 %v3762
        %v3988 = vpop.f32.mrf.mxu0
        %v3989 = vadd.f32 %v3864, %v3988
        %v3990 = vpop.f32.mrf.mxu0
        %v3991 = vadd.f32 %v3864, %v3990
        %3992 = vmatmul.bf16.gmra.mxu0 %v3763
        %v3993 = vpop.f32.mrf.mxu0
        %v3994 = vadd.f32 %v3864, %v3993
        %v3995 = vpop.f32.mrf.mxu0
        %v3996 = vadd.f32 %v3864, %v3995
        %3997 = vmatmul.bf16.gmra.mxu0 %v3764
        %v3998 = vpop.f32.mrf.mxu0
        %v3999 = vadd.f32 %v3864, %v3998
        %v4000 = vpop.f32.mrf.mxu0
        %v4001 = vadd.f32 %v3864, %v4000
        %4002 = vmatmul.bf16.gmra.mxu0 %v3765
        %v4003 = vpop.f32.mrf.mxu0
        %v4004 = vadd.f32 %v3864, %v4003
        %v4005 = vpop.f32.mrf.mxu0
        %v4006 = vadd.f32 %v3864, %v4005
        %4007 = vmatmul.bf16.gmra.mxu0 %v3766
        %v4008 = vpop.f32.mrf.mxu0
        %v4009 = vadd.f32 %v3864, %v4008
        %v4010 = vpop.f32.mrf.mxu0
        %v4011 = vadd.f32 %v3864, %v4010
        %4012 = vmatmul.bf16.gmra.mxu0 %v3767
        %v4013 = vpop.f32.mrf.mxu0
        %v4014 = vadd.f32 %v3864, %v4013
        %v4015 = vpop.f32.mrf.mxu0
        %v4016 = vadd.f32 %v3864, %v4015
        %4017 = vmatmul.bf16.gmra.mxu0 %v3768
        %v4018 = vpop.f32.mrf.mxu0
        %v4019 = vadd.f32 %v3864, %v4018
        %v4020 = vpop.f32.mrf.mxu0
        %v4021 = vadd.f32 %v3864, %v4020
        %4022 = vmatmul.bf16.gmra.mxu0 %v3769
        %v4023 = vpop.f32.mrf.mxu0
        %v4024 = vadd.f32 %v3864, %v4023
        %v4025 = vpop.f32.mrf.mxu0
        %v4026 = vadd.f32 %v3864, %v4025
        %4027 = vmatmul.bf16.gmra.mxu0 %v3770
        %v4028 = vpop.f32.mrf.mxu0
        %v4029 = vadd.f32 %v3864, %v4028
        %v4030 = vpop.f32.mrf.mxu0
        %v4031 = vadd.f32 %v3864, %v4030
        %4032 = vmatmul.bf16.gmra.mxu0 %v3771
        %v4033 = vpop.f32.mrf.mxu0
        %v4034 = vadd.f32 %v3864, %v4033
        %v4035 = vpop.f32.mrf.mxu0
        %v4036 = vadd.f32 %v3864, %v4035
        %4037 = vmatmul.bf16.gmra.mxu0 %v3772
        %v4038 = vpop.f32.mrf.mxu0
        %v4039 = vadd.f32 %v3864, %v4038
        %v4040 = vpop.f32.mrf.mxu0
        %v4041 = vadd.f32 %v3864, %v4040
        %4042 = vmatmul.bf16.gmra.mxu0 %v3773
        %v4043 = vpop.f32.mrf.mxu0
        %v4044 = vadd.f32 %v3864, %v4043
        %v4045 = vpop.f32.mrf.mxu0
        %v4046 = vadd.f32 %v3864, %v4045
        %4047 = vmatmul.bf16.gmra.mxu0 %v3774
        %v4048 = vpop.f32.mrf.mxu0
        %v4049 = vadd.f32 %v3864, %v4048
        %v4050 = vpop.f32.mrf.mxu0
        %v4051 = vadd.f32 %v3864, %v4050
        %4052 = vmatmul.bf16.gmra.mxu0 %v3775
        %v4053 = vpop.f32.mrf.mxu0
        %v4054 = vadd.f32 %v3864, %v4053
        %v4055 = vpop.f32.mrf.mxu0
        %v4056 = vadd.f32 %v3864, %v4055
        %4057 = vmatmul.bf16.gmra.mxu0 %v3776
        %v4058 = vpop.f32.mrf.mxu0
        %v4059 = vadd.f32 %v3864, %v4058
        %v4060 = vpop.f32.mrf.mxu0
        %v4061 = vadd.f32 %v3864, %v4060
        %4062 = vmatmul.bf16.gmra.mxu0 %v3777
        %v4063 = vpop.f32.mrf.mxu0
        %v4064 = vadd.f32 %v3864, %v4063
        %v4065 = vpop.f32.mrf.mxu0
        %v4066 = vadd.f32 %v3864, %v4065
        %4067 = vmatmul.bf16.gmra.mxu0 %v3778
        %v4068 = vpop.f32.mrf.mxu0
        %v4069 = vadd.f32 %v3864, %v4068
        %v4070 = vpop.f32.mrf.mxu0
        %v4071 = vadd.f32 %v3864, %v4070
        %4072 = vmatmul.bf16.gmra.mxu0 %v3779
        %v4073 = vpop.f32.mrf.mxu0
        %v4074 = vadd.f32 %v3864, %v4073
        %v4075 = vpop.f32.mrf.mxu0
        %v4076 = vadd.f32 %v3864, %v4075
        %4077 = vmatmul.bf16.gmra.mxu0 %v3780
        %v4078 = vpop.f32.mrf.mxu0
        %v4079 = vadd.f32 %v3864, %v4078
        %v4080 = vpop.f32.mrf.mxu0
        %v4081 = vadd.f32 %v3864, %v4080
        %4082 = vmatmul.bf16.gmra.mxu0 %v3781
        %v4083 = vpop.f32.mrf.mxu0
        %v4084 = vadd.f32 %v3864, %v4083
        %v4085 = vpop.f32.mrf.mxu0
        %v4086 = vadd.f32 %v3864, %v4085
        %4087 = vmatmul.bf16.gmra.mxu0 %v3782
        %v4088 = vpop.f32.mrf.mxu0
        %v4089 = vadd.f32 %v3864, %v4088
        %v4090 = vpop.f32.mrf.mxu0
        %v4091 = vadd.f32 %v3864, %v4090
        %4092 = vmatmul.bf16.gmra.mxu0 %v3783
        %v4093 = vpop.f32.mrf.mxu0
        %v4094 = vadd.f32 %v3864, %v4093
        %v4095 = vpop.f32.mrf.mxu0
        %v4096 = vadd.f32 %v3864, %v4095
        %4097 = vmatmul.bf16.gmra.mxu0 %v3784
        %v4098 = vpop.f32.mrf.mxu0
        %v4099 = vadd.f32 %v3864, %v4098
        %v4100 = vpop.f32.mrf.mxu0
        %v4101 = vadd.f32 %v3864, %v4100
        %4102 = vmatmul.bf16.gmra.mxu0 %v3785
        %v4103 = vpop.f32.mrf.mxu0
        %v4104 = vadd.f32 %v3864, %v4103
        %v4105 = vpop.f32.mrf.mxu0
        %v4106 = vadd.f32 %v3864, %v4105
        %4107 = vmatmul.bf16.gmra.mxu0 %v3786
        %v4108 = vpop.f32.mrf.mxu0
        %v4109 = vadd.f32 %v3864, %v4108
        %v4110 = vpop.f32.mrf.mxu0
        %v4111 = vadd.f32 %v3864, %v4110
        %4112 = vmatmul.bf16.gmra.mxu0 %v3787
        %v4113 = vpop.f32.mrf.mxu0
        %v4114 = vadd.f32 %v3864, %v4113
        %v4115 = vpop.f32.mrf.mxu0
        %v4116 = vadd.f32 %v3864, %v4115
        %4117 = vmatmul.bf16.gmra.mxu0 %v3788
        %v4118 = vpop.f32.mrf.mxu0
        %v4119 = vadd.f32 %v3864, %v4118
        %v4120 = vpop.f32.mrf.mxu0
        %v4121 = vadd.f32 %v3864, %v4120
        %4122 = vmatmul.bf16.gmra.mxu0 %v3789
        %v4123 = vpop.f32.mrf.mxu0
        %v4124 = vadd.f32 %v3864, %v4123
        %v4125 = vpop.f32.mrf.mxu0
        %v4126 = vadd.f32 %v3864, %v4125
        %4127 = vmatmul.bf16.gmra.mxu0 %v3790
        %v4128 = vpop.f32.mrf.mxu0
        %v4129 = vadd.f32 %v3864, %v4128
        %v4130 = vpop.f32.mrf.mxu0
        %v4131 = vadd.f32 %v3864, %v4130
        %4132 = vmatmul.bf16.gmra.mxu0 %v3791
        %v4133 = vpop.f32.mrf.mxu0
        %v4134 = vadd.f32 %v3864, %v4133
        %v4135 = vpop.f32.mrf.mxu0
        %v4136 = vadd.f32 %v3864, %v4135
        %4137 = vmatmul.bf16.gmra.mxu0 %v3792
        %v4138 = vpop.f32.mrf.mxu0
        %v4139 = vadd.f32 %v3864, %v4138
        %v4140 = vpop.f32.mrf.mxu0
        %v4141 = vadd.f32 %v3864, %v4140
        %4142 = vmatmul.bf16.gmra.mxu0 %v3793
        %v4143 = vpop.f32.mrf.mxu0
        %v4144 = vadd.f32 %v3864, %v4143
        %v4145 = vpop.f32.mrf.mxu0
        %v4146 = vadd.f32 %v3864, %v4145
        %4147 = vmatmul.bf16.gmra.mxu0 %v3794
        %v4148 = vpop.f32.mrf.mxu0
        %v4149 = vadd.f32 %v3864, %v4148
        %v4150 = vpop.f32.mrf.mxu0
        %v4151 = vadd.f32 %v3864, %v4150
        %4152 = vmatmul.bf16.gmra.mxu0 %v3795
        %v4153 = vpop.f32.mrf.mxu0
        %v4154 = vadd.f32 %v3864, %v4153
        %v4155 = vpop.f32.mrf.mxu0
        %v4156 = vadd.f32 %v3864, %v4155
        %4157 = vmatmul.bf16.gmra.mxu0 %v3796
        %v4158 = vpop.f32.mrf.mxu0
        %v4159 = vadd.f32 %v3864, %v4158
        %v4160 = vpop.f32.mrf.mxu0
        %v4161 = vadd.f32 %v3864, %v4160
        %4162 = vmatmul.bf16.gmra.mxu0 %v3797
        %v4163 = vpop.f32.mrf.mxu0
        %v4164 = vadd.f32 %v3864, %v4163
        %v4165 = vpop.f32.mrf.mxu0
        %v4166 = vadd.f32 %v3864, %v4165
        %4167 = vmatmul.bf16.gmra.mxu0 %v3798
        %v4168 = vpop.f32.mrf.mxu0
        %v4169 = vadd.f32 %v3864, %v4168
        %v4170 = vpop.f32.mrf.mxu0
        %v4171 = vadd.f32 %v3864, %v4170
        %4172 = vmatmul.bf16.gmra.mxu0 %v3799
        %v4173 = vpop.f32.mrf.mxu0
        %v4174 = vadd.f32 %v3864, %v4173
        %v4175 = vpop.f32.mrf.mxu0
        %v4176 = vadd.f32 %v3864, %v4175
        %4177 = vmatmul.bf16.gmra.mxu0 %v3800
        %v4178 = vpop.f32.mrf.mxu0
        %v4179 = vadd.f32 %v3864, %v4178
        %v4180 = vpop.f32.mrf.mxu0
        %v4181 = vadd.f32 %v3864, %v4180
        %4182 = vmatmul.bf16.gmra.mxu0 %v3801
        %v4183 = vpop.f32.mrf.mxu0
        %v4184 = vadd.f32 %v3864, %v4183
        %v4185 = vpop.f32.mrf.mxu0
        %v4186 = vadd.f32 %v3864, %v4185
        %4187 = vmatmul.bf16.gmra.mxu0 %v3802
        %v4188 = vpop.f32.mrf.mxu0
        %v4189 = vadd.f32 %v3864, %v4188
        %v4190 = vpop.f32.mrf.mxu0
        %v4191 = vadd.f32 %v3864, %v4190
        %4192 = vmatmul.bf16.gmra.mxu0 %v3803
        %v4193 = vpop.f32.mrf.mxu0
        %v4194 = vadd.f32 %v3864, %v4193
        %v4195 = vpop.f32.mrf.mxu0
        %v4196 = vadd.f32 %v3864, %v4195
        %4197 = vmatmul.bf16.gmra.mxu0 %v3804
        %v4198 = vpop.f32.mrf.mxu0
        %v4199 = vadd.f32 %v3864, %v4198
        %v4200 = vpop.f32.mrf.mxu0
        %v4201 = vadd.f32 %v3864, %v4200
        %4202 = vmatmul.bf16.gmra.mxu0 %v3805
        %v4203 = vpop.f32.mrf.mxu0
        %v4204 = vadd.f32 %v3864, %v4203
        %v4205 = vpop.f32.mrf.mxu0
        %v4206 = vadd.f32 %v3864, %v4205
        %4207 = vmatmul.bf16.gmra.mxu0 %v3806
        %v4208 = vpop.f32.mrf.mxu0
        %v4209 = vadd.f32 %v3864, %v4208
        %v4210 = vpop.f32.mrf.mxu0
        %v4211 = vadd.f32 %v3864, %v4210
        %4212 = vmatmul.bf16.gmra.mxu0 %v3807
        %v4213 = vpop.f32.mrf.mxu0
        %v4214 = vadd.f32 %v3864, %v4213
        %v4215 = vpop.f32.mrf.mxu0
        %v4216 = vadd.f32 %v3864, %v4215
        %4217 = vmatmul.bf16.gmra.mxu0 %v3808
        %v4218 = vpop.f32.mrf.mxu0
        %v4219 = vadd.f32 %v3864, %v4218
        %v4220 = vpop.f32.mrf.mxu0
        %v4221 = vadd.f32 %v3864, %v4220
        %4222 = vmatmul.bf16.gmra.mxu0 %v3809
        %v4223 = vpop.f32.mrf.mxu0
        %v4224 = vadd.f32 %v3864, %v4223
        %v4225 = vpop.f32.mrf.mxu0
        %v4226 = vadd.f32 %v3864, %v4225
        %4227 = vmatmul.bf16.gmra.mxu0 %v3810
        %v4228 = vpop.f32.mrf.mxu0
        %v4229 = vadd.f32 %v3864, %v4228
        %v4230 = vpop.f32.mrf.mxu0
        %v4231 = vadd.f32 %v3864, %v4230
        %4232 = vmatmul.bf16.gmra.mxu0 %v3811
        %v4233 = vpop.f32.mrf.mxu0
        %v4234 = vadd.f32 %v3864, %v4233
        %v4235 = vpop.f32.mrf.mxu0
        %v4236 = vadd.f32 %v3864, %v4235
        %4237 = vmatmul.bf16.gmra.mxu0 %v3812
        %v4238 = vpop.f32.mrf.mxu0
        %v4239 = vadd.f32 %v3864, %v4238
        %v4240 = vpop.f32.mrf.mxu0
        %v4241 = vadd.f32 %v3864, %v4240
        %4242 = vmatmul.bf16.gmra.mxu0 %v3813
        %v4243 = vpop.f32.mrf.mxu0
        %v4244 = vadd.f32 %v3864, %v4243
        %v4245 = vpop.f32.mrf.mxu0
        %v4246 = vadd.f32 %v3864, %v4245
        %4247 = vmatmul.bf16.gmra.mxu0 %v3814
        %v4248 = vpop.f32.mrf.mxu0
        %v4249 = vadd.f32 %v3864, %v4248
        %v4250 = vpop.f32.mrf.mxu0
        %v4251 = vadd.f32 %v3864, %v4250
        %4252 = vmatmul.bf16.gmra.mxu0 %v3815
        %v4253 = vpop.f32.mrf.mxu0
        %v4254 = vadd.f32 %v3864, %v4253
        %v4255 = vpop.f32.mrf.mxu0
        %v4256 = vadd.f32 %v3864, %v4255
        %4257 = vmatmul.bf16.gmra.mxu0 %v3816
        %v4258 = vpop.f32.mrf.mxu0
        %v4259 = vadd.f32 %v3864, %v4258
        %v4260 = vpop.f32.mrf.mxu0
        %v4261 = vadd.f32 %v3864, %v4260
        %4262 = vmatmul.bf16.gmra.mxu0 %v3817
        %v4263 = vpop.f32.mrf.mxu0
        %v4264 = vadd.f32 %v3864, %v4263
        %v4265 = vpop.f32.mrf.mxu0
        %v4266 = vadd.f32 %v3864, %v4265
        %4267 = vmatmul.bf16.gmra.mxu0 %v3818
        %v4268 = vpop.f32.mrf.mxu0
        %v4269 = vadd.f32 %v3864, %v4268
        %v4270 = vpop.f32.mrf.mxu0
        %v4271 = vadd.f32 %v3864, %v4270
        %4272 = vmatmul.bf16.gmra.mxu0 %v3819
        %v4273 = vpop.f32.mrf.mxu0
        %v4274 = vadd.f32 %v3864, %v4273
        %v4275 = vpop.f32.mrf.mxu0
        %v4276 = vadd.f32 %v3864, %v4275
        %4277 = vmatmul.bf16.gmra.mxu0 %v3820
        %v4278 = vpop.f32.mrf.mxu0
        %v4279 = vadd.f32 %v3864, %v4278
        %v4280 = vpop.f32.mrf.mxu0
        %v4281 = vadd.f32 %v3864, %v4280
        %4282 = vmatmul.bf16.gmra.mxu0 %v3821
        %v4283 = vpop.f32.mrf.mxu0
        %v4284 = vadd.f32 %v3864, %v4283
        %v4285 = vpop.f32.mrf.mxu0
        %v4286 = vadd.f32 %v3864, %v4285
        %4287 = vmatmul.bf16.gmra.mxu0 %v3822
        %v4288 = vpop.f32.mrf.mxu0
        %v4289 = vadd.f32 %v3864, %v4288
        %v4290 = vpop.f32.mrf.mxu0
        %v4291 = vadd.f32 %v3864, %v4290
        %4292 = vmatmul.bf16.gmra.mxu0 %v3823
        %v4293 = vpop.f32.mrf.mxu0
        %v4294 = vadd.f32 %v3864, %v4293
        %v4295 = vpop.f32.mrf.mxu0
        %v4296 = vadd.f32 %v3864, %v4295
        %4297 = vmatmul.bf16.gmra.mxu0 %v3824
        %v4298 = vpop.f32.mrf.mxu0
        %v4299 = vadd.f32 %v3864, %v4298
        %v4300 = vpop.f32.mrf.mxu0
        %v4301 = vadd.f32 %v3864, %v4300
        %4302 = vmatmul.bf16.gmra.mxu0 %v3825
        %v4303 = vpop.f32.mrf.mxu0
        %v4304 = vadd.f32 %v3864, %v4303
        %v4305 = vpop.f32.mrf.mxu0
        %v4306 = vadd.f32 %v3864, %v4305
        %4307 = vmatmul.bf16.gmra.mxu0 %v3826
        %v4308 = vpop.f32.mrf.mxu0
        %v4309 = vadd.f32 %v3864, %v4308
        %v4310 = vpop.f32.mrf.mxu0
        %v4311 = vadd.f32 %v3864, %v4310
        %4312 = vmatmul.bf16.gmra.mxu0 %v3827
        %v4313 = vpop.f32.mrf.mxu0
        %v4314 = vadd.f32 %v3864, %v4313
        %v4315 = vpop.f32.mrf.mxu0
        %v4316 = vadd.f32 %v3864, %v4315
        %4317 = vmatmul.bf16.gmra.mxu0 %v3828
        %v4318 = vpop.f32.mrf.mxu0
        %v4319 = vadd.f32 %v3864, %v4318
        %v4320 = vpop.f32.mrf.mxu0
        %v4321 = vadd.f32 %v3864, %v4320
        %4322 = vmatmul.bf16.gmra.mxu0 %v3829
        %v4323 = vpop.f32.mrf.mxu0
        %v4324 = vadd.f32 %v3864, %v4323
        %v4325 = vpop.f32.mrf.mxu0
        %v4326 = vadd.f32 %v3864, %v4325
        %4327 = vmatmul.bf16.gmra.mxu0 %v3830
        %v4328 = vpop.f32.mrf.mxu0
        %v4329 = vadd.f32 %v3864, %v4328
        %v4330 = vpop.f32.mrf.mxu0
        %v4331 = vadd.f32 %v3864, %v4330
        %4332 = vmatmul.bf16.gmra.mxu0 %v3831
        %v4333 = vpop.f32.mrf.mxu0
        %v4334 = vadd.f32 %v3864, %v4333
        %v4335 = vpop.f32.mrf.mxu0
        %v4336 = vadd.f32 %v3864, %v4335
        %4337 = vmatmul.bf16.gmra.mxu0 %v3832
        %v4338 = vpop.f32.mrf.mxu0
        %v4339 = vadd.f32 %v3864, %v4338
        %v4340 = vpop.f32.mrf.mxu0
        %v4341 = vadd.f32 %v3864, %v4340
        %4342 = vmatmul.bf16.gmra.mxu0 %v3833
        %v4343 = vpop.f32.mrf.mxu0
        %v4344 = vadd.f32 %v3864, %v4343
        %v4345 = vpop.f32.mrf.mxu0
        %v4346 = vadd.f32 %v3864, %v4345
        %4347 = vmatmul.bf16.gmra.mxu0 %v3834
        %v4348 = vpop.f32.mrf.mxu0
        %v4349 = vadd.f32 %v3864, %v4348
        %v4350 = vpop.f32.mrf.mxu0
        %v4351 = vadd.f32 %v3864, %v4350
        %4352 = vmatmul.bf16.gmra.mxu0 %v3835
        %v4353 = vpop.f32.mrf.mxu0
        %v4354 = vadd.f32 %v3864, %v4353
        %v4355 = vpop.f32.mrf.mxu0
        %v4356 = vadd.f32 %v3864, %v4355
        %4357 = vmatmul.bf16.gmra.mxu0 %v3836
        %v4358 = vpop.f32.mrf.mxu0
        %v4359 = vadd.f32 %v3864, %v4358
        %v4360 = vpop.f32.mrf.mxu0
        %v4361 = vadd.f32 %v3864, %v4360
        %4362 = vmatmul.bf16.gmra.mxu0 %v3837
        %v4363 = vpop.f32.mrf.mxu0
        %v4364 = vadd.f32 %v3864, %v4363
        %v4365 = vpop.f32.mrf.mxu0
        %v4366 = vadd.f32 %v3864, %v4365
        %4367 = vmatmul.bf16.gmra.mxu0 %v3838
        %v4368 = vpop.f32.mrf.mxu0
        %v4369 = vadd.f32 %v3864, %v4368
        %v4370 = vpop.f32.mrf.mxu0
        %v4371 = vadd.f32 %v3864, %v4370
        %4372 = vmatmul.bf16.gmra.mxu0 %v3839
        %v4373 = vpop.f32.mrf.mxu0
        %v4374 = vadd.f32 %v3864, %v4373
        %v4375 = vpop.f32.mrf.mxu0
        %v4376 = vadd.f32 %v3864, %v4375
        %4377 = vmatmul.bf16.gmra.mxu0 %v3840
        %v4378 = vpop.f32.mrf.mxu0
        %v4379 = vadd.f32 %v3864, %v4378
        %v4380 = vpop.f32.mrf.mxu0
        %v4381 = vadd.f32 %v3864, %v4380
        %4382 = vmatmul.bf16.gmra.mxu0 %v3841
        %v4383 = vpop.f32.mrf.mxu0
        %v4384 = vadd.f32 %v3864, %v4383
        %v4385 = vpop.f32.mrf.mxu0
        %v4386 = vadd.f32 %v3864, %v4385
        %4387 = vmatmul.bf16.gmra.mxu0 %v3842
        %v4388 = vpop.f32.mrf.mxu0
        %v4389 = vadd.f32 %v3864, %v4388
        %v4390 = vpop.f32.mrf.mxu0
        %v4391 = vadd.f32 %v3864, %v4390
        %4392 = vmatmul.bf16.gmra.mxu0 %v3843
        %v4393 = vpop.f32.mrf.mxu0
        %v4394 = vadd.f32 %v3864, %v4393
        %v4395 = vpop.f32.mrf.mxu0
        %v4396 = vadd.f32 %v3864, %v4395
        %4397 = vmatmul.bf16.gmra.mxu0 %v3844
        %v4398 = vpop.f32.mrf.mxu0
        %v4399 = vadd.f32 %v3864, %v4398
        %v4400 = vpop.f32.mrf.mxu0
        %v4401 = vadd.f32 %v3864, %v4400
        %4402 = vmatmul.bf16.gmra.mxu0 %v3845
        %v4403 = vpop.f32.mrf.mxu0
        %v4404 = vadd.f32 %v3864, %v4403
        %v4405 = vpop.f32.mrf.mxu0
        %4406 = vdwg.mxu0
        %v4407 = vmax.f32 %v3924, 0.0
        %v4408 = vmax.f32 %v3926, 0.0
        %v4409 = vmax.f32 %v3929, 0.0
        %v4410 = vmax.f32 %v3931, 0.0
        %v4411 = vmax.f32 %v3934, 0.0
        %v4412 = vmax.f32 %v3936, 0.0
        %v4413 = vmax.f32 %v3939, 0.0
        %v4414 = vmax.f32 %v3941, 0.0
        %v4415 = vmax.f32 %v3944, 0.0
        %v4416 = vmax.f32 %v3946, 0.0
        %v4417 = vmax.f32 %v3949, 0.0
        %v4418 = vmax.f32 %v3951, 0.0
        %v4419 = vmax.f32 %v3954, 0.0
        %v4420 = vmax.f32 %v3956, 0.0
        %v4421 = vmax.f32 %v3959, 0.0
        %v4422 = vmax.f32 %v3961, 0.0
        %v4423 = vmax.f32 %v3964, 0.0
        %v4424 = vmax.f32 %v3966, 0.0
        %v4425 = vmax.f32 %v3969, 0.0
        %v4426 = vmax.f32 %v3971, 0.0
        %v4427 = vmax.f32 %v3974, 0.0
        %v4428 = vmax.f32 %v3976, 0.0
        %v4429 = vmax.f32 %v3979, 0.0
        %v4430 = vmax.f32 %v3981, 0.0
        %v4431 = vmax.f32 %v3984, 0.0
        %v4432 = vmax.f32 %v3986, 0.0
        %v4433 = vmax.f32 %v3989, 0.0
        %v4434 = vmax.f32 %v3991, 0.0
        %v4435 = vmax.f32 %v3994, 0.0
        %v4436 = vmax.f32 %v3996, 0.0
        %v4437 = vmax.f32 %v3999, 0.0
        %v4438 = vmax.f32 %v4001, 0.0
        %v4439 = vmax.f32 %v4004, 0.0
        %v4440 = vmax.f32 %v4006, 0.0
        %v4441 = vmax.f32 %v4009, 0.0
        %v4442 = vmax.f32 %v4011, 0.0
        %v4443 = vmax.f32 %v4014, 0.0
        %v4444 = vmax.f32 %v4016, 0.0
        %v4445 = vmax.f32 %v4019, 0.0
        %v4446 = vmax.f32 %v4021, 0.0
        %v4447 = vmax.f32 %v4024, 0.0
        %v4448 = vmax.f32 %v4026, 0.0
        %v4449 = vmax.f32 %v4029, 0.0
        %v4450 = vmax.f32 %v4031, 0.0
        %v4451 = vmax.f32 %v4034, 0.0
        %v4452 = vmax.f32 %v4036, 0.0
        %v4453 = vmax.f32 %v4039, 0.0
        %v4454 = vmax.f32 %v4041, 0.0
        %v4455 = vmax.f32 %v4044, 0.0
        %v4456 = vmax.f32 %v4046, 0.0
        %v4457 = vmax.f32 %v4049, 0.0
        %v4458 = vmax.f32 %v4051, 0.0
        %v4459 = vmax.f32 %v4054, 0.0
        %v4460 = vmax.f32 %v4056, 0.0
        %v4461 = vmax.f32 %v4059, 0.0
        %v4462 = vmax.f32 %v4061, 0.0
        %v4463 = vmax.f32 %v4064, 0.0
        %v4464 = vmax.f32 %v4066, 0.0
        %v4465 = vmax.f32 %v4069, 0.0
        %v4466 = vmax.f32 %v4071, 0.0
        %v4467 = vmax.f32 %v4074, 0.0
        %v4468 = vmax.f32 %v4076, 0.0
        %v4469 = vmax.f32 %v4079, 0.0
        %v4470 = vmax.f32 %v4081, 0.0
        %v4471 = vmax.f32 %v4084, 0.0
        %v4472 = vmax.f32 %v4086, 0.0
        %v4473 = vmax.f32 %v4089, 0.0
        %v4474 = vmax.f32 %v4091, 0.0
        %v4475 = vmax.f32 %v4094, 0.0
        %v4476 = vmax.f32 %v4096, 0.0
        %v4477 = vmax.f32 %v4099, 0.0
        %v4478 = vmax.f32 %v4101, 0.0
        %v4479 = vmax.f32 %v4104, 0.0
        %v4480 = vmax.f32 %v4106, 0.0
        %v4481 = vmax.f32 %v4109, 0.0
        %v4482 = vmax.f32 %v4111, 0.0
        %v4483 = vmax.f32 %v4114, 0.0
        %v4484 = vmax.f32 %v4116, 0.0
        %v4485 = vmax.f32 %v4119, 0.0
        %v4486 = vmax.f32 %v4121, 0.0
        %v4487 = vmax.f32 %v4124, 0.0
        %v4488 = vmax.f32 %v4126, 0.0
        %v4489 = vmax.f32 %v4129, 0.0
        %v4490 = vmax.f32 %v4131, 0.0
        %v4491 = vmax.f32 %v4134, 0.0
        %v4492 = vmax.f32 %v4136, 0.0
        %v4493 = vmax.f32 %v4139, 0.0
        %v4494 = vmax.f32 %v4141, 0.0
        %v4495 = vmax.f32 %v4144, 0.0
        %v4496 = vmax.f32 %v4146, 0.0
        %v4497 = vmax.f32 %v4149, 0.0
        %v4498 = vmax.f32 %v4151, 0.0
        %v4499 = vmax.f32 %v4154, 0.0
        %v4500 = vmax.f32 %v4156, 0.0
        %v4501 = vmax.f32 %v4159, 0.0
        %v4502 = vmax.f32 %v4161, 0.0
        %v4503 = vmax.f32 %v4164, 0.0
        %v4504 = vmax.f32 %v4166, 0.0
        %v4505 = vmax.f32 %v4169, 0.0
        %v4506 = vmax.f32 %v4171, 0.0
        %v4507 = vmax.f32 %v4174, 0.0
        %v4508 = vmax.f32 %v4176, 0.0
        %v4509 = vmax.f32 %v4179, 0.0
        %v4510 = vmax.f32 %v4181, 0.0
        %v4511 = vmax.f32 %v4184, 0.0
        %v4512 = vmax.f32 %v4186, 0.0
        %v4513 = vmax.f32 %v4189, 0.0
        %v4514 = vmax.f32 %v4191, 0.0
        %v4515 = vmax.f32 %v4194, 0.0
        %v4516 = vmax.f32 %v4196, 0.0
        %v4517 = vmax.f32 %v4199, 0.0
        %v4518 = vmax.f32 %v4201, 0.0
        %v4519 = vmax.f32 %v4204, 0.0
        %v4520 = vmax.f32 %v4206, 0.0
        %v4521 = vmax.f32 %v4209, 0.0
        %v4522 = vmax.f32 %v4211, 0.0
        %v4523 = vmax.f32 %v4214, 0.0
        %v4524 = vmax.f32 %v4216, 0.0
        %v4525 = vmax.f32 %v4219, 0.0
        %v4526 = vmax.f32 %v4221, 0.0
        %v4527 = vmax.f32 %v4224, 0.0
        %v4528 = vmax.f32 %v4226, 0.0
        %v4529 = vmax.f32 %v4229, 0.0
        %v4530 = vmax.f32 %v4231, 0.0
        %v4531 = vmax.f32 %v4234, 0.0
        %v4532 = vmax.f32 %v4236, 0.0
        %v4533 = vmax.f32 %v4239, 0.0
        %v4534 = vmax.f32 %v4241, 0.0
        %v4535 = vmax.f32 %v4244, 0.0
        %v4536 = vmax.f32 %v4246, 0.0
        %v4537 = vmax.f32 %v4249, 0.0
        %v4538 = vmax.f32 %v4251, 0.0
        %v4539 = vmax.f32 %v4254, 0.0
        %v4540 = vmax.f32 %v4256, 0.0
        %v4541 = vmax.f32 %v4259, 0.0
        %v4542 = vmax.f32 %v4261, 0.0
        %v4543 = vmax.f32 %v4264, 0.0
        %v4544 = vmax.f32 %v4266, 0.0
        %v4545 = vmax.f32 %v4269, 0.0
        %v4546 = vmax.f32 %v4271, 0.0
        %v4547 = vmax.f32 %v4274, 0.0
        %v4548 = vmax.f32 %v4276, 0.0
        %v4549 = vmax.f32 %v4279, 0.0
        %v4550 = vmax.f32 %v4281, 0.0
        %v4551 = vmax.f32 %v4284, 0.0
        %v4552 = vmax.f32 %v4286, 0.0
        %v4553 = vmax.f32 %v4289, 0.0
        %v4554 = vmax.f32 %v4291, 0.0
        %v4555 = vmax.f32 %v4294, 0.0
        %v4556 = vmax.f32 %v4296, 0.0
        %v4557 = vmax.f32 %v4299, 0.0
        %v4558 = vmax.f32 %v4301, 0.0
        %v4559 = vmax.f32 %v4304, 0.0
        %v4560 = vmax.f32 %v4306, 0.0
        %v4561 = vmax.f32 %v4309, 0.0
        %v4562 = vmax.f32 %v4311, 0.0
        %v4563 = vmax.f32 %v4314, 0.0
        %v4564 = vmax.f32 %v4316, 0.0
        %v4565 = vmax.f32 %v4319, 0.0
        %v4566 = vmax.f32 %v4321, 0.0
        %v4567 = vmax.f32 %v4324, 0.0
        %v4568 = vmax.f32 %v4326, 0.0
        %v4569 = vmax.f32 %v4329, 0.0
        %v4570 = vmax.f32 %v4331, 0.0
        %v4571 = vmax.f32 %v4334, 0.0
        %v4572 = vmax.f32 %v4336, 0.0
        %v4573 = vmax.f32 %v4339, 0.0
        %v4574 = vmax.f32 %v4341, 0.0
        %v4575 = vmax.f32 %v4344, 0.0
        %v4576 = vmax.f32 %v4346, 0.0
        %v4577 = vmax.f32 %v4349, 0.0
        %v4578 = vmax.f32 %v4351, 0.0
        %v4579 = vmax.f32 %v4354, 0.0
        %v4580 = vmax.f32 %v4356, 0.0
        %v4581 = vmax.f32 %v4359, 0.0
        %v4582 = vmax.f32 %v4361, 0.0
        %v4583 = vmax.f32 %v4364, 0.0
        %v4584 = vmax.f32 %v4366, 0.0
        %v4585 = vmax.f32 %v4369, 0.0
        %v4586 = vmax.f32 %v4371, 0.0
        %v4587 = vmax.f32 %v4374, 0.0
        %v4588 = vmax.f32 %v4376, 0.0
        %v4589 = vmax.f32 %v4379, 0.0
        %v4590 = vmax.f32 %v4381, 0.0
        %v4591 = vmax.f32 %v4384, 0.0
        %v4592 = vmax.f32 %v4386, 0.0
        %v4593 = vmax.f32 %v4389, 0.0
        %v4594 = vmax.f32 %v4391, 0.0
        %v4595 = vmax.f32 %v4394, 0.0
        %v4596 = vmax.f32 %v4396, 0.0
        %v4597 = vmax.f32 %v4399, 0.0
        %v4598 = vmax.f32 %v4401, 0.0
        %v4599 = vmax.f32 %v4404, 0.0
        %v4600 = vrot.slane %v4407, 4
        %v4601 = vadd.f32 %v4407, %v4600
        %v4602 = vrot.slane %v4601, 2
        %v4603 = vadd.f32 %v4601, %v4602
        %v4604 = vrot.slane %v4603, 1
        %v4605 = vadd.f32 %v4603, %v4604
        %v4606 = vrot.slane %v4408, 4
        %v4607 = vadd.f32 %v4408, %v4606
        %v4608 = vrot.slane %v4607, 2
        %v4609 = vadd.f32 %v4607, %v4608
        %v4610 = vrot.slane %v4609, 1
        %v4611 = vadd.f32 %v4609, %v4610
        %v4612 = vrot.slane %v4409, 4
        %v4613 = vadd.f32 %v4409, %v4612
        %v4614 = vrot.slane %v4613, 2
        %v4615 = vadd.f32 %v4613, %v4614
        %v4616 = vrot.slane %v4615, 1
        %v4617 = vadd.f32 %v4615, %v4616
        %v4618 = vrot.slane %v4410, 4
        %v4619 = vadd.f32 %v4410, %v4618
        %v4620 = vrot.slane %v4619, 2
        %v4621 = vadd.f32 %v4619, %v4620
        %v4622 = vrot.slane %v4621, 1
        %v4623 = vadd.f32 %v4621, %v4622
        %v4624 = vrot.slane %v4411, 4
        %v4625 = vadd.f32 %v4411, %v4624
        %v4626 = vrot.slane %v4625, 2
        %v4627 = vadd.f32 %v4625, %v4626
        %v4628 = vrot.slane %v4627, 1
        %v4629 = vadd.f32 %v4627, %v4628
        %v4630 = vrot.slane %v4412, 4
        %v4631 = vadd.f32 %v4412, %v4630
        %v4632 = vrot.slane %v4631, 2
        %v4633 = vadd.f32 %v4631, %v4632
        %v4634 = vrot.slane %v4633, 1
        %v4635 = vadd.f32 %v4633, %v4634
        %v4636 = vrot.slane %v4413, 4
        %v4637 = vadd.f32 %v4413, %v4636
        %v4638 = vrot.slane %v4637, 2
        %v4639 = vadd.f32 %v4637, %v4638
        %v4640 = vrot.slane %v4639, 1
        %v4641 = vadd.f32 %v4639, %v4640
        %v4642 = vrot.slane %v4414, 4
        %v4643 = vadd.f32 %v4414, %v4642
        %v4644 = vrot.slane %v4643, 2
        %v4645 = vadd.f32 %v4643, %v4644
        %v4646 = vrot.slane %v4645, 1
        %v4647 = vadd.f32 %v4645, %v4646
        %v4648 = vrot.slane %v4415, 4
        %v4649 = vadd.f32 %v4415, %v4648
        %v4650 = vrot.slane %v4649, 2
        %v4651 = vadd.f32 %v4649, %v4650
        %v4652 = vrot.slane %v4651, 1
        %v4653 = vadd.f32 %v4651, %v4652
        %v4654 = vrot.slane %v4416, 4
        %v4655 = vadd.f32 %v4416, %v4654
        %v4656 = vrot.slane %v4655, 2
        %v4657 = vadd.f32 %v4655, %v4656
        %v4658 = vrot.slane %v4657, 1
        %v4659 = vadd.f32 %v4657, %v4658
        %v4660 = vrot.slane %v4417, 4
        %v4661 = vadd.f32 %v4417, %v4660
        %v4662 = vrot.slane %v4661, 2
        %v4663 = vadd.f32 %v4661, %v4662
        %v4664 = vrot.slane %v4663, 1
        %v4665 = vadd.f32 %v4663, %v4664
        %v4666 = vrot.slane %v4418, 4
        %v4667 = vadd.f32 %v4418, %v4666
        %v4668 = vrot.slane %v4667, 2
        %v4669 = vadd.f32 %v4667, %v4668
        %v4670 = vrot.slane %v4669, 1
        %v4671 = vadd.f32 %v4669, %v4670
        %v4672 = vrot.slane %v4419, 4
        %v4673 = vadd.f32 %v4419, %v4672
        %v4674 = vrot.slane %v4673, 2
        %v4675 = vadd.f32 %v4673, %v4674
        %v4676 = vrot.slane %v4675, 1
        %v4677 = vadd.f32 %v4675, %v4676
        %v4678 = vrot.slane %v4420, 4
        %v4679 = vadd.f32 %v4420, %v4678
        %v4680 = vrot.slane %v4679, 2
        %v4681 = vadd.f32 %v4679, %v4680
        %v4682 = vrot.slane %v4681, 1
        %v4683 = vadd.f32 %v4681, %v4682
        %v4684 = vrot.slane %v4421, 4
        %v4685 = vadd.f32 %v4421, %v4684
        %v4686 = vrot.slane %v4685, 2
        %v4687 = vadd.f32 %v4685, %v4686
        %v4688 = vrot.slane %v4687, 1
        %v4689 = vadd.f32 %v4687, %v4688
        %v4690 = vrot.slane %v4422, 4
        %v4691 = vadd.f32 %v4422, %v4690
        %v4692 = vrot.slane %v4691, 2
        %v4693 = vadd.f32 %v4691, %v4692
        %v4694 = vrot.slane %v4693, 1
        %v4695 = vadd.f32 %v4693, %v4694
        %v4696 = vrot.slane %v4423, 4
        %v4697 = vadd.f32 %v4423, %v4696
        %v4698 = vrot.slane %v4697, 2
        %v4699 = vadd.f32 %v4697, %v4698
        %v4700 = vrot.slane %v4699, 1
        %v4701 = vadd.f32 %v4699, %v4700
        %v4702 = vrot.slane %v4424, 4
        %v4703 = vadd.f32 %v4424, %v4702
        %v4704 = vrot.slane %v4703, 2
        %v4705 = vadd.f32 %v4703, %v4704
        %v4706 = vrot.slane %v4705, 1
        %v4707 = vadd.f32 %v4705, %v4706
        %v4708 = vrot.slane %v4425, 4
        %v4709 = vadd.f32 %v4425, %v4708
        %v4710 = vrot.slane %v4709, 2
        %v4711 = vadd.f32 %v4709, %v4710
        %v4712 = vrot.slane %v4711, 1
        %v4713 = vadd.f32 %v4711, %v4712
        %v4714 = vrot.slane %v4426, 4
        %v4715 = vadd.f32 %v4426, %v4714
        %v4716 = vrot.slane %v4715, 2
        %v4717 = vadd.f32 %v4715, %v4716
        %v4718 = vrot.slane %v4717, 1
        %v4719 = vadd.f32 %v4717, %v4718
        %v4720 = vrot.slane %v4427, 4
        %v4721 = vadd.f32 %v4427, %v4720
        %v4722 = vrot.slane %v4721, 2
        %v4723 = vadd.f32 %v4721, %v4722
        %v4724 = vrot.slane %v4723, 1
        %v4725 = vadd.f32 %v4723, %v4724
        %v4726 = vrot.slane %v4428, 4
        %v4727 = vadd.f32 %v4428, %v4726
        %v4728 = vrot.slane %v4727, 2
        %v4729 = vadd.f32 %v4727, %v4728
        %v4730 = vrot.slane %v4729, 1
        %v4731 = vadd.f32 %v4729, %v4730
        %v4732 = vrot.slane %v4429, 4
        %v4733 = vadd.f32 %v4429, %v4732
        %v4734 = vrot.slane %v4733, 2
        %v4735 = vadd.f32 %v4733, %v4734
        %v4736 = vrot.slane %v4735, 1
        %v4737 = vadd.f32 %v4735, %v4736
        %v4738 = vrot.slane %v4430, 4
        %v4739 = vadd.f32 %v4430, %v4738
        %v4740 = vrot.slane %v4739, 2
        %v4741 = vadd.f32 %v4739, %v4740
        %v4742 = vrot.slane %v4741, 1
        %v4743 = vadd.f32 %v4741, %v4742
        %v4744 = vrot.slane %v4431, 4
        %v4745 = vadd.f32 %v4431, %v4744
        %v4746 = vrot.slane %v4745, 2
        %v4747 = vadd.f32 %v4745, %v4746
        %v4748 = vrot.slane %v4747, 1
        %v4749 = vadd.f32 %v4747, %v4748
        %v4750 = vrot.slane %v4432, 4
        %v4751 = vadd.f32 %v4432, %v4750
        %v4752 = vrot.slane %v4751, 2
        %v4753 = vadd.f32 %v4751, %v4752
        %v4754 = vrot.slane %v4753, 1
        %v4755 = vadd.f32 %v4753, %v4754
        %v4756 = vrot.slane %v4433, 4
        %v4757 = vadd.f32 %v4433, %v4756
        %v4758 = vrot.slane %v4757, 2
        %v4759 = vadd.f32 %v4757, %v4758
        %v4760 = vrot.slane %v4759, 1
        %v4761 = vadd.f32 %v4759, %v4760
        %v4762 = vrot.slane %v4434, 4
        %v4763 = vadd.f32 %v4434, %v4762
        %v4764 = vrot.slane %v4763, 2
        %v4765 = vadd.f32 %v4763, %v4764
        %v4766 = vrot.slane %v4765, 1
        %v4767 = vadd.f32 %v4765, %v4766
        %v4768 = vrot.slane %v4435, 4
        %v4769 = vadd.f32 %v4435, %v4768
        %v4770 = vrot.slane %v4769, 2
        %v4771 = vadd.f32 %v4769, %v4770
        %v4772 = vrot.slane %v4771, 1
        %v4773 = vadd.f32 %v4771, %v4772
        %v4774 = vrot.slane %v4436, 4
        %v4775 = vadd.f32 %v4436, %v4774
        %v4776 = vrot.slane %v4775, 2
        %v4777 = vadd.f32 %v4775, %v4776
        %v4778 = vrot.slane %v4777, 1
        %v4779 = vadd.f32 %v4777, %v4778
        %v4780 = vrot.slane %v4437, 4
        %v4781 = vadd.f32 %v4437, %v4780
        %v4782 = vrot.slane %v4781, 2
        %v4783 = vadd.f32 %v4781, %v4782
        %v4784 = vrot.slane %v4783, 1
        %v4785 = vadd.f32 %v4783, %v4784
        %v4786 = vrot.slane %v4438, 4
        %v4787 = vadd.f32 %v4438, %v4786
        %v4788 = vrot.slane %v4787, 2
        %v4789 = vadd.f32 %v4787, %v4788
        %v4790 = vrot.slane %v4789, 1
        %v4791 = vadd.f32 %v4789, %v4790
        %v4792 = vrot.slane %v4439, 4
        %v4793 = vadd.f32 %v4439, %v4792
        %v4794 = vrot.slane %v4793, 2
        %v4795 = vadd.f32 %v4793, %v4794
        %v4796 = vrot.slane %v4795, 1
        %v4797 = vadd.f32 %v4795, %v4796
        %v4798 = vrot.slane %v4440, 4
        %v4799 = vadd.f32 %v4440, %v4798
        %v4800 = vrot.slane %v4799, 2
        %v4801 = vadd.f32 %v4799, %v4800
        %v4802 = vrot.slane %v4801, 1
        %v4803 = vadd.f32 %v4801, %v4802
        %v4804 = vrot.slane %v4441, 4
        %v4805 = vadd.f32 %v4441, %v4804
        %v4806 = vrot.slane %v4805, 2
        %v4807 = vadd.f32 %v4805, %v4806
        %v4808 = vrot.slane %v4807, 1
        %v4809 = vadd.f32 %v4807, %v4808
        %v4810 = vrot.slane %v4442, 4
        %v4811 = vadd.f32 %v4442, %v4810
        %v4812 = vrot.slane %v4811, 2
        %v4813 = vadd.f32 %v4811, %v4812
        %v4814 = vrot.slane %v4813, 1
        %v4815 = vadd.f32 %v4813, %v4814
        %v4816 = vrot.slane %v4443, 4
        %v4817 = vadd.f32 %v4443, %v4816
        %v4818 = vrot.slane %v4817, 2
        %v4819 = vadd.f32 %v4817, %v4818
        %v4820 = vrot.slane %v4819, 1
        %v4821 = vadd.f32 %v4819, %v4820
        %v4822 = vrot.slane %v4444, 4
        %v4823 = vadd.f32 %v4444, %v4822
        %v4824 = vrot.slane %v4823, 2
        %v4825 = vadd.f32 %v4823, %v4824
        %v4826 = vrot.slane %v4825, 1
        %v4827 = vadd.f32 %v4825, %v4826
        %v4828 = vrot.slane %v4445, 4
        %v4829 = vadd.f32 %v4445, %v4828
        %v4830 = vrot.slane %v4829, 2
        %v4831 = vadd.f32 %v4829, %v4830
        %v4832 = vrot.slane %v4831, 1
        %v4833 = vadd.f32 %v4831, %v4832
        %v4834 = vrot.slane %v4446, 4
        %v4835 = vadd.f32 %v4446, %v4834
        %v4836 = vrot.slane %v4835, 2
        %v4837 = vadd.f32 %v4835, %v4836
        %v4838 = vrot.slane %v4837, 1
        %v4839 = vadd.f32 %v4837, %v4838
        %v4840 = vrot.slane %v4447, 4
        %v4841 = vadd.f32 %v4447, %v4840
        %v4842 = vrot.slane %v4841, 2
        %v4843 = vadd.f32 %v4841, %v4842
        %v4844 = vrot.slane %v4843, 1
        %v4845 = vadd.f32 %v4843, %v4844
        %v4846 = vrot.slane %v4448, 4
        %v4847 = vadd.f32 %v4448, %v4846
        %v4848 = vrot.slane %v4847, 2
        %v4849 = vadd.f32 %v4847, %v4848
        %v4850 = vrot.slane %v4849, 1
        %v4851 = vadd.f32 %v4849, %v4850
        %v4852 = vrot.slane %v4449, 4
        %v4853 = vadd.f32 %v4449, %v4852
        %v4854 = vrot.slane %v4853, 2
        %v4855 = vadd.f32 %v4853, %v4854
        %v4856 = vrot.slane %v4855, 1
        %v4857 = vadd.f32 %v4855, %v4856
        %v4858 = vrot.slane %v4450, 4
        %v4859 = vadd.f32 %v4450, %v4858
        %v4860 = vrot.slane %v4859, 2
        %v4861 = vadd.f32 %v4859, %v4860
        %v4862 = vrot.slane %v4861, 1
        %v4863 = vadd.f32 %v4861, %v4862
        %v4864 = vrot.slane %v4451, 4
        %v4865 = vadd.f32 %v4451, %v4864
        %v4866 = vrot.slane %v4865, 2
        %v4867 = vadd.f32 %v4865, %v4866
        %v4868 = vrot.slane %v4867, 1
        %v4869 = vadd.f32 %v4867, %v4868
        %v4870 = vrot.slane %v4452, 4
        %v4871 = vadd.f32 %v4452, %v4870
        %v4872 = vrot.slane %v4871, 2
        %v4873 = vadd.f32 %v4871, %v4872
        %v4874 = vrot.slane %v4873, 1
        %v4875 = vadd.f32 %v4873, %v4874
        %v4876 = vrot.slane %v4453, 4
        %v4877 = vadd.f32 %v4453, %v4876
        %v4878 = vrot.slane %v4877, 2
        %v4879 = vadd.f32 %v4877, %v4878
        %v4880 = vrot.slane %v4879, 1
        %v4881 = vadd.f32 %v4879, %v4880
        %v4882 = vrot.slane %v4454, 4
        %v4883 = vadd.f32 %v4454, %v4882
        %v4884 = vrot.slane %v4883, 2
        %v4885 = vadd.f32 %v4883, %v4884
        %v4886 = vrot.slane %v4885, 1
        %v4887 = vadd.f32 %v4885, %v4886
        %v4888 = vrot.slane %v4455, 4
        %v4889 = vadd.f32 %v4455, %v4888
        %v4890 = vrot.slane %v4889, 2
        %v4891 = vadd.f32 %v4889, %v4890
        %v4892 = vrot.slane %v4891, 1
        %v4893 = vadd.f32 %v4891, %v4892
        %v4894 = vrot.slane %v4456, 4
        %v4895 = vadd.f32 %v4456, %v4894
        %v4896 = vrot.slane %v4895, 2
        %v4897 = vadd.f32 %v4895, %v4896
        %v4898 = vrot.slane %v4897, 1
        %v4899 = vadd.f32 %v4897, %v4898
        %v4900 = vrot.slane %v4457, 4
        %v4901 = vadd.f32 %v4457, %v4900
        %v4902 = vrot.slane %v4901, 2
        %v4903 = vadd.f32 %v4901, %v4902
        %v4904 = vrot.slane %v4903, 1
        %v4905 = vadd.f32 %v4903, %v4904
        %v4906 = vrot.slane %v4458, 4
        %v4907 = vadd.f32 %v4458, %v4906
        %v4908 = vrot.slane %v4907, 2
        %v4909 = vadd.f32 %v4907, %v4908
        %v4910 = vrot.slane %v4909, 1
        %v4911 = vadd.f32 %v4909, %v4910
        %v4912 = vrot.slane %v4459, 4
        %v4913 = vadd.f32 %v4459, %v4912
        %v4914 = vrot.slane %v4913, 2
        %v4915 = vadd.f32 %v4913, %v4914
        %v4916 = vrot.slane %v4915, 1
        %v4917 = vadd.f32 %v4915, %v4916
        %v4918 = vrot.slane %v4460, 4
        %v4919 = vadd.f32 %v4460, %v4918
        %v4920 = vrot.slane %v4919, 2
        %v4921 = vadd.f32 %v4919, %v4920
        %v4922 = vrot.slane %v4921, 1
        %v4923 = vadd.f32 %v4921, %v4922
        %v4924 = vrot.slane %v4461, 4
        %v4925 = vadd.f32 %v4461, %v4924
        %v4926 = vrot.slane %v4925, 2
        %v4927 = vadd.f32 %v4925, %v4926
        %v4928 = vrot.slane %v4927, 1
        %v4929 = vadd.f32 %v4927, %v4928
        %v4930 = vrot.slane %v4462, 4
        %v4931 = vadd.f32 %v4462, %v4930
        %v4932 = vrot.slane %v4931, 2
        %v4933 = vadd.f32 %v4931, %v4932
        %v4934 = vrot.slane %v4933, 1
        %v4935 = vadd.f32 %v4933, %v4934
        %v4936 = vrot.slane %v4463, 4
        %v4937 = vadd.f32 %v4463, %v4936
        %v4938 = vrot.slane %v4937, 2
        %v4939 = vadd.f32 %v4937, %v4938
        %v4940 = vrot.slane %v4939, 1
        %v4941 = vadd.f32 %v4939, %v4940
        %v4942 = vrot.slane %v4464, 4
        %v4943 = vadd.f32 %v4464, %v4942
        %v4944 = vrot.slane %v4943, 2
        %v4945 = vadd.f32 %v4943, %v4944
        %v4946 = vrot.slane %v4945, 1
        %v4947 = vadd.f32 %v4945, %v4946
        %v4948 = vrot.slane %v4465, 4
        %v4949 = vadd.f32 %v4465, %v4948
        %v4950 = vrot.slane %v4949, 2
        %v4951 = vadd.f32 %v4949, %v4950
        %v4952 = vrot.slane %v4951, 1
        %v4953 = vadd.f32 %v4951, %v4952
        %v4954 = vrot.slane %v4466, 4
        %v4955 = vadd.f32 %v4466, %v4954
        %v4956 = vrot.slane %v4955, 2
        %v4957 = vadd.f32 %v4955, %v4956
        %v4958 = vrot.slane %v4957, 1
        %v4959 = vadd.f32 %v4957, %v4958
        %v4960 = vrot.slane %v4467, 4
        %v4961 = vadd.f32 %v4467, %v4960
        %v4962 = vrot.slane %v4961, 2
        %v4963 = vadd.f32 %v4961, %v4962
        %v4964 = vrot.slane %v4963, 1
        %v4965 = vadd.f32 %v4963, %v4964
        %v4966 = vrot.slane %v4468, 4
        %v4967 = vadd.f32 %v4468, %v4966
        %v4968 = vrot.slane %v4967, 2
        %v4969 = vadd.f32 %v4967, %v4968
        %v4970 = vrot.slane %v4969, 1
        %v4971 = vadd.f32 %v4969, %v4970
        %v4972 = vrot.slane %v4469, 4
        %v4973 = vadd.f32 %v4469, %v4972
        %v4974 = vrot.slane %v4973, 2
        %v4975 = vadd.f32 %v4973, %v4974
        %v4976 = vrot.slane %v4975, 1
        %v4977 = vadd.f32 %v4975, %v4976
        %v4978 = vrot.slane %v4470, 4
        %v4979 = vadd.f32 %v4470, %v4978
        %v4980 = vrot.slane %v4979, 2
        %v4981 = vadd.f32 %v4979, %v4980
        %v4982 = vrot.slane %v4981, 1
        %v4983 = vadd.f32 %v4981, %v4982
        %v4984 = vrot.slane %v4471, 4
        %v4985 = vadd.f32 %v4471, %v4984
        %v4986 = vrot.slane %v4985, 2
        %v4987 = vadd.f32 %v4985, %v4986
        %v4988 = vrot.slane %v4987, 1
        %v4989 = vadd.f32 %v4987, %v4988
        %v4990 = vrot.slane %v4472, 4
        %v4991 = vadd.f32 %v4472, %v4990
        %v4992 = vrot.slane %v4991, 2
        %v4993 = vadd.f32 %v4991, %v4992
        %v4994 = vrot.slane %v4993, 1
        %v4995 = vadd.f32 %v4993, %v4994
        %v4996 = vrot.slane %v4473, 4
        %v4997 = vadd.f32 %v4473, %v4996
        %v4998 = vrot.slane %v4997, 2
        %v4999 = vadd.f32 %v4997, %v4998
        %v5000 = vrot.slane %v4999, 1
        %v5001 = vadd.f32 %v4999, %v5000
        %v5002 = vrot.slane %v4474, 4
        %v5003 = vadd.f32 %v4474, %v5002
        %v5004 = vrot.slane %v5003, 2
        %v5005 = vadd.f32 %v5003, %v5004
        %v5006 = vrot.slane %v5005, 1
        %v5007 = vadd.f32 %v5005, %v5006
        %v5008 = vrot.slane %v4475, 4
        %v5009 = vadd.f32 %v4475, %v5008
        %v5010 = vrot.slane %v5009, 2
        %v5011 = vadd.f32 %v5009, %v5010
        %v5012 = vrot.slane %v5011, 1
        %v5013 = vadd.f32 %v5011, %v5012
        %v5014 = vrot.slane %v4476, 4
        %v5015 = vadd.f32 %v4476, %v5014
        %v5016 = vrot.slane %v5015, 2
        %v5017 = vadd.f32 %v5015, %v5016
        %v5018 = vrot.slane %v5017, 1
        %v5019 = vadd.f32 %v5017, %v5018
        %v5020 = vrot.slane %v4477, 4
        %v5021 = vadd.f32 %v4477, %v5020
        %v5022 = vrot.slane %v5021, 2
        %v5023 = vadd.f32 %v5021, %v5022
        %v5024 = vrot.slane %v5023, 1
        %v5025 = vadd.f32 %v5023, %v5024
        %v5026 = vrot.slane %v4478, 4
        %v5027 = vadd.f32 %v4478, %v5026
        %v5028 = vrot.slane %v5027, 2
        %v5029 = vadd.f32 %v5027, %v5028
        %v5030 = vrot.slane %v5029, 1
        %v5031 = vadd.f32 %v5029, %v5030
        %v5032 = vrot.slane %v4479, 4
        %v5033 = vadd.f32 %v4479, %v5032
        %v5034 = vrot.slane %v5033, 2
        %v5035 = vadd.f32 %v5033, %v5034
        %v5036 = vrot.slane %v5035, 1
        %v5037 = vadd.f32 %v5035, %v5036
        %v5038 = vrot.slane %v4480, 4
        %v5039 = vadd.f32 %v4480, %v5038
        %v5040 = vrot.slane %v5039, 2
        %v5041 = vadd.f32 %v5039, %v5040
        %v5042 = vrot.slane %v5041, 1
        %v5043 = vadd.f32 %v5041, %v5042
        %v5044 = vrot.slane %v4481, 4
        %v5045 = vadd.f32 %v4481, %v5044
        %v5046 = vrot.slane %v5045, 2
        %v5047 = vadd.f32 %v5045, %v5046
        %v5048 = vrot.slane %v5047, 1
        %v5049 = vadd.f32 %v5047, %v5048
        %v5050 = vrot.slane %v4482, 4
        %v5051 = vadd.f32 %v4482, %v5050
        %v5052 = vrot.slane %v5051, 2
        %v5053 = vadd.f32 %v5051, %v5052
        %v5054 = vrot.slane %v5053, 1
        %v5055 = vadd.f32 %v5053, %v5054
        %v5056 = vrot.slane %v4483, 4
        %v5057 = vadd.f32 %v4483, %v5056
        %v5058 = vrot.slane %v5057, 2
        %v5059 = vadd.f32 %v5057, %v5058
        %v5060 = vrot.slane %v5059, 1
        %v5061 = vadd.f32 %v5059, %v5060
        %v5062 = vrot.slane %v4484, 4
        %v5063 = vadd.f32 %v4484, %v5062
        %v5064 = vrot.slane %v5063, 2
        %v5065 = vadd.f32 %v5063, %v5064
        %v5066 = vrot.slane %v5065, 1
        %v5067 = vadd.f32 %v5065, %v5066
        %v5068 = vrot.slane %v4485, 4
        %v5069 = vadd.f32 %v4485, %v5068
        %v5070 = vrot.slane %v5069, 2
        %v5071 = vadd.f32 %v5069, %v5070
        %v5072 = vrot.slane %v5071, 1
        %v5073 = vadd.f32 %v5071, %v5072
        %v5074 = vrot.slane %v4486, 4
        %v5075 = vadd.f32 %v4486, %v5074
        %v5076 = vrot.slane %v5075, 2
        %v5077 = vadd.f32 %v5075, %v5076
        %v5078 = vrot.slane %v5077, 1
        %v5079 = vadd.f32 %v5077, %v5078
        %v5080 = vrot.slane %v4487, 4
        %v5081 = vadd.f32 %v4487, %v5080
        %v5082 = vrot.slane %v5081, 2
        %v5083 = vadd.f32 %v5081, %v5082
        %v5084 = vrot.slane %v5083, 1
        %v5085 = vadd.f32 %v5083, %v5084
        %v5086 = vrot.slane %v4488, 4
        %v5087 = vadd.f32 %v4488, %v5086
        %v5088 = vrot.slane %v5087, 2
        %v5089 = vadd.f32 %v5087, %v5088
        %v5090 = vrot.slane %v5089, 1
        %v5091 = vadd.f32 %v5089, %v5090
        %v5092 = vrot.slane %v4489, 4
        %v5093 = vadd.f32 %v4489, %v5092
        %v5094 = vrot.slane %v5093, 2
        %v5095 = vadd.f32 %v5093, %v5094
        %v5096 = vrot.slane %v5095, 1
        %v5097 = vadd.f32 %v5095, %v5096
        %v5098 = vrot.slane %v4490, 4
        %v5099 = vadd.f32 %v4490, %v5098
        %v5100 = vrot.slane %v5099, 2
        %v5101 = vadd.f32 %v5099, %v5100
        %v5102 = vrot.slane %v5101, 1
        %v5103 = vadd.f32 %v5101, %v5102
        %v5104 = vrot.slane %v4491, 4
        %v5105 = vadd.f32 %v4491, %v5104
        %v5106 = vrot.slane %v5105, 2
        %v5107 = vadd.f32 %v5105, %v5106
        %v5108 = vrot.slane %v5107, 1
        %v5109 = vadd.f32 %v5107, %v5108
        %v5110 = vrot.slane %v4492, 4
        %v5111 = vadd.f32 %v4492, %v5110
        %v5112 = vrot.slane %v5111, 2
        %v5113 = vadd.f32 %v5111, %v5112
        %v5114 = vrot.slane %v5113, 1
        %v5115 = vadd.f32 %v5113, %v5114
        %v5116 = vrot.slane %v4493, 4
        %v5117 = vadd.f32 %v4493, %v5116
        %v5118 = vrot.slane %v5117, 2
        %v5119 = vadd.f32 %v5117, %v5118
        %v5120 = vrot.slane %v5119, 1
        %v5121 = vadd.f32 %v5119, %v5120
        %v5122 = vrot.slane %v4494, 4
        %v5123 = vadd.f32 %v4494, %v5122
        %v5124 = vrot.slane %v5123, 2
        %v5125 = vadd.f32 %v5123, %v5124
        %v5126 = vrot.slane %v5125, 1
        %v5127 = vadd.f32 %v5125, %v5126
        %v5128 = vrot.slane %v4495, 4
        %v5129 = vadd.f32 %v4495, %v5128
        %v5130 = vrot.slane %v5129, 2
        %v5131 = vadd.f32 %v5129, %v5130
        %v5132 = vrot.slane %v5131, 1
        %v5133 = vadd.f32 %v5131, %v5132
        %v5134 = vrot.slane %v4496, 4
        %v5135 = vadd.f32 %v4496, %v5134
        %v5136 = vrot.slane %v5135, 2
        %v5137 = vadd.f32 %v5135, %v5136
        %v5138 = vrot.slane %v5137, 1
        %v5139 = vadd.f32 %v5137, %v5138
        %v5140 = vrot.slane %v4497, 4
        %v5141 = vadd.f32 %v4497, %v5140
        %v5142 = vrot.slane %v5141, 2
        %v5143 = vadd.f32 %v5141, %v5142
        %v5144 = vrot.slane %v5143, 1
        %v5145 = vadd.f32 %v5143, %v5144
        %v5146 = vrot.slane %v4498, 4
        %v5147 = vadd.f32 %v4498, %v5146
        %v5148 = vrot.slane %v5147, 2
        %v5149 = vadd.f32 %v5147, %v5148
        %v5150 = vrot.slane %v5149, 1
        %v5151 = vadd.f32 %v5149, %v5150
        %v5152 = vrot.slane %v4499, 4
        %v5153 = vadd.f32 %v4499, %v5152
        %v5154 = vrot.slane %v5153, 2
        %v5155 = vadd.f32 %v5153, %v5154
        %v5156 = vrot.slane %v5155, 1
        %v5157 = vadd.f32 %v5155, %v5156
        %v5158 = vrot.slane %v4500, 4
        %v5159 = vadd.f32 %v4500, %v5158
        %v5160 = vrot.slane %v5159, 2
        %v5161 = vadd.f32 %v5159, %v5160
        %v5162 = vrot.slane %v5161, 1
        %v5163 = vadd.f32 %v5161, %v5162
        %v5164 = vrot.slane %v4501, 4
        %v5165 = vadd.f32 %v4501, %v5164
        %v5166 = vrot.slane %v5165, 2
        %v5167 = vadd.f32 %v5165, %v5166
        %v5168 = vrot.slane %v5167, 1
        %v5169 = vadd.f32 %v5167, %v5168
        %v5170 = vrot.slane %v4502, 4
        %v5171 = vadd.f32 %v4502, %v5170
        %v5172 = vrot.slane %v5171, 2
        %v5173 = vadd.f32 %v5171, %v5172
        %v5174 = vrot.slane %v5173, 1
        %v5175 = vadd.f32 %v5173, %v5174
        %v5176 = vrot.slane %v4503, 4
        %v5177 = vadd.f32 %v4503, %v5176
        %v5178 = vrot.slane %v5177, 2
        %v5179 = vadd.f32 %v5177, %v5178
        %v5180 = vrot.slane %v5179, 1
        %v5181 = vadd.f32 %v5179, %v5180
        %v5182 = vrot.slane %v4504, 4
        %v5183 = vadd.f32 %v4504, %v5182
        %v5184 = vrot.slane %v5183, 2
        %v5185 = vadd.f32 %v5183, %v5184
        %v5186 = vrot.slane %v5185, 1
        %v5187 = vadd.f32 %v5185, %v5186
        %v5188 = vrot.slane %v4505, 4
        %v5189 = vadd.f32 %v4505, %v5188
        %v5190 = vrot.slane %v5189, 2
        %v5191 = vadd.f32 %v5189, %v5190
        %v5192 = vrot.slane %v5191, 1
        %v5193 = vadd.f32 %v5191, %v5192
        %v5194 = vrot.slane %v4506, 4
        %v5195 = vadd.f32 %v4506, %v5194
        %v5196 = vrot.slane %v5195, 2
        %v5197 = vadd.f32 %v5195, %v5196
        %v5198 = vrot.slane %v5197, 1
        %v5199 = vadd.f32 %v5197, %v5198
        %v5200 = vrot.slane %v4507, 4
        %v5201 = vadd.f32 %v4507, %v5200
        %v5202 = vrot.slane %v5201, 2
        %v5203 = vadd.f32 %v5201, %v5202
        %v5204 = vrot.slane %v5203, 1
        %v5205 = vadd.f32 %v5203, %v5204
        %v5206 = vrot.slane %v4508, 4
        %v5207 = vadd.f32 %v4508, %v5206
        %v5208 = vrot.slane %v5207, 2
        %v5209 = vadd.f32 %v5207, %v5208
        %v5210 = vrot.slane %v5209, 1
        %v5211 = vadd.f32 %v5209, %v5210
        %v5212 = vrot.slane %v4509, 4
        %v5213 = vadd.f32 %v4509, %v5212
        %v5214 = vrot.slane %v5213, 2
        %v5215 = vadd.f32 %v5213, %v5214
        %v5216 = vrot.slane %v5215, 1
        %v5217 = vadd.f32 %v5215, %v5216
        %v5218 = vrot.slane %v4510, 4
        %v5219 = vadd.f32 %v4510, %v5218
        %v5220 = vrot.slane %v5219, 2
        %v5221 = vadd.f32 %v5219, %v5220
        %v5222 = vrot.slane %v5221, 1
        %v5223 = vadd.f32 %v5221, %v5222
        %v5224 = vrot.slane %v4511, 4
        %v5225 = vadd.f32 %v4511, %v5224
        %v5226 = vrot.slane %v5225, 2
        %v5227 = vadd.f32 %v5225, %v5226
        %v5228 = vrot.slane %v5227, 1
        %v5229 = vadd.f32 %v5227, %v5228
        %v5230 = vrot.slane %v4512, 4
        %v5231 = vadd.f32 %v4512, %v5230
        %v5232 = vrot.slane %v5231, 2
        %v5233 = vadd.f32 %v5231, %v5232
        %v5234 = vrot.slane %v5233, 1
        %v5235 = vadd.f32 %v5233, %v5234
        %v5236 = vrot.slane %v4513, 4
        %v5237 = vadd.f32 %v4513, %v5236
        %v5238 = vrot.slane %v5237, 2
        %v5239 = vadd.f32 %v5237, %v5238
        %v5240 = vrot.slane %v5239, 1
        %v5241 = vadd.f32 %v5239, %v5240
        %v5242 = vrot.slane %v4514, 4
        %v5243 = vadd.f32 %v4514, %v5242
        %v5244 = vrot.slane %v5243, 2
        %v5245 = vadd.f32 %v5243, %v5244
        %v5246 = vrot.slane %v5245, 1
        %v5247 = vadd.f32 %v5245, %v5246
        %v5248 = vrot.slane %v4515, 4
        %v5249 = vadd.f32 %v4515, %v5248
        %v5250 = vrot.slane %v5249, 2
        %v5251 = vadd.f32 %v5249, %v5250
        %v5252 = vrot.slane %v5251, 1
        %v5253 = vadd.f32 %v5251, %v5252
        %v5254 = vrot.slane %v4516, 4
        %v5255 = vadd.f32 %v4516, %v5254
        %v5256 = vrot.slane %v5255, 2
        %v5257 = vadd.f32 %v5255, %v5256
        %v5258 = vrot.slane %v5257, 1
        %v5259 = vadd.f32 %v5257, %v5258
        %v5260 = vrot.slane %v4517, 4
        %v5261 = vadd.f32 %v4517, %v5260
        %v5262 = vrot.slane %v5261, 2
        %v5263 = vadd.f32 %v5261, %v5262
        %v5264 = vrot.slane %v5263, 1
        %v5265 = vadd.f32 %v5263, %v5264
        %v5266 = vrot.slane %v4518, 4
        %v5267 = vadd.f32 %v4518, %v5266
        %v5268 = vrot.slane %v5267, 2
        %v5269 = vadd.f32 %v5267, %v5268
        %v5270 = vrot.slane %v5269, 1
        %v5271 = vadd.f32 %v5269, %v5270
        %v5272 = vrot.slane %v4519, 4
        %v5273 = vadd.f32 %v4519, %v5272
        %v5274 = vrot.slane %v5273, 2
        %v5275 = vadd.f32 %v5273, %v5274
        %v5276 = vrot.slane %v5275, 1
        %v5277 = vadd.f32 %v5275, %v5276
        %v5278 = vrot.slane %v4520, 4
        %v5279 = vadd.f32 %v4520, %v5278
        %v5280 = vrot.slane %v5279, 2
        %v5281 = vadd.f32 %v5279, %v5280
        %v5282 = vrot.slane %v5281, 1
        %v5283 = vadd.f32 %v5281, %v5282
        %v5284 = vrot.slane %v4521, 4
        %v5285 = vadd.f32 %v4521, %v5284
        %v5286 = vrot.slane %v5285, 2
        %v5287 = vadd.f32 %v5285, %v5286
        %v5288 = vrot.slane %v5287, 1
        %v5289 = vadd.f32 %v5287, %v5288
        %v5290 = vrot.slane %v4522, 4
        %v5291 = vadd.f32 %v4522, %v5290
        %v5292 = vrot.slane %v5291, 2
        %v5293 = vadd.f32 %v5291, %v5292
        %v5294 = vrot.slane %v5293, 1
        %v5295 = vadd.f32 %v5293, %v5294
        %v5296 = vrot.slane %v4523, 4
        %v5297 = vadd.f32 %v4523, %v5296
        %v5298 = vrot.slane %v5297, 2
        %v5299 = vadd.f32 %v5297, %v5298
        %v5300 = vrot.slane %v5299, 1
        %v5301 = vadd.f32 %v5299, %v5300
        %v5302 = vrot.slane %v4524, 4
        %v5303 = vadd.f32 %v4524, %v5302
        %v5304 = vrot.slane %v5303, 2
        %v5305 = vadd.f32 %v5303, %v5304
        %v5306 = vrot.slane %v5305, 1
        %v5307 = vadd.f32 %v5305, %v5306
        %v5308 = vrot.slane %v4525, 4
        %v5309 = vadd.f32 %v4525, %v5308
        %v5310 = vrot.slane %v5309, 2
        %v5311 = vadd.f32 %v5309, %v5310
        %v5312 = vrot.slane %v5311, 1
        %v5313 = vadd.f32 %v5311, %v5312
        %v5314 = vrot.slane %v4526, 4
        %v5315 = vadd.f32 %v4526, %v5314
        %v5316 = vrot.slane %v5315, 2
        %v5317 = vadd.f32 %v5315, %v5316
        %v5318 = vrot.slane %v5317, 1
        %v5319 = vadd.f32 %v5317, %v5318
        %v5320 = vrot.slane %v4527, 4
        %v5321 = vadd.f32 %v4527, %v5320
        %v5322 = vrot.slane %v5321, 2
        %v5323 = vadd.f32 %v5321, %v5322
        %v5324 = vrot.slane %v5323, 1
        %v5325 = vadd.f32 %v5323, %v5324
        %v5326 = vrot.slane %v4528, 4
        %v5327 = vadd.f32 %v4528, %v5326
        %v5328 = vrot.slane %v5327, 2
        %v5329 = vadd.f32 %v5327, %v5328
        %v5330 = vrot.slane %v5329, 1
        %v5331 = vadd.f32 %v5329, %v5330
        %v5332 = vrot.slane %v4529, 4
        %v5333 = vadd.f32 %v4529, %v5332
        %v5334 = vrot.slane %v5333, 2
        %v5335 = vadd.f32 %v5333, %v5334
        %v5336 = vrot.slane %v5335, 1
        %v5337 = vadd.f32 %v5335, %v5336
        %v5338 = vrot.slane %v4530, 4
        %v5339 = vadd.f32 %v4530, %v5338
        %v5340 = vrot.slane %v5339, 2
        %v5341 = vadd.f32 %v5339, %v5340
        %v5342 = vrot.slane %v5341, 1
        %v5343 = vadd.f32 %v5341, %v5342
        %v5344 = vrot.slane %v4531, 4
        %v5345 = vadd.f32 %v4531, %v5344
        %v5346 = vrot.slane %v5345, 2
        %v5347 = vadd.f32 %v5345, %v5346
        %v5348 = vrot.slane %v5347, 1
        %v5349 = vadd.f32 %v5347, %v5348
        %v5350 = vrot.slane %v4532, 4
        %v5351 = vadd.f32 %v4532, %v5350
        %v5352 = vrot.slane %v5351, 2
        %v5353 = vadd.f32 %v5351, %v5352
        %v5354 = vrot.slane %v5353, 1
        %v5355 = vadd.f32 %v5353, %v5354
        %v5356 = vrot.slane %v4533, 4
        %v5357 = vadd.f32 %v4533, %v5356
        %v5358 = vrot.slane %v5357, 2
        %v5359 = vadd.f32 %v5357, %v5358
        %v5360 = vrot.slane %v5359, 1
        %v5361 = vadd.f32 %v5359, %v5360
        %v5362 = vrot.slane %v4534, 4
        %v5363 = vadd.f32 %v4534, %v5362
        %v5364 = vrot.slane %v5363, 2
        %v5365 = vadd.f32 %v5363, %v5364
        %v5366 = vrot.slane %v5365, 1
        %v5367 = vadd.f32 %v5365, %v5366
        %v5368 = vrot.slane %v4535, 4
        %v5369 = vadd.f32 %v4535, %v5368
        %v5370 = vrot.slane %v5369, 2
        %v5371 = vadd.f32 %v5369, %v5370
        %v5372 = vrot.slane %v5371, 1
        %v5373 = vadd.f32 %v5371, %v5372
        %v5374 = vrot.slane %v4536, 4
        %v5375 = vadd.f32 %v4536, %v5374
        %v5376 = vrot.slane %v5375, 2
        %v5377 = vadd.f32 %v5375, %v5376
        %v5378 = vrot.slane %v5377, 1
        %v5379 = vadd.f32 %v5377, %v5378
        %v5380 = vrot.slane %v4537, 4
        %v5381 = vadd.f32 %v4537, %v5380
        %v5382 = vrot.slane %v5381, 2
        %v5383 = vadd.f32 %v5381, %v5382
        %v5384 = vrot.slane %v5383, 1
        %v5385 = vadd.f32 %v5383, %v5384
        %v5386 = vrot.slane %v4538, 4
        %v5387 = vadd.f32 %v4538, %v5386
        %v5388 = vrot.slane %v5387, 2
        %v5389 = vadd.f32 %v5387, %v5388
        %v5390 = vrot.slane %v5389, 1
        %v5391 = vadd.f32 %v5389, %v5390
        %v5392 = vrot.slane %v4539, 4
        %v5393 = vadd.f32 %v4539, %v5392
        %v5394 = vrot.slane %v5393, 2
        %v5395 = vadd.f32 %v5393, %v5394
        %v5396 = vrot.slane %v5395, 1
        %v5397 = vadd.f32 %v5395, %v5396
        %v5398 = vrot.slane %v4540, 4
        %v5399 = vadd.f32 %v4540, %v5398
        %v5400 = vrot.slane %v5399, 2
        %v5401 = vadd.f32 %v5399, %v5400
        %v5402 = vrot.slane %v5401, 1
        %v5403 = vadd.f32 %v5401, %v5402
        %v5404 = vrot.slane %v4541, 4
        %v5405 = vadd.f32 %v4541, %v5404
        %v5406 = vrot.slane %v5405, 2
        %v5407 = vadd.f32 %v5405, %v5406
        %v5408 = vrot.slane %v5407, 1
        %v5409 = vadd.f32 %v5407, %v5408
        %v5410 = vrot.slane %v4542, 4
        %v5411 = vadd.f32 %v4542, %v5410
        %v5412 = vrot.slane %v5411, 2
        %v5413 = vadd.f32 %v5411, %v5412
        %v5414 = vrot.slane %v5413, 1
        %v5415 = vadd.f32 %v5413, %v5414
        %v5416 = vrot.slane %v4543, 4
        %v5417 = vadd.f32 %v4543, %v5416
        %v5418 = vrot.slane %v5417, 2
        %v5419 = vadd.f32 %v5417, %v5418
        %v5420 = vrot.slane %v5419, 1
        %v5421 = vadd.f32 %v5419, %v5420
        %v5422 = vrot.slane %v4544, 4
        %v5423 = vadd.f32 %v4544, %v5422
        %v5424 = vrot.slane %v5423, 2
        %v5425 = vadd.f32 %v5423, %v5424
        %v5426 = vrot.slane %v5425, 1
        %v5427 = vadd.f32 %v5425, %v5426
        %v5428 = vrot.slane %v4545, 4
        %v5429 = vadd.f32 %v4545, %v5428
        %v5430 = vrot.slane %v5429, 2
        %v5431 = vadd.f32 %v5429, %v5430
        %v5432 = vrot.slane %v5431, 1
        %v5433 = vadd.f32 %v5431, %v5432
        %v5434 = vrot.slane %v4546, 4
        %v5435 = vadd.f32 %v4546, %v5434
        %v5436 = vrot.slane %v5435, 2
        %v5437 = vadd.f32 %v5435, %v5436
        %v5438 = vrot.slane %v5437, 1
        %v5439 = vadd.f32 %v5437, %v5438
        %v5440 = vrot.slane %v4547, 4
        %v5441 = vadd.f32 %v4547, %v5440
        %v5442 = vrot.slane %v5441, 2
        %v5443 = vadd.f32 %v5441, %v5442
        %v5444 = vrot.slane %v5443, 1
        %v5445 = vadd.f32 %v5443, %v5444
        %v5446 = vrot.slane %v4548, 4
        %v5447 = vadd.f32 %v4548, %v5446
        %v5448 = vrot.slane %v5447, 2
        %v5449 = vadd.f32 %v5447, %v5448
        %v5450 = vrot.slane %v5449, 1
        %v5451 = vadd.f32 %v5449, %v5450
        %v5452 = vrot.slane %v4549, 4
        %v5453 = vadd.f32 %v4549, %v5452
        %v5454 = vrot.slane %v5453, 2
        %v5455 = vadd.f32 %v5453, %v5454
        %v5456 = vrot.slane %v5455, 1
        %v5457 = vadd.f32 %v5455, %v5456
        %v5458 = vrot.slane %v4550, 4
        %v5459 = vadd.f32 %v4550, %v5458
        %v5460 = vrot.slane %v5459, 2
        %v5461 = vadd.f32 %v5459, %v5460
        %v5462 = vrot.slane %v5461, 1
        %v5463 = vadd.f32 %v5461, %v5462
        %v5464 = vrot.slane %v4551, 4
        %v5465 = vadd.f32 %v4551, %v5464
        %v5466 = vrot.slane %v5465, 2
        %v5467 = vadd.f32 %v5465, %v5466
        %v5468 = vrot.slane %v5467, 1
        %v5469 = vadd.f32 %v5467, %v5468
        %v5470 = vrot.slane %v4552, 4
        %v5471 = vadd.f32 %v4552, %v5470
        %v5472 = vrot.slane %v5471, 2
        %v5473 = vadd.f32 %v5471, %v5472
        %v5474 = vrot.slane %v5473, 1
        %v5475 = vadd.f32 %v5473, %v5474
        %v5476 = vrot.slane %v4553, 4
        %v5477 = vadd.f32 %v4553, %v5476
        %v5478 = vrot.slane %v5477, 2
        %v5479 = vadd.f32 %v5477, %v5478
        %v5480 = vrot.slane %v5479, 1
        %v5481 = vadd.f32 %v5479, %v5480
        %v5482 = vrot.slane %v4554, 4
        %v5483 = vadd.f32 %v4554, %v5482
        %v5484 = vrot.slane %v5483, 2
        %v5485 = vadd.f32 %v5483, %v5484
        %v5486 = vrot.slane %v5485, 1
        %v5487 = vadd.f32 %v5485, %v5486
        %v5488 = vrot.slane %v4555, 4
        %v5489 = vadd.f32 %v4555, %v5488
        %v5490 = vrot.slane %v5489, 2
        %v5491 = vadd.f32 %v5489, %v5490
        %v5492 = vrot.slane %v5491, 1
        %v5493 = vadd.f32 %v5491, %v5492
        %v5494 = vrot.slane %v4556, 4
        %v5495 = vadd.f32 %v4556, %v5494
        %v5496 = vrot.slane %v5495, 2
        %v5497 = vadd.f32 %v5495, %v5496
        %v5498 = vrot.slane %v5497, 1
        %v5499 = vadd.f32 %v5497, %v5498
        %v5500 = vrot.slane %v4557, 4
        %v5501 = vadd.f32 %v4557, %v5500
        %v5502 = vrot.slane %v5501, 2
        %v5503 = vadd.f32 %v5501, %v5502
        %v5504 = vrot.slane %v5503, 1
        %v5505 = vadd.f32 %v5503, %v5504
        %v5506 = vrot.slane %v4558, 4
        %v5507 = vadd.f32 %v4558, %v5506
        %v5508 = vrot.slane %v5507, 2
        %v5509 = vadd.f32 %v5507, %v5508
        %v5510 = vrot.slane %v5509, 1
        %v5511 = vadd.f32 %v5509, %v5510
        %v5512 = vrot.slane %v4559, 4
        %v5513 = vadd.f32 %v4559, %v5512
        %v5514 = vrot.slane %v5513, 2
        %v5515 = vadd.f32 %v5513, %v5514
        %v5516 = vrot.slane %v5515, 1
        %v5517 = vadd.f32 %v5515, %v5516
        %v5518 = vrot.slane %v4560, 4
        %v5519 = vadd.f32 %v4560, %v5518
        %v5520 = vrot.slane %v5519, 2
        %v5521 = vadd.f32 %v5519, %v5520
        %v5522 = vrot.slane %v5521, 1
        %v5523 = vadd.f32 %v5521, %v5522
        %v5524 = vrot.slane %v4561, 4
        %v5525 = vadd.f32 %v4561, %v5524
        %v5526 = vrot.slane %v5525, 2
        %v5527 = vadd.f32 %v5525, %v5526
        %v5528 = vrot.slane %v5527, 1
        %v5529 = vadd.f32 %v5527, %v5528
        %v5530 = vrot.slane %v4562, 4
        %v5531 = vadd.f32 %v4562, %v5530
        %v5532 = vrot.slane %v5531, 2
        %v5533 = vadd.f32 %v5531, %v5532
        %v5534 = vrot.slane %v5533, 1
        %v5535 = vadd.f32 %v5533, %v5534
        %v5536 = vrot.slane %v4563, 4
        %v5537 = vadd.f32 %v4563, %v5536
        %v5538 = vrot.slane %v5537, 2
        %v5539 = vadd.f32 %v5537, %v5538
        %v5540 = vrot.slane %v5539, 1
        %v5541 = vadd.f32 %v5539, %v5540
        %v5542 = vrot.slane %v4564, 4
        %v5543 = vadd.f32 %v4564, %v5542
        %v5544 = vrot.slane %v5543, 2
        %v5545 = vadd.f32 %v5543, %v5544
        %v5546 = vrot.slane %v5545, 1
        %v5547 = vadd.f32 %v5545, %v5546
        %v5548 = vrot.slane %v4565, 4
        %v5549 = vadd.f32 %v4565, %v5548
        %v5550 = vrot.slane %v5549, 2
        %v5551 = vadd.f32 %v5549, %v5550
        %v5552 = vrot.slane %v5551, 1
        %v5553 = vadd.f32 %v5551, %v5552
        %v5554 = vrot.slane %v4566, 4
        %v5555 = vadd.f32 %v4566, %v5554
        %v5556 = vrot.slane %v5555, 2
        %v5557 = vadd.f32 %v5555, %v5556
        %v5558 = vrot.slane %v5557, 1
        %v5559 = vadd.f32 %v5557, %v5558
        %v5560 = vrot.slane %v4567, 4
        %v5561 = vadd.f32 %v4567, %v5560
        %v5562 = vrot.slane %v5561, 2
        %v5563 = vadd.f32 %v5561, %v5562
        %v5564 = vrot.slane %v5563, 1
        %v5565 = vadd.f32 %v5563, %v5564
        %v5566 = vrot.slane %v4568, 4
        %v5567 = vadd.f32 %v4568, %v5566
        %v5568 = vrot.slane %v5567, 2
        %v5569 = vadd.f32 %v5567, %v5568
        %v5570 = vrot.slane %v5569, 1
        %v5571 = vadd.f32 %v5569, %v5570
        %v5572 = vrot.slane %v4569, 4
        %v5573 = vadd.f32 %v4569, %v5572
        %v5574 = vrot.slane %v5573, 2
        %v5575 = vadd.f32 %v5573, %v5574
        %v5576 = vrot.slane %v5575, 1
        %v5577 = vadd.f32 %v5575, %v5576
        %v5578 = vrot.slane %v4570, 4
        %v5579 = vadd.f32 %v4570, %v5578
        %v5580 = vrot.slane %v5579, 2
        %v5581 = vadd.f32 %v5579, %v5580
        %v5582 = vrot.slane %v5581, 1
        %v5583 = vadd.f32 %v5581, %v5582
        %v5584 = vrot.slane %v4571, 4
        %v5585 = vadd.f32 %v4571, %v5584
        %v5586 = vrot.slane %v5585, 2
        %v5587 = vadd.f32 %v5585, %v5586
        %v5588 = vrot.slane %v5587, 1
        %v5589 = vadd.f32 %v5587, %v5588
        %v5590 = vrot.slane %v4572, 4
        %v5591 = vadd.f32 %v4572, %v5590
        %v5592 = vrot.slane %v5591, 2
        %v5593 = vadd.f32 %v5591, %v5592
        %v5594 = vrot.slane %v5593, 1
        %v5595 = vadd.f32 %v5593, %v5594
        %v5596 = vrot.slane %v4573, 4
        %v5597 = vadd.f32 %v4573, %v5596
        %v5598 = vrot.slane %v5597, 2
        %v5599 = vadd.f32 %v5597, %v5598
        %v5600 = vrot.slane %v5599, 1
        %v5601 = vadd.f32 %v5599, %v5600
        %v5602 = vrot.slane %v4574, 4
        %v5603 = vadd.f32 %v4574, %v5602
        %v5604 = vrot.slane %v5603, 2
        %v5605 = vadd.f32 %v5603, %v5604
        %v5606 = vrot.slane %v5605, 1
        %v5607 = vadd.f32 %v5605, %v5606
        %v5608 = vrot.slane %v4575, 4
        %v5609 = vadd.f32 %v4575, %v5608
        %v5610 = vrot.slane %v5609, 2
        %v5611 = vadd.f32 %v5609, %v5610
        %v5612 = vrot.slane %v5611, 1
        %v5613 = vadd.f32 %v5611, %v5612
        %v5614 = vrot.slane %v4576, 4
        %v5615 = vadd.f32 %v4576, %v5614
        %v5616 = vrot.slane %v5615, 2
        %v5617 = vadd.f32 %v5615, %v5616
        %v5618 = vrot.slane %v5617, 1
        %v5619 = vadd.f32 %v5617, %v5618
        %v5620 = vrot.slane %v4577, 4
        %v5621 = vadd.f32 %v4577, %v5620
        %v5622 = vrot.slane %v5621, 2
        %v5623 = vadd.f32 %v5621, %v5622
        %v5624 = vrot.slane %v5623, 1
        %v5625 = vadd.f32 %v5623, %v5624
        %v5626 = vrot.slane %v4578, 4
        %v5627 = vadd.f32 %v4578, %v5626
        %v5628 = vrot.slane %v5627, 2
        %v5629 = vadd.f32 %v5627, %v5628
        %v5630 = vrot.slane %v5629, 1
        %v5631 = vadd.f32 %v5629, %v5630
        %v5632 = vrot.slane %v4579, 4
        %v5633 = vadd.f32 %v4579, %v5632
        %v5634 = vrot.slane %v5633, 2
        %v5635 = vadd.f32 %v5633, %v5634
        %v5636 = vrot.slane %v5635, 1
        %v5637 = vadd.f32 %v5635, %v5636
        %v5638 = vrot.slane %v4580, 4
        %v5639 = vadd.f32 %v4580, %v5638
        %v5640 = vrot.slane %v5639, 2
        %v5641 = vadd.f32 %v5639, %v5640
        %v5642 = vrot.slane %v5641, 1
        %v5643 = vadd.f32 %v5641, %v5642
        %v5644 = vrot.slane %v4581, 4
        %v5645 = vadd.f32 %v4581, %v5644
        %v5646 = vrot.slane %v5645, 2
        %v5647 = vadd.f32 %v5645, %v5646
        %v5648 = vrot.slane %v5647, 1
        %v5649 = vadd.f32 %v5647, %v5648
        %v5650 = vrot.slane %v4582, 4
        %v5651 = vadd.f32 %v4582, %v5650
        %v5652 = vrot.slane %v5651, 2
        %v5653 = vadd.f32 %v5651, %v5652
        %v5654 = vrot.slane %v5653, 1
        %v5655 = vadd.f32 %v5653, %v5654
        %v5656 = vrot.slane %v4583, 4
        %v5657 = vadd.f32 %v4583, %v5656
        %v5658 = vrot.slane %v5657, 2
        %v5659 = vadd.f32 %v5657, %v5658
        %v5660 = vrot.slane %v5659, 1
        %v5661 = vadd.f32 %v5659, %v5660
        %v5662 = vrot.slane %v4584, 4
        %v5663 = vadd.f32 %v4584, %v5662
        %v5664 = vrot.slane %v5663, 2
        %v5665 = vadd.f32 %v5663, %v5664
        %v5666 = vrot.slane %v5665, 1
        %v5667 = vadd.f32 %v5665, %v5666
        %v5668 = vrot.slane %v4585, 4
        %v5669 = vadd.f32 %v4585, %v5668
        %v5670 = vrot.slane %v5669, 2
        %v5671 = vadd.f32 %v5669, %v5670
        %v5672 = vrot.slane %v5671, 1
        %v5673 = vadd.f32 %v5671, %v5672
        %v5674 = vrot.slane %v4586, 4
        %v5675 = vadd.f32 %v4586, %v5674
        %v5676 = vrot.slane %v5675, 2
        %v5677 = vadd.f32 %v5675, %v5676
        %v5678 = vrot.slane %v5677, 1
        %v5679 = vadd.f32 %v5677, %v5678
        %v5680 = vrot.slane %v4587, 4
        %v5681 = vadd.f32 %v4587, %v5680
        %v5682 = vrot.slane %v5681, 2
        %v5683 = vadd.f32 %v5681, %v5682
        %v5684 = vrot.slane %v5683, 1
        %v5685 = vadd.f32 %v5683, %v5684
        %v5686 = vrot.slane %v4588, 4
        %v5687 = vadd.f32 %v4588, %v5686
        %v5688 = vrot.slane %v5687, 2
        %v5689 = vadd.f32 %v5687, %v5688
        %v5690 = vrot.slane %v5689, 1
        %v5691 = vadd.f32 %v5689, %v5690
        %v5692 = vrot.slane %v4589, 4
        %v5693 = vadd.f32 %v4589, %v5692
        %v5694 = vrot.slane %v5693, 2
        %v5695 = vadd.f32 %v5693, %v5694
        %v5696 = vrot.slane %v5695, 1
        %v5697 = vadd.f32 %v5695, %v5696
        %v5698 = vrot.slane %v4590, 4
        %v5699 = vadd.f32 %v4590, %v5698
        %v5700 = vrot.slane %v5699, 2
        %v5701 = vadd.f32 %v5699, %v5700
        %v5702 = vrot.slane %v5701, 1
        %v5703 = vadd.f32 %v5701, %v5702
        %v5704 = vrot.slane %v4591, 4
        %v5705 = vadd.f32 %v4591, %v5704
        %v5706 = vrot.slane %v5705, 2
        %v5707 = vadd.f32 %v5705, %v5706
        %v5708 = vrot.slane %v5707, 1
        %v5709 = vadd.f32 %v5707, %v5708
        %v5710 = vrot.slane %v4592, 4
        %v5711 = vadd.f32 %v4592, %v5710
        %v5712 = vrot.slane %v5711, 2
        %v5713 = vadd.f32 %v5711, %v5712
        %v5714 = vrot.slane %v5713, 1
        %v5715 = vadd.f32 %v5713, %v5714
        %v5716 = vrot.slane %v4593, 4
        %v5717 = vadd.f32 %v4593, %v5716
        %v5718 = vrot.slane %v5717, 2
        %v5719 = vadd.f32 %v5717, %v5718
        %v5720 = vrot.slane %v5719, 1
        %v5721 = vadd.f32 %v5719, %v5720
        %v5722 = vrot.slane %v4594, 4
        %v5723 = vadd.f32 %v4594, %v5722
        %v5724 = vrot.slane %v5723, 2
        %v5725 = vadd.f32 %v5723, %v5724
        %v5726 = vrot.slane %v5725, 1
        %v5727 = vadd.f32 %v5725, %v5726
        %v5728 = vrot.slane %v4595, 4
        %v5729 = vadd.f32 %v4595, %v5728
        %v5730 = vrot.slane %v5729, 2
        %v5731 = vadd.f32 %v5729, %v5730
        %v5732 = vrot.slane %v5731, 1
        %v5733 = vadd.f32 %v5731, %v5732
        %v5734 = vrot.slane %v4596, 4
        %v5735 = vadd.f32 %v4596, %v5734
        %v5736 = vrot.slane %v5735, 2
        %v5737 = vadd.f32 %v5735, %v5736
        %v5738 = vrot.slane %v5737, 1
        %v5739 = vadd.f32 %v5737, %v5738
        %v5740 = vrot.slane %v4597, 4
        %v5741 = vadd.f32 %v4597, %v5740
        %v5742 = vrot.slane %v5741, 2
        %v5743 = vadd.f32 %v5741, %v5742
        %v5744 = vrot.slane %v5743, 1
        %v5745 = vadd.f32 %v5743, %v5744
        %v5746 = vrot.slane %v4598, 4
        %v5747 = vadd.f32 %v4598, %v5746
        %v5748 = vrot.slane %v5747, 2
        %v5749 = vadd.f32 %v5747, %v5748
        %v5750 = vrot.slane %v5749, 1
        %v5751 = vadd.f32 %v5749, %v5750
        %v5752 = vrot.slane %v4599, 4
        %v5753 = vadd.f32 %v4599, %v5752
        %v5754 = vrot.slane %v5753, 2
        %v5755 = vadd.f32 %v5753, %v5754
        %v5756 = vrot.slane %v5755, 1
        %v5757 = vadd.f32 %v5755, %v5756
        %v5758 = vld [vmem:[#allocation8] sm:$0xff]
        %v5759 = vld [vmem:[#allocation8 + $0x8] sm:$0xff]
        %v5760 = vld [vmem:[#allocation8 + $0x10] sm:$0xff]
        %v5761 = vld [vmem:[#allocation8 + $0x18] sm:$0xff]
        %v5762 = vld [vmem:[#allocation8 + $0x20] sm:$0xff]
        %v5763 = vld [vmem:[#allocation8 + $0x28] sm:$0xff]
        %v5764 = vld [vmem:[#allocation8 + $0x30] sm:$0xff]
        %v5765 = vld [vmem:[#allocation8 + $0x38] sm:$0xff]
        %v5766 = vld [vmem:[#allocation8 + $0x40] sm:$0xff]
        %v5767 = vld [vmem:[#allocation8 + $0x48] sm:$0xff]
        %v5768 = vld [vmem:[#allocation8 + $0x50] sm:$0xff]
        %v5769 = vld [vmem:[#allocation8 + $0x58] sm:$0xff]
        %v5770 = vld [vmem:[#allocation8 + $0x60] sm:$0xff]
        %v5771 = vld [vmem:[#allocation8 + $0x68] sm:$0xff]
        %v5772 = vld [vmem:[#allocation8 + $0x70] sm:$0xff]
        %v5773 = vld [vmem:[#allocation8 + $0x78] sm:$0xff]
        %v5774 = vld [vmem:[#allocation8 + $0x80] sm:$0xff]
        %v5775 = vld [vmem:[#allocation8 + $0x88] sm:$0xff]
        %v5776 = vld [vmem:[#allocation8 + $0x90] sm:$0xff]
        %v5777 = vld [vmem:[#allocation8 + $0x98] sm:$0xff]
        %v5778 = vld [vmem:[#allocation8 + $0xa0] sm:$0xff]
        %v5779 = vld [vmem:[#allocation8 + $0xa8] sm:$0xff]
        %v5780 = vld [vmem:[#allocation8 + $0xb0] sm:$0xff]
        %v5781 = vld [vmem:[#allocation8 + $0xb8] sm:$0xff]
        %v5782 = vld [vmem:[#allocation8 + $0xc0] sm:$0xff]
        %v5783 = vld [vmem:[#allocation8 + $0xc8] sm:$0xff]
        %v5784 = vld [vmem:[#allocation8 + $0xd0] sm:$0xff]
        %v5785 = vld [vmem:[#allocation8 + $0xd8] sm:$0xff]
        %v5786 = vld [vmem:[#allocation8 + $0xe0] sm:$0xff]
        %v5787 = vld [vmem:[#allocation8 + $0xe8] sm:$0xff]
        %v5788 = vld [vmem:[#allocation8 + $0xf0] sm:$0xff]
        %v5789 = vld [vmem:[#allocation8 + $0xf8] sm:$0xff]
        %v5790 = vld [vmem:[#allocation8 + $0x100] sm:$0xff]
        %v5791 = vld [vmem:[#allocation8 + $0x108] sm:$0xff]
        %v5792 = vld [vmem:[#allocation8 + $0x110] sm:$0xff]
        %v5793 = vld [vmem:[#allocation8 + $0x118] sm:$0xff]
        %v5794 = vld [vmem:[#allocation8 + $0x120] sm:$0xff]
        %v5795 = vld [vmem:[#allocation8 + $0x128] sm:$0xff]
        %v5796 = vld [vmem:[#allocation8 + $0x130] sm:$0xff]
        %v5797 = vld [vmem:[#allocation8 + $0x138] sm:$0xff]
        %v5798 = vld [vmem:[#allocation8 + $0x140] sm:$0xff]
        %v5799 = vld [vmem:[#allocation8 + $0x148] sm:$0xff]
        %v5800 = vld [vmem:[#allocation8 + $0x150] sm:$0xff]
        %v5801 = vld [vmem:[#allocation8 + $0x158] sm:$0xff]
        %v5802 = vld [vmem:[#allocation8 + $0x160] sm:$0xff]
        %v5803 = vld [vmem:[#allocation8 + $0x168] sm:$0xff]
        %v5804 = vld [vmem:[#allocation8 + $0x170] sm:$0xff]
        %v5805 = vld [vmem:[#allocation8 + $0x178] sm:$0xff]
        %v5806 = vld [vmem:[%s6] sm:$0xff]
        %v5807 = vld [vmem:[%s6 + $0x8] sm:$0xff]
        %v5808 = vld [vmem:[%s6 + $0x10] sm:$0xff]
        %v5809 = vld [vmem:[%s6 + $0x18] sm:$0xff]
        %v5810 = vld [vmem:[%s6 + $0x20] sm:$0xff]
        %v5811 = vld [vmem:[%s6 + $0x28] sm:$0xff]
        %v5812 = vld [vmem:[%s6 + $0x30] sm:$0xff]
        %v5813 = vld [vmem:[%s6 + $0x38] sm:$0xff]
        %v5814 = vld [vmem:[%s6 + $0x40] sm:$0xff]
        %v5815 = vld [vmem:[%s6 + $0x48] sm:$0xff]
        %v5816 = vld [vmem:[%s6 + $0x50] sm:$0xff]
        %v5817 = vld [vmem:[%s6 + $0x58] sm:$0xff]
        %v5818 = vld [vmem:[%s6 + $0x60] sm:$0xff]
        %v5819 = vld [vmem:[%s6 + $0x68] sm:$0xff]
        %v5820 = vld [vmem:[%s6 + $0x70] sm:$0xff]
        %v5821 = vld [vmem:[%s6 + $0x78] sm:$0xff]
        %v5822 = vld [vmem:[%s6 + $0x80] sm:$0xff]
        %v5823 = vld [vmem:[%s6 + $0x88] sm:$0xff]
        %v5824 = vld [vmem:[%s6 + $0x90] sm:$0xff]
        %v5825 = vld [vmem:[%s6 + $0x98] sm:$0xff]
        %v5826 = vld [vmem:[%s6 + $0xa0] sm:$0xff]
        %v5827 = vld [vmem:[%s6 + $0xa8] sm:$0xff]
        %v5828 = vld [vmem:[%s6 + $0xb0] sm:$0xff]
        %v5829 = vld [vmem:[%s6 + $0xb8] sm:$0xff]
        %5831 = vset.pattern.permute.xlu0 0
        %5832 = vperm.xlu0 %5831, %v5806
        %v5833 = vpop.permute.xlu0 %5832
        %5836 = vset.pattern.permute.xlu0 0
        %5837 = vperm.xlu0 %5836, %v5807
        %v5838 = vpop.permute.xlu0 %5837
        %5841 = vset.pattern.permute.xlu0 0
        %5842 = vperm.xlu0 %5841, %v5808
        %v5843 = vpop.permute.xlu0 %5842
        %5846 = vset.pattern.permute.xlu0 0
        %5847 = vperm.xlu0 %5846, %v5809
        %v5848 = vpop.permute.xlu0 %5847
        %5851 = vset.pattern.permute.xlu0 0
        %5852 = vperm.xlu0 %5851, %v5810
        %v5853 = vpop.permute.xlu0 %5852
        %5856 = vset.pattern.permute.xlu0 0
        %5857 = vperm.xlu0 %5856, %v5811
        %v5858 = vpop.permute.xlu0 %5857
        %5861 = vset.pattern.permute.xlu0 0
        %5862 = vperm.xlu0 %5861, %v5812
        %v5863 = vpop.permute.xlu0 %5862
        %5866 = vset.pattern.permute.xlu0 0
        %5867 = vperm.xlu0 %5866, %v5813
        %v5868 = vpop.permute.xlu0 %5867
        %5871 = vset.pattern.permute.xlu0 0
        %5872 = vperm.xlu0 %5871, %v5814
        %v5873 = vpop.permute.xlu0 %5872
        %5876 = vset.pattern.permute.xlu0 0
        %5877 = vperm.xlu0 %5876, %v5815
        %v5878 = vpop.permute.xlu0 %5877
        %5881 = vset.pattern.permute.xlu0 0
        %5882 = vperm.xlu0 %5881, %v5816
        %v5883 = vpop.permute.xlu0 %5882
        %5886 = vset.pattern.permute.xlu0 0
        %5887 = vperm.xlu0 %5886, %v5817
        %v5888 = vpop.permute.xlu0 %5887
        %5891 = vset.pattern.permute.xlu0 0
        %5892 = vperm.xlu0 %5891, %v5818
        %v5893 = vpop.permute.xlu0 %5892
        %5896 = vset.pattern.permute.xlu0 0
        %5897 = vperm.xlu0 %5896, %v5819
        %v5898 = vpop.permute.xlu0 %5897
        %5901 = vset.pattern.permute.xlu0 0
        %5902 = vperm.xlu0 %5901, %v5820
        %v5903 = vpop.permute.xlu0 %5902
        %5906 = vset.pattern.permute.xlu0 0
        %5907 = vperm.xlu0 %5906, %v5821
        %v5908 = vpop.permute.xlu0 %5907
        %5911 = vset.pattern.permute.xlu0 0
        %5912 = vperm.xlu0 %5911, %v5822
        %v5913 = vpop.permute.xlu0 %5912
        %5916 = vset.pattern.permute.xlu0 0
        %5917 = vperm.xlu0 %5916, %v5823
        %v5918 = vpop.permute.xlu0 %5917
        %5921 = vset.pattern.permute.xlu0 0
        %5922 = vperm.xlu0 %5921, %v5824
        %v5923 = vpop.permute.xlu0 %5922
        %5926 = vset.pattern.permute.xlu0 0
        %5927 = vperm.xlu0 %5926, %v5825
        %v5928 = vpop.permute.xlu0 %5927
        %5931 = vset.pattern.permute.xlu0 0
        %5932 = vperm.xlu0 %5931, %v5826
        %v5933 = vpop.permute.xlu0 %5932
        %5936 = vset.pattern.permute.xlu0 0
        %5937 = vperm.xlu0 %5936, %v5827
        %v5938 = vpop.permute.xlu0 %5937
        %5941 = vset.pattern.permute.xlu0 0
        %5942 = vperm.xlu0 %5941, %v5828
        %v5943 = vpop.permute.xlu0 %5942
        %5946 = vset.pattern.permute.xlu0 0
        %5947 = vperm.xlu0 %5946, %v5829
        %v5948 = vpop.permute.xlu0 %5947
        %vm6143 = vcmask 1041409
        %v6144 = vsel %vm6143, %v4611, %v4605
        %vm6145 = vcmask 1042434
        %v6146 = vsel %vm6145, %v4617, %v6144
        %vm6147 = vcmask 1043459
        %v6148 = vsel %vm6147, %v4623, %v6146
        %vm6149 = vcmask 1044484
        %v6150 = vsel %vm6149, %v4629, %v6148
        %vm6151 = vcmask 1045509
        %v6152 = vsel %vm6151, %v4635, %v6150
        %vm6153 = vcmask 1046534
        %v6154 = vsel %vm6153, %v4641, %v6152
        %vm6155 = vcmask 1047559
        %v6156 = vsel %vm6155, %v4647, %v6154
        %v6157 = vsel %vm6143, %v4659, %v4653
        %v6158 = vsel %vm6145, %v4665, %v6157
        %v6159 = vsel %vm6147, %v4671, %v6158
        %v6160 = vsel %vm6149, %v4677, %v6159
        %v6161 = vsel %vm6151, %v4683, %v6160
        %v6162 = vsel %vm6153, %v4689, %v6161
        %v6163 = vsel %vm6155, %v4695, %v6162
        %v6164 = vsel %vm6143, %v4707, %v4701
        %v6165 = vsel %vm6145, %v4713, %v6164
        %v6166 = vsel %vm6147, %v4719, %v6165
        %v6167 = vsel %vm6149, %v4725, %v6166
        %v6168 = vsel %vm6151, %v4731, %v6167
        %v6169 = vsel %vm6153, %v4737, %v6168
        %v6170 = vsel %vm6155, %v4743, %v6169
        %v6171 = vsel %vm6143, %v4755, %v4749
        %v6172 = vsel %vm6145, %v4761, %v6171
        %v6173 = vsel %vm6147, %v4767, %v6172
        %v6174 = vsel %vm6149, %v4773, %v6173
        %v6175 = vsel %vm6151, %v4779, %v6174
        %v6176 = vsel %vm6153, %v4785, %v6175
        %v6177 = vsel %vm6155, %v4791, %v6176
        %v6178 = vsel %vm6143, %v4803, %v4797
        %v6179 = vsel %vm6145, %v4809, %v6178
        %v6180 = vsel %vm6147, %v4815, %v6179
        %v6181 = vsel %vm6149, %v4821, %v6180
        %v6182 = vsel %vm6151, %v4827, %v6181
        %v6183 = vsel %vm6153, %v4833, %v6182
        %v6184 = vsel %vm6155, %v4839, %v6183
        %v6185 = vsel %vm6143, %v4851, %v4845
        %v6186 = vsel %vm6145, %v4857, %v6185
        %v6187 = vsel %vm6147, %v4863, %v6186
        %v6188 = vsel %vm6149, %v4869, %v6187
        %v6189 = vsel %vm6151, %v4875, %v6188
        %v6190 = vsel %vm6153, %v4881, %v6189
        %v6191 = vsel %vm6155, %v4887, %v6190
        %v6192 = vsel %vm6143, %v4899, %v4893
        %v6193 = vsel %vm6145, %v4905, %v6192
        %v6194 = vsel %vm6147, %v4911, %v6193
        %v6195 = vsel %vm6149, %v4917, %v6194
        %v6196 = vsel %vm6151, %v4923, %v6195
        %v6197 = vsel %vm6153, %v4929, %v6196
        %v6198 = vsel %vm6155, %v4935, %v6197
        %v6199 = vsel %vm6143, %v4947, %v4941
        %v6200 = vsel %vm6145, %v4953, %v6199
        %v6201 = vsel %vm6147, %v4959, %v6200
        %v6202 = vsel %vm6149, %v4965, %v6201
        %v6203 = vsel %vm6151, %v4971, %v6202
        %v6204 = vsel %vm6153, %v4977, %v6203
        %v6205 = vsel %vm6155, %v4983, %v6204
        %v6206 = vsel %vm6143, %v4995, %v4989
        %v6207 = vsel %vm6145, %v5001, %v6206
        %v6208 = vsel %vm6147, %v5007, %v6207
        %v6209 = vsel %vm6149, %v5013, %v6208
        %v6210 = vsel %vm6151, %v5019, %v6209
        %v6211 = vsel %vm6153, %v5025, %v6210
        %v6212 = vsel %vm6155, %v5031, %v6211
        %v6213 = vsel %vm6143, %v5043, %v5037
        %v6214 = vsel %vm6145, %v5049, %v6213
        %v6215 = vsel %vm6147, %v5055, %v6214
        %v6216 = vsel %vm6149, %v5061, %v6215
        %v6217 = vsel %vm6151, %v5067, %v6216
        %v6218 = vsel %vm6153, %v5073, %v6217
        %v6219 = vsel %vm6155, %v5079, %v6218
        %v6220 = vsel %vm6143, %v5091, %v5085
        %v6221 = vsel %vm6145, %v5097, %v6220
        %v6222 = vsel %vm6147, %v5103, %v6221
        %v6223 = vsel %vm6149, %v5109, %v6222
        %v6224 = vsel %vm6151, %v5115, %v6223
        %v6225 = vsel %vm6153, %v5121, %v6224
        %v6226 = vsel %vm6155, %v5127, %v6225
        %v6227 = vsel %vm6143, %v5139, %v5133
        %v6228 = vsel %vm6145, %v5145, %v6227
        %v6229 = vsel %vm6147, %v5151, %v6228
        %v6230 = vsel %vm6149, %v5157, %v6229
        %v6231 = vsel %vm6151, %v5163, %v6230
        %v6232 = vsel %vm6153, %v5169, %v6231
        %v6233 = vsel %vm6155, %v5175, %v6232
        %v6234 = vsel %vm6143, %v5187, %v5181
        %v6235 = vsel %vm6145, %v5193, %v6234
        %v6236 = vsel %vm6147, %v5199, %v6235
        %v6237 = vsel %vm6149, %v5205, %v6236
        %v6238 = vsel %vm6151, %v5211, %v6237
        %v6239 = vsel %vm6153, %v5217, %v6238
        %v6240 = vsel %vm6155, %v5223, %v6239
        %v6241 = vsel %vm6143, %v5235, %v5229
        %v6242 = vsel %vm6145, %v5241, %v6241
        %v6243 = vsel %vm6147, %v5247, %v6242
        %v6244 = vsel %vm6149, %v5253, %v6243
        %v6245 = vsel %vm6151, %v5259, %v6244
        %v6246 = vsel %vm6153, %v5265, %v6245
        %v6247 = vsel %vm6155, %v5271, %v6246
        %v6248 = vsel %vm6143, %v5283, %v5277
        %v6249 = vsel %vm6145, %v5289, %v6248
        %v6250 = vsel %vm6147, %v5295, %v6249
        %v6251 = vsel %vm6149, %v5301, %v6250
        %v6252 = vsel %vm6151, %v5307, %v6251
        %v6253 = vsel %vm6153, %v5313, %v6252
        %v6254 = vsel %vm6155, %v5319, %v6253
        %v6255 = vsel %vm6143, %v5331, %v5325
        %v6256 = vsel %vm6145, %v5337, %v6255
        %v6257 = vsel %vm6147, %v5343, %v6256
        %v6258 = vsel %vm6149, %v5349, %v6257
        %v6259 = vsel %vm6151, %v5355, %v6258
        %v6260 = vsel %vm6153, %v5361, %v6259
        %v6261 = vsel %vm6155, %v5367, %v6260
        %v6262 = vsel %vm6143, %v5379, %v5373
        %v6263 = vsel %vm6145, %v5385, %v6262
        %v6264 = vsel %vm6147, %v5391, %v6263
        %v6265 = vsel %vm6149, %v5397, %v6264
        %v6266 = vsel %vm6151, %v5403, %v6265
        %v6267 = vsel %vm6153, %v5409, %v6266
        %v6268 = vsel %vm6155, %v5415, %v6267
        %v6269 = vsel %vm6143, %v5427, %v5421
        %v6270 = vsel %vm6145, %v5433, %v6269
        %v6271 = vsel %vm6147, %v5439, %v6270
        %v6272 = vsel %vm6149, %v5445, %v6271
        %v6273 = vsel %vm6151, %v5451, %v6272
        %v6274 = vsel %vm6153, %v5457, %v6273
        %v6275 = vsel %vm6155, %v5463, %v6274
        %v6276 = vsel %vm6143, %v5475, %v5469
        %v6277 = vsel %vm6145, %v5481, %v6276
        %v6278 = vsel %vm6147, %v5487, %v6277
        %v6279 = vsel %vm6149, %v5493, %v6278
        %v6280 = vsel %vm6151, %v5499, %v6279
        %v6281 = vsel %vm6153, %v5505, %v6280
        %v6282 = vsel %vm6155, %v5511, %v6281
        %v6283 = vsel %vm6143, %v5523, %v5517
        %v6284 = vsel %vm6145, %v5529, %v6283
        %v6285 = vsel %vm6147, %v5535, %v6284
        %v6286 = vsel %vm6149, %v5541, %v6285
        %v6287 = vsel %vm6151, %v5547, %v6286
        %v6288 = vsel %vm6153, %v5553, %v6287
        %v6289 = vsel %vm6155, %v5559, %v6288
        %v6290 = vsel %vm6143, %v5571, %v5565
        %v6291 = vsel %vm6145, %v5577, %v6290
        %v6292 = vsel %vm6147, %v5583, %v6291
        %v6293 = vsel %vm6149, %v5589, %v6292
        %v6294 = vsel %vm6151, %v5595, %v6293
        %v6295 = vsel %vm6153, %v5601, %v6294
        %v6296 = vsel %vm6155, %v5607, %v6295
        %v6297 = vsel %vm6143, %v5619, %v5613
        %v6298 = vsel %vm6145, %v5625, %v6297
        %v6299 = vsel %vm6147, %v5631, %v6298
        %v6300 = vsel %vm6149, %v5637, %v6299
        %v6301 = vsel %vm6151, %v5643, %v6300
        %v6302 = vsel %vm6153, %v5649, %v6301
        %v6303 = vsel %vm6155, %v5655, %v6302
        %v6304 = vsel %vm6143, %v5667, %v5661
        %v6305 = vsel %vm6145, %v5673, %v6304
        %v6306 = vsel %vm6147, %v5679, %v6305
        %v6307 = vsel %vm6149, %v5685, %v6306
        %v6308 = vsel %vm6151, %v5691, %v6307
        %v6309 = vsel %vm6153, %v5697, %v6308
        %v6310 = vsel %vm6155, %v5703, %v6309
        %v6311 = vsel %vm6143, %v5715, %v5709
        %v6312 = vsel %vm6145, %v5721, %v6311
        %v6313 = vsel %vm6147, %v5727, %v6312
        %v6314 = vsel %vm6149, %v5733, %v6313
        %v6315 = vsel %vm6151, %v5739, %v6314
        %v6316 = vsel %vm6153, %v5745, %v6315
        %v6317 = vsel %vm6155, %v5751, %v6316
        %vm6342 = vcmask 531456
        %v6344 = vsel %vm6342, %v5759, 0
        %v6347 = vsel %vm6342, %v5761, 0
        %v6350 = vsel %vm6342, %v5763, 0
        %v6353 = vsel %vm6342, %v5765, 0
        %v6356 = vsel %vm6342, %v5767, 0
        %v6359 = vsel %vm6342, %v5769, 0
        %v6362 = vsel %vm6342, %v5771, 0
        %v6365 = vsel %vm6342, %v5773, 0
        %v6368 = vsel %vm6342, %v5775, 0
        %v6371 = vsel %vm6342, %v5777, 0
        %v6374 = vsel %vm6342, %v5779, 0
        %v6377 = vsel %vm6342, %v5781, 0
        %v6380 = vsel %vm6342, %v5783, 0
        %v6383 = vsel %vm6342, %v5785, 0
        %v6386 = vsel %vm6342, %v5787, 0
        %v6389 = vsel %vm6342, %v5789, 0
        %v6392 = vsel %vm6342, %v5791, 0
        %v6395 = vsel %vm6342, %v5793, 0
        %v6398 = vsel %vm6342, %v5795, 0
        %v6401 = vsel %vm6342, %v5797, 0
        %v6404 = vsel %vm6342, %v5799, 0
        %v6407 = vsel %vm6342, %v5801, 0
        %v6410 = vsel %vm6342, %v5803, 0
        %v6413 = vsel %vm6342, %v5805, 0
        %vm6415 = vcmask 1040384
        %v6416 = vsel %vm6415, %v5757, 0
        %v6418 = vand.u32 %v6261, 4294901760
        %6419 = vmatpush.msra.mxu0 %v6418
        %v6420 = vand.u32 %v6254, 4294901760
        %6421 = vmatpush.msra.mxu0 %v6420
        %v6422 = vand.u32 %v6247, 4294901760
        %6423 = vmatpush.msra.mxu0 %v6422
        %v6424 = vand.u32 %v6240, 4294901760
        %6425 = vmatpush.msra.mxu0 %v6424
        %v6426 = vand.u32 %v6233, 4294901760
        %6427 = vmatpush.msra.mxu0 %v6426
        %v6428 = vand.u32 %v6226, 4294901760
        %6429 = vmatpush.msra.mxu0 %v6428
        %v6430 = vand.u32 %v6219, 4294901760
        %6431 = vmatpush.msra.mxu0 %v6430
        %v6432 = vand.u32 %v6212, 4294901760
        %6433 = vmatpush.msra.mxu0 %v6432
        %v6434 = vand.u32 %v6205, 4294901760
        %6435 = vmatpush.msra.mxu0 %v6434
        %v6436 = vand.u32 %v6198, 4294901760
        %6437 = vmatpush.msra.mxu0 %v6436
        %v6438 = vand.u32 %v6191, 4294901760
        %6439 = vmatpush.msra.mxu0 %v6438
        %v6440 = vand.u32 %v6184, 4294901760
        %6441 = vmatpush.msra.mxu0 %v6440
        %v6442 = vand.u32 %v6177, 4294901760
        %6443 = vmatpush.msra.mxu0 %v6442
        %v6444 = vand.u32 %v6170, 4294901760
        %6445 = vmatpush.msra.mxu0 %v6444
        %v6446 = vand.u32 %v6163, 4294901760
        %6447 = vmatpush.msra.mxu0 %v6446
        %v6448 = vand.u32 %v6156, 4294901760
        %6449 = vmatpush.msra.mxu0 %v6448
        %v6450 = vand.u32 %v5758, 4294901760
        %v6451 = vsub.f32 %v5758, %v6450
        %v6452 = vand.u32 %v6451, 4294901760
        %v6453 = vsub.f32 %v6451, %v6452
        %v6454 = vand.u32 %v6453, 4294901760
        %6455 = vmatmul.f32.gmra.mxu0 %v6454
        %v6456 = vpop.f32.mrf.mxu0
        %v6457 = vadd.f32 %v5833, %v6456
        %v6458 = vand.u32 %v5760, 4294901760
        %v6459 = vsub.f32 %v5760, %v6458
        %v6460 = vand.u32 %v6459, 4294901760
        %v6461 = vsub.f32 %v6459, %v6460
        %v6462 = vand.u32 %v6461, 4294901760
        %6463 = vmatmul.f32.gmra.mxu0 %v6462
        %v6464 = vpop.f32.mrf.mxu0
        %v6465 = vadd.f32 %v5838, %v6464
        %v6466 = vand.u32 %v5762, 4294901760
        %v6467 = vsub.f32 %v5762, %v6466
        %v6468 = vand.u32 %v6467, 4294901760
        %v6469 = vsub.f32 %v6467, %v6468
        %v6470 = vand.u32 %v6469, 4294901760
        %6471 = vmatmul.f32.gmra.mxu0 %v6470
        %v6472 = vpop.f32.mrf.mxu0
        %v6473 = vadd.f32 %v5843, %v6472
        %v6474 = vand.u32 %v5764, 4294901760
        %v6475 = vsub.f32 %v5764, %v6474
        %v6476 = vand.u32 %v6475, 4294901760
        %v6477 = vsub.f32 %v6475, %v6476
        %v6478 = vand.u32 %v6477, 4294901760
        %6479 = vmatmul.f32.gmra.mxu0 %v6478
        %v6480 = vpop.f32.mrf.mxu0
        %v6481 = vadd.f32 %v5848, %v6480
        %v6482 = vand.u32 %v5766, 4294901760
        %v6483 = vsub.f32 %v5766, %v6482
        %v6484 = vand.u32 %v6483, 4294901760
        %v6485 = vsub.f32 %v6483, %v6484
        %v6486 = vand.u32 %v6485, 4294901760
        %6487 = vmatmul.f32.gmra.mxu0 %v6486
        %v6488 = vpop.f32.mrf.mxu0
        %v6489 = vadd.f32 %v5853, %v6488
        %v6490 = vand.u32 %v5768, 4294901760
        %v6491 = vsub.f32 %v5768, %v6490
        %v6492 = vand.u32 %v6491, 4294901760
        %v6493 = vsub.f32 %v6491, %v6492
        %v6494 = vand.u32 %v6493, 4294901760
        %6495 = vmatmul.f32.gmra.mxu0 %v6494
        %v6496 = vpop.f32.mrf.mxu0
        %v6497 = vadd.f32 %v5858, %v6496
        %v6498 = vand.u32 %v5770, 4294901760
        %v6499 = vsub.f32 %v5770, %v6498
        %v6500 = vand.u32 %v6499, 4294901760
        %v6501 = vsub.f32 %v6499, %v6500
        %v6502 = vand.u32 %v6501, 4294901760
        %6503 = vmatmul.f32.gmra.mxu0 %v6502
        %v6504 = vpop.f32.mrf.mxu0
        %v6505 = vadd.f32 %v5863, %v6504
        %v6506 = vand.u32 %v5772, 4294901760
        %v6507 = vsub.f32 %v5772, %v6506
        %v6508 = vand.u32 %v6507, 4294901760
        %v6509 = vsub.f32 %v6507, %v6508
        %v6510 = vand.u32 %v6509, 4294901760
        %6511 = vmatmul.f32.gmra.mxu0 %v6510
        %v6512 = vpop.f32.mrf.mxu0
        %v6513 = vadd.f32 %v5868, %v6512
        %v6514 = vand.u32 %v5774, 4294901760
        %v6515 = vsub.f32 %v5774, %v6514
        %v6516 = vand.u32 %v6515, 4294901760
        %v6517 = vsub.f32 %v6515, %v6516
        %v6518 = vand.u32 %v6517, 4294901760
        %6519 = vmatmul.f32.gmra.mxu0 %v6518
        %v6520 = vpop.f32.mrf.mxu0
        %v6521 = vadd.f32 %v5873, %v6520
        %v6522 = vand.u32 %v5776, 4294901760
        %v6523 = vsub.f32 %v5776, %v6522
        %v6524 = vand.u32 %v6523, 4294901760
        %v6525 = vsub.f32 %v6523, %v6524
        %v6526 = vand.u32 %v6525, 4294901760
        %6527 = vmatmul.f32.gmra.mxu0 %v6526
        %v6528 = vpop.f32.mrf.mxu0
        %v6529 = vadd.f32 %v5878, %v6528
        %v6530 = vand.u32 %v5778, 4294901760
        %v6531 = vsub.f32 %v5778, %v6530
        %v6532 = vand.u32 %v6531, 4294901760
        %v6533 = vsub.f32 %v6531, %v6532
        %v6534 = vand.u32 %v6533, 4294901760
        %6535 = vmatmul.f32.gmra.mxu0 %v6534
        %v6536 = vpop.f32.mrf.mxu0
        %v6537 = vadd.f32 %v5883, %v6536
        %v6538 = vand.u32 %v5780, 4294901760
        %v6539 = vsub.f32 %v5780, %v6538
        %v6540 = vand.u32 %v6539, 4294901760
        %v6541 = vsub.f32 %v6539, %v6540
        %v6542 = vand.u32 %v6541, 4294901760
        %6543 = vmatmul.f32.gmra.mxu0 %v6542
        %v6544 = vpop.f32.mrf.mxu0
        %v6545 = vadd.f32 %v5888, %v6544
        %v6546 = vand.u32 %v5782, 4294901760
        %v6547 = vsub.f32 %v5782, %v6546
        %v6548 = vand.u32 %v6547, 4294901760
        %v6549 = vsub.f32 %v6547, %v6548
        %v6550 = vand.u32 %v6549, 4294901760
        %6551 = vmatmul.f32.gmra.mxu0 %v6550
        %v6552 = vpop.f32.mrf.mxu0
        %v6553 = vadd.f32 %v5893, %v6552
        %v6554 = vand.u32 %v5784, 4294901760
        %v6555 = vsub.f32 %v5784, %v6554
        %v6556 = vand.u32 %v6555, 4294901760
        %v6557 = vsub.f32 %v6555, %v6556
        %v6558 = vand.u32 %v6557, 4294901760
        %6559 = vmatmul.f32.gmra.mxu0 %v6558
        %v6560 = vpop.f32.mrf.mxu0
        %v6561 = vadd.f32 %v5898, %v6560
        %v6562 = vand.u32 %v5786, 4294901760
        %v6563 = vsub.f32 %v5786, %v6562
        %v6564 = vand.u32 %v6563, 4294901760
        %v6565 = vsub.f32 %v6563, %v6564
        %v6566 = vand.u32 %v6565, 4294901760
        %6567 = vmatmul.f32.gmra.mxu0 %v6566
        %v6568 = vpop.f32.mrf.mxu0
        %v6569 = vadd.f32 %v5903, %v6568
        %v6570 = vand.u32 %v5788, 4294901760
        %v6571 = vsub.f32 %v5788, %v6570
        %v6572 = vand.u32 %v6571, 4294901760
        %v6573 = vsub.f32 %v6571, %v6572
        %v6574 = vand.u32 %v6573, 4294901760
        %6575 = vmatmul.f32.gmra.mxu0 %v6574
        %v6576 = vpop.f32.mrf.mxu0
        %v6577 = vadd.f32 %v5908, %v6576
        %v6578 = vand.u32 %v5790, 4294901760
        %v6579 = vsub.f32 %v5790, %v6578
        %v6580 = vand.u32 %v6579, 4294901760
        %v6581 = vsub.f32 %v6579, %v6580
        %v6582 = vand.u32 %v6581, 4294901760
        %6583 = vmatmul.f32.gmra.mxu0 %v6582
        %v6584 = vpop.f32.mrf.mxu0
        %v6585 = vadd.f32 %v5913, %v6584
        %v6586 = vand.u32 %v5792, 4294901760
        %v6587 = vsub.f32 %v5792, %v6586
        %v6588 = vand.u32 %v6587, 4294901760
        %v6589 = vsub.f32 %v6587, %v6588
        %v6590 = vand.u32 %v6589, 4294901760
        %6591 = vmatmul.f32.gmra.mxu0 %v6590
        %v6592 = vpop.f32.mrf.mxu0
        %v6593 = vadd.f32 %v5918, %v6592
        %v6594 = vand.u32 %v5794, 4294901760
        %v6595 = vsub.f32 %v5794, %v6594
        %v6596 = vand.u32 %v6595, 4294901760
        %v6597 = vsub.f32 %v6595, %v6596
        %v6598 = vand.u32 %v6597, 4294901760
        %6599 = vmatmul.f32.gmra.mxu0 %v6598
        %v6600 = vpop.f32.mrf.mxu0
        %v6601 = vadd.f32 %v5923, %v6600
        %v6602 = vand.u32 %v5796, 4294901760
        %v6603 = vsub.f32 %v5796, %v6602
        %v6604 = vand.u32 %v6603, 4294901760
        %v6605 = vsub.f32 %v6603, %v6604
        %v6606 = vand.u32 %v6605, 4294901760
        %6607 = vmatmul.f32.gmra.mxu0 %v6606
        %v6608 = vpop.f32.mrf.mxu0
        %v6609 = vadd.f32 %v5928, %v6608
        %v6610 = vand.u32 %v5798, 4294901760
        %v6611 = vsub.f32 %v5798, %v6610
        %v6612 = vand.u32 %v6611, 4294901760
        %v6613 = vsub.f32 %v6611, %v6612
        %v6614 = vand.u32 %v6613, 4294901760
        %6615 = vmatmul.f32.gmra.mxu0 %v6614
        %v6616 = vpop.f32.mrf.mxu0
        %v6617 = vadd.f32 %v5933, %v6616
        %v6618 = vand.u32 %v5800, 4294901760
        %v6619 = vsub.f32 %v5800, %v6618
        %v6620 = vand.u32 %v6619, 4294901760
        %v6621 = vsub.f32 %v6619, %v6620
        %v6622 = vand.u32 %v6621, 4294901760
        %6623 = vmatmul.f32.gmra.mxu0 %v6622
        %v6624 = vpop.f32.mrf.mxu0
        %v6625 = vadd.f32 %v5938, %v6624
        %v6626 = vand.u32 %v5802, 4294901760
        %v6627 = vsub.f32 %v5802, %v6626
        %v6628 = vand.u32 %v6627, 4294901760
        %v6629 = vsub.f32 %v6627, %v6628
        %v6630 = vand.u32 %v6629, 4294901760
        %6631 = vmatmul.f32.gmra.mxu0 %v6630
        %v6632 = vpop.f32.mrf.mxu0
        %v6633 = vadd.f32 %v5943, %v6632
        %v6634 = vand.u32 %v5804, 4294901760
        %v6635 = vsub.f32 %v5804, %v6634
        %v6636 = vand.u32 %v6635, 4294901760
        %v6637 = vsub.f32 %v6635, %v6636
        %v6638 = vand.u32 %v6637, 4294901760
        %6639 = vmatmul.f32.gmra.mxu0 %v6638
        %v6640 = vpop.f32.mrf.mxu0
        %v6641 = vadd.f32 %v5948, %v6640
        %6642 = vdwg.mxu0
        %v6643 = vand.u32 %v6261, 4294901760
        %v6644 = vsub.f32 %v6261, %v6643
        %v6645 = vand.u32 %v6644, 4294901760
        %v6646 = vsub.f32 %v6644, %v6645
        %v6647 = vand.u32 %v6646, 4294901760
        %6648 = vmatpush.msra.mxu0 %v6647
        %v6649 = vand.u32 %v6254, 4294901760
        %v6650 = vsub.f32 %v6254, %v6649
        %v6651 = vand.u32 %v6650, 4294901760
        %v6652 = vsub.f32 %v6650, %v6651
        %v6653 = vand.u32 %v6652, 4294901760
        %6654 = vmatpush.msra.mxu0 %v6653
        %v6655 = vand.u32 %v6247, 4294901760
        %v6656 = vsub.f32 %v6247, %v6655
        %v6657 = vand.u32 %v6656, 4294901760
        %v6658 = vsub.f32 %v6656, %v6657
        %v6659 = vand.u32 %v6658, 4294901760
        %6660 = vmatpush.msra.mxu0 %v6659
        %v6661 = vand.u32 %v6240, 4294901760
        %v6662 = vsub.f32 %v6240, %v6661
        %v6663 = vand.u32 %v6662, 4294901760
        %v6664 = vsub.f32 %v6662, %v6663
        %v6665 = vand.u32 %v6664, 4294901760
        %6666 = vmatpush.msra.mxu0 %v6665
        %v6667 = vand.u32 %v6233, 4294901760
        %v6668 = vsub.f32 %v6233, %v6667
        %v6669 = vand.u32 %v6668, 4294901760
        %v6670 = vsub.f32 %v6668, %v6669
        %v6671 = vand.u32 %v6670, 4294901760
        %6672 = vmatpush.msra.mxu0 %v6671
        %v6673 = vand.u32 %v6226, 4294901760
        %v6674 = vsub.f32 %v6226, %v6673
        %v6675 = vand.u32 %v6674, 4294901760
        %v6676 = vsub.f32 %v6674, %v6675
        %v6677 = vand.u32 %v6676, 4294901760
        %6678 = vmatpush.msra.mxu0 %v6677
        %v6679 = vand.u32 %v6219, 4294901760
        %v6680 = vsub.f32 %v6219, %v6679
        %v6681 = vand.u32 %v6680, 4294901760
        %v6682 = vsub.f32 %v6680, %v6681
        %v6683 = vand.u32 %v6682, 4294901760
        %6684 = vmatpush.msra.mxu0 %v6683
        %v6685 = vand.u32 %v6212, 4294901760
        %v6686 = vsub.f32 %v6212, %v6685
        %v6687 = vand.u32 %v6686, 4294901760
        %v6688 = vsub.f32 %v6686, %v6687
        %v6689 = vand.u32 %v6688, 4294901760
        %6690 = vmatpush.msra.mxu0 %v6689
        %v6691 = vand.u32 %v6205, 4294901760
        %v6692 = vsub.f32 %v6205, %v6691
        %v6693 = vand.u32 %v6692, 4294901760
        %v6694 = vsub.f32 %v6692, %v6693
        %v6695 = vand.u32 %v6694, 4294901760
        %6696 = vmatpush.msra.mxu0 %v6695
        %v6697 = vand.u32 %v6198, 4294901760
        %v6698 = vsub.f32 %v6198, %v6697
        %v6699 = vand.u32 %v6698, 4294901760
        %v6700 = vsub.f32 %v6698, %v6699
        %v6701 = vand.u32 %v6700, 4294901760
        %6702 = vmatpush.msra.mxu0 %v6701
        %v6703 = vand.u32 %v6191, 4294901760
        %v6704 = vsub.f32 %v6191, %v6703
        %v6705 = vand.u32 %v6704, 4294901760
        %v6706 = vsub.f32 %v6704, %v6705
        %v6707 = vand.u32 %v6706, 4294901760
        %6708 = vmatpush.msra.mxu0 %v6707
        %v6709 = vand.u32 %v6184, 4294901760
        %v6710 = vsub.f32 %v6184, %v6709
        %v6711 = vand.u32 %v6710, 4294901760
        %v6712 = vsub.f32 %v6710, %v6711
        %v6713 = vand.u32 %v6712, 4294901760
        %6714 = vmatpush.msra.mxu0 %v6713
        %v6715 = vand.u32 %v6177, 4294901760
        %v6716 = vsub.f32 %v6177, %v6715
        %v6717 = vand.u32 %v6716, 4294901760
        %v6718 = vsub.f32 %v6716, %v6717
        %v6719 = vand.u32 %v6718, 4294901760
        %6720 = vmatpush.msra.mxu0 %v6719
        %v6721 = vand.u32 %v6170, 4294901760
        %v6722 = vsub.f32 %v6170, %v6721
        %v6723 = vand.u32 %v6722, 4294901760
        %v6724 = vsub.f32 %v6722, %v6723
        %v6725 = vand.u32 %v6724, 4294901760
        %6726 = vmatpush.msra.mxu0 %v6725
        %v6727 = vand.u32 %v6163, 4294901760
        %v6728 = vsub.f32 %v6163, %v6727
        %v6729 = vand.u32 %v6728, 4294901760
        %v6730 = vsub.f32 %v6728, %v6729
        %v6731 = vand.u32 %v6730, 4294901760
        %6732 = vmatpush.msra.mxu0 %v6731
        %v6733 = vand.u32 %v6156, 4294901760
        %v6734 = vsub.f32 %v6156, %v6733
        %v6735 = vand.u32 %v6734, 4294901760
        %v6736 = vsub.f32 %v6734, %v6735
        %v6737 = vand.u32 %v6736, 4294901760
        %6738 = vmatpush.msra.mxu0 %v6737
        %v6739 = vand.u32 %v5758, 4294901760
        %6740 = vmatmul.f32.gmra.mxu0 %v6739
        %v6741 = vpop.f32.mrf.mxu0
        %v6742 = vadd.f32 %v6457, %v6741
        %v6743 = vand.u32 %v5760, 4294901760
        %6744 = vmatmul.f32.gmra.mxu0 %v6743
        %v6745 = vpop.f32.mrf.mxu0
        %v6746 = vadd.f32 %v6465, %v6745
        %v6747 = vand.u32 %v5762, 4294901760
        %6748 = vmatmul.f32.gmra.mxu0 %v6747
        %v6749 = vpop.f32.mrf.mxu0
        %v6750 = vadd.f32 %v6473, %v6749
        %v6751 = vand.u32 %v5764, 4294901760
        %6752 = vmatmul.f32.gmra.mxu0 %v6751
        %v6753 = vpop.f32.mrf.mxu0
        %v6754 = vadd.f32 %v6481, %v6753
        %v6755 = vand.u32 %v5766, 4294901760
        %6756 = vmatmul.f32.gmra.mxu0 %v6755
        %v6757 = vpop.f32.mrf.mxu0
        %v6758 = vadd.f32 %v6489, %v6757
        %v6759 = vand.u32 %v5768, 4294901760
        %6760 = vmatmul.f32.gmra.mxu0 %v6759
        %v6761 = vpop.f32.mrf.mxu0
        %v6762 = vadd.f32 %v6497, %v6761
        %v6763 = vand.u32 %v5770, 4294901760
        %6764 = vmatmul.f32.gmra.mxu0 %v6763
        %v6765 = vpop.f32.mrf.mxu0
        %v6766 = vadd.f32 %v6505, %v6765
        %v6767 = vand.u32 %v5772, 4294901760
        %6768 = vmatmul.f32.gmra.mxu0 %v6767
        %v6769 = vpop.f32.mrf.mxu0
        %v6770 = vadd.f32 %v6513, %v6769
        %v6771 = vand.u32 %v5774, 4294901760
        %6772 = vmatmul.f32.gmra.mxu0 %v6771
        %v6773 = vpop.f32.mrf.mxu0
        %v6774 = vadd.f32 %v6521, %v6773
        %v6775 = vand.u32 %v5776, 4294901760
        %6776 = vmatmul.f32.gmra.mxu0 %v6775
        %v6777 = vpop.f32.mrf.mxu0
        %v6778 = vadd.f32 %v6529, %v6777
        %v6779 = vand.u32 %v5778, 4294901760
        %6780 = vmatmul.f32.gmra.mxu0 %v6779
        %v6781 = vpop.f32.mrf.mxu0
        %v6782 = vadd.f32 %v6537, %v6781
        %v6783 = vand.u32 %v5780, 4294901760
        %6784 = vmatmul.f32.gmra.mxu0 %v6783
        %v6785 = vpop.f32.mrf.mxu0
        %v6786 = vadd.f32 %v6545, %v6785
        %v6787 = vand.u32 %v5782, 4294901760
        %6788 = vmatmul.f32.gmra.mxu0 %v6787
        %v6789 = vpop.f32.mrf.mxu0
        %v6790 = vadd.f32 %v6553, %v6789
        %v6791 = vand.u32 %v5784, 4294901760
        %6792 = vmatmul.f32.gmra.mxu0 %v6791
        %v6793 = vpop.f32.mrf.mxu0
        %v6794 = vadd.f32 %v6561, %v6793
        %v6795 = vand.u32 %v5786, 4294901760
        %6796 = vmatmul.f32.gmra.mxu0 %v6795
        %v6797 = vpop.f32.mrf.mxu0
        %v6798 = vadd.f32 %v6569, %v6797
        %v6799 = vand.u32 %v5788, 4294901760
        %6800 = vmatmul.f32.gmra.mxu0 %v6799
        %v6801 = vpop.f32.mrf.mxu0
        %v6802 = vadd.f32 %v6577, %v6801
        %v6803 = vand.u32 %v5790, 4294901760
        %6804 = vmatmul.f32.gmra.mxu0 %v6803
        %v6805 = vpop.f32.mrf.mxu0
        %v6806 = vadd.f32 %v6585, %v6805
        %v6807 = vand.u32 %v5792, 4294901760
        %6808 = vmatmul.f32.gmra.mxu0 %v6807
        %v6809 = vpop.f32.mrf.mxu0
        %v6810 = vadd.f32 %v6593, %v6809
        %v6811 = vand.u32 %v5794, 4294901760
        %6812 = vmatmul.f32.gmra.mxu0 %v6811
        %v6813 = vpop.f32.mrf.mxu0
        %v6814 = vadd.f32 %v6601, %v6813
        %v6815 = vand.u32 %v5796, 4294901760
        %6816 = vmatmul.f32.gmra.mxu0 %v6815
        %v6817 = vpop.f32.mrf.mxu0
        %v6818 = vadd.f32 %v6609, %v6817
        %v6819 = vand.u32 %v5798, 4294901760
        %6820 = vmatmul.f32.gmra.mxu0 %v6819
        %v6821 = vpop.f32.mrf.mxu0
        %v6822 = vadd.f32 %v6617, %v6821
        %v6823 = vand.u32 %v5800, 4294901760
        %6824 = vmatmul.f32.gmra.mxu0 %v6823
        %v6825 = vpop.f32.mrf.mxu0
        %v6826 = vadd.f32 %v6625, %v6825
        %v6827 = vand.u32 %v5802, 4294901760
        %6828 = vmatmul.f32.gmra.mxu0 %v6827
        %v6829 = vpop.f32.mrf.mxu0
        %v6830 = vadd.f32 %v6633, %v6829
        %v6831 = vand.u32 %v5804, 4294901760
        %6832 = vmatmul.f32.gmra.mxu0 %v6831
        %v6833 = vpop.f32.mrf.mxu0
        %v6834 = vadd.f32 %v6641, %v6833
        %6835 = vdwg.mxu0
        %v6836 = vand.u32 %v6261, 4294901760
        %v6837 = vsub.f32 %v6261, %v6836
        %6838 = vmatpush.msra.mxu0 %v6837
        %v6839 = vand.u32 %v6254, 4294901760
        %v6840 = vsub.f32 %v6254, %v6839
        %6841 = vmatpush.msra.mxu0 %v6840
        %v6842 = vand.u32 %v6247, 4294901760
        %v6843 = vsub.f32 %v6247, %v6842
        %6844 = vmatpush.msra.mxu0 %v6843
        %v6845 = vand.u32 %v6240, 4294901760
        %v6846 = vsub.f32 %v6240, %v6845
        %6847 = vmatpush.msra.mxu0 %v6846
        %v6848 = vand.u32 %v6233, 4294901760
        %v6849 = vsub.f32 %v6233, %v6848
        %6850 = vmatpush.msra.mxu0 %v6849
        %v6851 = vand.u32 %v6226, 4294901760
        %v6852 = vsub.f32 %v6226, %v6851
        %6853 = vmatpush.msra.mxu0 %v6852
        %v6854 = vand.u32 %v6219, 4294901760
        %v6855 = vsub.f32 %v6219, %v6854
        %6856 = vmatpush.msra.mxu0 %v6855
        %v6857 = vand.u32 %v6212, 4294901760
        %v6858 = vsub.f32 %v6212, %v6857
        %6859 = vmatpush.msra.mxu0 %v6858
        %v6860 = vand.u32 %v6205, 4294901760
        %v6861 = vsub.f32 %v6205, %v6860
        %6862 = vmatpush.msra.mxu0 %v6861
        %v6863 = vand.u32 %v6198, 4294901760
        %v6864 = vsub.f32 %v6198, %v6863
        %6865 = vmatpush.msra.mxu0 %v6864
        %v6866 = vand.u32 %v6191, 4294901760
        %v6867 = vsub.f32 %v6191, %v6866
        %6868 = vmatpush.msra.mxu0 %v6867
        %v6869 = vand.u32 %v6184, 4294901760
        %v6870 = vsub.f32 %v6184, %v6869
        %6871 = vmatpush.msra.mxu0 %v6870
        %v6872 = vand.u32 %v6177, 4294901760
        %v6873 = vsub.f32 %v6177, %v6872
        %6874 = vmatpush.msra.mxu0 %v6873
        %v6875 = vand.u32 %v6170, 4294901760
        %v6876 = vsub.f32 %v6170, %v6875
        %6877 = vmatpush.msra.mxu0 %v6876
        %v6878 = vand.u32 %v6163, 4294901760
        %v6879 = vsub.f32 %v6163, %v6878
        %6880 = vmatpush.msra.mxu0 %v6879
        %v6881 = vand.u32 %v6156, 4294901760
        %v6882 = vsub.f32 %v6156, %v6881
        %6883 = vmatpush.msra.mxu0 %v6882
        %v6884 = vand.u32 %v5758, 4294901760
        %v6885 = vsub.f32 %v5758, %v6884
        %6886 = vmatmul.f32.gmra.mxu0 %v6885
        %v6887 = vpop.f32.mrf.mxu0
        %v6888 = vadd.f32 %v6742, %v6887
        %v6889 = vand.u32 %v5760, 4294901760
        %v6890 = vsub.f32 %v5760, %v6889
        %6891 = vmatmul.f32.gmra.mxu0 %v6890
        %v6892 = vpop.f32.mrf.mxu0
        %v6893 = vadd.f32 %v6746, %v6892
        %v6894 = vand.u32 %v5762, 4294901760
        %v6895 = vsub.f32 %v5762, %v6894
        %6896 = vmatmul.f32.gmra.mxu0 %v6895
        %v6897 = vpop.f32.mrf.mxu0
        %v6898 = vadd.f32 %v6750, %v6897
        %v6899 = vand.u32 %v5764, 4294901760
        %v6900 = vsub.f32 %v5764, %v6899
        %6901 = vmatmul.f32.gmra.mxu0 %v6900
        %v6902 = vpop.f32.mrf.mxu0
        %v6903 = vadd.f32 %v6754, %v6902
        %v6904 = vand.u32 %v5766, 4294901760
        %v6905 = vsub.f32 %v5766, %v6904
        %6906 = vmatmul.f32.gmra.mxu0 %v6905
        %v6907 = vpop.f32.mrf.mxu0
        %v6908 = vadd.f32 %v6758, %v6907
        %v6909 = vand.u32 %v5768, 4294901760
        %v6910 = vsub.f32 %v5768, %v6909
        %6911 = vmatmul.f32.gmra.mxu0 %v6910
        %v6912 = vpop.f32.mrf.mxu0
        %v6913 = vadd.f32 %v6762, %v6912
        %v6914 = vand.u32 %v5770, 4294901760
        %v6915 = vsub.f32 %v5770, %v6914
        %6916 = vmatmul.f32.gmra.mxu0 %v6915
        %v6917 = vpop.f32.mrf.mxu0
        %v6918 = vadd.f32 %v6766, %v6917
        %v6919 = vand.u32 %v5772, 4294901760
        %v6920 = vsub.f32 %v5772, %v6919
        %6921 = vmatmul.f32.gmra.mxu0 %v6920
        %v6922 = vpop.f32.mrf.mxu0
        %v6923 = vadd.f32 %v6770, %v6922
        %v6924 = vand.u32 %v5774, 4294901760
        %v6925 = vsub.f32 %v5774, %v6924
        %6926 = vmatmul.f32.gmra.mxu0 %v6925
        %v6927 = vpop.f32.mrf.mxu0
        %v6928 = vadd.f32 %v6774, %v6927
        %v6929 = vand.u32 %v5776, 4294901760
        %v6930 = vsub.f32 %v5776, %v6929
        %6931 = vmatmul.f32.gmra.mxu0 %v6930
        %v6932 = vpop.f32.mrf.mxu0
        %v6933 = vadd.f32 %v6778, %v6932
        %v6934 = vand.u32 %v5778, 4294901760
        %v6935 = vsub.f32 %v5778, %v6934
        %6936 = vmatmul.f32.gmra.mxu0 %v6935
        %v6937 = vpop.f32.mrf.mxu0
        %v6938 = vadd.f32 %v6782, %v6937
        %v6939 = vand.u32 %v5780, 4294901760
        %v6940 = vsub.f32 %v5780, %v6939
        %6941 = vmatmul.f32.gmra.mxu0 %v6940
        %v6942 = vpop.f32.mrf.mxu0
        %v6943 = vadd.f32 %v6786, %v6942
        %v6944 = vand.u32 %v5782, 4294901760
        %v6945 = vsub.f32 %v5782, %v6944
        %6946 = vmatmul.f32.gmra.mxu0 %v6945
        %v6947 = vpop.f32.mrf.mxu0
        %v6948 = vadd.f32 %v6790, %v6947
        %v6949 = vand.u32 %v5784, 4294901760
        %v6950 = vsub.f32 %v5784, %v6949
        %6951 = vmatmul.f32.gmra.mxu0 %v6950
        %v6952 = vpop.f32.mrf.mxu0
        %v6953 = vadd.f32 %v6794, %v6952
        %v6954 = vand.u32 %v5786, 4294901760
        %v6955 = vsub.f32 %v5786, %v6954
        %6956 = vmatmul.f32.gmra.mxu0 %v6955
        %v6957 = vpop.f32.mrf.mxu0
        %v6958 = vadd.f32 %v6798, %v6957
        %v6959 = vand.u32 %v5788, 4294901760
        %v6960 = vsub.f32 %v5788, %v6959
        %6961 = vmatmul.f32.gmra.mxu0 %v6960
        %v6962 = vpop.f32.mrf.mxu0
        %v6963 = vadd.f32 %v6802, %v6962
        %v6964 = vand.u32 %v5790, 4294901760
        %v6965 = vsub.f32 %v5790, %v6964
        %6966 = vmatmul.f32.gmra.mxu0 %v6965
        %v6967 = vpop.f32.mrf.mxu0
        %v6968 = vadd.f32 %v6806, %v6967
        %v6969 = vand.u32 %v5792, 4294901760
        %v6970 = vsub.f32 %v5792, %v6969
        %6971 = vmatmul.f32.gmra.mxu0 %v6970
        %v6972 = vpop.f32.mrf.mxu0
        %v6973 = vadd.f32 %v6810, %v6972
        %v6974 = vand.u32 %v5794, 4294901760
        %v6975 = vsub.f32 %v5794, %v6974
        %6976 = vmatmul.f32.gmra.mxu0 %v6975
        %v6977 = vpop.f32.mrf.mxu0
        %v6978 = vadd.f32 %v6814, %v6977
        %v6979 = vand.u32 %v5796, 4294901760
        %v6980 = vsub.f32 %v5796, %v6979
        %6981 = vmatmul.f32.gmra.mxu0 %v6980
        %v6982 = vpop.f32.mrf.mxu0
        %v6983 = vadd.f32 %v6818, %v6982
        %v6984 = vand.u32 %v5798, 4294901760
        %v6985 = vsub.f32 %v5798, %v6984
        %6986 = vmatmul.f32.gmra.mxu0 %v6985
        %v6987 = vpop.f32.mrf.mxu0
        %v6988 = vadd.f32 %v6822, %v6987
        %v6989 = vand.u32 %v5800, 4294901760
        %v6990 = vsub.f32 %v5800, %v6989
        %6991 = vmatmul.f32.gmra.mxu0 %v6990
        %v6992 = vpop.f32.mrf.mxu0
        %v6993 = vadd.f32 %v6826, %v6992
        %v6994 = vand.u32 %v5802, 4294901760
        %v6995 = vsub.f32 %v5802, %v6994
        %6996 = vmatmul.f32.gmra.mxu0 %v6995
        %v6997 = vpop.f32.mrf.mxu0
        %v6998 = vadd.f32 %v6830, %v6997
        %v6999 = vand.u32 %v5804, 4294901760
        %v7000 = vsub.f32 %v5804, %v6999
        %7001 = vmatmul.f32.gmra.mxu0 %v7000
        %v7002 = vpop.f32.mrf.mxu0
        %v7003 = vadd.f32 %v6834, %v7002
        %7004 = vdwg.mxu0
        %v7005 = vand.u32 %v6261, 4294901760
        %7006 = vmatpush.msra.mxu0 %v7005
        %v7007 = vand.u32 %v6254, 4294901760
        %7008 = vmatpush.msra.mxu0 %v7007
        %v7009 = vand.u32 %v6247, 4294901760
        %7010 = vmatpush.msra.mxu0 %v7009
        %v7011 = vand.u32 %v6240, 4294901760
        %7012 = vmatpush.msra.mxu0 %v7011
        %v7013 = vand.u32 %v6233, 4294901760
        %7014 = vmatpush.msra.mxu0 %v7013
        %v7015 = vand.u32 %v6226, 4294901760
        %7016 = vmatpush.msra.mxu0 %v7015
        %v7017 = vand.u32 %v6219, 4294901760
        %7018 = vmatpush.msra.mxu0 %v7017
        %v7019 = vand.u32 %v6212, 4294901760
        %7020 = vmatpush.msra.mxu0 %v7019
        %v7021 = vand.u32 %v6205, 4294901760
        %7022 = vmatpush.msra.mxu0 %v7021
        %v7023 = vand.u32 %v6198, 4294901760
        %7024 = vmatpush.msra.mxu0 %v7023
        %v7025 = vand.u32 %v6191, 4294901760
        %7026 = vmatpush.msra.mxu0 %v7025
        %v7027 = vand.u32 %v6184, 4294901760
        %7028 = vmatpush.msra.mxu0 %v7027
        %v7029 = vand.u32 %v6177, 4294901760
        %7030 = vmatpush.msra.mxu0 %v7029
        %v7031 = vand.u32 %v6170, 4294901760
        %7032 = vmatpush.msra.mxu0 %v7031
        %v7033 = vand.u32 %v6163, 4294901760
        %7034 = vmatpush.msra.mxu0 %v7033
        %v7035 = vand.u32 %v6156, 4294901760
        %7036 = vmatpush.msra.mxu0 %v7035
        %v7037 = vand.u32 %v5758, 4294901760
        %v7038 = vsub.f32 %v5758, %v7037
        %v7039 = vand.u32 %v7038, 4294901760
        %7040 = vmatmul.f32.gmra.mxu0 %v7039
        %v7041 = vpop.f32.mrf.mxu0
        %v7042 = vadd.f32 %v6888, %v7041
        %v7043 = vand.u32 %v5760, 4294901760
        %v7044 = vsub.f32 %v5760, %v7043
        %v7045 = vand.u32 %v7044, 4294901760
        %7046 = vmatmul.f32.gmra.mxu0 %v7045
        %v7047 = vpop.f32.mrf.mxu0
        %v7048 = vadd.f32 %v6893, %v7047
        %v7049 = vand.u32 %v5762, 4294901760
        %v7050 = vsub.f32 %v5762, %v7049
        %v7051 = vand.u32 %v7050, 4294901760
        %7052 = vmatmul.f32.gmra.mxu0 %v7051
        %v7053 = vpop.f32.mrf.mxu0
        %v7054 = vadd.f32 %v6898, %v7053
        %v7055 = vand.u32 %v5764, 4294901760
        %v7056 = vsub.f32 %v5764, %v7055
        %v7057 = vand.u32 %v7056, 4294901760
        %7058 = vmatmul.f32.gmra.mxu0 %v7057
        %v7059 = vpop.f32.mrf.mxu0
        %v7060 = vadd.f32 %v6903, %v7059
        %v7061 = vand.u32 %v5766, 4294901760
        %v7062 = vsub.f32 %v5766, %v7061
        %v7063 = vand.u32 %v7062, 4294901760
        %7064 = vmatmul.f32.gmra.mxu0 %v7063
        %v7065 = vpop.f32.mrf.mxu0
        %v7066 = vadd.f32 %v6908, %v7065
        %v7067 = vand.u32 %v5768, 4294901760
        %v7068 = vsub.f32 %v5768, %v7067
        %v7069 = vand.u32 %v7068, 4294901760
        %7070 = vmatmul.f32.gmra.mxu0 %v7069
        %v7071 = vpop.f32.mrf.mxu0
        %v7072 = vadd.f32 %v6913, %v7071
        %v7073 = vand.u32 %v5770, 4294901760
        %v7074 = vsub.f32 %v5770, %v7073
        %v7075 = vand.u32 %v7074, 4294901760
        %7076 = vmatmul.f32.gmra.mxu0 %v7075
        %v7077 = vpop.f32.mrf.mxu0
        %v7078 = vadd.f32 %v6918, %v7077
        %v7079 = vand.u32 %v5772, 4294901760
        %v7080 = vsub.f32 %v5772, %v7079
        %v7081 = vand.u32 %v7080, 4294901760
        %7082 = vmatmul.f32.gmra.mxu0 %v7081
        %v7083 = vpop.f32.mrf.mxu0
        %v7084 = vadd.f32 %v6923, %v7083
        %v7085 = vand.u32 %v5774, 4294901760
        %v7086 = vsub.f32 %v5774, %v7085
        %v7087 = vand.u32 %v7086, 4294901760
        %7088 = vmatmul.f32.gmra.mxu0 %v7087
        %v7089 = vpop.f32.mrf.mxu0
        %v7090 = vadd.f32 %v6928, %v7089
        %v7091 = vand.u32 %v5776, 4294901760
        %v7092 = vsub.f32 %v5776, %v7091
        %v7093 = vand.u32 %v7092, 4294901760
        %7094 = vmatmul.f32.gmra.mxu0 %v7093
        %v7095 = vpop.f32.mrf.mxu0
        %v7096 = vadd.f32 %v6933, %v7095
        %v7097 = vand.u32 %v5778, 4294901760
        %v7098 = vsub.f32 %v5778, %v7097
        %v7099 = vand.u32 %v7098, 4294901760
        %7100 = vmatmul.f32.gmra.mxu0 %v7099
        %v7101 = vpop.f32.mrf.mxu0
        %v7102 = vadd.f32 %v6938, %v7101
        %v7103 = vand.u32 %v5780, 4294901760
        %v7104 = vsub.f32 %v5780, %v7103
        %v7105 = vand.u32 %v7104, 4294901760
        %7106 = vmatmul.f32.gmra.mxu0 %v7105
        %v7107 = vpop.f32.mrf.mxu0
        %v7108 = vadd.f32 %v6943, %v7107
        %v7109 = vand.u32 %v5782, 4294901760
        %v7110 = vsub.f32 %v5782, %v7109
        %v7111 = vand.u32 %v7110, 4294901760
        %7112 = vmatmul.f32.gmra.mxu0 %v7111
        %v7113 = vpop.f32.mrf.mxu0
        %v7114 = vadd.f32 %v6948, %v7113
        %v7115 = vand.u32 %v5784, 4294901760
        %v7116 = vsub.f32 %v5784, %v7115
        %v7117 = vand.u32 %v7116, 4294901760
        %7118 = vmatmul.f32.gmra.mxu0 %v7117
        %v7119 = vpop.f32.mrf.mxu0
        %v7120 = vadd.f32 %v6953, %v7119
        %v7121 = vand.u32 %v5786, 4294901760
        %v7122 = vsub.f32 %v5786, %v7121
        %v7123 = vand.u32 %v7122, 4294901760
        %7124 = vmatmul.f32.gmra.mxu0 %v7123
        %v7125 = vpop.f32.mrf.mxu0
        %v7126 = vadd.f32 %v6958, %v7125
        %v7127 = vand.u32 %v5788, 4294901760
        %v7128 = vsub.f32 %v5788, %v7127
        %v7129 = vand.u32 %v7128, 4294901760
        %7130 = vmatmul.f32.gmra.mxu0 %v7129
        %v7131 = vpop.f32.mrf.mxu0
        %v7132 = vadd.f32 %v6963, %v7131
        %v7133 = vand.u32 %v5790, 4294901760
        %v7134 = vsub.f32 %v5790, %v7133
        %v7135 = vand.u32 %v7134, 4294901760
        %7136 = vmatmul.f32.gmra.mxu0 %v7135
        %v7137 = vpop.f32.mrf.mxu0
        %v7138 = vadd.f32 %v6968, %v7137
        %v7139 = vand.u32 %v5792, 4294901760
        %v7140 = vsub.f32 %v5792, %v7139
        %v7141 = vand.u32 %v7140, 4294901760
        %7142 = vmatmul.f32.gmra.mxu0 %v7141
        %v7143 = vpop.f32.mrf.mxu0
        %v7144 = vadd.f32 %v6973, %v7143
        %v7145 = vand.u32 %v5794, 4294901760
        %v7146 = vsub.f32 %v5794, %v7145
        %v7147 = vand.u32 %v7146, 4294901760
        %7148 = vmatmul.f32.gmra.mxu0 %v7147
        %v7149 = vpop.f32.mrf.mxu0
        %v7150 = vadd.f32 %v6978, %v7149
        %v7151 = vand.u32 %v5796, 4294901760
        %v7152 = vsub.f32 %v5796, %v7151
        %v7153 = vand.u32 %v7152, 4294901760
        %7154 = vmatmul.f32.gmra.mxu0 %v7153
        %v7155 = vpop.f32.mrf.mxu0
        %v7156 = vadd.f32 %v6983, %v7155
        %v7157 = vand.u32 %v5798, 4294901760
        %v7158 = vsub.f32 %v5798, %v7157
        %v7159 = vand.u32 %v7158, 4294901760
        %7160 = vmatmul.f32.gmra.mxu0 %v7159
        %v7161 = vpop.f32.mrf.mxu0
        %v7162 = vadd.f32 %v6988, %v7161
        %v7163 = vand.u32 %v5800, 4294901760
        %v7164 = vsub.f32 %v5800, %v7163
        %v7165 = vand.u32 %v7164, 4294901760
        %7166 = vmatmul.f32.gmra.mxu0 %v7165
        %v7167 = vpop.f32.mrf.mxu0
        %v7168 = vadd.f32 %v6993, %v7167
        %v7169 = vand.u32 %v5802, 4294901760
        %v7170 = vsub.f32 %v5802, %v7169
        %v7171 = vand.u32 %v7170, 4294901760
        %7172 = vmatmul.f32.gmra.mxu0 %v7171
        %v7173 = vpop.f32.mrf.mxu0
        %v7174 = vadd.f32 %v6998, %v7173
        %v7175 = vand.u32 %v5804, 4294901760
        %v7176 = vsub.f32 %v5804, %v7175
        %v7177 = vand.u32 %v7176, 4294901760
        %7178 = vmatmul.f32.gmra.mxu0 %v7177
        %v7179 = vpop.f32.mrf.mxu0
        %v7180 = vadd.f32 %v7003, %v7179
        %7181 = vdwg.mxu0
        %v7182 = vand.u32 %v6261, 4294901760
        %v7183 = vsub.f32 %v6261, %v7182
        %v7184 = vand.u32 %v7183, 4294901760
        %7185 = vmatpush.msra.mxu0 %v7184
        %v7186 = vand.u32 %v6254, 4294901760
        %v7187 = vsub.f32 %v6254, %v7186
        %v7188 = vand.u32 %v7187, 4294901760
        %7189 = vmatpush.msra.mxu0 %v7188
        %v7190 = vand.u32 %v6247, 4294901760
        %v7191 = vsub.f32 %v6247, %v7190
        %v7192 = vand.u32 %v7191, 4294901760
        %7193 = vmatpush.msra.mxu0 %v7192
        %v7194 = vand.u32 %v6240, 4294901760
        %v7195 = vsub.f32 %v6240, %v7194
        %v7196 = vand.u32 %v7195, 4294901760
        %7197 = vmatpush.msra.mxu0 %v7196
        %v7198 = vand.u32 %v6233, 4294901760
        %v7199 = vsub.f32 %v6233, %v7198
        %v7200 = vand.u32 %v7199, 4294901760
        %7201 = vmatpush.msra.mxu0 %v7200
        %v7202 = vand.u32 %v6226, 4294901760
        %v7203 = vsub.f32 %v6226, %v7202
        %v7204 = vand.u32 %v7203, 4294901760
        %7205 = vmatpush.msra.mxu0 %v7204
        %v7206 = vand.u32 %v6219, 4294901760
        %v7207 = vsub.f32 %v6219, %v7206
        %v7208 = vand.u32 %v7207, 4294901760
        %7209 = vmatpush.msra.mxu0 %v7208
        %v7210 = vand.u32 %v6212, 4294901760
        %v7211 = vsub.f32 %v6212, %v7210
        %v7212 = vand.u32 %v7211, 4294901760
        %7213 = vmatpush.msra.mxu0 %v7212
        %v7214 = vand.u32 %v6205, 4294901760
        %v7215 = vsub.f32 %v6205, %v7214
        %v7216 = vand.u32 %v7215, 4294901760
        %7217 = vmatpush.msra.mxu0 %v7216
        %v7218 = vand.u32 %v6198, 4294901760
        %v7219 = vsub.f32 %v6198, %v7218
        %v7220 = vand.u32 %v7219, 4294901760
        %7221 = vmatpush.msra.mxu0 %v7220
        %v7222 = vand.u32 %v6191, 4294901760
        %v7223 = vsub.f32 %v6191, %v7222
        %v7224 = vand.u32 %v7223, 4294901760
        %7225 = vmatpush.msra.mxu0 %v7224
        %v7226 = vand.u32 %v6184, 4294901760
        %v7227 = vsub.f32 %v6184, %v7226
        %v7228 = vand.u32 %v7227, 4294901760
        %7229 = vmatpush.msra.mxu0 %v7228
        %v7230 = vand.u32 %v6177, 4294901760
        %v7231 = vsub.f32 %v6177, %v7230
        %v7232 = vand.u32 %v7231, 4294901760
        %7233 = vmatpush.msra.mxu0 %v7232
        %v7234 = vand.u32 %v6170, 4294901760
        %v7235 = vsub.f32 %v6170, %v7234
        %v7236 = vand.u32 %v7235, 4294901760
        %7237 = vmatpush.msra.mxu0 %v7236
        %v7238 = vand.u32 %v6163, 4294901760
        %v7239 = vsub.f32 %v6163, %v7238
        %v7240 = vand.u32 %v7239, 4294901760
        %7241 = vmatpush.msra.mxu0 %v7240
        %v7242 = vand.u32 %v6156, 4294901760
        %v7243 = vsub.f32 %v6156, %v7242
        %v7244 = vand.u32 %v7243, 4294901760
        %7245 = vmatpush.msra.mxu0 %v7244
        %v7246 = vand.u32 %v5758, 4294901760
        %7247 = vmatmul.f32.gmra.mxu0 %v7246
        %v7248 = vpop.f32.mrf.mxu0
        %v7249 = vadd.f32 %v7042, %v7248
        %v7250 = vand.u32 %v5760, 4294901760
        %7251 = vmatmul.f32.gmra.mxu0 %v7250
        %v7252 = vpop.f32.mrf.mxu0
        %v7253 = vadd.f32 %v7048, %v7252
        %v7254 = vand.u32 %v5762, 4294901760
        %7255 = vmatmul.f32.gmra.mxu0 %v7254
        %v7256 = vpop.f32.mrf.mxu0
        %v7257 = vadd.f32 %v7054, %v7256
        %v7258 = vand.u32 %v5764, 4294901760
        %7259 = vmatmul.f32.gmra.mxu0 %v7258
        %v7260 = vpop.f32.mrf.mxu0
        %v7261 = vadd.f32 %v7060, %v7260
        %v7262 = vand.u32 %v5766, 4294901760
        %7263 = vmatmul.f32.gmra.mxu0 %v7262
        %v7264 = vpop.f32.mrf.mxu0
        %v7265 = vadd.f32 %v7066, %v7264
        %v7266 = vand.u32 %v5768, 4294901760
        %7267 = vmatmul.f32.gmra.mxu0 %v7266
        %v7268 = vpop.f32.mrf.mxu0
        %v7269 = vadd.f32 %v7072, %v7268
        %v7270 = vand.u32 %v5770, 4294901760
        %7271 = vmatmul.f32.gmra.mxu0 %v7270
        %v7272 = vpop.f32.mrf.mxu0
        %v7273 = vadd.f32 %v7078, %v7272
        %v7274 = vand.u32 %v5772, 4294901760
        %7275 = vmatmul.f32.gmra.mxu0 %v7274
        %v7276 = vpop.f32.mrf.mxu0
        %v7277 = vadd.f32 %v7084, %v7276
        %v7278 = vand.u32 %v5774, 4294901760
        %7279 = vmatmul.f32.gmra.mxu0 %v7278
        %v7280 = vpop.f32.mrf.mxu0
        %v7281 = vadd.f32 %v7090, %v7280
        %v7282 = vand.u32 %v5776, 4294901760
        %7283 = vmatmul.f32.gmra.mxu0 %v7282
        %v7284 = vpop.f32.mrf.mxu0
        %v7285 = vadd.f32 %v7096, %v7284
        %v7286 = vand.u32 %v5778, 4294901760
        %7287 = vmatmul.f32.gmra.mxu0 %v7286
        %v7288 = vpop.f32.mrf.mxu0
        %v7289 = vadd.f32 %v7102, %v7288
        %v7290 = vand.u32 %v5780, 4294901760
        %7291 = vmatmul.f32.gmra.mxu0 %v7290
        %v7292 = vpop.f32.mrf.mxu0
        %v7293 = vadd.f32 %v7108, %v7292
        %v7294 = vand.u32 %v5782, 4294901760
        %7295 = vmatmul.f32.gmra.mxu0 %v7294
        %v7296 = vpop.f32.mrf.mxu0
        %v7297 = vadd.f32 %v7114, %v7296
        %v7298 = vand.u32 %v5784, 4294901760
        %7299 = vmatmul.f32.gmra.mxu0 %v7298
        %v7300 = vpop.f32.mrf.mxu0
        %v7301 = vadd.f32 %v7120, %v7300
        %v7302 = vand.u32 %v5786, 4294901760
        %7303 = vmatmul.f32.gmra.mxu0 %v7302
        %v7304 = vpop.f32.mrf.mxu0
        %v7305 = vadd.f32 %v7126, %v7304
        %v7306 = vand.u32 %v5788, 4294901760
        %7307 = vmatmul.f32.gmra.mxu0 %v7306
        %v7308 = vpop.f32.mrf.mxu0
        %v7309 = vadd.f32 %v7132, %v7308
        %v7310 = vand.u32 %v5790, 4294901760
        %7311 = vmatmul.f32.gmra.mxu0 %v7310
        %v7312 = vpop.f32.mrf.mxu0
        %v7313 = vadd.f32 %v7138, %v7312
        %v7314 = vand.u32 %v5792, 4294901760
        %7315 = vmatmul.f32.gmra.mxu0 %v7314
        %v7316 = vpop.f32.mrf.mxu0
        %v7317 = vadd.f32 %v7144, %v7316
        %v7318 = vand.u32 %v5794, 4294901760
        %7319 = vmatmul.f32.gmra.mxu0 %v7318
        %v7320 = vpop.f32.mrf.mxu0
        %v7321 = vadd.f32 %v7150, %v7320
        %v7322 = vand.u32 %v5796, 4294901760
        %7323 = vmatmul.f32.gmra.mxu0 %v7322
        %v7324 = vpop.f32.mrf.mxu0
        %v7325 = vadd.f32 %v7156, %v7324
        %v7326 = vand.u32 %v5798, 4294901760
        %7327 = vmatmul.f32.gmra.mxu0 %v7326
        %v7328 = vpop.f32.mrf.mxu0
        %v7329 = vadd.f32 %v7162, %v7328
        %v7330 = vand.u32 %v5800, 4294901760
        %7331 = vmatmul.f32.gmra.mxu0 %v7330
        %v7332 = vpop.f32.mrf.mxu0
        %v7333 = vadd.f32 %v7168, %v7332
        %v7334 = vand.u32 %v5802, 4294901760
        %7335 = vmatmul.f32.gmra.mxu0 %v7334
        %v7336 = vpop.f32.mrf.mxu0
        %v7337 = vadd.f32 %v7174, %v7336
        %v7338 = vand.u32 %v5804, 4294901760
        %7339 = vmatmul.f32.gmra.mxu0 %v7338
        %v7340 = vpop.f32.mrf.mxu0
        %v7341 = vadd.f32 %v7180, %v7340
        %7342 = vdwg.mxu0
        %v7343 = vand.u32 %v6261, 4294901760
        %7344 = vmatpush.msra.mxu0 %v7343
        %v7345 = vand.u32 %v6254, 4294901760
        %7346 = vmatpush.msra.mxu0 %v7345
        %v7347 = vand.u32 %v6247, 4294901760
        %7348 = vmatpush.msra.mxu0 %v7347
        %v7349 = vand.u32 %v6240, 4294901760
        %7350 = vmatpush.msra.mxu0 %v7349
        %v7351 = vand.u32 %v6233, 4294901760
        %7352 = vmatpush.msra.mxu0 %v7351
        %v7353 = vand.u32 %v6226, 4294901760
        %7354 = vmatpush.msra.mxu0 %v7353
        %v7355 = vand.u32 %v6219, 4294901760
        %7356 = vmatpush.msra.mxu0 %v7355
        %v7357 = vand.u32 %v6212, 4294901760
        %7358 = vmatpush.msra.mxu0 %v7357
        %v7359 = vand.u32 %v6205, 4294901760
        %7360 = vmatpush.msra.mxu0 %v7359
        %v7361 = vand.u32 %v6198, 4294901760
        %7362 = vmatpush.msra.mxu0 %v7361
        %v7363 = vand.u32 %v6191, 4294901760
        %7364 = vmatpush.msra.mxu0 %v7363
        %v7365 = vand.u32 %v6184, 4294901760
        %7366 = vmatpush.msra.mxu0 %v7365
        %v7367 = vand.u32 %v6177, 4294901760
        %7368 = vmatpush.msra.mxu0 %v7367
        %v7369 = vand.u32 %v6170, 4294901760
        %7370 = vmatpush.msra.mxu0 %v7369
        %v7371 = vand.u32 %v6163, 4294901760
        %7372 = vmatpush.msra.mxu0 %v7371
        %v7373 = vand.u32 %v6156, 4294901760
        %7374 = vmatpush.msra.mxu0 %v7373
        %v7375 = vand.u32 %v5758, 4294901760
        %7376 = vmatmul.f32.gmra.mxu0 %v7375
        %v7377 = vpop.f32.mrf.mxu0
        %v7378 = vadd.f32 %v7249, %v7377
        %v7379 = vand.u32 %v5760, 4294901760
        %7380 = vmatmul.f32.gmra.mxu0 %v7379
        %v7381 = vpop.f32.mrf.mxu0
        %v7382 = vadd.f32 %v7253, %v7381
        %v7383 = vand.u32 %v5762, 4294901760
        %7384 = vmatmul.f32.gmra.mxu0 %v7383
        %v7385 = vpop.f32.mrf.mxu0
        %v7386 = vadd.f32 %v7257, %v7385
        %v7387 = vand.u32 %v5764, 4294901760
        %7388 = vmatmul.f32.gmra.mxu0 %v7387
        %v7389 = vpop.f32.mrf.mxu0
        %v7390 = vadd.f32 %v7261, %v7389
        %v7391 = vand.u32 %v5766, 4294901760
        %7392 = vmatmul.f32.gmra.mxu0 %v7391
        %v7393 = vpop.f32.mrf.mxu0
        %v7394 = vadd.f32 %v7265, %v7393
        %v7395 = vand.u32 %v5768, 4294901760
        %7396 = vmatmul.f32.gmra.mxu0 %v7395
        %v7397 = vpop.f32.mrf.mxu0
        %v7398 = vadd.f32 %v7269, %v7397
        %v7399 = vand.u32 %v5770, 4294901760
        %7400 = vmatmul.f32.gmra.mxu0 %v7399
        %v7401 = vpop.f32.mrf.mxu0
        %v7402 = vadd.f32 %v7273, %v7401
        %v7403 = vand.u32 %v5772, 4294901760
        %7404 = vmatmul.f32.gmra.mxu0 %v7403
        %v7405 = vpop.f32.mrf.mxu0
        %v7406 = vadd.f32 %v7277, %v7405
        %v7407 = vand.u32 %v5774, 4294901760
        %7408 = vmatmul.f32.gmra.mxu0 %v7407
        %v7409 = vpop.f32.mrf.mxu0
        %v7410 = vadd.f32 %v7281, %v7409
        %v7411 = vand.u32 %v5776, 4294901760
        %7412 = vmatmul.f32.gmra.mxu0 %v7411
        %v7413 = vpop.f32.mrf.mxu0
        %v7414 = vadd.f32 %v7285, %v7413
        %v7415 = vand.u32 %v5778, 4294901760
        %7416 = vmatmul.f32.gmra.mxu0 %v7415
        %v7417 = vpop.f32.mrf.mxu0
        %v7418 = vadd.f32 %v7289, %v7417
        %v7419 = vand.u32 %v5780, 4294901760
        %7420 = vmatmul.f32.gmra.mxu0 %v7419
        %v7421 = vpop.f32.mrf.mxu0
        %v7422 = vadd.f32 %v7293, %v7421
        %v7423 = vand.u32 %v5782, 4294901760
        %7424 = vmatmul.f32.gmra.mxu0 %v7423
        %v7425 = vpop.f32.mrf.mxu0
        %v7426 = vadd.f32 %v7297, %v7425
        %v7427 = vand.u32 %v5784, 4294901760
        %7428 = vmatmul.f32.gmra.mxu0 %v7427
        %v7429 = vpop.f32.mrf.mxu0
        %v7430 = vadd.f32 %v7301, %v7429
        %v7431 = vand.u32 %v5786, 4294901760
        %7432 = vmatmul.f32.gmra.mxu0 %v7431
        %v7433 = vpop.f32.mrf.mxu0
        %v7434 = vadd.f32 %v7305, %v7433
        %v7435 = vand.u32 %v5788, 4294901760
        %7436 = vmatmul.f32.gmra.mxu0 %v7435
        %v7437 = vpop.f32.mrf.mxu0
        %v7438 = vadd.f32 %v7309, %v7437
        %v7439 = vand.u32 %v5790, 4294901760
        %7440 = vmatmul.f32.gmra.mxu0 %v7439
        %v7441 = vpop.f32.mrf.mxu0
        %v7442 = vadd.f32 %v7313, %v7441
        %v7443 = vand.u32 %v5792, 4294901760
        %7444 = vmatmul.f32.gmra.mxu0 %v7443
        %v7445 = vpop.f32.mrf.mxu0
        %v7446 = vadd.f32 %v7317, %v7445
        %v7447 = vand.u32 %v5794, 4294901760
        %7448 = vmatmul.f32.gmra.mxu0 %v7447
        %v7449 = vpop.f32.mrf.mxu0
        %v7450 = vadd.f32 %v7321, %v7449
        %v7451 = vand.u32 %v5796, 4294901760
        %7452 = vmatmul.f32.gmra.mxu0 %v7451
        %v7453 = vpop.f32.mrf.mxu0
        %v7454 = vadd.f32 %v7325, %v7453
        %v7455 = vand.u32 %v5798, 4294901760
        %7456 = vmatmul.f32.gmra.mxu0 %v7455
        %v7457 = vpop.f32.mrf.mxu0
        %v7458 = vadd.f32 %v7329, %v7457
        %v7459 = vand.u32 %v5800, 4294901760
        %7460 = vmatmul.f32.gmra.mxu0 %v7459
        %v7461 = vpop.f32.mrf.mxu0
        %v7462 = vadd.f32 %v7333, %v7461
        %v7463 = vand.u32 %v5802, 4294901760
        %7464 = vmatmul.f32.gmra.mxu0 %v7463
        %v7465 = vpop.f32.mrf.mxu0
        %v7466 = vadd.f32 %v7337, %v7465
        %v7467 = vand.u32 %v5804, 4294901760
        %7468 = vmatmul.f32.gmra.mxu0 %v7467
        %v7469 = vpop.f32.mrf.mxu0
        %v7470 = vadd.f32 %v7341, %v7469
        %7471 = vdwg.mxu0
        %7472 = vmatpush.msra.mxu0 0.0
        %7473 = vmatpush.msra.mxu0 0.0
        %7474 = vmatpush.msra.mxu0 0.0
        %7475 = vmatpush.msra.mxu0 0.0
        %7476 = vmatpush.msra.mxu0 0.0
        %7477 = vmatpush.msra.mxu0 0.0
        %7478 = vmatpush.msra.mxu0 0.0
        %v7479 = vand.u32 %v6416, 4294901760
        %7480 = vmatpush.msra.mxu0 %v7479
        %v7481 = vand.u32 %v6317, 4294901760
        %7482 = vmatpush.msra.mxu0 %v7481
        %v7483 = vand.u32 %v6310, 4294901760
        %7484 = vmatpush.msra.mxu0 %v7483
        %v7485 = vand.u32 %v6303, 4294901760
        %7486 = vmatpush.msra.mxu0 %v7485
        %v7487 = vand.u32 %v6296, 4294901760
        %7488 = vmatpush.msra.mxu0 %v7487
        %v7489 = vand.u32 %v6289, 4294901760
        %7490 = vmatpush.msra.mxu0 %v7489
        %v7491 = vand.u32 %v6282, 4294901760
        %7492 = vmatpush.msra.mxu0 %v7491
        %v7493 = vand.u32 %v6275, 4294901760
        %7494 = vmatpush.msra.mxu0 %v7493
        %v7495 = vand.u32 %v6268, 4294901760
        %7496 = vmatpush.msra.mxu0 %v7495
        %v7497 = vand.u32 %v6344, 4294901760
        %v7498 = vsub.f32 %v6344, %v7497
        %v7499 = vand.u32 %v7498, 4294901760
        %v7500 = vsub.f32 %v7498, %v7499
        %v7501 = vand.u32 %v7500, 4294901760
        %7502 = vmatmul.f32.gmra.mxu0 %v7501
        %v7503 = vpop.f32.mrf.mxu0
        %v7504 = vadd.f32 %v7378, %v7503
        %v7505 = vand.u32 %v6347, 4294901760
        %v7506 = vsub.f32 %v6347, %v7505
        %v7507 = vand.u32 %v7506, 4294901760
        %v7508 = vsub.f32 %v7506, %v7507
        %v7509 = vand.u32 %v7508, 4294901760
        %7510 = vmatmul.f32.gmra.mxu0 %v7509
        %v7511 = vpop.f32.mrf.mxu0
        %v7512 = vadd.f32 %v7382, %v7511
        %v7513 = vand.u32 %v6350, 4294901760
        %v7514 = vsub.f32 %v6350, %v7513
        %v7515 = vand.u32 %v7514, 4294901760
        %v7516 = vsub.f32 %v7514, %v7515
        %v7517 = vand.u32 %v7516, 4294901760
        %7518 = vmatmul.f32.gmra.mxu0 %v7517
        %v7519 = vpop.f32.mrf.mxu0
        %v7520 = vadd.f32 %v7386, %v7519
        %v7521 = vand.u32 %v6353, 4294901760
        %v7522 = vsub.f32 %v6353, %v7521
        %v7523 = vand.u32 %v7522, 4294901760
        %v7524 = vsub.f32 %v7522, %v7523
        %v7525 = vand.u32 %v7524, 4294901760
        %7526 = vmatmul.f32.gmra.mxu0 %v7525
        %v7527 = vpop.f32.mrf.mxu0
        %v7528 = vadd.f32 %v7390, %v7527
        %v7529 = vand.u32 %v6356, 4294901760
        %v7530 = vsub.f32 %v6356, %v7529
        %v7531 = vand.u32 %v7530, 4294901760
        %v7532 = vsub.f32 %v7530, %v7531
        %v7533 = vand.u32 %v7532, 4294901760
        %7534 = vmatmul.f32.gmra.mxu0 %v7533
        %v7535 = vpop.f32.mrf.mxu0
        %v7536 = vadd.f32 %v7394, %v7535
        %v7537 = vand.u32 %v6359, 4294901760
        %v7538 = vsub.f32 %v6359, %v7537
        %v7539 = vand.u32 %v7538, 4294901760
        %v7540 = vsub.f32 %v7538, %v7539
        %v7541 = vand.u32 %v7540, 4294901760
        %7542 = vmatmul.f32.gmra.mxu0 %v7541
        %v7543 = vpop.f32.mrf.mxu0
        %v7544 = vadd.f32 %v7398, %v7543
        %v7545 = vand.u32 %v6362, 4294901760
        %v7546 = vsub.f32 %v6362, %v7545
        %v7547 = vand.u32 %v7546, 4294901760
        %v7548 = vsub.f32 %v7546, %v7547
        %v7549 = vand.u32 %v7548, 4294901760
        %7550 = vmatmul.f32.gmra.mxu0 %v7549
        %v7551 = vpop.f32.mrf.mxu0
        %v7552 = vadd.f32 %v7402, %v7551
        %v7553 = vand.u32 %v6365, 4294901760
        %v7554 = vsub.f32 %v6365, %v7553
        %v7555 = vand.u32 %v7554, 4294901760
        %v7556 = vsub.f32 %v7554, %v7555
        %v7557 = vand.u32 %v7556, 4294901760
        %7558 = vmatmul.f32.gmra.mxu0 %v7557
        %v7559 = vpop.f32.mrf.mxu0
        %v7560 = vadd.f32 %v7406, %v7559
        %v7561 = vand.u32 %v6368, 4294901760
        %v7562 = vsub.f32 %v6368, %v7561
        %v7563 = vand.u32 %v7562, 4294901760
        %v7564 = vsub.f32 %v7562, %v7563
        %v7565 = vand.u32 %v7564, 4294901760
        %7566 = vmatmul.f32.gmra.mxu0 %v7565
        %v7567 = vpop.f32.mrf.mxu0
        %v7568 = vadd.f32 %v7410, %v7567
        %v7569 = vand.u32 %v6371, 4294901760
        %v7570 = vsub.f32 %v6371, %v7569
        %v7571 = vand.u32 %v7570, 4294901760
        %v7572 = vsub.f32 %v7570, %v7571
        %v7573 = vand.u32 %v7572, 4294901760
        %7574 = vmatmul.f32.gmra.mxu0 %v7573
        %v7575 = vpop.f32.mrf.mxu0
        %v7576 = vadd.f32 %v7414, %v7575
        %v7577 = vand.u32 %v6374, 4294901760
        %v7578 = vsub.f32 %v6374, %v7577
        %v7579 = vand.u32 %v7578, 4294901760
        %v7580 = vsub.f32 %v7578, %v7579
        %v7581 = vand.u32 %v7580, 4294901760
        %7582 = vmatmul.f32.gmra.mxu0 %v7581
        %v7583 = vpop.f32.mrf.mxu0
        %v7584 = vadd.f32 %v7418, %v7583
        %v7585 = vand.u32 %v6377, 4294901760
        %v7586 = vsub.f32 %v6377, %v7585
        %v7587 = vand.u32 %v7586, 4294901760
        %v7588 = vsub.f32 %v7586, %v7587
        %v7589 = vand.u32 %v7588, 4294901760
        %7590 = vmatmul.f32.gmra.mxu0 %v7589
        %v7591 = vpop.f32.mrf.mxu0
        %v7592 = vadd.f32 %v7422, %v7591
        %v7593 = vand.u32 %v6380, 4294901760
        %v7594 = vsub.f32 %v6380, %v7593
        %v7595 = vand.u32 %v7594, 4294901760
        %v7596 = vsub.f32 %v7594, %v7595
        %v7597 = vand.u32 %v7596, 4294901760
        %7598 = vmatmul.f32.gmra.mxu0 %v7597
        %v7599 = vpop.f32.mrf.mxu0
        %v7600 = vadd.f32 %v7426, %v7599
        %v7601 = vand.u32 %v6383, 4294901760
        %v7602 = vsub.f32 %v6383, %v7601
        %v7603 = vand.u32 %v7602, 4294901760
        %v7604 = vsub.f32 %v7602, %v7603
        %v7605 = vand.u32 %v7604, 4294901760
        %7606 = vmatmul.f32.gmra.mxu0 %v7605
        %v7607 = vpop.f32.mrf.mxu0
        %v7608 = vadd.f32 %v7430, %v7607
        %v7609 = vand.u32 %v6386, 4294901760
        %v7610 = vsub.f32 %v6386, %v7609
        %v7611 = vand.u32 %v7610, 4294901760
        %v7612 = vsub.f32 %v7610, %v7611
        %v7613 = vand.u32 %v7612, 4294901760
        %7614 = vmatmul.f32.gmra.mxu0 %v7613
        %v7615 = vpop.f32.mrf.mxu0
        %v7616 = vadd.f32 %v7434, %v7615
        %v7617 = vand.u32 %v6389, 4294901760
        %v7618 = vsub.f32 %v6389, %v7617
        %v7619 = vand.u32 %v7618, 4294901760
        %v7620 = vsub.f32 %v7618, %v7619
        %v7621 = vand.u32 %v7620, 4294901760
        %7622 = vmatmul.f32.gmra.mxu0 %v7621
        %v7623 = vpop.f32.mrf.mxu0
        %v7624 = vadd.f32 %v7438, %v7623
        %v7625 = vand.u32 %v6392, 4294901760
        %v7626 = vsub.f32 %v6392, %v7625
        %v7627 = vand.u32 %v7626, 4294901760
        %v7628 = vsub.f32 %v7626, %v7627
        %v7629 = vand.u32 %v7628, 4294901760
        %7630 = vmatmul.f32.gmra.mxu0 %v7629
        %v7631 = vpop.f32.mrf.mxu0
        %v7632 = vadd.f32 %v7442, %v7631
        %v7633 = vand.u32 %v6395, 4294901760
        %v7634 = vsub.f32 %v6395, %v7633
        %v7635 = vand.u32 %v7634, 4294901760
        %v7636 = vsub.f32 %v7634, %v7635
        %v7637 = vand.u32 %v7636, 4294901760
        %7638 = vmatmul.f32.gmra.mxu0 %v7637
        %v7639 = vpop.f32.mrf.mxu0
        %v7640 = vadd.f32 %v7446, %v7639
        %v7641 = vand.u32 %v6398, 4294901760
        %v7642 = vsub.f32 %v6398, %v7641
        %v7643 = vand.u32 %v7642, 4294901760
        %v7644 = vsub.f32 %v7642, %v7643
        %v7645 = vand.u32 %v7644, 4294901760
        %7646 = vmatmul.f32.gmra.mxu0 %v7645
        %v7647 = vpop.f32.mrf.mxu0
        %v7648 = vadd.f32 %v7450, %v7647
        %v7649 = vand.u32 %v6401, 4294901760
        %v7650 = vsub.f32 %v6401, %v7649
        %v7651 = vand.u32 %v7650, 4294901760
        %v7652 = vsub.f32 %v7650, %v7651
        %v7653 = vand.u32 %v7652, 4294901760
        %7654 = vmatmul.f32.gmra.mxu0 %v7653
        %v7655 = vpop.f32.mrf.mxu0
        %v7656 = vadd.f32 %v7454, %v7655
        %v7657 = vand.u32 %v6404, 4294901760
        %v7658 = vsub.f32 %v6404, %v7657
        %v7659 = vand.u32 %v7658, 4294901760
        %v7660 = vsub.f32 %v7658, %v7659
        %v7661 = vand.u32 %v7660, 4294901760
        %7662 = vmatmul.f32.gmra.mxu0 %v7661
        %v7663 = vpop.f32.mrf.mxu0
        %v7664 = vadd.f32 %v7458, %v7663
        %v7665 = vand.u32 %v6407, 4294901760
        %v7666 = vsub.f32 %v6407, %v7665
        %v7667 = vand.u32 %v7666, 4294901760
        %v7668 = vsub.f32 %v7666, %v7667
        %v7669 = vand.u32 %v7668, 4294901760
        %7670 = vmatmul.f32.gmra.mxu0 %v7669
        %v7671 = vpop.f32.mrf.mxu0
        %v7672 = vadd.f32 %v7462, %v7671
        %v7673 = vand.u32 %v6410, 4294901760
        %v7674 = vsub.f32 %v6410, %v7673
        %v7675 = vand.u32 %v7674, 4294901760
        %v7676 = vsub.f32 %v7674, %v7675
        %v7677 = vand.u32 %v7676, 4294901760
        %7678 = vmatmul.f32.gmra.mxu0 %v7677
        %v7679 = vpop.f32.mrf.mxu0
        %v7680 = vadd.f32 %v7466, %v7679
        %v7681 = vand.u32 %v6413, 4294901760
        %v7682 = vsub.f32 %v6413, %v7681
        %v7683 = vand.u32 %v7682, 4294901760
        %v7684 = vsub.f32 %v7682, %v7683
        %v7685 = vand.u32 %v7684, 4294901760
        %7686 = vmatmul.f32.gmra.mxu0 %v7685
        %v7687 = vpop.f32.mrf.mxu0
        %v7688 = vadd.f32 %v7470, %v7687
        %7689 = vdwg.mxu0
        %7690 = vmatpush.msra.mxu0 0.0
        %7691 = vmatpush.msra.mxu0 0.0
        %7692 = vmatpush.msra.mxu0 0.0
        %7693 = vmatpush.msra.mxu0 0.0
        %7694 = vmatpush.msra.mxu0 0.0
        %7695 = vmatpush.msra.mxu0 0.0
        %7696 = vmatpush.msra.mxu0 0.0
        %v7697 = vand.u32 %v6416, 4294901760
        %v7698 = vsub.f32 %v6416, %v7697
        %v7699 = vand.u32 %v7698, 4294901760
        %v7700 = vsub.f32 %v7698, %v7699
        %v7701 = vand.u32 %v7700, 4294901760
        %7702 = vmatpush.msra.mxu0 %v7701
        %v7703 = vand.u32 %v6317, 4294901760
        %v7704 = vsub.f32 %v6317, %v7703
        %v7705 = vand.u32 %v7704, 4294901760
        %v7706 = vsub.f32 %v7704, %v7705
        %v7707 = vand.u32 %v7706, 4294901760
        %7708 = vmatpush.msra.mxu0 %v7707
        %v7709 = vand.u32 %v6310, 4294901760
        %v7710 = vsub.f32 %v6310, %v7709
        %v7711 = vand.u32 %v7710, 4294901760
        %v7712 = vsub.f32 %v7710, %v7711
        %v7713 = vand.u32 %v7712, 4294901760
        %7714 = vmatpush.msra.mxu0 %v7713
        %v7715 = vand.u32 %v6303, 4294901760
        %v7716 = vsub.f32 %v6303, %v7715
        %v7717 = vand.u32 %v7716, 4294901760
        %v7718 = vsub.f32 %v7716, %v7717
        %v7719 = vand.u32 %v7718, 4294901760
        %7720 = vmatpush.msra.mxu0 %v7719
        %v7721 = vand.u32 %v6296, 4294901760
        %v7722 = vsub.f32 %v6296, %v7721
        %v7723 = vand.u32 %v7722, 4294901760
        %v7724 = vsub.f32 %v7722, %v7723
        %v7725 = vand.u32 %v7724, 4294901760
        %7726 = vmatpush.msra.mxu0 %v7725
        %v7727 = vand.u32 %v6289, 4294901760
        %v7728 = vsub.f32 %v6289, %v7727
        %v7729 = vand.u32 %v7728, 4294901760
        %v7730 = vsub.f32 %v7728, %v7729
        %v7731 = vand.u32 %v7730, 4294901760
        %7732 = vmatpush.msra.mxu0 %v7731
        %v7733 = vand.u32 %v6282, 4294901760
        %v7734 = vsub.f32 %v6282, %v7733
        %v7735 = vand.u32 %v7734, 4294901760
        %v7736 = vsub.f32 %v7734, %v7735
        %v7737 = vand.u32 %v7736, 4294901760
        %7738 = vmatpush.msra.mxu0 %v7737
        %v7739 = vand.u32 %v6275, 4294901760
        %v7740 = vsub.f32 %v6275, %v7739
        %v7741 = vand.u32 %v7740, 4294901760
        %v7742 = vsub.f32 %v7740, %v7741
        %v7743 = vand.u32 %v7742, 4294901760
        %7744 = vmatpush.msra.mxu0 %v7743
        %v7745 = vand.u32 %v6268, 4294901760
        %v7746 = vsub.f32 %v6268, %v7745
        %v7747 = vand.u32 %v7746, 4294901760
        %v7748 = vsub.f32 %v7746, %v7747
        %v7749 = vand.u32 %v7748, 4294901760
        %7750 = vmatpush.msra.mxu0 %v7749
        %v7751 = vand.u32 %v6344, 4294901760
        %7752 = vmatmul.f32.gmra.mxu0 %v7751
        %v7753 = vpop.f32.mrf.mxu0
        %v7754 = vadd.f32 %v7504, %v7753
        %v7755 = vand.u32 %v6347, 4294901760
        %7756 = vmatmul.f32.gmra.mxu0 %v7755
        %v7757 = vpop.f32.mrf.mxu0
        %v7758 = vadd.f32 %v7512, %v7757
        %v7759 = vand.u32 %v6350, 4294901760
        %7760 = vmatmul.f32.gmra.mxu0 %v7759
        %v7761 = vpop.f32.mrf.mxu0
        %v7762 = vadd.f32 %v7520, %v7761
        %v7763 = vand.u32 %v6353, 4294901760
        %7764 = vmatmul.f32.gmra.mxu0 %v7763
        %v7765 = vpop.f32.mrf.mxu0
        %v7766 = vadd.f32 %v7528, %v7765
        %v7767 = vand.u32 %v6356, 4294901760
        %7768 = vmatmul.f32.gmra.mxu0 %v7767
        %v7769 = vpop.f32.mrf.mxu0
        %v7770 = vadd.f32 %v7536, %v7769
        %v7771 = vand.u32 %v6359, 4294901760
        %7772 = vmatmul.f32.gmra.mxu0 %v7771
        %v7773 = vpop.f32.mrf.mxu0
        %v7774 = vadd.f32 %v7544, %v7773
        %v7775 = vand.u32 %v6362, 4294901760
        %7776 = vmatmul.f32.gmra.mxu0 %v7775
        %v7777 = vpop.f32.mrf.mxu0
        %v7778 = vadd.f32 %v7552, %v7777
        %v7779 = vand.u32 %v6365, 4294901760
        %7780 = vmatmul.f32.gmra.mxu0 %v7779
        %v7781 = vpop.f32.mrf.mxu0
        %v7782 = vadd.f32 %v7560, %v7781
        %v7783 = vand.u32 %v6368, 4294901760
        %7784 = vmatmul.f32.gmra.mxu0 %v7783
        %v7785 = vpop.f32.mrf.mxu0
        %v7786 = vadd.f32 %v7568, %v7785
        %v7787 = vand.u32 %v6371, 4294901760
        %7788 = vmatmul.f32.gmra.mxu0 %v7787
        %v7789 = vpop.f32.mrf.mxu0
        %v7790 = vadd.f32 %v7576, %v7789
        %v7791 = vand.u32 %v6374, 4294901760
        %7792 = vmatmul.f32.gmra.mxu0 %v7791
        %v7793 = vpop.f32.mrf.mxu0
        %v7794 = vadd.f32 %v7584, %v7793
        %v7795 = vand.u32 %v6377, 4294901760
        %7796 = vmatmul.f32.gmra.mxu0 %v7795
        %v7797 = vpop.f32.mrf.mxu0
        %v7798 = vadd.f32 %v7592, %v7797
        %v7799 = vand.u32 %v6380, 4294901760
        %7800 = vmatmul.f32.gmra.mxu0 %v7799
        %v7801 = vpop.f32.mrf.mxu0
        %v7802 = vadd.f32 %v7600, %v7801
        %v7803 = vand.u32 %v6383, 4294901760
        %7804 = vmatmul.f32.gmra.mxu0 %v7803
        %v7805 = vpop.f32.mrf.mxu0
        %v7806 = vadd.f32 %v7608, %v7805
        %v7807 = vand.u32 %v6386, 4294901760
        %7808 = vmatmul.f32.gmra.mxu0 %v7807
        %v7809 = vpop.f32.mrf.mxu0
        %v7810 = vadd.f32 %v7616, %v7809
        %v7811 = vand.u32 %v6389, 4294901760
        %7812 = vmatmul.f32.gmra.mxu0 %v7811
        %v7813 = vpop.f32.mrf.mxu0
        %v7814 = vadd.f32 %v7624, %v7813
        %v7815 = vand.u32 %v6392, 4294901760
        %7816 = vmatmul.f32.gmra.mxu0 %v7815
        %v7817 = vpop.f32.mrf.mxu0
        %v7818 = vadd.f32 %v7632, %v7817
        %v7819 = vand.u32 %v6395, 4294901760
        %7820 = vmatmul.f32.gmra.mxu0 %v7819
        %v7821 = vpop.f32.mrf.mxu0
        %v7822 = vadd.f32 %v7640, %v7821
        %v7823 = vand.u32 %v6398, 4294901760
        %7824 = vmatmul.f32.gmra.mxu0 %v7823
        %v7825 = vpop.f32.mrf.mxu0
        %v7826 = vadd.f32 %v7648, %v7825
        %v7827 = vand.u32 %v6401, 4294901760
        %7828 = vmatmul.f32.gmra.mxu0 %v7827
        %v7829 = vpop.f32.mrf.mxu0
        %v7830 = vadd.f32 %v7656, %v7829
        %v7831 = vand.u32 %v6404, 4294901760
        %7832 = vmatmul.f32.gmra.mxu0 %v7831
        %v7833 = vpop.f32.mrf.mxu0
        %v7834 = vadd.f32 %v7664, %v7833
        %v7835 = vand.u32 %v6407, 4294901760
        %7836 = vmatmul.f32.gmra.mxu0 %v7835
        %v7837 = vpop.f32.mrf.mxu0
        %v7838 = vadd.f32 %v7672, %v7837
        %v7839 = vand.u32 %v6410, 4294901760
        %7840 = vmatmul.f32.gmra.mxu0 %v7839
        %v7841 = vpop.f32.mrf.mxu0
        %v7842 = vadd.f32 %v7680, %v7841
        %v7843 = vand.u32 %v6413, 4294901760
        %7844 = vmatmul.f32.gmra.mxu0 %v7843
        %v7845 = vpop.f32.mrf.mxu0
        %v7846 = vadd.f32 %v7688, %v7845
        %7847 = vdwg.mxu0
        %7848 = vmatpush.msra.mxu0 0.0
        %7849 = vmatpush.msra.mxu0 0.0
        %7850 = vmatpush.msra.mxu0 0.0
        %7851 = vmatpush.msra.mxu0 0.0
        %7852 = vmatpush.msra.mxu0 0.0
        %7853 = vmatpush.msra.mxu0 0.0
        %7854 = vmatpush.msra.mxu0 0.0
        %v7855 = vand.u32 %v6416, 4294901760
        %v7856 = vsub.f32 %v6416, %v7855
        %7857 = vmatpush.msra.mxu0 %v7856
        %v7858 = vand.u32 %v6317, 4294901760
        %v7859 = vsub.f32 %v6317, %v7858
        %7860 = vmatpush.msra.mxu0 %v7859
        %v7861 = vand.u32 %v6310, 4294901760
        %v7862 = vsub.f32 %v6310, %v7861
        %7863 = vmatpush.msra.mxu0 %v7862
        %v7864 = vand.u32 %v6303, 4294901760
        %v7865 = vsub.f32 %v6303, %v7864
        %7866 = vmatpush.msra.mxu0 %v7865
        %v7867 = vand.u32 %v6296, 4294901760
        %v7868 = vsub.f32 %v6296, %v7867
        %7869 = vmatpush.msra.mxu0 %v7868
        %v7870 = vand.u32 %v6289, 4294901760
        %v7871 = vsub.f32 %v6289, %v7870
        %7872 = vmatpush.msra.mxu0 %v7871
        %v7873 = vand.u32 %v6282, 4294901760
        %v7874 = vsub.f32 %v6282, %v7873
        %7875 = vmatpush.msra.mxu0 %v7874
        %v7876 = vand.u32 %v6275, 4294901760
        %v7877 = vsub.f32 %v6275, %v7876
        %7878 = vmatpush.msra.mxu0 %v7877
        %v7879 = vand.u32 %v6268, 4294901760
        %v7880 = vsub.f32 %v6268, %v7879
        %7881 = vmatpush.msra.mxu0 %v7880
        %v7882 = vand.u32 %v6344, 4294901760
        %v7883 = vsub.f32 %v6344, %v7882
        %7884 = vmatmul.f32.gmra.mxu0 %v7883
        %v7885 = vpop.f32.mrf.mxu0
        %v7886 = vadd.f32 %v7754, %v7885
        %v7887 = vand.u32 %v6347, 4294901760
        %v7888 = vsub.f32 %v6347, %v7887
        %7889 = vmatmul.f32.gmra.mxu0 %v7888
        %v7890 = vpop.f32.mrf.mxu0
        %v7891 = vadd.f32 %v7758, %v7890
        %v7892 = vand.u32 %v6350, 4294901760
        %v7893 = vsub.f32 %v6350, %v7892
        %7894 = vmatmul.f32.gmra.mxu0 %v7893
        %v7895 = vpop.f32.mrf.mxu0
        %v7896 = vadd.f32 %v7762, %v7895
        %v7897 = vand.u32 %v6353, 4294901760
        %v7898 = vsub.f32 %v6353, %v7897
        %7899 = vmatmul.f32.gmra.mxu0 %v7898
        %v7900 = vpop.f32.mrf.mxu0
        %v7901 = vadd.f32 %v7766, %v7900
        %v7902 = vand.u32 %v6356, 4294901760
        %v7903 = vsub.f32 %v6356, %v7902
        %7904 = vmatmul.f32.gmra.mxu0 %v7903
        %v7905 = vpop.f32.mrf.mxu0
        %v7906 = vadd.f32 %v7770, %v7905
        %v7907 = vand.u32 %v6359, 4294901760
        %v7908 = vsub.f32 %v6359, %v7907
        %7909 = vmatmul.f32.gmra.mxu0 %v7908
        %v7910 = vpop.f32.mrf.mxu0
        %v7911 = vadd.f32 %v7774, %v7910
        %v7912 = vand.u32 %v6362, 4294901760
        %v7913 = vsub.f32 %v6362, %v7912
        %7914 = vmatmul.f32.gmra.mxu0 %v7913
        %v7915 = vpop.f32.mrf.mxu0
        %v7916 = vadd.f32 %v7778, %v7915
        %v7917 = vand.u32 %v6365, 4294901760
        %v7918 = vsub.f32 %v6365, %v7917
        %7919 = vmatmul.f32.gmra.mxu0 %v7918
        %v7920 = vpop.f32.mrf.mxu0
        %v7921 = vadd.f32 %v7782, %v7920
        %v7922 = vand.u32 %v6368, 4294901760
        %v7923 = vsub.f32 %v6368, %v7922
        %7924 = vmatmul.f32.gmra.mxu0 %v7923
        %v7925 = vpop.f32.mrf.mxu0
        %v7926 = vadd.f32 %v7786, %v7925
        %v7927 = vand.u32 %v6371, 4294901760
        %v7928 = vsub.f32 %v6371, %v7927
        %7929 = vmatmul.f32.gmra.mxu0 %v7928
        %v7930 = vpop.f32.mrf.mxu0
        %v7931 = vadd.f32 %v7790, %v7930
        %v7932 = vand.u32 %v6374, 4294901760
        %v7933 = vsub.f32 %v6374, %v7932
        %7934 = vmatmul.f32.gmra.mxu0 %v7933
        %v7935 = vpop.f32.mrf.mxu0
        %v7936 = vadd.f32 %v7794, %v7935
        %v7937 = vand.u32 %v6377, 4294901760
        %v7938 = vsub.f32 %v6377, %v7937
        %7939 = vmatmul.f32.gmra.mxu0 %v7938
        %v7940 = vpop.f32.mrf.mxu0
        %v7941 = vadd.f32 %v7798, %v7940
        %v7942 = vand.u32 %v6380, 4294901760
        %v7943 = vsub.f32 %v6380, %v7942
        %7944 = vmatmul.f32.gmra.mxu0 %v7943
        %v7945 = vpop.f32.mrf.mxu0
        %v7946 = vadd.f32 %v7802, %v7945
        %v7947 = vand.u32 %v6383, 4294901760
        %v7948 = vsub.f32 %v6383, %v7947
        %7949 = vmatmul.f32.gmra.mxu0 %v7948
        %v7950 = vpop.f32.mrf.mxu0
        %v7951 = vadd.f32 %v7806, %v7950
        %v7952 = vand.u32 %v6386, 4294901760
        %v7953 = vsub.f32 %v6386, %v7952
        %7954 = vmatmul.f32.gmra.mxu0 %v7953
        %v7955 = vpop.f32.mrf.mxu0
        %v7956 = vadd.f32 %v7810, %v7955
        %v7957 = vand.u32 %v6389, 4294901760
        %v7958 = vsub.f32 %v6389, %v7957
        %7959 = vmatmul.f32.gmra.mxu0 %v7958
        %v7960 = vpop.f32.mrf.mxu0
        %v7961 = vadd.f32 %v7814, %v7960
        %v7962 = vand.u32 %v6392, 4294901760
        %v7963 = vsub.f32 %v6392, %v7962
        %7964 = vmatmul.f32.gmra.mxu0 %v7963
        %v7965 = vpop.f32.mrf.mxu0
        %v7966 = vadd.f32 %v7818, %v7965
        %v7967 = vand.u32 %v6395, 4294901760
        %v7968 = vsub.f32 %v6395, %v7967
        %7969 = vmatmul.f32.gmra.mxu0 %v7968
        %v7970 = vpop.f32.mrf.mxu0
        %v7971 = vadd.f32 %v7822, %v7970
        %v7972 = vand.u32 %v6398, 4294901760
        %v7973 = vsub.f32 %v6398, %v7972
        %7974 = vmatmul.f32.gmra.mxu0 %v7973
        %v7975 = vpop.f32.mrf.mxu0
        %v7976 = vadd.f32 %v7826, %v7975
        %v7977 = vand.u32 %v6401, 4294901760
        %v7978 = vsub.f32 %v6401, %v7977
        %7979 = vmatmul.f32.gmra.mxu0 %v7978
        %v7980 = vpop.f32.mrf.mxu0
        %v7981 = vadd.f32 %v7830, %v7980
        %v7982 = vand.u32 %v6404, 4294901760
        %v7983 = vsub.f32 %v6404, %v7982
        %7984 = vmatmul.f32.gmra.mxu0 %v7983
        %v7985 = vpop.f32.mrf.mxu0
        %v7986 = vadd.f32 %v7834, %v7985
        %v7987 = vand.u32 %v6407, 4294901760
        %v7988 = vsub.f32 %v6407, %v7987
        %7989 = vmatmul.f32.gmra.mxu0 %v7988
        %v7990 = vpop.f32.mrf.mxu0
        %v7991 = vadd.f32 %v7838, %v7990
        %v7992 = vand.u32 %v6410, 4294901760
        %v7993 = vsub.f32 %v6410, %v7992
        %7994 = vmatmul.f32.gmra.mxu0 %v7993
        %v7995 = vpop.f32.mrf.mxu0
        %v7996 = vadd.f32 %v7842, %v7995
        %v7997 = vand.u32 %v6413, 4294901760
        %v7998 = vsub.f32 %v6413, %v7997
        %7999 = vmatmul.f32.gmra.mxu0 %v7998
        %v8000 = vpop.f32.mrf.mxu0
        %v8001 = vadd.f32 %v7846, %v8000
        %8002 = vdwg.mxu0
        %8003 = vmatpush.msra.mxu0 0.0
        %8004 = vmatpush.msra.mxu0 0.0
        %8005 = vmatpush.msra.mxu0 0.0
        %8006 = vmatpush.msra.mxu0 0.0
        %8007 = vmatpush.msra.mxu0 0.0
        %8008 = vmatpush.msra.mxu0 0.0
        %8009 = vmatpush.msra.mxu0 0.0
        %v8010 = vand.u32 %v6416, 4294901760
        %8011 = vmatpush.msra.mxu0 %v8010
        %v8012 = vand.u32 %v6317, 4294901760
        %8013 = vmatpush.msra.mxu0 %v8012
        %v8014 = vand.u32 %v6310, 4294901760
        %8015 = vmatpush.msra.mxu0 %v8014
        %v8016 = vand.u32 %v6303, 4294901760
        %8017 = vmatpush.msra.mxu0 %v8016
        %v8018 = vand.u32 %v6296, 4294901760
        %8019 = vmatpush.msra.mxu0 %v8018
        %v8020 = vand.u32 %v6289, 4294901760
        %8021 = vmatpush.msra.mxu0 %v8020
        %v8022 = vand.u32 %v6282, 4294901760
        %8023 = vmatpush.msra.mxu0 %v8022
        %v8024 = vand.u32 %v6275, 4294901760
        %8025 = vmatpush.msra.mxu0 %v8024
        %v8026 = vand.u32 %v6268, 4294901760
        %8027 = vmatpush.msra.mxu0 %v8026
        %v8028 = vand.u32 %v6344, 4294901760
        %v8029 = vsub.f32 %v6344, %v8028
        %v8030 = vand.u32 %v8029, 4294901760
        %8031 = vmatmul.f32.gmra.mxu0 %v8030
        %v8032 = vpop.f32.mrf.mxu0
        %v8033 = vadd.f32 %v7886, %v8032
        %v8034 = vand.u32 %v6347, 4294901760
        %v8035 = vsub.f32 %v6347, %v8034
        %v8036 = vand.u32 %v8035, 4294901760
        %8037 = vmatmul.f32.gmra.mxu0 %v8036
        %v8038 = vpop.f32.mrf.mxu0
        %v8039 = vadd.f32 %v7891, %v8038
        %v8040 = vand.u32 %v6350, 4294901760
        %v8041 = vsub.f32 %v6350, %v8040
        %v8042 = vand.u32 %v8041, 4294901760
        %8043 = vmatmul.f32.gmra.mxu0 %v8042
        %v8044 = vpop.f32.mrf.mxu0
        %v8045 = vadd.f32 %v7896, %v8044
        %v8046 = vand.u32 %v6353, 4294901760
        %v8047 = vsub.f32 %v6353, %v8046
        %v8048 = vand.u32 %v8047, 4294901760
        %8049 = vmatmul.f32.gmra.mxu0 %v8048
        %v8050 = vpop.f32.mrf.mxu0
        %v8051 = vadd.f32 %v7901, %v8050
        %v8052 = vand.u32 %v6356, 4294901760
        %v8053 = vsub.f32 %v6356, %v8052
        %v8054 = vand.u32 %v8053, 4294901760
        %8055 = vmatmul.f32.gmra.mxu0 %v8054
        %v8056 = vpop.f32.mrf.mxu0
        %v8057 = vadd.f32 %v7906, %v8056
        %v8058 = vand.u32 %v6359, 4294901760
        %v8059 = vsub.f32 %v6359, %v8058
        %v8060 = vand.u32 %v8059, 4294901760
        %8061 = vmatmul.f32.gmra.mxu0 %v8060
        %v8062 = vpop.f32.mrf.mxu0
        %v8063 = vadd.f32 %v7911, %v8062
        %v8064 = vand.u32 %v6362, 4294901760
        %v8065 = vsub.f32 %v6362, %v8064
        %v8066 = vand.u32 %v8065, 4294901760
        %8067 = vmatmul.f32.gmra.mxu0 %v8066
        %v8068 = vpop.f32.mrf.mxu0
        %v8069 = vadd.f32 %v7916, %v8068
        %v8070 = vand.u32 %v6365, 4294901760
        %v8071 = vsub.f32 %v6365, %v8070
        %v8072 = vand.u32 %v8071, 4294901760
        %8073 = vmatmul.f32.gmra.mxu0 %v8072
        %v8074 = vpop.f32.mrf.mxu0
        %v8075 = vadd.f32 %v7921, %v8074
        %v8076 = vand.u32 %v6368, 4294901760
        %v8077 = vsub.f32 %v6368, %v8076
        %v8078 = vand.u32 %v8077, 4294901760
        %8079 = vmatmul.f32.gmra.mxu0 %v8078
        %v8080 = vpop.f32.mrf.mxu0
        %v8081 = vadd.f32 %v7926, %v8080
        %v8082 = vand.u32 %v6371, 4294901760
        %v8083 = vsub.f32 %v6371, %v8082
        %v8084 = vand.u32 %v8083, 4294901760
        %8085 = vmatmul.f32.gmra.mxu0 %v8084
        %v8086 = vpop.f32.mrf.mxu0
        %v8087 = vadd.f32 %v7931, %v8086
        %v8088 = vand.u32 %v6374, 4294901760
        %v8089 = vsub.f32 %v6374, %v8088
        %v8090 = vand.u32 %v8089, 4294901760
        %8091 = vmatmul.f32.gmra.mxu0 %v8090
        %v8092 = vpop.f32.mrf.mxu0
        %v8093 = vadd.f32 %v7936, %v8092
        %v8094 = vand.u32 %v6377, 4294901760
        %v8095 = vsub.f32 %v6377, %v8094
        %v8096 = vand.u32 %v8095, 4294901760
        %8097 = vmatmul.f32.gmra.mxu0 %v8096
        %v8098 = vpop.f32.mrf.mxu0
        %v8099 = vadd.f32 %v7941, %v8098
        %v8100 = vand.u32 %v6380, 4294901760
        %v8101 = vsub.f32 %v6380, %v8100
        %v8102 = vand.u32 %v8101, 4294901760
        %8103 = vmatmul.f32.gmra.mxu0 %v8102
        %v8104 = vpop.f32.mrf.mxu0
        %v8105 = vadd.f32 %v7946, %v8104
        %v8106 = vand.u32 %v6383, 4294901760
        %v8107 = vsub.f32 %v6383, %v8106
        %v8108 = vand.u32 %v8107, 4294901760
        %8109 = vmatmul.f32.gmra.mxu0 %v8108
        %v8110 = vpop.f32.mrf.mxu0
        %v8111 = vadd.f32 %v7951, %v8110
        %v8112 = vand.u32 %v6386, 4294901760
        %v8113 = vsub.f32 %v6386, %v8112
        %v8114 = vand.u32 %v8113, 4294901760
        %8115 = vmatmul.f32.gmra.mxu0 %v8114
        %v8116 = vpop.f32.mrf.mxu0
        %v8117 = vadd.f32 %v7956, %v8116
        %v8118 = vand.u32 %v6389, 4294901760
        %v8119 = vsub.f32 %v6389, %v8118
        %v8120 = vand.u32 %v8119, 4294901760
        %8121 = vmatmul.f32.gmra.mxu0 %v8120
        %v8122 = vpop.f32.mrf.mxu0
        %v8123 = vadd.f32 %v7961, %v8122
        %v8124 = vand.u32 %v6392, 4294901760
        %v8125 = vsub.f32 %v6392, %v8124
        %v8126 = vand.u32 %v8125, 4294901760
        %8127 = vmatmul.f32.gmra.mxu0 %v8126
        %v8128 = vpop.f32.mrf.mxu0
        %v8129 = vadd.f32 %v7966, %v8128
        %v8130 = vand.u32 %v6395, 4294901760
        %v8131 = vsub.f32 %v6395, %v8130
        %v8132 = vand.u32 %v8131, 4294901760
        %8133 = vmatmul.f32.gmra.mxu0 %v8132
        %v8134 = vpop.f32.mrf.mxu0
        %v8135 = vadd.f32 %v7971, %v8134
        %v8136 = vand.u32 %v6398, 4294901760
        %v8137 = vsub.f32 %v6398, %v8136
        %v8138 = vand.u32 %v8137, 4294901760
        %8139 = vmatmul.f32.gmra.mxu0 %v8138
        %v8140 = vpop.f32.mrf.mxu0
        %v8141 = vadd.f32 %v7976, %v8140
        %v8142 = vand.u32 %v6401, 4294901760
        %v8143 = vsub.f32 %v6401, %v8142
        %v8144 = vand.u32 %v8143, 4294901760
        %8145 = vmatmul.f32.gmra.mxu0 %v8144
        %v8146 = vpop.f32.mrf.mxu0
        %v8147 = vadd.f32 %v7981, %v8146
        %v8148 = vand.u32 %v6404, 4294901760
        %v8149 = vsub.f32 %v6404, %v8148
        %v8150 = vand.u32 %v8149, 4294901760
        %8151 = vmatmul.f32.gmra.mxu0 %v8150
        %v8152 = vpop.f32.mrf.mxu0
        %v8153 = vadd.f32 %v7986, %v8152
        %v8154 = vand.u32 %v6407, 4294901760
        %v8155 = vsub.f32 %v6407, %v8154
        %v8156 = vand.u32 %v8155, 4294901760
        %8157 = vmatmul.f32.gmra.mxu0 %v8156
        %v8158 = vpop.f32.mrf.mxu0
        %v8159 = vadd.f32 %v7991, %v8158
        %v8160 = vand.u32 %v6410, 4294901760
        %v8161 = vsub.f32 %v6410, %v8160
        %v8162 = vand.u32 %v8161, 4294901760
        %8163 = vmatmul.f32.gmra.mxu0 %v8162
        %v8164 = vpop.f32.mrf.mxu0
        %v8165 = vadd.f32 %v7996, %v8164
        %v8166 = vand.u32 %v6413, 4294901760
        %v8167 = vsub.f32 %v6413, %v8166
        %v8168 = vand.u32 %v8167, 4294901760
        %8169 = vmatmul.f32.gmra.mxu0 %v8168
        %v8170 = vpop.f32.mrf.mxu0
        %v8171 = vadd.f32 %v8001, %v8170
        %8172 = vdwg.mxu0
        %8173 = vmatpush.msra.mxu0 0.0
        %8174 = vmatpush.msra.mxu0 0.0
        %8175 = vmatpush.msra.mxu0 0.0
        %8176 = vmatpush.msra.mxu0 0.0
        %8177 = vmatpush.msra.mxu0 0.0
        %8178 = vmatpush.msra.mxu0 0.0
        %8179 = vmatpush.msra.mxu0 0.0
        %v8180 = vand.u32 %v6416, 4294901760
        %v8181 = vsub.f32 %v6416, %v8180
        %v8182 = vand.u32 %v8181, 4294901760
        %8183 = vmatpush.msra.mxu0 %v8182
        %v8184 = vand.u32 %v6317, 4294901760
        %v8185 = vsub.f32 %v6317, %v8184
        %v8186 = vand.u32 %v8185, 4294901760
        %8187 = vmatpush.msra.mxu0 %v8186
        %v8188 = vand.u32 %v6310, 4294901760
        %v8189 = vsub.f32 %v6310, %v8188
        %v8190 = vand.u32 %v8189, 4294901760
        %8191 = vmatpush.msra.mxu0 %v8190
        %v8192 = vand.u32 %v6303, 4294901760
        %v8193 = vsub.f32 %v6303, %v8192
        %v8194 = vand.u32 %v8193, 4294901760
        %8195 = vmatpush.msra.mxu0 %v8194
        %v8196 = vand.u32 %v6296, 4294901760
        %v8197 = vsub.f32 %v6296, %v8196
        %v8198 = vand.u32 %v8197, 4294901760
        %8199 = vmatpush.msra.mxu0 %v8198
        %v8200 = vand.u32 %v6289, 4294901760
        %v8201 = vsub.f32 %v6289, %v8200
        %v8202 = vand.u32 %v8201, 4294901760
        %8203 = vmatpush.msra.mxu0 %v8202
        %v8204 = vand.u32 %v6282, 4294901760
        %v8205 = vsub.f32 %v6282, %v8204
        %v8206 = vand.u32 %v8205, 4294901760
        %8207 = vmatpush.msra.mxu0 %v8206
        %v8208 = vand.u32 %v6275, 4294901760
        %v8209 = vsub.f32 %v6275, %v8208
        %v8210 = vand.u32 %v8209, 4294901760
        %8211 = vmatpush.msra.mxu0 %v8210
        %v8212 = vand.u32 %v6268, 4294901760
        %v8213 = vsub.f32 %v6268, %v8212
        %v8214 = vand.u32 %v8213, 4294901760
        %8215 = vmatpush.msra.mxu0 %v8214
        %v8216 = vand.u32 %v6344, 4294901760
        %8217 = vmatmul.f32.gmra.mxu0 %v8216
        %v8218 = vpop.f32.mrf.mxu0
        %v8219 = vadd.f32 %v8033, %v8218
        %v8220 = vand.u32 %v6347, 4294901760
        %8221 = vmatmul.f32.gmra.mxu0 %v8220
        %v8222 = vpop.f32.mrf.mxu0
        %v8223 = vadd.f32 %v8039, %v8222
        %v8224 = vand.u32 %v6350, 4294901760
        %8225 = vmatmul.f32.gmra.mxu0 %v8224
        %v8226 = vpop.f32.mrf.mxu0
        %v8227 = vadd.f32 %v8045, %v8226
        %v8228 = vand.u32 %v6353, 4294901760
        %8229 = vmatmul.f32.gmra.mxu0 %v8228
        %v8230 = vpop.f32.mrf.mxu0
        %v8231 = vadd.f32 %v8051, %v8230
        %v8232 = vand.u32 %v6356, 4294901760
        %8233 = vmatmul.f32.gmra.mxu0 %v8232
        %v8234 = vpop.f32.mrf.mxu0
        %v8235 = vadd.f32 %v8057, %v8234
        %v8236 = vand.u32 %v6359, 4294901760
        %8237 = vmatmul.f32.gmra.mxu0 %v8236
        %v8238 = vpop.f32.mrf.mxu0
        %v8239 = vadd.f32 %v8063, %v8238
        %v8240 = vand.u32 %v6362, 4294901760
        %8241 = vmatmul.f32.gmra.mxu0 %v8240
        %v8242 = vpop.f32.mrf.mxu0
        %v8243 = vadd.f32 %v8069, %v8242
        %v8244 = vand.u32 %v6365, 4294901760
        %8245 = vmatmul.f32.gmra.mxu0 %v8244
        %v8246 = vpop.f32.mrf.mxu0
        %v8247 = vadd.f32 %v8075, %v8246
        %v8248 = vand.u32 %v6368, 4294901760
        %8249 = vmatmul.f32.gmra.mxu0 %v8248
        %v8250 = vpop.f32.mrf.mxu0
        %v8251 = vadd.f32 %v8081, %v8250
        %v8252 = vand.u32 %v6371, 4294901760
        %8253 = vmatmul.f32.gmra.mxu0 %v8252
        %v8254 = vpop.f32.mrf.mxu0
        %v8255 = vadd.f32 %v8087, %v8254
        %v8256 = vand.u32 %v6374, 4294901760
        %8257 = vmatmul.f32.gmra.mxu0 %v8256
        %v8258 = vpop.f32.mrf.mxu0
        %v8259 = vadd.f32 %v8093, %v8258
        %v8260 = vand.u32 %v6377, 4294901760
        %8261 = vmatmul.f32.gmra.mxu0 %v8260
        %v8262 = vpop.f32.mrf.mxu0
        %v8263 = vadd.f32 %v8099, %v8262
        %v8264 = vand.u32 %v6380, 4294901760
        %8265 = vmatmul.f32.gmra.mxu0 %v8264
        %v8266 = vpop.f32.mrf.mxu0
        %v8267 = vadd.f32 %v8105, %v8266
        %v8268 = vand.u32 %v6383, 4294901760
        %8269 = vmatmul.f32.gmra.mxu0 %v8268
        %v8270 = vpop.f32.mrf.mxu0
        %v8271 = vadd.f32 %v8111, %v8270
        %v8272 = vand.u32 %v6386, 4294901760
        %8273 = vmatmul.f32.gmra.mxu0 %v8272
        %v8274 = vpop.f32.mrf.mxu0
        %v8275 = vadd.f32 %v8117, %v8274
        %v8276 = vand.u32 %v6389, 4294901760
        %8277 = vmatmul.f32.gmra.mxu0 %v8276
        %v8278 = vpop.f32.mrf.mxu0
        %v8279 = vadd.f32 %v8123, %v8278
        %v8280 = vand.u32 %v6392, 4294901760
        %8281 = vmatmul.f32.gmra.mxu0 %v8280
        %v8282 = vpop.f32.mrf.mxu0
        %v8283 = vadd.f32 %v8129, %v8282
        %v8284 = vand.u32 %v6395, 4294901760
        %8285 = vmatmul.f32.gmra.mxu0 %v8284
        %v8286 = vpop.f32.mrf.mxu0
        %v8287 = vadd.f32 %v8135, %v8286
        %v8288 = vand.u32 %v6398, 4294901760
        %8289 = vmatmul.f32.gmra.mxu0 %v8288
        %v8290 = vpop.f32.mrf.mxu0
        %v8291 = vadd.f32 %v8141, %v8290
        %v8292 = vand.u32 %v6401, 4294901760
        %8293 = vmatmul.f32.gmra.mxu0 %v8292
        %v8294 = vpop.f32.mrf.mxu0
        %v8295 = vadd.f32 %v8147, %v8294
        %v8296 = vand.u32 %v6404, 4294901760
        %8297 = vmatmul.f32.gmra.mxu0 %v8296
        %v8298 = vpop.f32.mrf.mxu0
        %v8299 = vadd.f32 %v8153, %v8298
        %v8300 = vand.u32 %v6407, 4294901760
        %8301 = vmatmul.f32.gmra.mxu0 %v8300
        %v8302 = vpop.f32.mrf.mxu0
        %v8303 = vadd.f32 %v8159, %v8302
        %v8304 = vand.u32 %v6410, 4294901760
        %8305 = vmatmul.f32.gmra.mxu0 %v8304
        %v8306 = vpop.f32.mrf.mxu0
        %v8307 = vadd.f32 %v8165, %v8306
        %v8308 = vand.u32 %v6413, 4294901760
        %8309 = vmatmul.f32.gmra.mxu0 %v8308
        %v8310 = vpop.f32.mrf.mxu0
        %v8311 = vadd.f32 %v8171, %v8310
        %8312 = vdwg.mxu0
        %8313 = vmatpush.msra.mxu0 0.0
        %8314 = vmatpush.msra.mxu0 0.0
        %8315 = vmatpush.msra.mxu0 0.0
        %8316 = vmatpush.msra.mxu0 0.0
        %8317 = vmatpush.msra.mxu0 0.0
        %8318 = vmatpush.msra.mxu0 0.0
        %8319 = vmatpush.msra.mxu0 0.0
        %v8320 = vand.u32 %v6416, 4294901760
        %8321 = vmatpush.msra.mxu0 %v8320
        %v8322 = vand.u32 %v6317, 4294901760
        %8323 = vmatpush.msra.mxu0 %v8322
        %v8324 = vand.u32 %v6310, 4294901760
        %8325 = vmatpush.msra.mxu0 %v8324
        %v8326 = vand.u32 %v6303, 4294901760
        %8327 = vmatpush.msra.mxu0 %v8326
        %v8328 = vand.u32 %v6296, 4294901760
        %8329 = vmatpush.msra.mxu0 %v8328
        %v8330 = vand.u32 %v6289, 4294901760
        %8331 = vmatpush.msra.mxu0 %v8330
        %v8332 = vand.u32 %v6282, 4294901760
        %8333 = vmatpush.msra.mxu0 %v8332
        %v8334 = vand.u32 %v6275, 4294901760
        %8335 = vmatpush.msra.mxu0 %v8334
        %v8336 = vand.u32 %v6268, 4294901760
        %8337 = vmatpush.msra.mxu0 %v8336
        %v8338 = vand.u32 %v6344, 4294901760
        %8339 = vmatmul.f32.gmra.mxu0 %v8338
        %v8340 = vpop.f32.mrf.mxu0
        %v8341 = vadd.f32 %v8219, %v8340
        %v8342 = vand.u32 %v6347, 4294901760
        %8343 = vmatmul.f32.gmra.mxu0 %v8342
        %v8344 = vpop.f32.mrf.mxu0
        %v8345 = vadd.f32 %v8223, %v8344
        %v8346 = vand.u32 %v6350, 4294901760
        %8347 = vmatmul.f32.gmra.mxu0 %v8346
        %v8348 = vpop.f32.mrf.mxu0
        %v8349 = vadd.f32 %v8227, %v8348
        %v8350 = vand.u32 %v6353, 4294901760
        %8351 = vmatmul.f32.gmra.mxu0 %v8350
        %v8352 = vpop.f32.mrf.mxu0
        %v8353 = vadd.f32 %v8231, %v8352
        %v8354 = vand.u32 %v6356, 4294901760
        %8355 = vmatmul.f32.gmra.mxu0 %v8354
        %v8356 = vpop.f32.mrf.mxu0
        %v8357 = vadd.f32 %v8235, %v8356
        %v8358 = vand.u32 %v6359, 4294901760
        %8359 = vmatmul.f32.gmra.mxu0 %v8358
        %v8360 = vpop.f32.mrf.mxu0
        %v8361 = vadd.f32 %v8239, %v8360
        %v8362 = vand.u32 %v6362, 4294901760
        %8363 = vmatmul.f32.gmra.mxu0 %v8362
        %v8364 = vpop.f32.mrf.mxu0
        %v8365 = vadd.f32 %v8243, %v8364
        %v8366 = vand.u32 %v6365, 4294901760
        %8367 = vmatmul.f32.gmra.mxu0 %v8366
        %v8368 = vpop.f32.mrf.mxu0
        %v8369 = vadd.f32 %v8247, %v8368
        %v8370 = vand.u32 %v6368, 4294901760
        %8371 = vmatmul.f32.gmra.mxu0 %v8370
        %v8372 = vpop.f32.mrf.mxu0
        %v8373 = vadd.f32 %v8251, %v8372
        %v8374 = vand.u32 %v6371, 4294901760
        %8375 = vmatmul.f32.gmra.mxu0 %v8374
        %v8376 = vpop.f32.mrf.mxu0
        %v8377 = vadd.f32 %v8255, %v8376
        %v8378 = vand.u32 %v6374, 4294901760
        %8379 = vmatmul.f32.gmra.mxu0 %v8378
        %v8380 = vpop.f32.mrf.mxu0
        %v8381 = vadd.f32 %v8259, %v8380
        %v8382 = vand.u32 %v6377, 4294901760
        %8383 = vmatmul.f32.gmra.mxu0 %v8382
        %v8384 = vpop.f32.mrf.mxu0
        %v8385 = vadd.f32 %v8263, %v8384
        %v8386 = vand.u32 %v6380, 4294901760
        %8387 = vmatmul.f32.gmra.mxu0 %v8386
        %v8388 = vpop.f32.mrf.mxu0
        %v8389 = vadd.f32 %v8267, %v8388
        %v8390 = vand.u32 %v6383, 4294901760
        %8391 = vmatmul.f32.gmra.mxu0 %v8390
        %v8392 = vpop.f32.mrf.mxu0
        %v8393 = vadd.f32 %v8271, %v8392
        %v8394 = vand.u32 %v6386, 4294901760
        %8395 = vmatmul.f32.gmra.mxu0 %v8394
        %v8396 = vpop.f32.mrf.mxu0
        %v8397 = vadd.f32 %v8275, %v8396
        %v8398 = vand.u32 %v6389, 4294901760
        %8399 = vmatmul.f32.gmra.mxu0 %v8398
        %v8400 = vpop.f32.mrf.mxu0
        %v8401 = vadd.f32 %v8279, %v8400
        %v8402 = vand.u32 %v6392, 4294901760
        %8403 = vmatmul.f32.gmra.mxu0 %v8402
        %v8404 = vpop.f32.mrf.mxu0
        %v8405 = vadd.f32 %v8283, %v8404
        %v8406 = vand.u32 %v6395, 4294901760
        %8407 = vmatmul.f32.gmra.mxu0 %v8406
        %v8408 = vpop.f32.mrf.mxu0
        %v8409 = vadd.f32 %v8287, %v8408
        %v8410 = vand.u32 %v6398, 4294901760
        %8411 = vmatmul.f32.gmra.mxu0 %v8410
        %v8412 = vpop.f32.mrf.mxu0
        %v8413 = vadd.f32 %v8291, %v8412
        %v8414 = vand.u32 %v6401, 4294901760
        %8415 = vmatmul.f32.gmra.mxu0 %v8414
        %v8416 = vpop.f32.mrf.mxu0
        %v8417 = vadd.f32 %v8295, %v8416
        %v8418 = vand.u32 %v6404, 4294901760
        %8419 = vmatmul.f32.gmra.mxu0 %v8418
        %v8420 = vpop.f32.mrf.mxu0
        %v8421 = vadd.f32 %v8299, %v8420
        %v8422 = vand.u32 %v6407, 4294901760
        %8423 = vmatmul.f32.gmra.mxu0 %v8422
        %v8424 = vpop.f32.mrf.mxu0
        %v8425 = vadd.f32 %v8303, %v8424
        %v8426 = vand.u32 %v6410, 4294901760
        %8427 = vmatmul.f32.gmra.mxu0 %v8426
        %v8428 = vpop.f32.mrf.mxu0
        %v8429 = vadd.f32 %v8307, %v8428
        %v8430 = vand.u32 %v6413, 4294901760
        %8431 = vmatmul.f32.gmra.mxu0 %v8430
        %v8432 = vpop.f32.mrf.mxu0
        %v8433 = vadd.f32 %v8311, %v8432
        %8434 = vdwg.mxu0
        %8435 = vst [vmem:[%s363] sm:$0xff] %v8341
        %8436 = vst [vmem:[%s363 + $0x8] sm:$0xff] %v8345
        %8437 = vst [vmem:[%s363 + $0x10] sm:$0xff] %v8349
        %8438 = vst [vmem:[%s363 + $0x18] sm:$0xff] %v8353
        %8439 = vst [vmem:[%s363 + $0x20] sm:$0xff] %v8357
        %8440 = vst [vmem:[%s363 + $0x28] sm:$0xff] %v8361
        %8441 = vst [vmem:[%s363 + $0x30] sm:$0xff] %v8365
        %8442 = vst [vmem:[%s363 + $0x38] sm:$0xff] %v8369
        %8443 = vst [vmem:[%s363 + $0x40] sm:$0xff] %v8373
        %8444 = vst [vmem:[%s363 + $0x48] sm:$0xff] %v8377
        %8445 = vst [vmem:[%s363 + $0x50] sm:$0xff] %v8381
        %8446 = vst [vmem:[%s363 + $0x58] sm:$0xff] %v8385
        %8447 = vst [vmem:[%s363 + $0x60] sm:$0xff] %v8389
        %8448 = vst [vmem:[%s363 + $0x68] sm:$0xff] %v8393
        %8449 = vst [vmem:[%s363 + $0x70] sm:$0xff] %v8397
        %8450 = vst [vmem:[%s363 + $0x78] sm:$0xff] %v8401
        %8451 = vst [vmem:[%s363 + $0x80] sm:$0xff] %v8405
        %8452 = vst [vmem:[%s363 + $0x88] sm:$0xff] %v8409
        %8453 = vst [vmem:[%s363 + $0x90] sm:$0xff] %v8413
        %8454 = vst [vmem:[%s363 + $0x98] sm:$0xff] %v8417
        %8455 = vst [vmem:[%s363 + $0xa0] sm:$0xff] %v8421
        %8456 = vst [vmem:[%s363 + $0xa8] sm:$0xff] %v8425
        %8457 = vst [vmem:[%s363 + $0xb0] sm:$0xff] %v8429
        %8458 = vst [vmem:[%s363 + $0xb8] sm:$0xff] %v8433
        %s8459 = sand.u32 %s190, 1
        %s8460 = scalar_lea.sflag [#allocation4], %s8459
        %s8461 = sand.u32 %s190, 1
        %s8462 = smul.addr %s8461, 192
        %s8463 = scalar_lea.vmem [#allocation9], %s8462
        // Predicated region
        $region65: #{tpu_custom_call.1} parent=47 // pred_check
          %p8464 = pneg %p200
        $region66: #{tpu_custom_call.1} parent=47 // pred_check_branch
          %8466 = sbr.rel (%p8464) target = $region68
        $region67: #{tpu_custom_call.1} parent=47 // pred_region
          %8468 = vsyncadd %s8460, 0
          %s8469 = smul.addr %s25, 24
          %s8470 = smul.addr %s8469, 8
          %s8471 = scalar_lea.hbm %s7, %s8470
          %s8472 = sshll.u32 %s8463, 4
          %s8473 = int_to_ptr.vmem [resolvable:$true] %s8472
          %s8474 = sshll.u32 %s8471, 4
          %s8475 = int_to_ptr.hbm [resolvable:$true] %s8474
          %8480 = dma.vmem_to_hbm [thread:$0]  %s8473, 3072, %s8475, %s8460, 128, 128, 8
        $region68: #{tpu_custom_call.1} parent=47 // pred_fallthru
          _
      $region48: #{tpu_custom_call.1} parent=5 // pred_fallthru
        _
      %p8481 = scmp.le.s32.totalorder 2, %s20
      // Predicated region
      $region69: #{tpu_custom_call.1} parent=5 // pred_check
        %p8482 = pneg %p8481
      $region70: #{tpu_custom_call.1} parent=5 // pred_check_branch
        %8484 = sbr.rel (%p8482) target = $region72
      $region71: #{tpu_custom_call.1} parent=5 // pred_region
        %s8485 = ssub.s32 %s20, 2
        // Predicated region
        $region73: #{tpu_custom_call.1} parent=71 // pred_check
          %p8486 = pneg %p206
        $region74: #{tpu_custom_call.1} parent=71 // pred_check_branch
          %8488 = sbr.rel (%p8486) target = $region76
        $region75: #{tpu_custom_call.1} parent=71 // pred_region
          %s8489 = sand.u32 %s191, 1
          %s8490 = scalar_lea.sflag [#allocation4], %s8489
          %s8491 = sand.u32 %s191, 1
          %s8492 = smul.addr %s8491, 192
          %s8493 = scalar_lea.vmem [#allocation9], %s8492
          %8495 = dma.done %s8490, 3072
        $region76: #{tpu_custom_call.1} parent=71 // pred_fallthru
          _
      $region72: #{tpu_custom_call.1} parent=5 // pred_fallthru
        _
    $region6: #{tpu_custom_call.1} parent=1 // loop_footer
      %s24 = sadd.s32 1, %s20
    $region7: #{tpu_custom_call.1} parent=1 // loop_footer_branch
      %19 = sbr.rel target = $region3
    $region8: #{tpu_custom_call.1} parent=1 // loop_exit
      _
    %8496 = vsyncpa [#allocation3], 1
    %s8497 = scalar_lea.sflag [#allocation3], 1
    %8498 = vsyncpa %s8497, 1
    %8499 = vsyncpa [#allocation6], 1
    %8500 = vsyncpa [#allocation4], 1
    %s8501 = scalar_lea.sflag [#allocation4], 1
    %8502 = vsyncpa %s8501, 1

</llo_original>
